<compile_context>
chip_gen: v7x
topology: tpu7x:2x2x1
jax: 0.10.0
libtpu: 0.0.40
codegen_flags: <defaults>
</compile_context>

<pallas_src>
import functools

import jax
import jax.numpy as jnp
from jax.experimental import pallas as pl
from jax.experimental.pallas import tpu as pltpu

LEAKY_SLOPE = 0.01          # F.leaky_relu default negative_slope
BN_EPS = 1e-5               # nn.BatchNorm2d default eps


def _leaky(v):
    return jnp.where(v > 0, v, LEAKY_SLOPE * v)


# ----------------------------------------------------------------------------
# Pallas kernels
# ----------------------------------------------------------------------------
def _mm_bias_act_kernel(x_ref, w_ref, b_ref, o_ref, *, act):
    """y = act(x @ w + b) -- bf16 operands, f32 MXU accumulation, f32 epilogue."""
    y = jnp.dot(x_ref[...], w_ref[...], preferred_element_type=jnp.float32)
    y = y + b_ref[...]
    if act == "leaky":
        y = _leaky(y)
    elif act == "relu":
        y = jnp.maximum(y, 0.0)
    o_ref[...] = y.astype(o_ref.dtype)


def matmul_bias_act(x2d, w2d, b, act):
    """x2d: (M, K) bf16, w2d: (K, N) bf16, b: (1, N) f32 (BN already folded)."""
    M, K = x2d.shape
    N = w2d.shape[1]
    # Largest M here is 2048 (conv1): a single full-M block is well under VMEM
    # limits on every generation, so avoid grid-step overhead entirely.
    TM = M if (M <= 2048 or M % 1024 != 0) else 1024
    grid = (M // TM,)
    return pl.pallas_call(
        functools.partial(_mm_bias_act_kernel, act=act),
        out_shape=jax.ShapeDtypeStruct((M, N), jnp.float32),
        grid=grid,
        in_specs=[
            pl.BlockSpec((TM, K), lambda i: (i, 0)),
            pl.BlockSpec((K, N), lambda i: (0, 0)),
            pl.BlockSpec((1, N), lambda i: (0, 0)),
        ],
        out_specs=pl.BlockSpec((TM, N), lambda i: (i, 0)),
        compiler_params=pltpu.CompilerParams(dimension_semantics=("arbitrary",)),
    )(x2d, w2d, b)


def _max4_kernel(a_ref, b_ref, c_ref, d_ref, o_ref):
    o_ref[...] = jnp.maximum(jnp.maximum(a_ref[...], b_ref[...]),
                             jnp.maximum(c_ref[...], d_ref[...]))


def max_pool_2x2(x):
    """x: (N, H, W, C) NHWC -> (N, H//2, W//2, C); 2x2 window, stride 2 (floor).

    The four window taps are fed as four lane-dense 2-D slabs; the kernel is a
    pure VPU 4-way max (no (M,4,C) padding, no 6-D transpose).
    """
    n, h, w, c = x.shape
    ho, wo = h // 2, w // 2
    x = x[:, : ho * 2, : wo * 2, :]
    s00 = x[:, 0::2, 0::2, :]
    s01 = x[:, 0::2, 1::2, :]
    s10 = x[:, 1::2, 0::2, :]
    s11 = x[:, 1::2, 1::2, :]
    total = n * ho * wo * c
    lane = 128 if total % 128 == 0 else c          # lane-dense when possible
    rows = total // lane

    def flat(s):
        return s.reshape(rows, lane)

    out = pl.pallas_call(
        _max4_kernel,
        out_shape=jax.ShapeDtypeStruct((rows, lane), jnp.float32),
        grid=(1,),
        in_specs=[pl.BlockSpec((rows, lane), lambda i: (0, 0))] * 4,
        out_specs=pl.BlockSpec((rows, lane), lambda i: (0, 0)),
    )(flat(s00), flat(s01), flat(s10), flat(s11))
    return out.reshape(n, ho, wo, c)


def _tail_kernel(pa_ref, pb_ref, w4_ref, b4_ref,
                 w1a_ref, w1b_ref, b1_ref,
                 w2_ref, b2_ref, w3_ref, b3_ref,
                 w5_ref, b5_ref, o_ref):
    """Fused conv4 (as matmul) + ReLU + view(-1,512) + 4-layer MLP + tanh.

    pa/pb are the im2col patches of even/odd batch samples: concat of their
    conv4 outputs is exactly x.view(-1, 512) (conv4 spatial is 1x1), so
    linear1 is computed as ha @ W1[:256] + hb @ W1[256:].
    """
    ha = jnp.dot(pa_ref[...], w4_ref[...], preferred_element_type=jnp.float32) + b4_ref[...]
    hb = jnp.dot(pb_ref[...], w4_ref[...], preferred_element_type=jnp.float32) + b4_ref[...]
    ha = jnp.maximum(ha, 0.0).astype(jnp.bfloat16)      # torch.relu
    hb = jnp.maximum(hb, 0.0).astype(jnp.bfloat16)
    # linear1 on the concatenated (.., 512) row
    y = (jnp.dot(ha, w1a_ref[...], preferred_element_type=jnp.float32)
         + jnp.dot(hb, w1b_ref[...], preferred_element_type=jnp.float32)
         + b1_ref[...])
    y = _leaky(y).astype(jnp.bfloat16)                  # dropout == identity (eval)
    y = jnp.dot(y, w2_ref[...], preferred_element_type=jnp.float32) + b2_ref[...]
    y = _leaky(y).astype(jnp.bfloat16)
    y = jnp.dot(y, w3_ref[...], preferred_element_type=jnp.float32) + b3_ref[...]
    y = _leaky(y).astype(jnp.bfloat16)
    y = jnp.dot(y, w5_ref[...], preferred_element_type=jnp.float32) + b5_ref[...]
    y = jnp.tanh(_leaky(y))                             # leaky_relu then tanh
    o_ref[...] = y.astype(o_ref.dtype)


def fused_tail(pa, pb, fp):
    rows = pa.shape[0]
    args = [pa, pb,
            fp["conv4_w"], fp["conv4_b"],
            fp["linear1_w_top"], fp["linear1_w_bot"], fp["linear1_b"],
            fp["linear2_w"], fp["linear2_b"],
            fp["linear3_w"], fp["linear3_b"],
            fp["linear4_w"], fp["linear4_b"]]
    return pl.pallas_call(
        _tail_kernel,
        out_shape=jax.ShapeDtypeStruct((rows, 1), jnp.float32),
        grid=(1,),
        in_specs=[pl.BlockSpec(a.shape, lambda i: (0, 0)) for a in args],
        out_specs=pl.BlockSpec((rows, 1), lambda i: (0, 0)),
    )(*args)


# ----------------------------------------------------------------------------
# JAX glue: im2col + conv wrapper
# ----------------------------------------------------------------------------
def im2col(x, k, s, p):
    """x: (N, H, W, C) -> patches (N*Ho*Wo, k*k*C), column layout (kh, kw, cin)."""
    n, h, w, c = x.shape
    xp = jnp.pad(x, ((0, 0), (p, p), (p, p), (0, 0)))
    hp, wp = h + 2 * p, w + 2 * p
    ho = (hp - k) // s + 1
    wo = (wp - k) // s + 1
    cols = []
    for kh in range(k):
        for kw in range(k):
            cols.append(xp[:, kh: kh + (ho - 1) * s + 1: s,
                           kw: kw + (wo - 1) * s + 1: s, :])
    patches = jnp.concatenate(cols, axis=-1)          # (N, Ho, Wo, k*k*C)
    return patches.reshape(n * ho * wo, k * k * c), ho, wo


def conv_layer(x, w2d, b, k, s, p, act):
    """w2d: (k*k*Cin, Cout) bf16 with BN folded; b: (1, Cout) f32."""
    n = x.shape[0]
    cout = w2d.shape[1]
    patches, ho, wo = im2col(x, k, s, p)
    y = matmul_bias_act(patches.astype(jnp.bfloat16), w2d, b, act)
    return y.reshape(n, ho, wo, cout)


# ----------------------------------------------------------------------------
# Parameters (deterministic in-script init, mirrors weights_init) + folding
# ----------------------------------------------------------------------------
def xavier_uniform(key, shape, fan_in, fan_out):
    a = (6.0 / (fan_in + fan_out)) ** 0.5
    return jax.random.uniform(key, shape, jnp.float32, -a, a)


def init_params(key):
    keys = jax.random.split(key, 8)
    p = {}
    conv_defs = [("conv1", 5, 1, 64), ("conv2", 3, 64, 128),
                 ("conv3", 3, 128, 256), ("conv4", 3, 256, 256)]
    for i, (name, k, cin, cout) in enumerate(conv_defs):
        p[name + "_w"] = xavier_uniform(keys[i], (k, k, cin, cout),
                                        cin * k * k, cout * k * k)
        p[name + "_b"] = jnp.full((cout,), 0.01, jnp.float32)
    # BatchNorm (inference): scale = gamma/sqrt(var+eps), shift = beta - mean*scale
    for name, c in [("bn1", 64), ("bn2", 128), ("bn3", 256)]:
        p[name + "_scale"] = jnp.ones((c,), jnp.float32) / jnp.sqrt(1.0 + BN_EPS)
        p[name + "_shift"] = jnp.zeros((c,), jnp.float32)
    lin_defs = [("linear1", 512, 512), ("linear2", 512, 256),
                ("linear3", 256, 64), ("linear4", 64, 1)]
    for i, (name, din, dout) in enumerate(lin_defs):
        p[name + "_w"] = xavier_uniform(keys[4 + i], (din, dout), din, dout)
        p[name + "_b"] = jnp.full((dout,), 0.01, jnp.float32)
    return p


def fold_params(p):
    """Fold BN into conv weights/bias, reshape for matmul, cast weights to bf16."""
    f = {}

    def fold_conv(name, bn):
        w = p[name + "_w"]
        b = p[name + "_b"]
        if bn is not None:
            s = p[bn + "_scale"]
            sh = p[bn + "_shift"]
            w = w * s                       # broadcast over Cout
            b = b * s + sh
        cout = w.shape[-1]
        f[name + "_w"] = w.reshape(-1, cout).astype(jnp.bfloat16)
        f[name + "_b"] = b.reshape(1, cout).astype(jnp.float32)

    fold_conv("conv1", "bn1")
    fold_conv("conv2", "bn2")
    fold_conv("conv3", "bn3")
    fold_conv("conv4", None)

    for name in ["linear1", "linear2", "linear3", "linear4"]:
        f[name + "_w"] = p[name + "_w"].astype(jnp.bfloat16)
        f[name + "_b"] = p[name + "_b"].reshape(1, -1).astype(jnp.float32)

    # linear1 weight split into halves so the fused tail kernel never needs the
    # (2,256)->(1,512) relayout.
    f["linear1_w_top"] = f["linear1_w"][:256]
    f["linear1_w_bot"] = f["linear1_w"][256:]
    del f["linear1_w"]
    return f


# ----------------------------------------------------------------------------
# Model forward
# ----------------------------------------------------------------------------
@jax.jit
def model_forward(fp, x_nchw):
    # layout: input is PyTorch NCHW (N, 1, H, W); converted to NHWC here.
    x = jnp.transpose(x_nchw, (0, 2, 3, 1)).astype(jnp.float32)

    # ---- CNN (conv1..conv3 + pools) ----
    x = conv_layer(x, fp["conv1_w"], fp["conv1_b"], 5, 3, 2, "leaky")
    x = max_pool_2x2(x)
    x = conv_layer(x, fp["conv2_w"], fp["conv2_b"], 3, 2, 1, "leaky")
    x = max_pool_2x2(x)
    x = conv_layer(x, fp["conv3_w"], fp["conv3_b"], 3, 2, 1, "leaky")
    x = max_pool_2x2(x)

    # ---- fused conv4 + ReLU + view(-1, 512) + MLP (one pallas_call) ----
    patches, ho, wo = im2col(x, 3, 2, 1)               # (B, 2304) when 1x1 spatial
    # view(-1, 512) merges channel vectors of consecutive batch samples; the
    # fused kernel relies on conv4's spatial output being 1x1 and B even.
    assert ho == 1 and wo == 1 and patches.shape[0] % 2 == 0, (ho, wo, patches.shape)
    pa = patches[0::2].astype(jnp.bfloat16)            # even batch samples
    pb = patches[1::2].astype(jnp.bfloat16)            # odd  batch samples
    return fused_tail(pa, pb, fp)


if __name__ == "__main__":
    key = jax.random.PRNGKey(0)
    pkey, xkey = jax.random.split(key)
    params = init_params(pkey)
    folded = fold_params(params)
    # NCHW input like the PyTorch module; 96x96 makes the final view(-1, 512)
    # valid (conv4 output is (2, 256, 1, 1) -> (1, 512)).
    x = jax.random.normal(xkey, (2, 1, 96, 96), jnp.float32)
    out = jax.block_until_ready(model_forward(folded, x))
    assert out.shape == (1, 1), out.shape
    assert bool(jnp.all(jnp.isfinite(out)))
    print("KERNEL_OK")
</pallas_src>

<mosaic_0001>
module attributes {stable_mosaic.version = 11 : i64} {
  func.func @_mm_bias_act_kernel(%arg0: i32, %arg1: memref<2048x25xbf16, #tpu.memory_space<vmem>>, %arg2: memref<25x64xbf16, #tpu.memory_space<vmem>>, %arg3: memref<1x64xf32, #tpu.memory_space<vmem>>, %arg4: memref<2048x64xf32, #tpu.memory_space<vmem>>) attributes {dimension_semantics = [#tpu.dimension_semantics<arbitrary>], iteration_bounds = array<i64: 1>, scalar_prefetch = 0 : i64, scratch_operands = 0 : i64, tpu.core_type = #tpu.core_type<tc>, window_params = [{transform_indices = @transform_0, window_bounds = array<i64: 2048, 25>}, {pipeline_mode = #tpu.pipeline_mode<synchronous>, transform_indices = @transform_1, window_bounds = array<i64: 25, 64>}, {pipeline_mode = #tpu.pipeline_mode<synchronous>, transform_indices = @transform_2, window_bounds = array<i64: 1, 64>}, {transform_indices = @transform_3, window_bounds = array<i64: 2048, 64>}]} {
    %c0 = arith.constant 0 : index
    %c0_0 = arith.constant 0 : index
    %0 = vector.load %arg1[%c0, %c0_0] : memref<2048x25xbf16, #tpu.memory_space<vmem>>, vector<2048x25xbf16>
    %c0_1 = arith.constant 0 : index
    %c0_2 = arith.constant 0 : index
    %1 = vector.load %arg2[%c0_1, %c0_2] : memref<25x64xbf16, #tpu.memory_space<vmem>>, vector<25x64xbf16>
    %cst = arith.constant dense<0.000000e+00> : vector<2048x64xf32>
    %2 = tpu.matmul %0, %1, %cst {dimension_numbers = #tpu.dot_dimension_numbers<[1], [0], [0], [1], [0, 0, 1, 1], [], []>} : vector<2048x25xbf16>, vector<25x64xbf16>, vector<2048x64xf32> -> vector<2048x64xf32>
    %c0_3 = arith.constant 0 : index
    %c0_4 = arith.constant 0 : index
    %3 = vector.load %arg3[%c0_3, %c0_4] : memref<1x64xf32, #tpu.memory_space<vmem>>, vector<1x64xf32>
    %4 = vector.broadcast %3 : vector<1x64xf32> to vector<2048x64xf32>
    %5 = arith.addf %2, %4 : vector<2048x64xf32>
    %cst_5 = arith.constant 0.000000e+00 : f32
    %6 = vector.broadcast %cst_5 : f32 to vector<2048x64xf32>
    %7 = arith.cmpf ogt, %5, %6 : vector<2048x64xf32>
    %cst_6 = arith.constant 0.00999999977 : f32
    %8 = vector.broadcast %cst_6 : f32 to vector<2048x64xf32>
    %9 = arith.mulf %8, %5 : vector<2048x64xf32>
    %10 = arith.select %7, %5, %9 : vector<2048x64xi1>, vector<2048x64xf32>
    %c0_7 = arith.constant 0 : index
    %c0_8 = arith.constant 0 : index
    %11 = vector.load %arg4[%c0_7, %c0_8] : memref<2048x64xf32, #tpu.memory_space<vmem>>, vector<2048x64xf32>
    tpu.vector_store %arg4[%c0_7, %c0_8], %10 {strides = array<i32>} : memref<2048x64xf32, #tpu.memory_space<vmem>>, vector<2048x64xf32>,
    return
  }
  func.func @transform_0(%arg0: i32) -> (i32, i32) {
    %c0_i32 = arith.constant 0 : i32
    %c0_i32_0 = arith.constant 0 : i32
    return %arg0, %c0_i32 : i32, i32
  }
  func.func @transform_1(%arg0: i32) -> (i32, i32) {
    %c0_i32 = arith.constant 0 : i32
    %c0_i32_0 = arith.constant 0 : i32
    %c0_i32_1 = arith.constant 0 : i32
    return %c0_i32, %c0_i32_0 : i32, i32
  }
  func.func @transform_2(%arg0: i32) -> (i32, i32) {
    %c0_i32 = arith.constant 0 : i32
    %c0_i32_0 = arith.constant 0 : i32
    %c0_i32_1 = arith.constant 0 : i32
    return %c0_i32, %c0_i32_0 : i32, i32
  }
  func.func @transform_3(%arg0: i32) -> (i32, i32) {
    %c0_i32 = arith.constant 0 : i32
    %c0_i32_0 = arith.constant 0 : i32
    return %arg0, %c0_i32 : i32, i32
  }
}

module attributes {stable_mosaic.version = 11 : i64} {
  func.func @_max4_kernel(%arg0: i32, %arg1: memref<256x128xf32, #tpu.memory_space<vmem>>, %arg2: memref<256x128xf32, #tpu.memory_space<vmem>>, %arg3: memref<256x128xf32, #tpu.memory_space<vmem>>, %arg4: memref<256x128xf32, #tpu.memory_space<vmem>>, %arg5: memref<256x128xf32, #tpu.memory_space<vmem>>) attributes {dimension_semantics = [#tpu.dimension_semantics<arbitrary>], iteration_bounds = array<i64: 1>, scalar_prefetch = 0 : i64, scratch_operands = 0 : i64, tpu.core_type = #tpu.core_type<tc>, window_params = [{pipeline_mode = #tpu.pipeline_mode<synchronous>, transform_indices = @transform_0, window_bounds = array<i64: 256, 128>}, {pipeline_mode = #tpu.pipeline_mode<synchronous>, transform_indices = @transform_1, window_bounds = array<i64: 256, 128>}, {pipeline_mode = #tpu.pipeline_mode<synchronous>, transform_indices = @transform_2, window_bounds = array<i64: 256, 128>}, {pipeline_mode = #tpu.pipeline_mode<synchronous>, transform_indices = @transform_3, window_bounds = array<i64: 256, 128>}, {pipeline_mode = #tpu.pipeline_mode<synchronous>, transform_indices = @transform_4, window_bounds = array<i64: 256, 128>}]} {
    %c0 = arith.constant 0 : index
    %c0_0 = arith.constant 0 : index
    %0 = vector.load %arg1[%c0, %c0_0] : memref<256x128xf32, #tpu.memory_space<vmem>>, vector<256x128xf32>
    %c0_1 = arith.constant 0 : index
    %c0_2 = arith.constant 0 : index
    %1 = vector.load %arg2[%c0_1, %c0_2] : memref<256x128xf32, #tpu.memory_space<vmem>>, vector<256x128xf32>
    %2 = arith.maximumf %0, %1 : vector<256x128xf32>
    %c0_3 = arith.constant 0 : index
    %c0_4 = arith.constant 0 : index
    %3 = vector.load %arg3[%c0_3, %c0_4] : memref<256x128xf32, #tpu.memory_space<vmem>>, vector<256x128xf32>
    %c0_5 = arith.constant 0 : index
    %c0_6 = arith.constant 0 : index
    %4 = vector.load %arg4[%c0_5, %c0_6] : memref<256x128xf32, #tpu.memory_space<vmem>>, vector<256x128xf32>
    %5 = arith.maximumf %3, %4 : vector<256x128xf32>
    %6 = arith.maximumf %2, %5 : vector<256x128xf32>
    %c0_7 = arith.constant 0 : index
    %c0_8 = arith.constant 0 : index
    %7 = vector.load %arg5[%c0_7, %c0_8] : memref<256x128xf32, #tpu.memory_space<vmem>>, vector<256x128xf32>
    tpu.vector_store %arg5[%c0_7, %c0_8], %6 {strides = array<i32>} : memref<256x128xf32, #tpu.memory_space<vmem>>, vector<256x128xf32>,
    return
  }
  func.func @transform_0(%arg0: i32) -> (i32, i32) {
    %c0_i32 = arith.constant 0 : i32
    %c0_i32_0 = arith.constant 0 : i32
    %c0_i32_1 = arith.constant 0 : i32
    return %c0_i32, %c0_i32_0 : i32, i32
  }
  func.func @transform_1(%arg0: i32) -> (i32, i32) {
    %c0_i32 = arith.constant 0 : i32
    %c0_i32_0 = arith.constant 0 : i32
    %c0_i32_1 = arith.constant 0 : i32
    return %c0_i32, %c0_i32_0 : i32, i32
  }
  func.func @transform_2(%arg0: i32) -> (i32, i32) {
    %c0_i32 = arith.constant 0 : i32
    %c0_i32_0 = arith.constant 0 : i32
    %c0_i32_1 = arith.constant 0 : i32
    return %c0_i32, %c0_i32_0 : i32, i32
  }
  func.func @transform_3(%arg0: i32) -> (i32, i32) {
    %c0_i32 = arith.constant 0 : i32
    %c0_i32_0 = arith.constant 0 : i32
    %c0_i32_1 = arith.constant 0 : i32
    return %c0_i32, %c0_i32_0 : i32, i32
  }
  func.func @transform_4(%arg0: i32) -> (i32, i32) {
    %c0_i32 = arith.constant 0 : i32
    %c0_i32_0 = arith.constant 0 : i32
    %c0_i32_1 = arith.constant 0 : i32
    return %c0_i32, %c0_i32_0 : i32, i32
  }
}

module attributes {stable_mosaic.version = 11 : i64} {
  func.func @_mm_bias_act_kernel(%arg0: i32, %arg1: memref<128x576xbf16, #tpu.memory_space<vmem>>, %arg2: memref<576x128xbf16, #tpu.memory_space<vmem>>, %arg3: memref<1x128xf32, #tpu.memory_space<vmem>>, %arg4: memref<128x128xf32, #tpu.memory_space<vmem>>) attributes {dimension_semantics = [#tpu.dimension_semantics<arbitrary>], iteration_bounds = array<i64: 1>, scalar_prefetch = 0 : i64, scratch_operands = 0 : i64, tpu.core_type = #tpu.core_type<tc>, window_params = [{transform_indices = @transform_0, window_bounds = array<i64: 128, 576>}, {pipeline_mode = #tpu.pipeline_mode<synchronous>, transform_indices = @transform_1, window_bounds = array<i64: 576, 128>}, {pipeline_mode = #tpu.pipeline_mode<synchronous>, transform_indices = @transform_2, window_bounds = array<i64: 1, 128>}, {transform_indices = @transform_3, window_bounds = array<i64: 128, 128>}]} {
    %c0 = arith.constant 0 : index
    %c0_0 = arith.constant 0 : index
    %0 = vector.load %arg1[%c0, %c0_0] : memref<128x576xbf16, #tpu.memory_space<vmem>>, vector<128x576xbf16>
    %c0_1 = arith.constant 0 : index
    %c0_2 = arith.constant 0 : index
    %1 = vector.load %arg2[%c0_1, %c0_2] : memref<576x128xbf16, #tpu.memory_space<vmem>>, vector<576x128xbf16>
    %cst = arith.constant dense<0.000000e+00> : vector<128x128xf32>
    %2 = tpu.matmul %0, %1, %cst {dimension_numbers = #tpu.dot_dimension_numbers<[1], [0], [0], [1], [0, 0, 1, 1], [], []>} : vector<128x576xbf16>, vector<576x128xbf16>, vector<128x128xf32> -> vector<128x128xf32>
    %c0_3 = arith.constant 0 : index
    %c0_4 = arith.constant 0 : index
    %3 = vector.load %arg3[%c0_3, %c0_4] : memref<1x128xf32, #tpu.memory_space<vmem>>, vector<1x128xf32>
    %4 = vector.broadcast %3 : vector<1x128xf32> to vector<128x128xf32>
    %5 = arith.addf %2, %4 : vector<128x128xf32>
    %cst_5 = arith.constant 0.000000e+00 : f32
    %6 = vector.broadcast %cst_5 : f32 to vector<128x128xf32>
    %7 = arith.cmpf ogt, %5, %6 : vector<128x128xf32>
    %cst_6 = arith.constant 0.00999999977 : f32
    %8 = vector.broadcast %cst_6 : f32 to vector<128x128xf32>
    %9 = arith.mulf %8, %5 : vector<128x128xf32>
    %10 = arith.select %7, %5, %9 : vector<128x128xi1>, vector<128x128xf32>
    %c0_7 = arith.constant 0 : index
    %c0_8 = arith.constant 0 : index
    %11 = vector.load %arg4[%c0_7, %c0_8] : memref<128x128xf32, #tpu.memory_space<vmem>>, vector<128x128xf32>
    tpu.vector_store %arg4[%c0_7, %c0_8], %10 {strides = array<i32>} : memref<128x128xf32, #tpu.memory_space<vmem>>, vector<128x128xf32>,
    return
  }
  func.func @transform_0(%arg0: i32) -> (i32, i32) {
    %c0_i32 = arith.constant 0 : i32
    %c0_i32_0 = arith.constant 0 : i32
    return %arg0, %c0_i32 : i32, i32
  }
  func.func @transform_1(%arg0: i32) -> (i32, i32) {
    %c0_i32 = arith.constant 0 : i32
    %c0_i32_0 = arith.constant 0 : i32
    %c0_i32_1 = arith.constant 0 : i32
    return %c0_i32, %c0_i32_0 : i32, i32
  }
  func.func @transform_2(%arg0: i32) -> (i32, i32) {
    %c0_i32 = arith.constant 0 : i32
    %c0_i32_0 = arith.constant 0 : i32
    %c0_i32_1 = arith.constant 0 : i32
    return %c0_i32, %c0_i32_0 : i32, i32
  }
  func.func @transform_3(%arg0: i32) -> (i32, i32) {
    %c0_i32 = arith.constant 0 : i32
    %c0_i32_0 = arith.constant 0 : i32
    return %arg0, %c0_i32 : i32, i32
  }
}

module attributes {stable_mosaic.version = 11 : i64} {
  func.func @_max4_kernel(%arg0: i32, %arg1: memref<32x128xf32, #tpu.memory_space<vmem>>, %arg2: memref<32x128xf32, #tpu.memory_space<vmem>>, %arg3: memref<32x128xf32, #tpu.memory_space<vmem>>, %arg4: memref<32x128xf32, #tpu.memory_space<vmem>>, %arg5: memref<32x128xf32, #tpu.memory_space<vmem>>) attributes {dimension_semantics = [#tpu.dimension_semantics<arbitrary>], iteration_bounds = array<i64: 1>, scalar_prefetch = 0 : i64, scratch_operands = 0 : i64, tpu.core_type = #tpu.core_type<tc>, window_params = [{pipeline_mode = #tpu.pipeline_mode<synchronous>, transform_indices = @transform_0, window_bounds = array<i64: 32, 128>}, {pipeline_mode = #tpu.pipeline_mode<synchronous>, transform_indices = @transform_1, window_bounds = array<i64: 32, 128>}, {pipeline_mode = #tpu.pipeline_mode<synchronous>, transform_indices = @transform_2, window_bounds = array<i64: 32, 128>}, {pipeline_mode = #tpu.pipeline_mode<synchronous>, transform_indices = @transform_3, window_bounds = array<i64: 32, 128>}, {pipeline_mode = #tpu.pipeline_mode<synchronous>, transform_indices = @transform_4, window_bounds = array<i64: 32, 128>}]} {
    %c0 = arith.constant 0 : index
    %c0_0 = arith.constant 0 : index
    %0 = vector.load %arg1[%c0, %c0_0] : memref<32x128xf32, #tpu.memory_space<vmem>>, vector<32x128xf32>
    %c0_1 = arith.constant 0 : index
    %c0_2 = arith.constant 0 : index
    %1 = vector.load %arg2[%c0_1, %c0_2] : memref<32x128xf32, #tpu.memory_space<vmem>>, vector<32x128xf32>
    %2 = arith.maximumf %0, %1 : vector<32x128xf32>
    %c0_3 = arith.constant 0 : index
    %c0_4 = arith.constant 0 : index
    %3 = vector.load %arg3[%c0_3, %c0_4] : memref<32x128xf32, #tpu.memory_space<vmem>>, vector<32x128xf32>
    %c0_5 = arith.constant 0 : index
    %c0_6 = arith.constant 0 : index
    %4 = vector.load %arg4[%c0_5, %c0_6] : memref<32x128xf32, #tpu.memory_space<vmem>>, vector<32x128xf32>
    %5 = arith.maximumf %3, %4 : vector<32x128xf32>
    %6 = arith.maximumf %2, %5 : vector<32x128xf32>
    %c0_7 = arith.constant 0 : index
    %c0_8 = arith.constant 0 : index
    %7 = vector.load %arg5[%c0_7, %c0_8] : memref<32x128xf32, #tpu.memory_space<vmem>>, vector<32x128xf32>
    tpu.vector_store %arg5[%c0_7, %c0_8], %6 {strides = array<i32>} : memref<32x128xf32, #tpu.memory_space<vmem>>, vector<32x128xf32>,
    return
  }
  func.func @transform_0(%arg0: i32) -> (i32, i32) {
    %c0_i32 = arith.constant 0 : i32
    %c0_i32_0 = arith.constant 0 : i32
    %c0_i32_1 = arith.constant 0 : i32
    return %c0_i32, %c0_i32_0 : i32, i32
  }
  func.func @transform_1(%arg0: i32) -> (i32, i32) {
    %c0_i32 = arith.constant 0 : i32
    %c0_i32_0 = arith.constant 0 : i32
    %c0_i32_1 = arith.constant 0 : i32
    return %c0_i32, %c0_i32_0 : i32, i32
  }
  func.func @transform_2(%arg0: i32) -> (i32, i32) {
    %c0_i32 = arith.constant 0 : i32
    %c0_i32_0 = arith.constant 0 : i32
    %c0_i32_1 = arith.constant 0 : i32
    return %c0_i32, %c0_i32_0 : i32, i32
  }
  func.func @transform_3(%arg0: i32) -> (i32, i32) {
    %c0_i32 = arith.constant 0 : i32
    %c0_i32_0 = arith.constant 0 : i32
    %c0_i32_1 = arith.constant 0 : i32
    return %c0_i32, %c0_i32_0 : i32, i32
  }
  func.func @transform_4(%arg0: i32) -> (i32, i32) {
    %c0_i32 = arith.constant 0 : i32
    %c0_i32_0 = arith.constant 0 : i32
    %c0_i32_1 = arith.constant 0 : i32
    return %c0_i32, %c0_i32_0 : i32, i32
  }
}

module attributes {stable_mosaic.version = 11 : i64} {
  func.func @_mm_bias_act_kernel(%arg0: i32, %arg1: memref<8x1152xbf16, #tpu.memory_space<vmem>>, %arg2: memref<1152x256xbf16, #tpu.memory_space<vmem>>, %arg3: memref<1x256xf32, #tpu.memory_space<vmem>>, %arg4: memref<8x256xf32, #tpu.memory_space<vmem>>) attributes {dimension_semantics = [#tpu.dimension_semantics<arbitrary>], iteration_bounds = array<i64: 1>, scalar_prefetch = 0 : i64, scratch_operands = 0 : i64, tpu.core_type = #tpu.core_type<tc>, window_params = [{transform_indices = @transform_0, window_bounds = array<i64: 8, 1152>}, {pipeline_mode = #tpu.pipeline_mode<synchronous>, transform_indices = @transform_1, window_bounds = array<i64: 1152, 256>}, {pipeline_mode = #tpu.pipeline_mode<synchronous>, transform_indices = @transform_2, window_bounds = array<i64: 1, 256>}, {transform_indices = @transform_3, window_bounds = array<i64: 8, 256>}]} {
    %c0 = arith.constant 0 : index
    %c0_0 = arith.constant 0 : index
    %0 = vector.load %arg1[%c0, %c0_0] : memref<8x1152xbf16, #tpu.memory_space<vmem>>, vector<8x1152xbf16>
    %c0_1 = arith.constant 0 : index
    %c0_2 = arith.constant 0 : index
    %1 = vector.load %arg2[%c0_1, %c0_2] : memref<1152x256xbf16, #tpu.memory_space<vmem>>, vector<1152x256xbf16>
    %cst = arith.constant dense<0.000000e+00> : vector<8x256xf32>
    %2 = tpu.matmul %0, %1, %cst {dimension_numbers = #tpu.dot_dimension_numbers<[1], [0], [0], [1], [0, 0, 1, 1], [], []>} : vector<8x1152xbf16>, vector<1152x256xbf16>, vector<8x256xf32> -> vector<8x256xf32>
    %c0_3 = arith.constant 0 : index
    %c0_4 = arith.constant 0 : index
    %3 = vector.load %arg3[%c0_3, %c0_4] : memref<1x256xf32, #tpu.memory_space<vmem>>, vector<1x256xf32>
    %4 = vector.broadcast %3 : vector<1x256xf32> to vector<8x256xf32>
    %5 = arith.addf %2, %4 : vector<8x256xf32>
    %cst_5 = arith.constant 0.000000e+00 : f32
    %6 = vector.broadcast %cst_5 : f32 to vector<8x256xf32>
    %7 = arith.cmpf ogt, %5, %6 : vector<8x256xf32>
    %cst_6 = arith.constant 0.00999999977 : f32
    %8 = vector.broadcast %cst_6 : f32 to vector<8x256xf32>
    %9 = arith.mulf %8, %5 : vector<8x256xf32>
    %10 = arith.select %7, %5, %9 : vector<8x256xi1>, vector<8x256xf32>
    %c0_7 = arith.constant 0 : index
    %c0_8 = arith.constant 0 : index
    %11 = vector.load %arg4[%c0_7, %c0_8] : memref<8x256xf32, #tpu.memory_space<vmem>>, vector<8x256xf32>
    tpu.vector_store %arg4[%c0_7, %c0_8], %10 {strides = array<i32>} : memref<8x256xf32, #tpu.memory_space<vmem>>, vector<8x256xf32>,
    return
  }
  func.func @transform_0(%arg0: i32) -> (i32, i32) {
    %c0_i32 = arith.constant 0 : i32
    %c0_i32_0 = arith.constant 0 : i32
    return %arg0, %c0_i32 : i32, i32
  }
  func.func @transform_1(%arg0: i32) -> (i32, i32) {
    %c0_i32 = arith.constant 0 : i32
    %c0_i32_0 = arith.constant 0 : i32
    %c0_i32_1 = arith.constant 0 : i32
    return %c0_i32, %c0_i32_0 : i32, i32
  }
  func.func @transform_2(%arg0: i32) -> (i32, i32) {
    %c0_i32 = arith.constant 0 : i32
    %c0_i32_0 = arith.constant 0 : i32
    %c0_i32_1 = arith.constant 0 : i32
    return %c0_i32, %c0_i32_0 : i32, i32
  }
  func.func @transform_3(%arg0: i32) -> (i32, i32) {
    %c0_i32 = arith.constant 0 : i32
    %c0_i32_0 = arith.constant 0 : i32
    return %arg0, %c0_i32 : i32, i32
  }
}

module attributes {stable_mosaic.version = 11 : i64} {
  func.func @_max4_kernel(%arg0: i32, %arg1: memref<4x128xf32, #tpu.memory_space<vmem>>, %arg2: memref<4x128xf32, #tpu.memory_space<vmem>>, %arg3: memref<4x128xf32, #tpu.memory_space<vmem>>, %arg4: memref<4x128xf32, #tpu.memory_space<vmem>>, %arg5: memref<4x128xf32, #tpu.memory_space<vmem>>) attributes {dimension_semantics = [#tpu.dimension_semantics<arbitrary>], iteration_bounds = array<i64: 1>, scalar_prefetch = 0 : i64, scratch_operands = 0 : i64, tpu.core_type = #tpu.core_type<tc>, window_params = [{pipeline_mode = #tpu.pipeline_mode<synchronous>, transform_indices = @transform_0, window_bounds = array<i64: 4, 128>}, {pipeline_mode = #tpu.pipeline_mode<synchronous>, transform_indices = @transform_1, window_bounds = array<i64: 4, 128>}, {pipeline_mode = #tpu.pipeline_mode<synchronous>, transform_indices = @transform_2, window_bounds = array<i64: 4, 128>}, {pipeline_mode = #tpu.pipeline_mode<synchronous>, transform_indices = @transform_3, window_bounds = array<i64: 4, 128>}, {pipeline_mode = #tpu.pipeline_mode<synchronous>, transform_indices = @transform_4, window_bounds = array<i64: 4, 128>}]} {
    %c0 = arith.constant 0 : index
    %c0_0 = arith.constant 0 : index
    %0 = vector.load %arg1[%c0, %c0_0] : memref<4x128xf32, #tpu.memory_space<vmem>>, vector<4x128xf32>
    %c0_1 = arith.constant 0 : index
    %c0_2 = arith.constant 0 : index
    %1 = vector.load %arg2[%c0_1, %c0_2] : memref<4x128xf32, #tpu.memory_space<vmem>>, vector<4x128xf32>
    %2 = arith.maximumf %0, %1 : vector<4x128xf32>
    %c0_3 = arith.constant 0 : index
    %c0_4 = arith.constant 0 : index
    %3 = vector.load %arg3[%c0_3, %c0_4] : memref<4x128xf32, #tpu.memory_space<vmem>>, vector<4x128xf32>
    %c0_5 = arith.constant 0 : index
    %c0_6 = arith.constant 0 : index
    %4 = vector.load %arg4[%c0_5, %c0_6] : memref<4x128xf32, #tpu.memory_space<vmem>>, vector<4x128xf32>
    %5 = arith.maximumf %3, %4 : vector<4x128xf32>
    %6 = arith.maximumf %2, %5 : vector<4x128xf32>
    %c0_7 = arith.constant 0 : index
    %c0_8 = arith.constant 0 : index
    %7 = vector.load %arg5[%c0_7, %c0_8] : memref<4x128xf32, #tpu.memory_space<vmem>>, vector<4x128xf32>
    tpu.vector_store %arg5[%c0_7, %c0_8], %6 {strides = array<i32>} : memref<4x128xf32, #tpu.memory_space<vmem>>, vector<4x128xf32>,
    return
  }
  func.func @transform_0(%arg0: i32) -> (i32, i32) {
    %c0_i32 = arith.constant 0 : i32
    %c0_i32_0 = arith.constant 0 : i32
    %c0_i32_1 = arith.constant 0 : i32
    return %c0_i32, %c0_i32_0 : i32, i32
  }
  func.func @transform_1(%arg0: i32) -> (i32, i32) {
    %c0_i32 = arith.constant 0 : i32
    %c0_i32_0 = arith.constant 0 : i32
    %c0_i32_1 = arith.constant 0 : i32
    return %c0_i32, %c0_i32_0 : i32, i32
  }
  func.func @transform_2(%arg0: i32) -> (i32, i32) {
    %c0_i32 = arith.constant 0 : i32
    %c0_i32_0 = arith.constant 0 : i32
    %c0_i32_1 = arith.constant 0 : i32
    return %c0_i32, %c0_i32_0 : i32, i32
  }
  func.func @transform_3(%arg0: i32) -> (i32, i32) {
    %c0_i32 = arith.constant 0 : i32
    %c0_i32_0 = arith.constant 0 : i32
    %c0_i32_1 = arith.constant 0 : i32
    return %c0_i32, %c0_i32_0 : i32, i32
  }
  func.func @transform_4(%arg0: i32) -> (i32, i32) {
    %c0_i32 = arith.constant 0 : i32
    %c0_i32_0 = arith.constant 0 : i32
    %c0_i32_1 = arith.constant 0 : i32
    return %c0_i32, %c0_i32_0 : i32, i32
  }
}

module attributes {stable_mosaic.version = 11 : i64} {
  func.func @_tail_kernel(%arg0: i32, %arg1: memref<1x2304xbf16, #tpu.memory_space<vmem>>, %arg2: memref<1x2304xbf16, #tpu.memory_space<vmem>>, %arg3: memref<2304x256xbf16, #tpu.memory_space<vmem>>, %arg4: memref<1x256xf32, #tpu.memory_space<vmem>>, %arg5: memref<256x512xbf16, #tpu.memory_space<vmem>>, %arg6: memref<256x512xbf16, #tpu.memory_space<vmem>>, %arg7: memref<1x512xf32, #tpu.memory_space<vmem>>, %arg8: memref<512x256xbf16, #tpu.memory_space<vmem>>, %arg9: memref<1x256xf32, #tpu.memory_space<vmem>>, %arg10: memref<256x64xbf16, #tpu.memory_space<vmem>>, %arg11: memref<1x64xf32, #tpu.memory_space<vmem>>, %arg12: memref<64x1xbf16, #tpu.memory_space<vmem>>, %arg13: memref<1x1xf32, #tpu.memory_space<vmem>>, %arg14: memref<1x1xf32, #tpu.memory_space<vmem>>) attributes {dimension_semantics = [#tpu.dimension_semantics<arbitrary>], iteration_bounds = array<i64: 1>, scalar_prefetch = 0 : i64, scratch_operands = 0 : i64, tpu.core_type = #tpu.core_type<tc>, window_params = [{pipeline_mode = #tpu.pipeline_mode<synchronous>, transform_indices = @transform_0, window_bounds = array<i64: 1, 2304>}, {pipeline_mode = #tpu.pipeline_mode<synchronous>, transform_indices = @transform_1, window_bounds = array<i64: 1, 2304>}, {pipeline_mode = #tpu.pipeline_mode<synchronous>, transform_indices = @transform_2, window_bounds = array<i64: 2304, 256>}, {pipeline_mode = #tpu.pipeline_mode<synchronous>, transform_indices = @transform_3, window_bounds = array<i64: 1, 256>}, {pipeline_mode = #tpu.pipeline_mode<synchronous>, transform_indices = @transform_4, window_bounds = array<i64: 256, 512>}, {pipeline_mode = #tpu.pipeline_mode<synchronous>, transform_indices = @transform_5, window_bounds = array<i64: 256, 512>}, {pipeline_mode = #tpu.pipeline_mode<synchronous>, transform_indices = @transform_6, window_bounds = array<i64: 1, 512>}, {pipeline_mode = #tpu.pipeline_mode<synchronous>, transform_indices = @transform_7, window_bounds = array<i64: 512, 256>}, {pipeline_mode = #tpu.pipeline_mode<synchronous>, transform_indices = @transform_8, window_bounds = array<i64: 1, 256>}, {pipeline_mode = #tpu.pipeline_mode<synchronous>, transform_indices = @transform_9, window_bounds = array<i64: 256, 64>}, {pipeline_mode = #tpu.pipeline_mode<synchronous>, transform_indices = @transform_10, window_bounds = array<i64: 1, 64>}, {pipeline_mode = #tpu.pipeline_mode<synchronous>, transform_indices = @transform_11, window_bounds = array<i64: 64, 1>}, {pipeline_mode = #tpu.pipeline_mode<synchronous>, transform_indices = @transform_12, window_bounds = array<i64: 1, 1>}, {pipeline_mode = #tpu.pipeline_mode<synchronous>, transform_indices = @transform_13, window_bounds = array<i64: 1, 1>}]} {
    %c0 = arith.constant 0 : index
    %c0_0 = arith.constant 0 : index
    %0 = vector.load %arg1[%c0, %c0_0] : memref<1x2304xbf16, #tpu.memory_space<vmem>>, vector<1x2304xbf16>
    %c0_1 = arith.constant 0 : index
    %c0_2 = arith.constant 0 : index
    %1 = vector.load %arg3[%c0_1, %c0_2] : memref<2304x256xbf16, #tpu.memory_space<vmem>>, vector<2304x256xbf16>
    %cst = arith.constant dense<0.000000e+00> : vector<1x256xf32>
    %2 = tpu.matmul %0, %1, %cst {dimension_numbers = #tpu.dot_dimension_numbers<[1], [0], [0], [1], [0, 0, 1, 1], [], []>} : vector<1x2304xbf16>, vector<2304x256xbf16>, vector<1x256xf32> -> vector<1x256xf32>
    %c0_3 = arith.constant 0 : index
    %c0_4 = arith.constant 0 : index
    %3 = vector.load %arg4[%c0_3, %c0_4] : memref<1x256xf32, #tpu.memory_space<vmem>>, vector<1x256xf32>
    %4 = arith.addf %2, %3 : vector<1x256xf32>
    %c0_5 = arith.constant 0 : index
    %c0_6 = arith.constant 0 : index
    %5 = vector.load %arg2[%c0_5, %c0_6] : memref<1x2304xbf16, #tpu.memory_space<vmem>>, vector<1x2304xbf16>
    %c0_7 = arith.constant 0 : index
    %c0_8 = arith.constant 0 : index
    %6 = vector.load %arg3[%c0_7, %c0_8] : memref<2304x256xbf16, #tpu.memory_space<vmem>>, vector<2304x256xbf16>
    %cst_9 = arith.constant dense<0.000000e+00> : vector<1x256xf32>
    %7 = tpu.matmul %5, %6, %cst_9 {dimension_numbers = #tpu.dot_dimension_numbers<[1], [0], [0], [1], [0, 0, 1, 1], [], []>} : vector<1x2304xbf16>, vector<2304x256xbf16>, vector<1x256xf32> -> vector<1x256xf32>
    %c0_10 = arith.constant 0 : index
    %c0_11 = arith.constant 0 : index
    %8 = vector.load %arg4[%c0_10, %c0_11] : memref<1x256xf32, #tpu.memory_space<vmem>>, vector<1x256xf32>
    %9 = arith.addf %7, %8 : vector<1x256xf32>
    %cst_12 = arith.constant 0.000000e+00 : f32
    %10 = vector.broadcast %cst_12 : f32 to vector<1x256xf32>
    %11 = arith.maximumf %4, %10 : vector<1x256xf32>
    %12 = arith.truncf %11 : vector<1x256xf32> to vector<1x256xbf16>
    %cst_13 = arith.constant 0.000000e+00 : f32
    %13 = vector.broadcast %cst_13 : f32 to vector<1x256xf32>
    %14 = arith.maximumf %9, %13 : vector<1x256xf32>
    %15 = arith.truncf %14 : vector<1x256xf32> to vector<1x256xbf16>
    %c0_14 = arith.constant 0 : index
    %c0_15 = arith.constant 0 : index
    %16 = vector.load %arg5[%c0_14, %c0_15] : memref<256x512xbf16, #tpu.memory_space<vmem>>, vector<256x512xbf16>
    %cst_16 = arith.constant dense<0.000000e+00> : vector<1x512xf32>
    %17 = tpu.matmul %12, %16, %cst_16 {dimension_numbers = #tpu.dot_dimension_numbers<[1], [0], [0], [1], [0, 0, 1, 1], [], []>} : vector<1x256xbf16>, vector<256x512xbf16>, vector<1x512xf32> -> vector<1x512xf32>
    %c0_17 = arith.constant 0 : index
    %c0_18 = arith.constant 0 : index
    %18 = vector.load %arg6[%c0_17, %c0_18] : memref<256x512xbf16, #tpu.memory_space<vmem>>, vector<256x512xbf16>
    %cst_19 = arith.constant dense<0.000000e+00> : vector<1x512xf32>
    %19 = tpu.matmul %15, %18, %cst_19 {dimension_numbers = #tpu.dot_dimension_numbers<[1], [0], [0], [1], [0, 0, 1, 1], [], []>} : vector<1x256xbf16>, vector<256x512xbf16>, vector<1x512xf32> -> vector<1x512xf32>
    %20 = arith.addf %17, %19 : vector<1x512xf32>
    %c0_20 = arith.constant 0 : index
    %c0_21 = arith.constant 0 : index
    %21 = vector.load %arg7[%c0_20, %c0_21] : memref<1x512xf32, #tpu.memory_space<vmem>>, vector<1x512xf32>
    %22 = arith.addf %20, %21 : vector<1x512xf32>
    %cst_22 = arith.constant 0.000000e+00 : f32
    %23 = vector.broadcast %cst_22 : f32 to vector<1x512xf32>
    %24 = arith.cmpf ogt, %22, %23 : vector<1x512xf32>
    %cst_23 = arith.constant 0.00999999977 : f32
    %25 = vector.broadcast %cst_23 : f32 to vector<1x512xf32>
    %26 = arith.mulf %25, %22 : vector<1x512xf32>
    %27 = arith.select %24, %22, %26 : vector<1x512xi1>, vector<1x512xf32>
    %28 = arith.truncf %27 : vector<1x512xf32> to vector<1x512xbf16>
    %c0_24 = arith.constant 0 : index
    %c0_25 = arith.constant 0 : index
    %29 = vector.load %arg8[%c0_24, %c0_25] : memref<512x256xbf16, #tpu.memory_space<vmem>>, vector<512x256xbf16>
    %cst_26 = arith.constant dense<0.000000e+00> : vector<1x256xf32>
    %30 = tpu.matmul %28, %29, %cst_26 {dimension_numbers = #tpu.dot_dimension_numbers<[1], [0], [0], [1], [0, 0, 1, 1], [], []>} : vector<1x512xbf16>, vector<512x256xbf16>, vector<1x256xf32> -> vector<1x256xf32>
    %c0_27 = arith.constant 0 : index
    %c0_28 = arith.constant 0 : index
    %31 = vector.load %arg9[%c0_27, %c0_28] : memref<1x256xf32, #tpu.memory_space<vmem>>, vector<1x256xf32>
    %32 = arith.addf %30, %31 : vector<1x256xf32>
    %cst_29 = arith.constant 0.000000e+00 : f32
    %33 = vector.broadcast %cst_29 : f32 to vector<1x256xf32>
    %34 = arith.cmpf ogt, %32, %33 : vector<1x256xf32>
    %cst_30 = arith.constant 0.00999999977 : f32
    %35 = vector.broadcast %cst_30 : f32 to vector<1x256xf32>
    %36 = arith.mulf %35, %32 : vector<1x256xf32>
    %37 = arith.select %34, %32, %36 : vector<1x256xi1>, vector<1x256xf32>
    %38 = arith.truncf %37 : vector<1x256xf32> to vector<1x256xbf16>
    %c0_31 = arith.constant 0 : index
    %c0_32 = arith.constant 0 : index
    %39 = vector.load %arg10[%c0_31, %c0_32] : memref<256x64xbf16, #tpu.memory_space<vmem>>, vector<256x64xbf16>
    %cst_33 = arith.constant dense<0.000000e+00> : vector<1x64xf32>
    %40 = tpu.matmul %38, %39, %cst_33 {dimension_numbers = #tpu.dot_dimension_numbers<[1], [0], [0], [1], [0, 0, 1, 1], [], []>} : vector<1x256xbf16>, vector<256x64xbf16>, vector<1x64xf32> -> vector<1x64xf32>
    %c0_34 = arith.constant 0 : index
    %c0_35 = arith.constant 0 : index
    %41 = vector.load %arg11[%c0_34, %c0_35] : memref<1x64xf32, #tpu.memory_space<vmem>>, vector<1x64xf32>
    %42 = arith.addf %40, %41 : vector<1x64xf32>
    %cst_36 = arith.constant 0.000000e+00 : f32
    %43 = vector.broadcast %cst_36 : f32 to vector<1x64xf32>
    %44 = arith.cmpf ogt, %42, %43 : vector<1x64xf32>
    %cst_37 = arith.constant 0.00999999977 : f32
    %45 = vector.broadcast %cst_37 : f32 to vector<1x64xf32>
    %46 = arith.mulf %45, %42 : vector<1x64xf32>
    %47 = arith.select %44, %42, %46 : vector<1x64xi1>, vector<1x64xf32>
    %48 = arith.truncf %47 : vector<1x64xf32> to vector<1x64xbf16>
    %c0_38 = arith.constant 0 : index
    %c0_39 = arith.constant 0 : index
    %49 = vector.load %arg12[%c0_38, %c0_39] : memref<64x1xbf16, #tpu.memory_space<vmem>>, vector<64x1xbf16>
    %cst_40 = arith.constant dense<0.000000e+00> : vector<1x1xf32>
    %50 = tpu.matmul %48, %49, %cst_40 {dimension_numbers = #tpu.dot_dimension_numbers<[1], [0], [0], [1], [0, 0, 1, 1], [], []>} : vector<1x64xbf16>, vector<64x1xbf16>, vector<1x1xf32> -> vector<1x1xf32>
    %c0_41 = arith.constant 0 : index
    %c0_42 = arith.constant 0 : index
    %51 = vector.load %arg13[%c0_41, %c0_42] : memref<1x1xf32, #tpu.memory_space<vmem>>, vector<1x1xf32>
    %52 = arith.addf %50, %51 : vector<1x1xf32>
    %cst_43 = arith.constant 0.000000e+00 : f32
    %53 = vector.broadcast %cst_43 : f32 to vector<1x1xf32>
    %54 = arith.cmpf ogt, %52, %53 : vector<1x1xf32>
    %cst_44 = arith.constant 0.00999999977 : f32
    %55 = vector.broadcast %cst_44 : f32 to vector<1x1xf32>
    %56 = arith.mulf %55, %52 : vector<1x1xf32>
    %57 = arith.select %54, %52, %56 : vector<1x1xi1>, vector<1x1xf32>
    %58 = math.tanh %57 : vector<1x1xf32>
    %c0_45 = arith.constant 0 : index
    %c0_46 = arith.constant 0 : index
    %59 = vector.load %arg14[%c0_45, %c0_46] : memref<1x1xf32, #tpu.memory_space<vmem>>, vector<1x1xf32>
    tpu.vector_store %arg14[%c0_45, %c0_46], %58 {strides = array<i32>} : memref<1x1xf32, #tpu.memory_space<vmem>>, vector<1x1xf32>,
    return
  }
  func.func @transform_0(%arg0: i32) -> (i32, i32) {
    %c0_i32 = arith.constant 0 : i32
    %c0_i32_0 = arith.constant 0 : i32
    %c0_i32_1 = arith.constant 0 : i32
    return %c0_i32, %c0_i32_0 : i32, i32
  }
  func.func @transform_1(%arg0: i32) -> (i32, i32) {
    %c0_i32 = arith.constant 0 : i32
    %c0_i32_0 = arith.constant 0 : i32
    %c0_i32_1 = arith.constant 0 : i32
    return %c0_i32, %c0_i32_0 : i32, i32
  }
  func.func @transform_2(%arg0: i32) -> (i32, i32) {
    %c0_i32 = arith.constant 0 : i32
    %c0_i32_0 = arith.constant 0 : i32
    %c0_i32_1 = arith.constant 0 : i32
    return %c0_i32, %c0_i32_0 : i32, i32
  }
  func.func @transform_3(%arg0: i32) -> (i32, i32) {
    %c0_i32 = arith.constant 0 : i32
    %c0_i32_0 = arith.constant 0 : i32
    %c0_i32_1 = arith.constant 0 : i32
    return %c0_i32, %c0_i32_0 : i32, i32
  }
  func.func @transform_4(%arg0: i32) -> (i32, i32) {
    %c0_i32 = arith.constant 0 : i32
    %c0_i32_0 = arith.constant 0 : i32
    %c0_i32_1 = arith.constant 0 : i32
    return %c0_i32, %c0_i32_0 : i32, i32
  }
  func.func @transform_5(%arg0: i32) -> (i32, i32) {
    %c0_i32 = arith.constant 0 : i32
    %c0_i32_0 = arith.constant 0 : i32
    %c0_i32_1 = arith.constant 0 : i32
    return %c0_i32, %c0_i32_0 : i32, i32
  }
  func.func @transform_6(%arg0: i32) -> (i32, i32) {
    %c0_i32 = arith.constant 0 : i32
    %c0_i32_0 = arith.constant 0 : i32
    %c0_i32_1 = arith.constant 0 : i32
    return %c0_i32, %c0_i32_0 : i32, i32
  }
  func.func @transform_7(%arg0: i32) -> (i32, i32) {
    %c0_i32 = arith.constant 0 : i32
    %c0_i32_0 = arith.constant 0 : i32
    %c0_i32_1 = arith.constant 0 : i32
    return %c0_i32, %c0_i32_0 : i32, i32
  }
  func.func @transform_8(%arg0: i32) -> (i32, i32) {
    %c0_i32 = arith.constant 0 : i32
    %c0_i32_0 = arith.constant 0 : i32
    %c0_i32_1 = arith.constant 0 : i32
    return %c0_i32, %c0_i32_0 : i32, i32
  }
  func.func @transform_9(%arg0: i32) -> (i32, i32) {
    %c0_i32 = arith.constant 0 : i32
    %c0_i32_0 = arith.constant 0 : i32
    %c0_i32_1 = arith.constant 0 : i32
    return %c0_i32, %c0_i32_0 : i32, i32
  }
  func.func @transform_10(%arg0: i32) -> (i32, i32) {
    %c0_i32 = arith.constant 0 : i32
    %c0_i32_0 = arith.constant 0 : i32
    %c0_i32_1 = arith.constant 0 : i32
    return %c0_i32, %c0_i32_0 : i32, i32
  }
  func.func @transform_11(%arg0: i32) -> (i32, i32) {
    %c0_i32 = arith.constant 0 : i32
    %c0_i32_0 = arith.constant 0 : i32
    %c0_i32_1 = arith.constant 0 : i32
    return %c0_i32, %c0_i32_0 : i32, i32
  }
  func.func @transform_12(%arg0: i32) -> (i32, i32) {
    %c0_i32 = arith.constant 0 : i32
    %c0_i32_0 = arith.constant 0 : i32
    %c0_i32_1 = arith.constant 0 : i32
    return %c0_i32, %c0_i32_0 : i32, i32
  }
  func.func @transform_13(%arg0: i32) -> (i32, i32) {
    %c0_i32 = arith.constant 0 : i32
    %c0_i32_0 = arith.constant 0 : i32
    %c0_i32_1 = arith.constant 0 : i32
    return %c0_i32, %c0_i32_0 : i32, i32
  }
}

</mosaic_0001>

<llo_original>
// kernel: model_forward.8
$region0: #{model_forward.8}
  #allocation0 [shape = 'u32[]', space=smem, size = 0x4, offset = 0x4, fixed_abs, tag = 'smem constant byte address 0x4 - core index']
  #allocation1 [shape = 'u32[144,128]{1,0:T(1,128)}', space=vmem, size = 0x12000, scoped, tag = 'internal scratch']
  %s0 = inlined_call_operand.vmem [shape: f32[256,128], index: 0, kind: input, shape index: {}]
  %s1 = inlined_call_operand.vmem [shape: f32[256,128], index: 1, kind: input, shape index: {}]
  %s2 = inlined_call_operand.vmem [shape: f32[256,128], index: 2, kind: input, shape index: {}]
  %s3 = inlined_call_operand.vmem [shape: f32[256,128], index: 3, kind: input, shape index: {}]
  %s4 = inlined_call_operand.vmem [shape: f32[256,128], index: 4, kind: output, shape index: {}]
  %s5 = sld [smem:[#allocation0]]
  $region26: #{model_forward.8} parent=0
    _
  %s7 = ssub.s32 1, %s5
  %s8 = scalar_select 0, %s7, %s5
  // Predicated region
  $region2: #{model_forward.8} parent=0 // pred_check
    _
  $region3: #{model_forward.8} parent=0 // pred_check_branch
    %10 = sbr.rel (0) target = $region5
  $region4: #{model_forward.8} parent=0 // pred_region
    _
  $region5: #{model_forward.8} parent=0 // pred_fallthru
    _
  // Predicated region
  $region6: #{model_forward.8} parent=0 // pred_check
    _
  $region7: #{model_forward.8} parent=0 // pred_check_branch
    %12 = sbr.rel (0) target = $region9
  $region8: #{model_forward.8} parent=0 // pred_region
    _
  $region9: #{model_forward.8} parent=0 // pred_fallthru
    _
  // Predicated region
  $region10: #{model_forward.8} parent=0 // pred_check
    _
  $region11: #{model_forward.8} parent=0 // pred_check_branch
    %14 = sbr.rel (0) target = $region13
  $region12: #{model_forward.8} parent=0 // pred_region
    _
  $region13: #{model_forward.8} parent=0 // pred_fallthru
    _
  // Predicated region
  $region14: #{model_forward.8} parent=0 // pred_check
    _
  $region15: #{model_forward.8} parent=0 // pred_check_branch
    %16 = sbr.rel (0) target = $region17
  $region16: #{model_forward.8} parent=0 // pred_region
    _
  $region17: #{model_forward.8} parent=0 // pred_fallthru
    _
  %v17 = vld [vmem:[%s0] sm:$0xff]
  %v18 = vld [vmem:[%s0 + $0x8] sm:$0xff]
  %v19 = vld [vmem:[%s0 + $0x10] sm:$0xff]
  %v20 = vld [vmem:[%s0 + $0x18] sm:$0xff]
  %v21 = vld [vmem:[%s0 + $0x20] sm:$0xff]
  %v22 = vld [vmem:[%s0 + $0x28] sm:$0xff]
  %v23 = vld [vmem:[%s0 + $0x30] sm:$0xff]
  %v24 = vld [vmem:[%s0 + $0x38] sm:$0xff]
  %v25 = vld [vmem:[%s0 + $0x40] sm:$0xff]
  %v26 = vld [vmem:[%s0 + $0x48] sm:$0xff]
  %v27 = vld [vmem:[%s0 + $0x50] sm:$0xff]
  %v28 = vld [vmem:[%s0 + $0x58] sm:$0xff]
  %v29 = vld [vmem:[%s0 + $0x60] sm:$0xff]
  %v30 = vld [vmem:[%s0 + $0x68] sm:$0xff]
  %v31 = vld [vmem:[%s0 + $0x70] sm:$0xff]
  %v32 = vld [vmem:[%s0 + $0x78] sm:$0xff]
  %v33 = vld [vmem:[%s0 + $0x80] sm:$0xff]
  %v34 = vld [vmem:[%s0 + $0x88] sm:$0xff]
  %v35 = vld [vmem:[%s0 + $0x90] sm:$0xff]
  %v36 = vld [vmem:[%s0 + $0x98] sm:$0xff]
  %v37 = vld [vmem:[%s0 + $0xa0] sm:$0xff]
  %v38 = vld [vmem:[%s0 + $0xa8] sm:$0xff]
  %v39 = vld [vmem:[%s0 + $0xb0] sm:$0xff]
  %v40 = vld [vmem:[%s0 + $0xb8] sm:$0xff]
  %v41 = vld [vmem:[%s0 + $0xc0] sm:$0xff]
  %v42 = vld [vmem:[%s0 + $0xc8] sm:$0xff]
  %v43 = vld [vmem:[%s0 + $0xd0] sm:$0xff]
  %v44 = vld [vmem:[%s0 + $0xd8] sm:$0xff]
  %v45 = vld [vmem:[%s0 + $0xe0] sm:$0xff]
  %v46 = vld [vmem:[%s0 + $0xe8] sm:$0xff]
  %v47 = vld [vmem:[%s0 + $0xf0] sm:$0xff]
  %v48 = vld [vmem:[%s0 + $0xf8] sm:$0xff]
  %v49 = vld [vmem:[%s1] sm:$0xff]
  %v50 = vld [vmem:[%s1 + $0x8] sm:$0xff]
  %v51 = vld [vmem:[%s1 + $0x10] sm:$0xff]
  %v52 = vld [vmem:[%s1 + $0x18] sm:$0xff]
  %v53 = vld [vmem:[%s1 + $0x20] sm:$0xff]
  %v54 = vld [vmem:[%s1 + $0x28] sm:$0xff]
  %v55 = vld [vmem:[%s1 + $0x30] sm:$0xff]
  %v56 = vld [vmem:[%s1 + $0x38] sm:$0xff]
  %v57 = vld [vmem:[%s1 + $0x40] sm:$0xff]
  %v58 = vld [vmem:[%s1 + $0x48] sm:$0xff]
  %v59 = vld [vmem:[%s1 + $0x50] sm:$0xff]
  %v60 = vld [vmem:[%s1 + $0x58] sm:$0xff]
  %v61 = vld [vmem:[%s1 + $0x60] sm:$0xff]
  %v62 = vld [vmem:[%s1 + $0x68] sm:$0xff]
  %v63 = vld [vmem:[%s1 + $0x70] sm:$0xff]
  %v64 = vld [vmem:[%s1 + $0x78] sm:$0xff]
  %v65 = vld [vmem:[%s1 + $0x80] sm:$0xff]
  %v66 = vld [vmem:[%s1 + $0x88] sm:$0xff]
  %v67 = vld [vmem:[%s1 + $0x90] sm:$0xff]
  %v68 = vld [vmem:[%s1 + $0x98] sm:$0xff]
  %v69 = vld [vmem:[%s1 + $0xa0] sm:$0xff]
  %v70 = vld [vmem:[%s1 + $0xa8] sm:$0xff]
  %v71 = vld [vmem:[%s1 + $0xb0] sm:$0xff]
  %v72 = vld [vmem:[%s1 + $0xb8] sm:$0xff]
  %v73 = vld [vmem:[%s1 + $0xc0] sm:$0xff]
  %v74 = vld [vmem:[%s1 + $0xc8] sm:$0xff]
  %v75 = vld [vmem:[%s1 + $0xd0] sm:$0xff]
  %v76 = vld [vmem:[%s1 + $0xd8] sm:$0xff]
  %v77 = vld [vmem:[%s1 + $0xe0] sm:$0xff]
  %v78 = vld [vmem:[%s1 + $0xe8] sm:$0xff]
  %v79 = vld [vmem:[%s1 + $0xf0] sm:$0xff]
  %v80 = vld [vmem:[%s1 + $0xf8] sm:$0xff]
  %v81 = vmax.f32 %v17, %v49
  %v82 = vmax.f32 %v18, %v50
  %v83 = vmax.f32 %v19, %v51
  %v84 = vmax.f32 %v20, %v52
  %v85 = vmax.f32 %v21, %v53
  %v86 = vmax.f32 %v22, %v54
  %v87 = vmax.f32 %v23, %v55
  %v88 = vmax.f32 %v24, %v56
  %v89 = vmax.f32 %v25, %v57
  %v90 = vmax.f32 %v26, %v58
  %v91 = vmax.f32 %v27, %v59
  %v92 = vmax.f32 %v28, %v60
  %v93 = vmax.f32 %v29, %v61
  %v94 = vmax.f32 %v30, %v62
  %v95 = vmax.f32 %v31, %v63
  %v96 = vmax.f32 %v32, %v64
  %v97 = vmax.f32 %v33, %v65
  %v98 = vmax.f32 %v34, %v66
  %v99 = vmax.f32 %v35, %v67
  %v100 = vmax.f32 %v36, %v68
  %v101 = vmax.f32 %v37, %v69
  %v102 = vmax.f32 %v38, %v70
  %v103 = vmax.f32 %v39, %v71
  %v104 = vmax.f32 %v40, %v72
  %v105 = vmax.f32 %v41, %v73
  %v106 = vmax.f32 %v42, %v74
  %v107 = vmax.f32 %v43, %v75
  %v108 = vmax.f32 %v44, %v76
  %v109 = vmax.f32 %v45, %v77
  %v110 = vmax.f32 %v46, %v78
  %v111 = vmax.f32 %v47, %v79
  %v112 = vmax.f32 %v48, %v80
  %v113 = vld [vmem:[%s2] sm:$0xff]
  %v114 = vld [vmem:[%s2 + $0x8] sm:$0xff]
  %v115 = vld [vmem:[%s2 + $0x10] sm:$0xff]
  %v116 = vld [vmem:[%s2 + $0x18] sm:$0xff]
  %v117 = vld [vmem:[%s2 + $0x20] sm:$0xff]
  %v118 = vld [vmem:[%s2 + $0x28] sm:$0xff]
  %v119 = vld [vmem:[%s2 + $0x30] sm:$0xff]
  %v120 = vld [vmem:[%s2 + $0x38] sm:$0xff]
  %v121 = vld [vmem:[%s2 + $0x40] sm:$0xff]
  %v122 = vld [vmem:[%s2 + $0x48] sm:$0xff]
  %v123 = vld [vmem:[%s2 + $0x50] sm:$0xff]
  %v124 = vld [vmem:[%s2 + $0x58] sm:$0xff]
  %v125 = vld [vmem:[%s2 + $0x60] sm:$0xff]
  %v126 = vld [vmem:[%s2 + $0x68] sm:$0xff]
  %v127 = vld [vmem:[%s2 + $0x70] sm:$0xff]
  %v128 = vld [vmem:[%s2 + $0x78] sm:$0xff]
  %v129 = vld [vmem:[%s2 + $0x80] sm:$0xff]
  %v130 = vld [vmem:[%s2 + $0x88] sm:$0xff]
  %v131 = vld [vmem:[%s2 + $0x90] sm:$0xff]
  %v132 = vld [vmem:[%s2 + $0x98] sm:$0xff]
  %v133 = vld [vmem:[%s2 + $0xa0] sm:$0xff]
  %v134 = vld [vmem:[%s2 + $0xa8] sm:$0xff]
  %v135 = vld [vmem:[%s2 + $0xb0] sm:$0xff]
  %v136 = vld [vmem:[%s2 + $0xb8] sm:$0xff]
  %v137 = vld [vmem:[%s2 + $0xc0] sm:$0xff]
  %v138 = vld [vmem:[%s2 + $0xc8] sm:$0xff]
  %v139 = vld [vmem:[%s2 + $0xd0] sm:$0xff]
  %v140 = vld [vmem:[%s2 + $0xd8] sm:$0xff]
  %v141 = vld [vmem:[%s2 + $0xe0] sm:$0xff]
  %v142 = vld [vmem:[%s2 + $0xe8] sm:$0xff]
  %v143 = vld [vmem:[%s2 + $0xf0] sm:$0xff]
  %v144 = vld [vmem:[%s2 + $0xf8] sm:$0xff]
  %v145 = vld [vmem:[%s3] sm:$0xff]
  %v146 = vld [vmem:[%s3 + $0x8] sm:$0xff]
  %v147 = vld [vmem:[%s3 + $0x10] sm:$0xff]
  %v148 = vld [vmem:[%s3 + $0x18] sm:$0xff]
  %v149 = vld [vmem:[%s3 + $0x20] sm:$0xff]
  %v150 = vld [vmem:[%s3 + $0x28] sm:$0xff]
  %v151 = vld [vmem:[%s3 + $0x30] sm:$0xff]
  %v152 = vld [vmem:[%s3 + $0x38] sm:$0xff]
  %v153 = vld [vmem:[%s3 + $0x40] sm:$0xff]
  %v154 = vld [vmem:[%s3 + $0x48] sm:$0xff]
  %v155 = vld [vmem:[%s3 + $0x50] sm:$0xff]
  %v156 = vld [vmem:[%s3 + $0x58] sm:$0xff]
  %v157 = vld [vmem:[%s3 + $0x60] sm:$0xff]
  %v158 = vld [vmem:[%s3 + $0x68] sm:$0xff]
  %v159 = vld [vmem:[%s3 + $0x70] sm:$0xff]
  %v160 = vld [vmem:[%s3 + $0x78] sm:$0xff]
  %v161 = vld [vmem:[%s3 + $0x80] sm:$0xff]
  %v162 = vld [vmem:[%s3 + $0x88] sm:$0xff]
  %v163 = vld [vmem:[%s3 + $0x90] sm:$0xff]
  %v164 = vld [vmem:[%s3 + $0x98] sm:$0xff]
  %v165 = vld [vmem:[%s3 + $0xa0] sm:$0xff]
  %v166 = vld [vmem:[%s3 + $0xa8] sm:$0xff]
  %v167 = vld [vmem:[%s3 + $0xb0] sm:$0xff]
  %v168 = vld [vmem:[%s3 + $0xb8] sm:$0xff]
  %v169 = vld [vmem:[%s3 + $0xc0] sm:$0xff]
  %v170 = vld [vmem:[%s3 + $0xc8] sm:$0xff]
  %v171 = vld [vmem:[%s3 + $0xd0] sm:$0xff]
  %v172 = vld [vmem:[%s3 + $0xd8] sm:$0xff]
  %v173 = vld [vmem:[%s3 + $0xe0] sm:$0xff]
  %v174 = vld [vmem:[%s3 + $0xe8] sm:$0xff]
  %v175 = vld [vmem:[%s3 + $0xf0] sm:$0xff]
  %v176 = vld [vmem:[%s3 + $0xf8] sm:$0xff]
  %v177 = vmax.f32 %v113, %v145
  %v178 = vmax.f32 %v114, %v146
  %v179 = vmax.f32 %v115, %v147
  %v180 = vmax.f32 %v116, %v148
  %v181 = vmax.f32 %v117, %v149
  %v182 = vmax.f32 %v118, %v150
  %v183 = vmax.f32 %v119, %v151
  %v184 = vmax.f32 %v120, %v152
  %v185 = vmax.f32 %v121, %v153
  %v186 = vmax.f32 %v122, %v154
  %v187 = vmax.f32 %v123, %v155
  %v188 = vmax.f32 %v124, %v156
  %v189 = vmax.f32 %v125, %v157
  %v190 = vmax.f32 %v126, %v158
  %v191 = vmax.f32 %v127, %v159
  %v192 = vmax.f32 %v128, %v160
  %v193 = vmax.f32 %v129, %v161
  %v194 = vmax.f32 %v130, %v162
  %v195 = vmax.f32 %v131, %v163
  %v196 = vmax.f32 %v132, %v164
  %v197 = vmax.f32 %v133, %v165
  %v198 = vmax.f32 %v134, %v166
  %v199 = vmax.f32 %v135, %v167
  %v200 = vmax.f32 %v136, %v168
  %v201 = vmax.f32 %v137, %v169
  %v202 = vmax.f32 %v138, %v170
  %v203 = vmax.f32 %v139, %v171
  %v204 = vmax.f32 %v140, %v172
  %v205 = vmax.f32 %v141, %v173
  %v206 = vmax.f32 %v142, %v174
  %v207 = vmax.f32 %v143, %v175
  %v208 = vmax.f32 %v144, %v176
  %v209 = vmax.f32 %v81, %v177
  %v210 = vmax.f32 %v82, %v178
  %v211 = vmax.f32 %v83, %v179
  %v212 = vmax.f32 %v84, %v180
  %v213 = vmax.f32 %v85, %v181
  %v214 = vmax.f32 %v86, %v182
  %v215 = vmax.f32 %v87, %v183
  %v216 = vmax.f32 %v88, %v184
  %v217 = vmax.f32 %v89, %v185
  %v218 = vmax.f32 %v90, %v186
  %v219 = vmax.f32 %v91, %v187
  %v220 = vmax.f32 %v92, %v188
  %v221 = vmax.f32 %v93, %v189
  %v222 = vmax.f32 %v94, %v190
  %v223 = vmax.f32 %v95, %v191
  %v224 = vmax.f32 %v96, %v192
  %v225 = vmax.f32 %v97, %v193
  %v226 = vmax.f32 %v98, %v194
  %v227 = vmax.f32 %v99, %v195
  %v228 = vmax.f32 %v100, %v196
  %v229 = vmax.f32 %v101, %v197
  %v230 = vmax.f32 %v102, %v198
  %v231 = vmax.f32 %v103, %v199
  %v232 = vmax.f32 %v104, %v200
  %v233 = vmax.f32 %v105, %v201
  %v234 = vmax.f32 %v106, %v202
  %v235 = vmax.f32 %v107, %v203
  %v236 = vmax.f32 %v108, %v204
  %v237 = vmax.f32 %v109, %v205
  %v238 = vmax.f32 %v110, %v206
  %v239 = vmax.f32 %v111, %v207
  %v240 = vmax.f32 %v112, %v208
  %241 = vst [vmem:[%s4] sm:$0xff] %v209
  %242 = vst [vmem:[%s4 + $0x8] sm:$0xff] %v210
  %243 = vst [vmem:[%s4 + $0x10] sm:$0xff] %v211
  %244 = vst [vmem:[%s4 + $0x18] sm:$0xff] %v212
  %245 = vst [vmem:[%s4 + $0x20] sm:$0xff] %v213
  %246 = vst [vmem:[%s4 + $0x28] sm:$0xff] %v214
  %247 = vst [vmem:[%s4 + $0x30] sm:$0xff] %v215
  %248 = vst [vmem:[%s4 + $0x38] sm:$0xff] %v216
  %249 = vst [vmem:[%s4 + $0x40] sm:$0xff] %v217
  %250 = vst [vmem:[%s4 + $0x48] sm:$0xff] %v218
  %251 = vst [vmem:[%s4 + $0x50] sm:$0xff] %v219
  %252 = vst [vmem:[%s4 + $0x58] sm:$0xff] %v220
  %253 = vst [vmem:[%s4 + $0x60] sm:$0xff] %v221
  %254 = vst [vmem:[%s4 + $0x68] sm:$0xff] %v222
  %255 = vst [vmem:[%s4 + $0x70] sm:$0xff] %v223
  %256 = vst [vmem:[%s4 + $0x78] sm:$0xff] %v224
  %257 = vst [vmem:[%s4 + $0x80] sm:$0xff] %v225
  %258 = vst [vmem:[%s4 + $0x88] sm:$0xff] %v226
  %259 = vst [vmem:[%s4 + $0x90] sm:$0xff] %v227
  %260 = vst [vmem:[%s4 + $0x98] sm:$0xff] %v228
  %261 = vst [vmem:[%s4 + $0xa0] sm:$0xff] %v229
  %262 = vst [vmem:[%s4 + $0xa8] sm:$0xff] %v230
  %263 = vst [vmem:[%s4 + $0xb0] sm:$0xff] %v231
  %264 = vst [vmem:[%s4 + $0xb8] sm:$0xff] %v232
  %265 = vst [vmem:[%s4 + $0xc0] sm:$0xff] %v233
  %266 = vst [vmem:[%s4 + $0xc8] sm:$0xff] %v234
  %267 = vst [vmem:[%s4 + $0xd0] sm:$0xff] %v235
  %268 = vst [vmem:[%s4 + $0xd8] sm:$0xff] %v236
  %269 = vst [vmem:[%s4 + $0xe0] sm:$0xff] %v237
  %270 = vst [vmem:[%s4 + $0xe8] sm:$0xff] %v238
  %271 = vst [vmem:[%s4 + $0xf0] sm:$0xff] %v239
  %272 = vst [vmem:[%s4 + $0xf8] sm:$0xff] %v240
  // Predicated region
  $region18: #{model_forward.8} parent=0 // pred_check
    _
  $region19: #{model_forward.8} parent=0 // pred_check_branch
    %274 = sbr.rel (0) target = $region21
  $region20: #{model_forward.8} parent=0 // pred_region
    _
  $region21: #{model_forward.8} parent=0 // pred_fallthru
    _
  // Predicated region
  $region22: #{model_forward.8} parent=0 // pred_check
    _
  $region23: #{model_forward.8} parent=0 // pred_check_branch
    %276 = sbr.rel (0) target = $region25
  $region24: #{model_forward.8} parent=0 // pred_region
    _
  $region25: #{model_forward.8} parent=0 // pred_fallthru
    _

// kernel: model_forward.7
$region0: #{model_forward.7}
  #allocation0 [shape = 'u32[]', space=smem, size = 0x4, offset = 0x4, fixed_abs, tag = 'smem constant byte address 0x4 - core index']
  #allocation1 [shape = 'u32[144,128]{1,0:T(1,128)}', space=vmem, size = 0x12000, scoped, tag = 'internal scratch']
  %s0 = inlined_call_operand.vmem [shape: bf16[2048,25], index: 0, kind: input, shape index: {}]
  %s1 = inlined_call_operand.vmem [shape: bf16[25,64], index: 1, kind: input, shape index: {}]
  %s2 = inlined_call_operand.vmem [shape: f32[1,64], index: 2, kind: input, shape index: {}]
  %s3 = inlined_call_operand.vmem [shape: f32[2048,64], index: 3, kind: output, shape index: {}]
  %s4 = sld [smem:[#allocation0]]
  $region22: #{model_forward.7} parent=0
    _
  %s6 = ssub.s32 1, %s4
  %s7 = scalar_select 0, %s6, %s4
  // Predicated region
  $region2: #{model_forward.7} parent=0 // pred_check
    _
  $region3: #{model_forward.7} parent=0 // pred_check_branch
    %9 = sbr.rel (0) target = $region5
  $region4: #{model_forward.7} parent=0 // pred_region
    _
  $region5: #{model_forward.7} parent=0 // pred_fallthru
    _
  // Predicated region
  $region6: #{model_forward.7} parent=0 // pred_check
    _
  $region7: #{model_forward.7} parent=0 // pred_check_branch
    %11 = sbr.rel (0) target = $region9
  $region8: #{model_forward.7} parent=0 // pred_region
    _
  $region9: #{model_forward.7} parent=0 // pred_fallthru
    _
  // Predicated region
  $region10: #{model_forward.7} parent=0 // pred_check
    _
  $region11: #{model_forward.7} parent=0 // pred_check_branch
    %13 = sbr.rel (0) target = $region13
  $region12: #{model_forward.7} parent=0 // pred_region
    _
  $region13: #{model_forward.7} parent=0 // pred_fallthru
    _
  %v15 = vld [vmem:[%s0] sm:$0xf]
  %v16 = vld [vmem:[%s0 + $0x4] sm:$0xf]
  %v17 = vld [vmem:[%s0 + $0x8] sm:$0xf]
  %v18 = vld [vmem:[%s0 + $0xc] sm:$0xf]
  %v19 = vld [vmem:[%s0 + $0x10] sm:$0xf]
  %v20 = vld [vmem:[%s0 + $0x14] sm:$0xf]
  %v21 = vld [vmem:[%s0 + $0x18] sm:$0xf]
  %v22 = vld [vmem:[%s0 + $0x1c] sm:$0xf]
  %v23 = vld [vmem:[%s0 + $0x20] sm:$0xf]
  %v24 = vld [vmem:[%s0 + $0x24] sm:$0xf]
  %v25 = vld [vmem:[%s0 + $0x28] sm:$0xf]
  %v26 = vld [vmem:[%s0 + $0x2c] sm:$0xf]
  %v27 = vld [vmem:[%s0 + $0x30] sm:$0xf]
  %v28 = vld [vmem:[%s0 + $0x34] sm:$0xf]
  %v29 = vld [vmem:[%s0 + $0x38] sm:$0xf]
  %v30 = vld [vmem:[%s0 + $0x3c] sm:$0xf]
  %v31 = vld [vmem:[%s0 + $0x40] sm:$0xf]
  %v32 = vld [vmem:[%s0 + $0x44] sm:$0xf]
  %v33 = vld [vmem:[%s0 + $0x48] sm:$0xf]
  %v34 = vld [vmem:[%s0 + $0x4c] sm:$0xf]
  %v35 = vld [vmem:[%s0 + $0x50] sm:$0xf]
  %v36 = vld [vmem:[%s0 + $0x54] sm:$0xf]
  %v37 = vld [vmem:[%s0 + $0x58] sm:$0xf]
  %v38 = vld [vmem:[%s0 + $0x5c] sm:$0xf]
  %v39 = vld [vmem:[%s0 + $0x60] sm:$0xf]
  %v40 = vld [vmem:[%s0 + $0x64] sm:$0xf]
  %v41 = vld [vmem:[%s0 + $0x68] sm:$0xf]
  %v42 = vld [vmem:[%s0 + $0x6c] sm:$0xf]
  %v43 = vld [vmem:[%s0 + $0x70] sm:$0xf]
  %v44 = vld [vmem:[%s0 + $0x74] sm:$0xf]
  %v45 = vld [vmem:[%s0 + $0x78] sm:$0xf]
  %v46 = vld [vmem:[%s0 + $0x7c] sm:$0xf]
  %v47 = vld [vmem:[%s0 + $0x80] sm:$0xf]
  %v48 = vld [vmem:[%s0 + $0x84] sm:$0xf]
  %v49 = vld [vmem:[%s0 + $0x88] sm:$0xf]
  %v50 = vld [vmem:[%s0 + $0x8c] sm:$0xf]
  %v51 = vld [vmem:[%s0 + $0x90] sm:$0xf]
  %v52 = vld [vmem:[%s0 + $0x94] sm:$0xf]
  %v53 = vld [vmem:[%s0 + $0x98] sm:$0xf]
  %v54 = vld [vmem:[%s0 + $0x9c] sm:$0xf]
  %v55 = vld [vmem:[%s0 + $0xa0] sm:$0xf]
  %v56 = vld [vmem:[%s0 + $0xa4] sm:$0xf]
  %v57 = vld [vmem:[%s0 + $0xa8] sm:$0xf]
  %v58 = vld [vmem:[%s0 + $0xac] sm:$0xf]
  %v59 = vld [vmem:[%s0 + $0xb0] sm:$0xf]
  %v60 = vld [vmem:[%s0 + $0xb4] sm:$0xf]
  %v61 = vld [vmem:[%s0 + $0xb8] sm:$0xf]
  %v62 = vld [vmem:[%s0 + $0xbc] sm:$0xf]
  %v63 = vld [vmem:[%s0 + $0xc0] sm:$0xf]
  %v64 = vld [vmem:[%s0 + $0xc4] sm:$0xf]
  %v65 = vld [vmem:[%s0 + $0xc8] sm:$0xf]
  %v66 = vld [vmem:[%s0 + $0xcc] sm:$0xf]
  %v67 = vld [vmem:[%s0 + $0xd0] sm:$0xf]
  %v68 = vld [vmem:[%s0 + $0xd4] sm:$0xf]
  %v69 = vld [vmem:[%s0 + $0xd8] sm:$0xf]
  %v70 = vld [vmem:[%s0 + $0xdc] sm:$0xf]
  %v71 = vld [vmem:[%s0 + $0xe0] sm:$0xf]
  %v72 = vld [vmem:[%s0 + $0xe4] sm:$0xf]
  %v73 = vld [vmem:[%s0 + $0xe8] sm:$0xf]
  %v74 = vld [vmem:[%s0 + $0xec] sm:$0xf]
  %v75 = vld [vmem:[%s0 + $0xf0] sm:$0xf]
  %v76 = vld [vmem:[%s0 + $0xf4] sm:$0xf]
  %v77 = vld [vmem:[%s0 + $0xf8] sm:$0xf]
  %v78 = vld [vmem:[%s0 + $0xfc] sm:$0xf]
  %v79 = vld [vmem:[%s0 + $0x100] sm:$0xf]
  %v80 = vld [vmem:[%s0 + $0x104] sm:$0xf]
  %v81 = vld [vmem:[%s0 + $0x108] sm:$0xf]
  %v82 = vld [vmem:[%s0 + $0x10c] sm:$0xf]
  %v83 = vld [vmem:[%s0 + $0x110] sm:$0xf]
  %v84 = vld [vmem:[%s0 + $0x114] sm:$0xf]
  %v85 = vld [vmem:[%s0 + $0x118] sm:$0xf]
  %v86 = vld [vmem:[%s0 + $0x11c] sm:$0xf]
  %v87 = vld [vmem:[%s0 + $0x120] sm:$0xf]
  %v88 = vld [vmem:[%s0 + $0x124] sm:$0xf]
  %v89 = vld [vmem:[%s0 + $0x128] sm:$0xf]
  %v90 = vld [vmem:[%s0 + $0x12c] sm:$0xf]
  %v91 = vld [vmem:[%s0 + $0x130] sm:$0xf]
  %v92 = vld [vmem:[%s0 + $0x134] sm:$0xf]
  %v93 = vld [vmem:[%s0 + $0x138] sm:$0xf]
  %v94 = vld [vmem:[%s0 + $0x13c] sm:$0xf]
  %v95 = vld [vmem:[%s0 + $0x140] sm:$0xf]
  %v96 = vld [vmem:[%s0 + $0x144] sm:$0xf]
  %v97 = vld [vmem:[%s0 + $0x148] sm:$0xf]
  %v98 = vld [vmem:[%s0 + $0x14c] sm:$0xf]
  %v99 = vld [vmem:[%s0 + $0x150] sm:$0xf]
  %v100 = vld [vmem:[%s0 + $0x154] sm:$0xf]
  %v101 = vld [vmem:[%s0 + $0x158] sm:$0xf]
  %v102 = vld [vmem:[%s0 + $0x15c] sm:$0xf]
  %v103 = vld [vmem:[%s0 + $0x160] sm:$0xf]
  %v104 = vld [vmem:[%s0 + $0x164] sm:$0xf]
  %v105 = vld [vmem:[%s0 + $0x168] sm:$0xf]
  %v106 = vld [vmem:[%s0 + $0x16c] sm:$0xf]
  %v107 = vld [vmem:[%s0 + $0x170] sm:$0xf]
  %v108 = vld [vmem:[%s0 + $0x174] sm:$0xf]
  %v109 = vld [vmem:[%s0 + $0x178] sm:$0xf]
  %v110 = vld [vmem:[%s0 + $0x17c] sm:$0xf]
  %v111 = vld [vmem:[%s0 + $0x180] sm:$0xf]
  %v112 = vld [vmem:[%s0 + $0x184] sm:$0xf]
  %v113 = vld [vmem:[%s0 + $0x188] sm:$0xf]
  %v114 = vld [vmem:[%s0 + $0x18c] sm:$0xf]
  %v115 = vld [vmem:[%s0 + $0x190] sm:$0xf]
  %v116 = vld [vmem:[%s0 + $0x194] sm:$0xf]
  %v117 = vld [vmem:[%s0 + $0x198] sm:$0xf]
  %v118 = vld [vmem:[%s0 + $0x19c] sm:$0xf]
  %v119 = vld [vmem:[%s0 + $0x1a0] sm:$0xf]
  %v120 = vld [vmem:[%s0 + $0x1a4] sm:$0xf]
  %v121 = vld [vmem:[%s0 + $0x1a8] sm:$0xf]
  %v122 = vld [vmem:[%s0 + $0x1ac] sm:$0xf]
  %v123 = vld [vmem:[%s0 + $0x1b0] sm:$0xf]
  %v124 = vld [vmem:[%s0 + $0x1b4] sm:$0xf]
  %v125 = vld [vmem:[%s0 + $0x1b8] sm:$0xf]
  %v126 = vld [vmem:[%s0 + $0x1bc] sm:$0xf]
  %v127 = vld [vmem:[%s0 + $0x1c0] sm:$0xf]
  %v128 = vld [vmem:[%s0 + $0x1c4] sm:$0xf]
  %v129 = vld [vmem:[%s0 + $0x1c8] sm:$0xf]
  %v130 = vld [vmem:[%s0 + $0x1cc] sm:$0xf]
  %v131 = vld [vmem:[%s0 + $0x1d0] sm:$0xf]
  %v132 = vld [vmem:[%s0 + $0x1d4] sm:$0xf]
  %v133 = vld [vmem:[%s0 + $0x1d8] sm:$0xf]
  %v134 = vld [vmem:[%s0 + $0x1dc] sm:$0xf]
  %v135 = vld [vmem:[%s0 + $0x1e0] sm:$0xf]
  %v136 = vld [vmem:[%s0 + $0x1e4] sm:$0xf]
  %v137 = vld [vmem:[%s0 + $0x1e8] sm:$0xf]
  %v138 = vld [vmem:[%s0 + $0x1ec] sm:$0xf]
  %v139 = vld [vmem:[%s0 + $0x1f0] sm:$0xf]
  %v140 = vld [vmem:[%s0 + $0x1f4] sm:$0xf]
  %v141 = vld [vmem:[%s0 + $0x1f8] sm:$0xf]
  %v142 = vld [vmem:[%s0 + $0x1fc] sm:$0xf]
  %v143 = vld [vmem:[%s0 + $0x200] sm:$0xf]
  %v144 = vld [vmem:[%s0 + $0x204] sm:$0xf]
  %v145 = vld [vmem:[%s0 + $0x208] sm:$0xf]
  %v146 = vld [vmem:[%s0 + $0x20c] sm:$0xf]
  %v147 = vld [vmem:[%s0 + $0x210] sm:$0xf]
  %v148 = vld [vmem:[%s0 + $0x214] sm:$0xf]
  %v149 = vld [vmem:[%s0 + $0x218] sm:$0xf]
  %v150 = vld [vmem:[%s0 + $0x21c] sm:$0xf]
  %v151 = vld [vmem:[%s0 + $0x220] sm:$0xf]
  %v152 = vld [vmem:[%s0 + $0x224] sm:$0xf]
  %v153 = vld [vmem:[%s0 + $0x228] sm:$0xf]
  %v154 = vld [vmem:[%s0 + $0x22c] sm:$0xf]
  %v155 = vld [vmem:[%s0 + $0x230] sm:$0xf]
  %v156 = vld [vmem:[%s0 + $0x234] sm:$0xf]
  %v157 = vld [vmem:[%s0 + $0x238] sm:$0xf]
  %v158 = vld [vmem:[%s0 + $0x23c] sm:$0xf]
  %v159 = vld [vmem:[%s0 + $0x240] sm:$0xf]
  %v160 = vld [vmem:[%s0 + $0x244] sm:$0xf]
  %v161 = vld [vmem:[%s0 + $0x248] sm:$0xf]
  %v162 = vld [vmem:[%s0 + $0x24c] sm:$0xf]
  %v163 = vld [vmem:[%s0 + $0x250] sm:$0xf]
  %v164 = vld [vmem:[%s0 + $0x254] sm:$0xf]
  %v165 = vld [vmem:[%s0 + $0x258] sm:$0xf]
  %v166 = vld [vmem:[%s0 + $0x25c] sm:$0xf]
  %v167 = vld [vmem:[%s0 + $0x260] sm:$0xf]
  %v168 = vld [vmem:[%s0 + $0x264] sm:$0xf]
  %v169 = vld [vmem:[%s0 + $0x268] sm:$0xf]
  %v170 = vld [vmem:[%s0 + $0x26c] sm:$0xf]
  %v171 = vld [vmem:[%s0 + $0x270] sm:$0xf]
  %v172 = vld [vmem:[%s0 + $0x274] sm:$0xf]
  %v173 = vld [vmem:[%s0 + $0x278] sm:$0xf]
  %v174 = vld [vmem:[%s0 + $0x27c] sm:$0xf]
  %v175 = vld [vmem:[%s0 + $0x280] sm:$0xf]
  %v176 = vld [vmem:[%s0 + $0x284] sm:$0xf]
  %v177 = vld [vmem:[%s0 + $0x288] sm:$0xf]
  %v178 = vld [vmem:[%s0 + $0x28c] sm:$0xf]
  %v179 = vld [vmem:[%s0 + $0x290] sm:$0xf]
  %v180 = vld [vmem:[%s0 + $0x294] sm:$0xf]
  %v181 = vld [vmem:[%s0 + $0x298] sm:$0xf]
  %v182 = vld [vmem:[%s0 + $0x29c] sm:$0xf]
  %v183 = vld [vmem:[%s0 + $0x2a0] sm:$0xf]
  %v184 = vld [vmem:[%s0 + $0x2a4] sm:$0xf]
  %v185 = vld [vmem:[%s0 + $0x2a8] sm:$0xf]
  %v186 = vld [vmem:[%s0 + $0x2ac] sm:$0xf]
  %v187 = vld [vmem:[%s0 + $0x2b0] sm:$0xf]
  %v188 = vld [vmem:[%s0 + $0x2b4] sm:$0xf]
  %v189 = vld [vmem:[%s0 + $0x2b8] sm:$0xf]
  %v190 = vld [vmem:[%s0 + $0x2bc] sm:$0xf]
  %v191 = vld [vmem:[%s0 + $0x2c0] sm:$0xf]
  %v192 = vld [vmem:[%s0 + $0x2c4] sm:$0xf]
  %v193 = vld [vmem:[%s0 + $0x2c8] sm:$0xf]
  %v194 = vld [vmem:[%s0 + $0x2cc] sm:$0xf]
  %v195 = vld [vmem:[%s0 + $0x2d0] sm:$0xf]
  %v196 = vld [vmem:[%s0 + $0x2d4] sm:$0xf]
  %v197 = vld [vmem:[%s0 + $0x2d8] sm:$0xf]
  %v198 = vld [vmem:[%s0 + $0x2dc] sm:$0xf]
  %v199 = vld [vmem:[%s0 + $0x2e0] sm:$0xf]
  %v200 = vld [vmem:[%s0 + $0x2e4] sm:$0xf]
  %v201 = vld [vmem:[%s0 + $0x2e8] sm:$0xf]
  %v202 = vld [vmem:[%s0 + $0x2ec] sm:$0xf]
  %v203 = vld [vmem:[%s0 + $0x2f0] sm:$0xf]
  %v204 = vld [vmem:[%s0 + $0x2f4] sm:$0xf]
  %v205 = vld [vmem:[%s0 + $0x2f8] sm:$0xf]
  %v206 = vld [vmem:[%s0 + $0x2fc] sm:$0xf]
  %v207 = vld [vmem:[%s0 + $0x300] sm:$0xf]
  %v208 = vld [vmem:[%s0 + $0x304] sm:$0xf]
  %v209 = vld [vmem:[%s0 + $0x308] sm:$0xf]
  %v210 = vld [vmem:[%s0 + $0x30c] sm:$0xf]
  %v211 = vld [vmem:[%s0 + $0x310] sm:$0xf]
  %v212 = vld [vmem:[%s0 + $0x314] sm:$0xf]
  %v213 = vld [vmem:[%s0 + $0x318] sm:$0xf]
  %v214 = vld [vmem:[%s0 + $0x31c] sm:$0xf]
  %v215 = vld [vmem:[%s0 + $0x320] sm:$0xf]
  %v216 = vld [vmem:[%s0 + $0x324] sm:$0xf]
  %v217 = vld [vmem:[%s0 + $0x328] sm:$0xf]
  %v218 = vld [vmem:[%s0 + $0x32c] sm:$0xf]
  %v219 = vld [vmem:[%s0 + $0x330] sm:$0xf]
  %v220 = vld [vmem:[%s0 + $0x334] sm:$0xf]
  %v221 = vld [vmem:[%s0 + $0x338] sm:$0xf]
  %v222 = vld [vmem:[%s0 + $0x33c] sm:$0xf]
  %v223 = vld [vmem:[%s0 + $0x340] sm:$0xf]
  %v224 = vld [vmem:[%s0 + $0x344] sm:$0xf]
  %v225 = vld [vmem:[%s0 + $0x348] sm:$0xf]
  %v226 = vld [vmem:[%s0 + $0x34c] sm:$0xf]
  %v227 = vld [vmem:[%s0 + $0x350] sm:$0xf]
  %v228 = vld [vmem:[%s0 + $0x354] sm:$0xf]
  %v229 = vld [vmem:[%s0 + $0x358] sm:$0xf]
  %v230 = vld [vmem:[%s0 + $0x35c] sm:$0xf]
  %v231 = vld [vmem:[%s0 + $0x360] sm:$0xf]
  %v232 = vld [vmem:[%s0 + $0x364] sm:$0xf]
  %v233 = vld [vmem:[%s0 + $0x368] sm:$0xf]
  %v234 = vld [vmem:[%s0 + $0x36c] sm:$0xf]
  %v235 = vld [vmem:[%s0 + $0x370] sm:$0xf]
  %v236 = vld [vmem:[%s0 + $0x374] sm:$0xf]
  %v237 = vld [vmem:[%s0 + $0x378] sm:$0xf]
  %v238 = vld [vmem:[%s0 + $0x37c] sm:$0xf]
  %v239 = vld [vmem:[%s0 + $0x380] sm:$0xf]
  %v240 = vld [vmem:[%s0 + $0x384] sm:$0xf]
  %v241 = vld [vmem:[%s0 + $0x388] sm:$0xf]
  %v242 = vld [vmem:[%s0 + $0x38c] sm:$0xf]
  %v243 = vld [vmem:[%s0 + $0x390] sm:$0xf]
  %v244 = vld [vmem:[%s0 + $0x394] sm:$0xf]
  %v245 = vld [vmem:[%s0 + $0x398] sm:$0xf]
  %v246 = vld [vmem:[%s0 + $0x39c] sm:$0xf]
  %v247 = vld [vmem:[%s0 + $0x3a0] sm:$0xf]
  %v248 = vld [vmem:[%s0 + $0x3a4] sm:$0xf]
  %v249 = vld [vmem:[%s0 + $0x3a8] sm:$0xf]
  %v250 = vld [vmem:[%s0 + $0x3ac] sm:$0xf]
  %v251 = vld [vmem:[%s0 + $0x3b0] sm:$0xf]
  %v252 = vld [vmem:[%s0 + $0x3b4] sm:$0xf]
  %v253 = vld [vmem:[%s0 + $0x3b8] sm:$0xf]
  %v254 = vld [vmem:[%s0 + $0x3bc] sm:$0xf]
  %v255 = vld [vmem:[%s0 + $0x3c0] sm:$0xf]
  %v256 = vld [vmem:[%s0 + $0x3c4] sm:$0xf]
  %v257 = vld [vmem:[%s0 + $0x3c8] sm:$0xf]
  %v258 = vld [vmem:[%s0 + $0x3cc] sm:$0xf]
  %v259 = vld [vmem:[%s0 + $0x3d0] sm:$0xf]
  %v260 = vld [vmem:[%s0 + $0x3d4] sm:$0xf]
  %v261 = vld [vmem:[%s0 + $0x3d8] sm:$0xf]
  %v262 = vld [vmem:[%s0 + $0x3dc] sm:$0xf]
  %v263 = vld [vmem:[%s0 + $0x3e0] sm:$0xf]
  %v264 = vld [vmem:[%s0 + $0x3e4] sm:$0xf]
  %v265 = vld [vmem:[%s0 + $0x3e8] sm:$0xf]
  %v266 = vld [vmem:[%s0 + $0x3ec] sm:$0xf]
  %v267 = vld [vmem:[%s0 + $0x3f0] sm:$0xf]
  %v268 = vld [vmem:[%s0 + $0x3f4] sm:$0xf]
  %v269 = vld [vmem:[%s0 + $0x3f8] sm:$0xf]
  %v270 = vld [vmem:[%s0 + $0x3fc] sm:$0xf]
  %v271 = vld [vmem:[%s1] sm:$0xf]
  %v272 = vld [vmem:[%s1 + $0x4] sm:$0xf]
  %v273 = vld [vmem:[%s1 + $0x8] sm:$0xf]
  %v274 = vld [vmem:[%s1 + $0xc] sm:$0x1]
  %v275 = vld [vmem:[%s2] sm:$0x1]
  %v277 = vlaneseq
  %v278 = vshrl.u32 %v277, 7
  %v279 = vsub.s32 0, %v278
  %v280 = vrot.slane %v275, %v279
  %v538 = vunpack.c.l.b16 %v15
  %v539 = vunpack.c.l.b16 %v16
  %v540 = vunpack.c.l.b16 %v17
  %v541 = vunpack.c.l.b16 %v18
  %v542 = vunpack.c.l.b16 %v19
  %v543 = vunpack.c.l.b16 %v20
  %v544 = vunpack.c.l.b16 %v21
  %v545 = vunpack.c.l.b16 %v22
  %v546 = vunpack.c.l.b16 %v23
  %v547 = vunpack.c.l.b16 %v24
  %v548 = vunpack.c.l.b16 %v25
  %v549 = vunpack.c.l.b16 %v26
  %v550 = vunpack.c.l.b16 %v27
  %v551 = vunpack.c.l.b16 %v28
  %v552 = vunpack.c.l.b16 %v29
  %v553 = vunpack.c.l.b16 %v30
  %v554 = vunpack.c.l.b16 %v31
  %v555 = vunpack.c.l.b16 %v32
  %v556 = vunpack.c.l.b16 %v33
  %v557 = vunpack.c.l.b16 %v34
  %v558 = vunpack.c.l.b16 %v35
  %v559 = vunpack.c.l.b16 %v36
  %v560 = vunpack.c.l.b16 %v37
  %v561 = vunpack.c.l.b16 %v38
  %v562 = vunpack.c.l.b16 %v39
  %v563 = vunpack.c.l.b16 %v40
  %v564 = vunpack.c.l.b16 %v41
  %v565 = vunpack.c.l.b16 %v42
  %v566 = vunpack.c.l.b16 %v43
  %v567 = vunpack.c.l.b16 %v44
  %v568 = vunpack.c.l.b16 %v45
  %v569 = vunpack.c.l.b16 %v46
  %v570 = vunpack.c.l.b16 %v47
  %v571 = vunpack.c.l.b16 %v48
  %v572 = vunpack.c.l.b16 %v49
  %v573 = vunpack.c.l.b16 %v50
  %v574 = vunpack.c.l.b16 %v51
  %v575 = vunpack.c.l.b16 %v52
  %v576 = vunpack.c.l.b16 %v53
  %v577 = vunpack.c.l.b16 %v54
  %v578 = vunpack.c.l.b16 %v55
  %v579 = vunpack.c.l.b16 %v56
  %v580 = vunpack.c.l.b16 %v57
  %v581 = vunpack.c.l.b16 %v58
  %v582 = vunpack.c.l.b16 %v59
  %v583 = vunpack.c.l.b16 %v60
  %v584 = vunpack.c.l.b16 %v61
  %v585 = vunpack.c.l.b16 %v62
  %v586 = vunpack.c.l.b16 %v63
  %v587 = vunpack.c.l.b16 %v64
  %v588 = vunpack.c.l.b16 %v65
  %v589 = vunpack.c.l.b16 %v66
  %v590 = vunpack.c.l.b16 %v67
  %v591 = vunpack.c.l.b16 %v68
  %v592 = vunpack.c.l.b16 %v69
  %v593 = vunpack.c.l.b16 %v70
  %v594 = vunpack.c.l.b16 %v71
  %v595 = vunpack.c.l.b16 %v72
  %v596 = vunpack.c.l.b16 %v73
  %v597 = vunpack.c.l.b16 %v74
  %v598 = vunpack.c.l.b16 %v75
  %v599 = vunpack.c.l.b16 %v76
  %v600 = vunpack.c.l.b16 %v77
  %v601 = vunpack.c.l.b16 %v78
  %v602 = vunpack.c.l.b16 %v79
  %v603 = vunpack.c.l.b16 %v80
  %v604 = vunpack.c.l.b16 %v81
  %v605 = vunpack.c.l.b16 %v82
  %v606 = vunpack.c.l.b16 %v83
  %v607 = vunpack.c.l.b16 %v84
  %v608 = vunpack.c.l.b16 %v85
  %v609 = vunpack.c.l.b16 %v86
  %v610 = vunpack.c.l.b16 %v87
  %v611 = vunpack.c.l.b16 %v88
  %v612 = vunpack.c.l.b16 %v89
  %v613 = vunpack.c.l.b16 %v90
  %v614 = vunpack.c.l.b16 %v91
  %v615 = vunpack.c.l.b16 %v92
  %v616 = vunpack.c.l.b16 %v93
  %v617 = vunpack.c.l.b16 %v94
  %v618 = vunpack.c.l.b16 %v95
  %v619 = vunpack.c.l.b16 %v96
  %v620 = vunpack.c.l.b16 %v97
  %v621 = vunpack.c.l.b16 %v98
  %v622 = vunpack.c.l.b16 %v99
  %v623 = vunpack.c.l.b16 %v100
  %v624 = vunpack.c.l.b16 %v101
  %v625 = vunpack.c.l.b16 %v102
  %v626 = vunpack.c.l.b16 %v103
  %v627 = vunpack.c.l.b16 %v104
  %v628 = vunpack.c.l.b16 %v105
  %v629 = vunpack.c.l.b16 %v106
  %v630 = vunpack.c.l.b16 %v107
  %v631 = vunpack.c.l.b16 %v108
  %v632 = vunpack.c.l.b16 %v109
  %v633 = vunpack.c.l.b16 %v110
  %v634 = vunpack.c.l.b16 %v111
  %v635 = vunpack.c.l.b16 %v112
  %v636 = vunpack.c.l.b16 %v113
  %v637 = vunpack.c.l.b16 %v114
  %v638 = vunpack.c.l.b16 %v115
  %v639 = vunpack.c.l.b16 %v116
  %v640 = vunpack.c.l.b16 %v117
  %v641 = vunpack.c.l.b16 %v118
  %v642 = vunpack.c.l.b16 %v119
  %v643 = vunpack.c.l.b16 %v120
  %v644 = vunpack.c.l.b16 %v121
  %v645 = vunpack.c.l.b16 %v122
  %v646 = vunpack.c.l.b16 %v123
  %v647 = vunpack.c.l.b16 %v124
  %v648 = vunpack.c.l.b16 %v125
  %v649 = vunpack.c.l.b16 %v126
  %v650 = vunpack.c.l.b16 %v127
  %v651 = vunpack.c.l.b16 %v128
  %v652 = vunpack.c.l.b16 %v129
  %v653 = vunpack.c.l.b16 %v130
  %v654 = vunpack.c.l.b16 %v131
  %v655 = vunpack.c.l.b16 %v132
  %v656 = vunpack.c.l.b16 %v133
  %v657 = vunpack.c.l.b16 %v134
  %v658 = vunpack.c.l.b16 %v135
  %v659 = vunpack.c.l.b16 %v136
  %v660 = vunpack.c.l.b16 %v137
  %v661 = vunpack.c.l.b16 %v138
  %v662 = vunpack.c.l.b16 %v139
  %v663 = vunpack.c.l.b16 %v140
  %v664 = vunpack.c.l.b16 %v141
  %v665 = vunpack.c.l.b16 %v142
  %v666 = vunpack.c.l.b16 %v143
  %v667 = vunpack.c.l.b16 %v144
  %v668 = vunpack.c.l.b16 %v145
  %v669 = vunpack.c.l.b16 %v146
  %v670 = vunpack.c.l.b16 %v147
  %v671 = vunpack.c.l.b16 %v148
  %v672 = vunpack.c.l.b16 %v149
  %v673 = vunpack.c.l.b16 %v150
  %v674 = vunpack.c.l.b16 %v151
  %v675 = vunpack.c.l.b16 %v152
  %v676 = vunpack.c.l.b16 %v153
  %v677 = vunpack.c.l.b16 %v154
  %v678 = vunpack.c.l.b16 %v155
  %v679 = vunpack.c.l.b16 %v156
  %v680 = vunpack.c.l.b16 %v157
  %v681 = vunpack.c.l.b16 %v158
  %v682 = vunpack.c.l.b16 %v159
  %v683 = vunpack.c.l.b16 %v160
  %v684 = vunpack.c.l.b16 %v161
  %v685 = vunpack.c.l.b16 %v162
  %v686 = vunpack.c.l.b16 %v163
  %v687 = vunpack.c.l.b16 %v164
  %v688 = vunpack.c.l.b16 %v165
  %v689 = vunpack.c.l.b16 %v166
  %v690 = vunpack.c.l.b16 %v167
  %v691 = vunpack.c.l.b16 %v168
  %v692 = vunpack.c.l.b16 %v169
  %v693 = vunpack.c.l.b16 %v170
  %v694 = vunpack.c.l.b16 %v171
  %v695 = vunpack.c.l.b16 %v172
  %v696 = vunpack.c.l.b16 %v173
  %v697 = vunpack.c.l.b16 %v174
  %v698 = vunpack.c.l.b16 %v175
  %v699 = vunpack.c.l.b16 %v176
  %v700 = vunpack.c.l.b16 %v177
  %v701 = vunpack.c.l.b16 %v178
  %v702 = vunpack.c.l.b16 %v179
  %v703 = vunpack.c.l.b16 %v180
  %v704 = vunpack.c.l.b16 %v181
  %v705 = vunpack.c.l.b16 %v182
  %v706 = vunpack.c.l.b16 %v183
  %v707 = vunpack.c.l.b16 %v184
  %v708 = vunpack.c.l.b16 %v185
  %v709 = vunpack.c.l.b16 %v186
  %v710 = vunpack.c.l.b16 %v187
  %v711 = vunpack.c.l.b16 %v188
  %v712 = vunpack.c.l.b16 %v189
  %v713 = vunpack.c.l.b16 %v190
  %v714 = vunpack.c.l.b16 %v191
  %v715 = vunpack.c.l.b16 %v192
  %v716 = vunpack.c.l.b16 %v193
  %v717 = vunpack.c.l.b16 %v194
  %v718 = vunpack.c.l.b16 %v195
  %v719 = vunpack.c.l.b16 %v196
  %v720 = vunpack.c.l.b16 %v197
  %v721 = vunpack.c.l.b16 %v198
  %v722 = vunpack.c.l.b16 %v199
  %v723 = vunpack.c.l.b16 %v200
  %v724 = vunpack.c.l.b16 %v201
  %v725 = vunpack.c.l.b16 %v202
  %v726 = vunpack.c.l.b16 %v203
  %v727 = vunpack.c.l.b16 %v204
  %v728 = vunpack.c.l.b16 %v205
  %v729 = vunpack.c.l.b16 %v206
  %v730 = vunpack.c.l.b16 %v207
  %v731 = vunpack.c.l.b16 %v208
  %v732 = vunpack.c.l.b16 %v209
  %v733 = vunpack.c.l.b16 %v210
  %v734 = vunpack.c.l.b16 %v211
  %v735 = vunpack.c.l.b16 %v212
  %v736 = vunpack.c.l.b16 %v213
  %v737 = vunpack.c.l.b16 %v214
  %v738 = vunpack.c.l.b16 %v215
  %v739 = vunpack.c.l.b16 %v216
  %v740 = vunpack.c.l.b16 %v217
  %v741 = vunpack.c.l.b16 %v218
  %v742 = vunpack.c.l.b16 %v219
  %v743 = vunpack.c.l.b16 %v220
  %v744 = vunpack.c.l.b16 %v221
  %v745 = vunpack.c.l.b16 %v222
  %v746 = vunpack.c.l.b16 %v223
  %v747 = vunpack.c.l.b16 %v224
  %v748 = vunpack.c.l.b16 %v225
  %v749 = vunpack.c.l.b16 %v226
  %v750 = vunpack.c.l.b16 %v227
  %v751 = vunpack.c.l.b16 %v228
  %v752 = vunpack.c.l.b16 %v229
  %v753 = vunpack.c.l.b16 %v230
  %v754 = vunpack.c.l.b16 %v231
  %v755 = vunpack.c.l.b16 %v232
  %v756 = vunpack.c.l.b16 %v233
  %v757 = vunpack.c.l.b16 %v234
  %v758 = vunpack.c.l.b16 %v235
  %v759 = vunpack.c.l.b16 %v236
  %v760 = vunpack.c.l.b16 %v237
  %v761 = vunpack.c.l.b16 %v238
  %v762 = vunpack.c.l.b16 %v239
  %v763 = vunpack.c.l.b16 %v240
  %v764 = vunpack.c.l.b16 %v241
  %v765 = vunpack.c.l.b16 %v242
  %v766 = vunpack.c.l.b16 %v243
  %v767 = vunpack.c.l.b16 %v244
  %v768 = vunpack.c.l.b16 %v245
  %v769 = vunpack.c.l.b16 %v246
  %v770 = vunpack.c.l.b16 %v247
  %v771 = vunpack.c.l.b16 %v248
  %v772 = vunpack.c.l.b16 %v249
  %v773 = vunpack.c.l.b16 %v250
  %v774 = vunpack.c.l.b16 %v251
  %v775 = vunpack.c.l.b16 %v252
  %v776 = vunpack.c.l.b16 %v253
  %v777 = vunpack.c.l.b16 %v254
  %v778 = vunpack.c.l.b16 %v255
  %v779 = vunpack.c.l.b16 %v256
  %v780 = vunpack.c.l.b16 %v257
  %v781 = vunpack.c.l.b16 %v258
  %v782 = vunpack.c.l.b16 %v259
  %v783 = vunpack.c.l.b16 %v260
  %v784 = vunpack.c.l.b16 %v261
  %v785 = vunpack.c.l.b16 %v262
  %v786 = vunpack.c.l.b16 %v263
  %v787 = vunpack.c.l.b16 %v264
  %v788 = vunpack.c.l.b16 %v265
  %v789 = vunpack.c.l.b16 %v266
  %v790 = vunpack.c.l.b16 %v267
  %v791 = vunpack.c.l.b16 %v268
  %v792 = vunpack.c.l.b16 %v269
  %v793 = vunpack.c.l.b16 %v270
  %v794 = vpack.c.b16 %v539, %v538
  %v795 = vpack.c.b16 %v541, %v540
  %v796 = vpack.c.b16 %v543, %v542
  %v797 = vpack.c.b16 %v545, %v544
  %v798 = vpack.c.b16 %v547, %v546
  %v799 = vpack.c.b16 %v549, %v548
  %v800 = vpack.c.b16 %v551, %v550
  %v801 = vpack.c.b16 %v553, %v552
  %v802 = vpack.c.b16 %v555, %v554
  %v803 = vpack.c.b16 %v557, %v556
  %v804 = vpack.c.b16 %v559, %v558
  %v805 = vpack.c.b16 %v561, %v560
  %v806 = vpack.c.b16 %v563, %v562
  %v807 = vpack.c.b16 %v565, %v564
  %v808 = vpack.c.b16 %v567, %v566
  %v809 = vpack.c.b16 %v569, %v568
  %v810 = vpack.c.b16 %v571, %v570
  %v811 = vpack.c.b16 %v573, %v572
  %v812 = vpack.c.b16 %v575, %v574
  %v813 = vpack.c.b16 %v577, %v576
  %v814 = vpack.c.b16 %v579, %v578
  %v815 = vpack.c.b16 %v581, %v580
  %v816 = vpack.c.b16 %v583, %v582
  %v817 = vpack.c.b16 %v585, %v584
  %v818 = vpack.c.b16 %v587, %v586
  %v819 = vpack.c.b16 %v589, %v588
  %v820 = vpack.c.b16 %v591, %v590
  %v821 = vpack.c.b16 %v593, %v592
  %v822 = vpack.c.b16 %v595, %v594
  %v823 = vpack.c.b16 %v597, %v596
  %v824 = vpack.c.b16 %v599, %v598
  %v825 = vpack.c.b16 %v601, %v600
  %v826 = vpack.c.b16 %v603, %v602
  %v827 = vpack.c.b16 %v605, %v604
  %v828 = vpack.c.b16 %v607, %v606
  %v829 = vpack.c.b16 %v609, %v608
  %v830 = vpack.c.b16 %v611, %v610
  %v831 = vpack.c.b16 %v613, %v612
  %v832 = vpack.c.b16 %v615, %v614
  %v833 = vpack.c.b16 %v617, %v616
  %v834 = vpack.c.b16 %v619, %v618
  %v835 = vpack.c.b16 %v621, %v620
  %v836 = vpack.c.b16 %v623, %v622
  %v837 = vpack.c.b16 %v625, %v624
  %v838 = vpack.c.b16 %v627, %v626
  %v839 = vpack.c.b16 %v629, %v628
  %v840 = vpack.c.b16 %v631, %v630
  %v841 = vpack.c.b16 %v633, %v632
  %v842 = vpack.c.b16 %v635, %v634
  %v843 = vpack.c.b16 %v637, %v636
  %v844 = vpack.c.b16 %v639, %v638
  %v845 = vpack.c.b16 %v641, %v640
  %v846 = vpack.c.b16 %v643, %v642
  %v847 = vpack.c.b16 %v645, %v644
  %v848 = vpack.c.b16 %v647, %v646
  %v849 = vpack.c.b16 %v649, %v648
  %v850 = vpack.c.b16 %v651, %v650
  %v851 = vpack.c.b16 %v653, %v652
  %v852 = vpack.c.b16 %v655, %v654
  %v853 = vpack.c.b16 %v657, %v656
  %v854 = vpack.c.b16 %v659, %v658
  %v855 = vpack.c.b16 %v661, %v660
  %v856 = vpack.c.b16 %v663, %v662
  %v857 = vpack.c.b16 %v665, %v664
  %v858 = vpack.c.b16 %v667, %v666
  %v859 = vpack.c.b16 %v669, %v668
  %v860 = vpack.c.b16 %v671, %v670
  %v861 = vpack.c.b16 %v673, %v672
  %v862 = vpack.c.b16 %v675, %v674
  %v863 = vpack.c.b16 %v677, %v676
  %v864 = vpack.c.b16 %v679, %v678
  %v865 = vpack.c.b16 %v681, %v680
  %v866 = vpack.c.b16 %v683, %v682
  %v867 = vpack.c.b16 %v685, %v684
  %v868 = vpack.c.b16 %v687, %v686
  %v869 = vpack.c.b16 %v689, %v688
  %v870 = vpack.c.b16 %v691, %v690
  %v871 = vpack.c.b16 %v693, %v692
  %v872 = vpack.c.b16 %v695, %v694
  %v873 = vpack.c.b16 %v697, %v696
  %v874 = vpack.c.b16 %v699, %v698
  %v875 = vpack.c.b16 %v701, %v700
  %v876 = vpack.c.b16 %v703, %v702
  %v877 = vpack.c.b16 %v705, %v704
  %v878 = vpack.c.b16 %v707, %v706
  %v879 = vpack.c.b16 %v709, %v708
  %v880 = vpack.c.b16 %v711, %v710
  %v881 = vpack.c.b16 %v713, %v712
  %v882 = vpack.c.b16 %v715, %v714
  %v883 = vpack.c.b16 %v717, %v716
  %v884 = vpack.c.b16 %v719, %v718
  %v885 = vpack.c.b16 %v721, %v720
  %v886 = vpack.c.b16 %v723, %v722
  %v887 = vpack.c.b16 %v725, %v724
  %v888 = vpack.c.b16 %v727, %v726
  %v889 = vpack.c.b16 %v729, %v728
  %v890 = vpack.c.b16 %v731, %v730
  %v891 = vpack.c.b16 %v733, %v732
  %v892 = vpack.c.b16 %v735, %v734
  %v893 = vpack.c.b16 %v737, %v736
  %v894 = vpack.c.b16 %v739, %v738
  %v895 = vpack.c.b16 %v741, %v740
  %v896 = vpack.c.b16 %v743, %v742
  %v897 = vpack.c.b16 %v745, %v744
  %v898 = vpack.c.b16 %v747, %v746
  %v899 = vpack.c.b16 %v749, %v748
  %v900 = vpack.c.b16 %v751, %v750
  %v901 = vpack.c.b16 %v753, %v752
  %v902 = vpack.c.b16 %v755, %v754
  %v903 = vpack.c.b16 %v757, %v756
  %v904 = vpack.c.b16 %v759, %v758
  %v905 = vpack.c.b16 %v761, %v760
  %v906 = vpack.c.b16 %v763, %v762
  %v907 = vpack.c.b16 %v765, %v764
  %v908 = vpack.c.b16 %v767, %v766
  %v909 = vpack.c.b16 %v769, %v768
  %v910 = vpack.c.b16 %v771, %v770
  %v911 = vpack.c.b16 %v773, %v772
  %v912 = vpack.c.b16 %v775, %v774
  %v913 = vpack.c.b16 %v777, %v776
  %v914 = vpack.c.b16 %v779, %v778
  %v915 = vpack.c.b16 %v781, %v780
  %v916 = vpack.c.b16 %v783, %v782
  %v917 = vpack.c.b16 %v785, %v784
  %v918 = vpack.c.b16 %v787, %v786
  %v919 = vpack.c.b16 %v789, %v788
  %v920 = vpack.c.b16 %v791, %v790
  %v921 = vpack.c.b16 %v793, %v792
  %v926 = vunpack.c.l.b16 %v271
  %v927 = vunpack.c.l.b16 %v272
  %v928 = vunpack.c.l.b16 %v273
  %v929 = vunpack.c.l.b16 %v274
  %v930 = vpack.c.b16 %v927, %v926
  %v931 = vpack.c.b16 %v929, %v928
  %vm933 = vcmask 203776
  %v935 = vsel %vm933, %v794, 0
  %v938 = vsel %vm933, %v795, 0
  %v941 = vsel %vm933, %v796, 0
  %v944 = vsel %vm933, %v797, 0
  %v947 = vsel %vm933, %v798, 0
  %v950 = vsel %vm933, %v799, 0
  %v953 = vsel %vm933, %v800, 0
  %v956 = vsel %vm933, %v801, 0
  %v959 = vsel %vm933, %v802, 0
  %v962 = vsel %vm933, %v803, 0
  %v965 = vsel %vm933, %v804, 0
  %v968 = vsel %vm933, %v805, 0
  %v971 = vsel %vm933, %v806, 0
  %v974 = vsel %vm933, %v807, 0
  %v977 = vsel %vm933, %v808, 0
  %v980 = vsel %vm933, %v809, 0
  %v983 = vsel %vm933, %v810, 0
  %v986 = vsel %vm933, %v811, 0
  %v989 = vsel %vm933, %v812, 0
  %v992 = vsel %vm933, %v813, 0
  %v995 = vsel %vm933, %v814, 0
  %v998 = vsel %vm933, %v815, 0
  %v1001 = vsel %vm933, %v816, 0
  %v1004 = vsel %vm933, %v817, 0
  %v1007 = vsel %vm933, %v818, 0
  %v1010 = vsel %vm933, %v819, 0
  %v1013 = vsel %vm933, %v820, 0
  %v1016 = vsel %vm933, %v821, 0
  %v1019 = vsel %vm933, %v822, 0
  %v1022 = vsel %vm933, %v823, 0
  %v1025 = vsel %vm933, %v824, 0
  %v1028 = vsel %vm933, %v825, 0
  %v1031 = vsel %vm933, %v826, 0
  %v1034 = vsel %vm933, %v827, 0
  %v1037 = vsel %vm933, %v828, 0
  %v1040 = vsel %vm933, %v829, 0
  %v1043 = vsel %vm933, %v830, 0
  %v1046 = vsel %vm933, %v831, 0
  %v1049 = vsel %vm933, %v832, 0
  %v1052 = vsel %vm933, %v833, 0
  %v1055 = vsel %vm933, %v834, 0
  %v1058 = vsel %vm933, %v835, 0
  %v1061 = vsel %vm933, %v836, 0
  %v1064 = vsel %vm933, %v837, 0
  %v1067 = vsel %vm933, %v838, 0
  %v1070 = vsel %vm933, %v839, 0
  %v1073 = vsel %vm933, %v840, 0
  %v1076 = vsel %vm933, %v841, 0
  %v1079 = vsel %vm933, %v842, 0
  %v1082 = vsel %vm933, %v843, 0
  %v1085 = vsel %vm933, %v844, 0
  %v1088 = vsel %vm933, %v845, 0
  %v1091 = vsel %vm933, %v846, 0
  %v1094 = vsel %vm933, %v847, 0
  %v1097 = vsel %vm933, %v848, 0
  %v1100 = vsel %vm933, %v849, 0
  %v1103 = vsel %vm933, %v850, 0
  %v1106 = vsel %vm933, %v851, 0
  %v1109 = vsel %vm933, %v852, 0
  %v1112 = vsel %vm933, %v853, 0
  %v1115 = vsel %vm933, %v854, 0
  %v1118 = vsel %vm933, %v855, 0
  %v1121 = vsel %vm933, %v856, 0
  %v1124 = vsel %vm933, %v857, 0
  %v1127 = vsel %vm933, %v858, 0
  %v1130 = vsel %vm933, %v859, 0
  %v1133 = vsel %vm933, %v860, 0
  %v1136 = vsel %vm933, %v861, 0
  %v1139 = vsel %vm933, %v862, 0
  %v1142 = vsel %vm933, %v863, 0
  %v1145 = vsel %vm933, %v864, 0
  %v1148 = vsel %vm933, %v865, 0
  %v1151 = vsel %vm933, %v866, 0
  %v1154 = vsel %vm933, %v867, 0
  %v1157 = vsel %vm933, %v868, 0
  %v1160 = vsel %vm933, %v869, 0
  %v1163 = vsel %vm933, %v870, 0
  %v1166 = vsel %vm933, %v871, 0
  %v1169 = vsel %vm933, %v872, 0
  %v1172 = vsel %vm933, %v873, 0
  %v1175 = vsel %vm933, %v874, 0
  %v1178 = vsel %vm933, %v875, 0
  %v1181 = vsel %vm933, %v876, 0
  %v1184 = vsel %vm933, %v877, 0
  %v1187 = vsel %vm933, %v878, 0
  %v1190 = vsel %vm933, %v879, 0
  %v1193 = vsel %vm933, %v880, 0
  %v1196 = vsel %vm933, %v881, 0
  %v1199 = vsel %vm933, %v882, 0
  %v1202 = vsel %vm933, %v883, 0
  %v1205 = vsel %vm933, %v884, 0
  %v1208 = vsel %vm933, %v885, 0
  %v1211 = vsel %vm933, %v886, 0
  %v1214 = vsel %vm933, %v887, 0
  %v1217 = vsel %vm933, %v888, 0
  %v1220 = vsel %vm933, %v889, 0
  %v1223 = vsel %vm933, %v890, 0
  %v1226 = vsel %vm933, %v891, 0
  %v1229 = vsel %vm933, %v892, 0
  %v1232 = vsel %vm933, %v893, 0
  %v1235 = vsel %vm933, %v894, 0
  %v1238 = vsel %vm933, %v895, 0
  %v1241 = vsel %vm933, %v896, 0
  %v1244 = vsel %vm933, %v897, 0
  %v1247 = vsel %vm933, %v898, 0
  %v1250 = vsel %vm933, %v899, 0
  %v1253 = vsel %vm933, %v900, 0
  %v1256 = vsel %vm933, %v901, 0
  %v1259 = vsel %vm933, %v902, 0
  %v1262 = vsel %vm933, %v903, 0
  %v1265 = vsel %vm933, %v904, 0
  %v1268 = vsel %vm933, %v905, 0
  %v1271 = vsel %vm933, %v906, 0
  %v1274 = vsel %vm933, %v907, 0
  %v1277 = vsel %vm933, %v908, 0
  %v1280 = vsel %vm933, %v909, 0
  %v1283 = vsel %vm933, %v910, 0
  %v1286 = vsel %vm933, %v911, 0
  %v1289 = vsel %vm933, %v912, 0
  %v1292 = vsel %vm933, %v913, 0
  %v1295 = vsel %vm933, %v914, 0
  %v1298 = vsel %vm933, %v915, 0
  %v1301 = vsel %vm933, %v916, 0
  %v1304 = vsel %vm933, %v917, 0
  %v1307 = vsel %vm933, %v918, 0
  %v1310 = vsel %vm933, %v919, 0
  %v1313 = vsel %vm933, %v920, 0
  %v1316 = vsel %vm933, %v921, 0
  %vm1318 = vcmask 1043456
  %vm1319 = vcmask 1044480
  %v1320 = vsel %vm1318, 4294967295, 65535
  %v1321 = vsel %vm1319, %v1320, 0
  %v1323 = vand.u32 %v931, %v1321
  %1325 = vmatprep.subr.bf16.mxu0 0
  %1326 = vmatpush1.bf16.msra.mxu0 %v930
  %1327 = vmatprep.subr.bf16.mxu0 0
  %1328 = vmatpush1.bf16.msra.mxu0 %v1323
  %1329 = vmatprep.subr.bf16.mxu0 0
  %1330 = vmatpush1.bf16.msra.mxu0 0
  %1331 = vmatprep.subr.bf16.mxu0 0
  %1332 = vmatpush1.bf16.msra.mxu0 0
  %1333 = vmatprep.subr.bf16.mxu0 0
  %1334 = vmatpush1.bf16.msra.mxu0 0
  %1335 = vmatprep.subr.bf16.mxu0 0
  %1336 = vmatpush1.bf16.msra.mxu0 0
  %1337 = vmatprep.subr.bf16.mxu0 0
  %1338 = vmatpush1.bf16.msra.mxu0 0
  %1339 = vmatprep.subr.bf16.mxu0 0
  %1340 = vmatpush1.bf16.msra.mxu0 0
  %1341 = vmatprep.subr.bf16.mxu0 0
  %1342 = vmatpush1.bf16.msra.mxu0 0
  %1343 = vmatprep.subr.bf16.mxu0 0
  %1344 = vmatpush1.bf16.msra.mxu0 0
  %1345 = vmatprep.subr.bf16.mxu0 0
  %1346 = vmatpush1.bf16.msra.mxu0 0
  %1347 = vmatprep.subr.bf16.mxu0 0
  %1348 = vmatpush1.bf16.msra.mxu0 0
  %1349 = vmatprep.subr.bf16.mxu0 0
  %1350 = vmatpush1.bf16.msra.mxu0 0
  %1351 = vmatprep.subr.bf16.mxu0 0
  %1352 = vmatpush1.bf16.msra.mxu0 0
  %1353 = vmatprep.subr.bf16.mxu0 0
  %1354 = vmatpush1.bf16.msra.mxu0 0
  %1355 = vmatprep.subr.bf16.mxu0 0
  %1356 = vmatpush1.bf16.msra.mxu0 0
  %1357 = vmatprep.mubr.bf16.mxu0 0
  %1358 = vmatmul.mubr.bf16.gmra.mrb[0].mxu0 %v935
  %v1359 = vpop.f32.mrb[0].mxu0
  %v1360 = vadd.f32 %v280, %v1359
  %v1361 = vpop.f32.mrb[0].mxu0
  %v1362 = vpop.f32.mrb[0].mxu0
  %v1363 = vadd.f32 %v280, %v1362
  %v1364 = vpop.f32.mrb[0].mxu0
  %1365 = vmatprep.mubr.bf16.mxu0 0
  %1366 = vmatmul.mubr.bf16.gmra.mrb[0].mxu0 %v938
  %v1367 = vpop.f32.mrb[0].mxu0
  %v1368 = vadd.f32 %v280, %v1367
  %v1369 = vpop.f32.mrb[0].mxu0
  %v1370 = vpop.f32.mrb[0].mxu0
  %v1371 = vadd.f32 %v280, %v1370
  %v1372 = vpop.f32.mrb[0].mxu0
  %1373 = vmatprep.mubr.bf16.mxu0 0
  %1374 = vmatmul.mubr.bf16.gmra.mrb[0].mxu0 %v941
  %v1375 = vpop.f32.mrb[0].mxu0
  %v1376 = vadd.f32 %v280, %v1375
  %v1377 = vpop.f32.mrb[0].mxu0
  %v1378 = vpop.f32.mrb[0].mxu0
  %v1379 = vadd.f32 %v280, %v1378
  %v1380 = vpop.f32.mrb[0].mxu0
  %1381 = vmatprep.mubr.bf16.mxu0 0
  %1382 = vmatmul.mubr.bf16.gmra.mrb[0].mxu0 %v944
  %v1383 = vpop.f32.mrb[0].mxu0
  %v1384 = vadd.f32 %v280, %v1383
  %v1385 = vpop.f32.mrb[0].mxu0
  %v1386 = vpop.f32.mrb[0].mxu0
  %v1387 = vadd.f32 %v280, %v1386
  %v1388 = vpop.f32.mrb[0].mxu0
  %1389 = vmatprep.mubr.bf16.mxu0 0
  %1390 = vmatmul.mubr.bf16.gmra.mrb[0].mxu0 %v947
  %v1391 = vpop.f32.mrb[0].mxu0
  %v1392 = vadd.f32 %v280, %v1391
  %v1393 = vpop.f32.mrb[0].mxu0
  %v1394 = vpop.f32.mrb[0].mxu0
  %v1395 = vadd.f32 %v280, %v1394
  %v1396 = vpop.f32.mrb[0].mxu0
  %1397 = vmatprep.mubr.bf16.mxu0 0
  %1398 = vmatmul.mubr.bf16.gmra.mrb[0].mxu0 %v950
  %v1399 = vpop.f32.mrb[0].mxu0
  %v1400 = vadd.f32 %v280, %v1399
  %v1401 = vpop.f32.mrb[0].mxu0
  %v1402 = vpop.f32.mrb[0].mxu0
  %v1403 = vadd.f32 %v280, %v1402
  %v1404 = vpop.f32.mrb[0].mxu0
  %1405 = vmatprep.mubr.bf16.mxu0 0
  %1406 = vmatmul.mubr.bf16.gmra.mrb[0].mxu0 %v953
  %v1407 = vpop.f32.mrb[0].mxu0
  %v1408 = vadd.f32 %v280, %v1407
  %v1409 = vpop.f32.mrb[0].mxu0
  %v1410 = vpop.f32.mrb[0].mxu0
  %v1411 = vadd.f32 %v280, %v1410
  %v1412 = vpop.f32.mrb[0].mxu0
  %1413 = vmatprep.mubr.bf16.mxu0 0
  %1414 = vmatmul.mubr.bf16.gmra.mrb[0].mxu0 %v956
  %v1415 = vpop.f32.mrb[0].mxu0
  %v1416 = vadd.f32 %v280, %v1415
  %v1417 = vpop.f32.mrb[0].mxu0
  %v1418 = vpop.f32.mrb[0].mxu0
  %v1419 = vadd.f32 %v280, %v1418
  %v1420 = vpop.f32.mrb[0].mxu0
  %1421 = vmatprep.mubr.bf16.mxu0 0
  %1422 = vmatmul.mubr.bf16.gmra.mrb[0].mxu0 %v959
  %v1423 = vpop.f32.mrb[0].mxu0
  %v1424 = vadd.f32 %v280, %v1423
  %v1425 = vpop.f32.mrb[0].mxu0
  %v1426 = vpop.f32.mrb[0].mxu0
  %v1427 = vadd.f32 %v280, %v1426
  %v1428 = vpop.f32.mrb[0].mxu0
  %1429 = vmatprep.mubr.bf16.mxu0 0
  %1430 = vmatmul.mubr.bf16.gmra.mrb[0].mxu0 %v962
  %v1431 = vpop.f32.mrb[0].mxu0
  %v1432 = vadd.f32 %v280, %v1431
  %v1433 = vpop.f32.mrb[0].mxu0
  %v1434 = vpop.f32.mrb[0].mxu0
  %v1435 = vadd.f32 %v280, %v1434
  %v1436 = vpop.f32.mrb[0].mxu0
  %1437 = vmatprep.mubr.bf16.mxu0 0
  %1438 = vmatmul.mubr.bf16.gmra.mrb[0].mxu0 %v965
  %v1439 = vpop.f32.mrb[0].mxu0
  %v1440 = vadd.f32 %v280, %v1439
  %v1441 = vpop.f32.mrb[0].mxu0
  %v1442 = vpop.f32.mrb[0].mxu0
  %v1443 = vadd.f32 %v280, %v1442
  %v1444 = vpop.f32.mrb[0].mxu0
  %1445 = vmatprep.mubr.bf16.mxu0 0
  %1446 = vmatmul.mubr.bf16.gmra.mrb[0].mxu0 %v968
  %v1447 = vpop.f32.mrb[0].mxu0
  %v1448 = vadd.f32 %v280, %v1447
  %v1449 = vpop.f32.mrb[0].mxu0
  %v1450 = vpop.f32.mrb[0].mxu0
  %v1451 = vadd.f32 %v280, %v1450
  %v1452 = vpop.f32.mrb[0].mxu0
  %1453 = vmatprep.mubr.bf16.mxu0 0
  %1454 = vmatmul.mubr.bf16.gmra.mrb[0].mxu0 %v971
  %v1455 = vpop.f32.mrb[0].mxu0
  %v1456 = vadd.f32 %v280, %v1455
  %v1457 = vpop.f32.mrb[0].mxu0
  %v1458 = vpop.f32.mrb[0].mxu0
  %v1459 = vadd.f32 %v280, %v1458
  %v1460 = vpop.f32.mrb[0].mxu0
  %1461 = vmatprep.mubr.bf16.mxu0 0
  %1462 = vmatmul.mubr.bf16.gmra.mrb[0].mxu0 %v974
  %v1463 = vpop.f32.mrb[0].mxu0
  %v1464 = vadd.f32 %v280, %v1463
  %v1465 = vpop.f32.mrb[0].mxu0
  %v1466 = vpop.f32.mrb[0].mxu0
  %v1467 = vadd.f32 %v280, %v1466
  %v1468 = vpop.f32.mrb[0].mxu0
  %1469 = vmatprep.mubr.bf16.mxu0 0
  %1470 = vmatmul.mubr.bf16.gmra.mrb[0].mxu0 %v977
  %v1471 = vpop.f32.mrb[0].mxu0
  %v1472 = vadd.f32 %v280, %v1471
  %v1473 = vpop.f32.mrb[0].mxu0
  %v1474 = vpop.f32.mrb[0].mxu0
  %v1475 = vadd.f32 %v280, %v1474
  %v1476 = vpop.f32.mrb[0].mxu0
  %1477 = vmatprep.mubr.bf16.mxu0 0
  %1478 = vmatmul.mubr.bf16.gmra.mrb[0].mxu0 %v980
  %v1479 = vpop.f32.mrb[0].mxu0
  %v1480 = vadd.f32 %v280, %v1479
  %v1481 = vpop.f32.mrb[0].mxu0
  %v1482 = vpop.f32.mrb[0].mxu0
  %v1483 = vadd.f32 %v280, %v1482
  %v1484 = vpop.f32.mrb[0].mxu0
  %1485 = vmatprep.mubr.bf16.mxu0 0
  %1486 = vmatmul.mubr.bf16.gmra.mrb[0].mxu0 %v983
  %v1487 = vpop.f32.mrb[0].mxu0
  %v1488 = vadd.f32 %v280, %v1487
  %v1489 = vpop.f32.mrb[0].mxu0
  %v1490 = vpop.f32.mrb[0].mxu0
  %v1491 = vadd.f32 %v280, %v1490
  %v1492 = vpop.f32.mrb[0].mxu0
  %1493 = vmatprep.mubr.bf16.mxu0 0
  %1494 = vmatmul.mubr.bf16.gmra.mrb[0].mxu0 %v986
  %v1495 = vpop.f32.mrb[0].mxu0
  %v1496 = vadd.f32 %v280, %v1495
  %v1497 = vpop.f32.mrb[0].mxu0
  %v1498 = vpop.f32.mrb[0].mxu0
  %v1499 = vadd.f32 %v280, %v1498
  %v1500 = vpop.f32.mrb[0].mxu0
  %1501 = vmatprep.mubr.bf16.mxu0 0
  %1502 = vmatmul.mubr.bf16.gmra.mrb[0].mxu0 %v989
  %v1503 = vpop.f32.mrb[0].mxu0
  %v1504 = vadd.f32 %v280, %v1503
  %v1505 = vpop.f32.mrb[0].mxu0
  %v1506 = vpop.f32.mrb[0].mxu0
  %v1507 = vadd.f32 %v280, %v1506
  %v1508 = vpop.f32.mrb[0].mxu0
  %1509 = vmatprep.mubr.bf16.mxu0 0
  %1510 = vmatmul.mubr.bf16.gmra.mrb[0].mxu0 %v992
  %v1511 = vpop.f32.mrb[0].mxu0
  %v1512 = vadd.f32 %v280, %v1511
  %v1513 = vpop.f32.mrb[0].mxu0
  %v1514 = vpop.f32.mrb[0].mxu0
  %v1515 = vadd.f32 %v280, %v1514
  %v1516 = vpop.f32.mrb[0].mxu0
  %1517 = vmatprep.mubr.bf16.mxu0 0
  %1518 = vmatmul.mubr.bf16.gmra.mrb[0].mxu0 %v995
  %v1519 = vpop.f32.mrb[0].mxu0
  %v1520 = vadd.f32 %v280, %v1519
  %v1521 = vpop.f32.mrb[0].mxu0
  %v1522 = vpop.f32.mrb[0].mxu0
  %v1523 = vadd.f32 %v280, %v1522
  %v1524 = vpop.f32.mrb[0].mxu0
  %1525 = vmatprep.mubr.bf16.mxu0 0
  %1526 = vmatmul.mubr.bf16.gmra.mrb[0].mxu0 %v998
  %v1527 = vpop.f32.mrb[0].mxu0
  %v1528 = vadd.f32 %v280, %v1527
  %v1529 = vpop.f32.mrb[0].mxu0
  %v1530 = vpop.f32.mrb[0].mxu0
  %v1531 = vadd.f32 %v280, %v1530
  %v1532 = vpop.f32.mrb[0].mxu0
  %1533 = vmatprep.mubr.bf16.mxu0 0
  %1534 = vmatmul.mubr.bf16.gmra.mrb[0].mxu0 %v1001
  %v1535 = vpop.f32.mrb[0].mxu0
  %v1536 = vadd.f32 %v280, %v1535
  %v1537 = vpop.f32.mrb[0].mxu0
  %v1538 = vpop.f32.mrb[0].mxu0
  %v1539 = vadd.f32 %v280, %v1538
  %v1540 = vpop.f32.mrb[0].mxu0
  %1541 = vmatprep.mubr.bf16.mxu0 0
  %1542 = vmatmul.mubr.bf16.gmra.mrb[0].mxu0 %v1004
  %v1543 = vpop.f32.mrb[0].mxu0
  %v1544 = vadd.f32 %v280, %v1543
  %v1545 = vpop.f32.mrb[0].mxu0
  %v1546 = vpop.f32.mrb[0].mxu0
  %v1547 = vadd.f32 %v280, %v1546
  %v1548 = vpop.f32.mrb[0].mxu0
  %1549 = vmatprep.mubr.bf16.mxu0 0
  %1550 = vmatmul.mubr.bf16.gmra.mrb[0].mxu0 %v1007
  %v1551 = vpop.f32.mrb[0].mxu0
  %v1552 = vadd.f32 %v280, %v1551
  %v1553 = vpop.f32.mrb[0].mxu0
  %v1554 = vpop.f32.mrb[0].mxu0
  %v1555 = vadd.f32 %v280, %v1554
  %v1556 = vpop.f32.mrb[0].mxu0
  %1557 = vmatprep.mubr.bf16.mxu0 0
  %1558 = vmatmul.mubr.bf16.gmra.mrb[0].mxu0 %v1010
  %v1559 = vpop.f32.mrb[0].mxu0
  %v1560 = vadd.f32 %v280, %v1559
  %v1561 = vpop.f32.mrb[0].mxu0
  %v1562 = vpop.f32.mrb[0].mxu0
  %v1563 = vadd.f32 %v280, %v1562
  %v1564 = vpop.f32.mrb[0].mxu0
  %1565 = vmatprep.mubr.bf16.mxu0 0
  %1566 = vmatmul.mubr.bf16.gmra.mrb[0].mxu0 %v1013
  %v1567 = vpop.f32.mrb[0].mxu0
  %v1568 = vadd.f32 %v280, %v1567
  %v1569 = vpop.f32.mrb[0].mxu0
  %v1570 = vpop.f32.mrb[0].mxu0
  %v1571 = vadd.f32 %v280, %v1570
  %v1572 = vpop.f32.mrb[0].mxu0
  %1573 = vmatprep.mubr.bf16.mxu0 0
  %1574 = vmatmul.mubr.bf16.gmra.mrb[0].mxu0 %v1016
  %v1575 = vpop.f32.mrb[0].mxu0
  %v1576 = vadd.f32 %v280, %v1575
  %v1577 = vpop.f32.mrb[0].mxu0
  %v1578 = vpop.f32.mrb[0].mxu0
  %v1579 = vadd.f32 %v280, %v1578
  %v1580 = vpop.f32.mrb[0].mxu0
  %1581 = vmatprep.mubr.bf16.mxu0 0
  %1582 = vmatmul.mubr.bf16.gmra.mrb[0].mxu0 %v1019
  %v1583 = vpop.f32.mrb[0].mxu0
  %v1584 = vadd.f32 %v280, %v1583
  %v1585 = vpop.f32.mrb[0].mxu0
  %v1586 = vpop.f32.mrb[0].mxu0
  %v1587 = vadd.f32 %v280, %v1586
  %v1588 = vpop.f32.mrb[0].mxu0
  %1589 = vmatprep.mubr.bf16.mxu0 0
  %1590 = vmatmul.mubr.bf16.gmra.mrb[0].mxu0 %v1022
  %v1591 = vpop.f32.mrb[0].mxu0
  %v1592 = vadd.f32 %v280, %v1591
  %v1593 = vpop.f32.mrb[0].mxu0
  %v1594 = vpop.f32.mrb[0].mxu0
  %v1595 = vadd.f32 %v280, %v1594
  %v1596 = vpop.f32.mrb[0].mxu0
  %1597 = vmatprep.mubr.bf16.mxu0 0
  %1598 = vmatmul.mubr.bf16.gmra.mrb[0].mxu0 %v1025
  %v1599 = vpop.f32.mrb[0].mxu0
  %v1600 = vadd.f32 %v280, %v1599
  %v1601 = vpop.f32.mrb[0].mxu0
  %v1602 = vpop.f32.mrb[0].mxu0
  %v1603 = vadd.f32 %v280, %v1602
  %v1604 = vpop.f32.mrb[0].mxu0
  %1605 = vmatprep.mubr.bf16.mxu0 0
  %1606 = vmatmul.mubr.bf16.gmra.mrb[0].mxu0 %v1028
  %v1607 = vpop.f32.mrb[0].mxu0
  %v1608 = vadd.f32 %v280, %v1607
  %v1609 = vpop.f32.mrb[0].mxu0
  %v1610 = vpop.f32.mrb[0].mxu0
  %v1611 = vadd.f32 %v280, %v1610
  %v1612 = vpop.f32.mrb[0].mxu0
  %1613 = vmatprep.mubr.bf16.mxu0 0
  %1614 = vmatmul.mubr.bf16.gmra.mrb[0].mxu0 %v1031
  %v1615 = vpop.f32.mrb[0].mxu0
  %v1616 = vadd.f32 %v280, %v1615
  %v1617 = vpop.f32.mrb[0].mxu0
  %v1618 = vpop.f32.mrb[0].mxu0
  %v1619 = vadd.f32 %v280, %v1618
  %v1620 = vpop.f32.mrb[0].mxu0
  %1621 = vmatprep.mubr.bf16.mxu0 0
  %1622 = vmatmul.mubr.bf16.gmra.mrb[0].mxu0 %v1034
  %v1623 = vpop.f32.mrb[0].mxu0
  %v1624 = vadd.f32 %v280, %v1623
  %v1625 = vpop.f32.mrb[0].mxu0
  %v1626 = vpop.f32.mrb[0].mxu0
  %v1627 = vadd.f32 %v280, %v1626
  %v1628 = vpop.f32.mrb[0].mxu0
  %1629 = vmatprep.mubr.bf16.mxu0 0
  %1630 = vmatmul.mubr.bf16.gmra.mrb[0].mxu0 %v1037
  %v1631 = vpop.f32.mrb[0].mxu0
  %v1632 = vadd.f32 %v280, %v1631
  %v1633 = vpop.f32.mrb[0].mxu0
  %v1634 = vpop.f32.mrb[0].mxu0
  %v1635 = vadd.f32 %v280, %v1634
  %v1636 = vpop.f32.mrb[0].mxu0
  %1637 = vmatprep.mubr.bf16.mxu0 0
  %1638 = vmatmul.mubr.bf16.gmra.mrb[0].mxu0 %v1040
  %v1639 = vpop.f32.mrb[0].mxu0
  %v1640 = vadd.f32 %v280, %v1639
  %v1641 = vpop.f32.mrb[0].mxu0
  %v1642 = vpop.f32.mrb[0].mxu0
  %v1643 = vadd.f32 %v280, %v1642
  %v1644 = vpop.f32.mrb[0].mxu0
  %1645 = vmatprep.mubr.bf16.mxu0 0
  %1646 = vmatmul.mubr.bf16.gmra.mrb[0].mxu0 %v1043
  %v1647 = vpop.f32.mrb[0].mxu0
  %v1648 = vadd.f32 %v280, %v1647
  %v1649 = vpop.f32.mrb[0].mxu0
  %v1650 = vpop.f32.mrb[0].mxu0
  %v1651 = vadd.f32 %v280, %v1650
  %v1652 = vpop.f32.mrb[0].mxu0
  %1653 = vmatprep.mubr.bf16.mxu0 0
  %1654 = vmatmul.mubr.bf16.gmra.mrb[0].mxu0 %v1046
  %v1655 = vpop.f32.mrb[0].mxu0
  %v1656 = vadd.f32 %v280, %v1655
  %v1657 = vpop.f32.mrb[0].mxu0
  %v1658 = vpop.f32.mrb[0].mxu0
  %v1659 = vadd.f32 %v280, %v1658
  %v1660 = vpop.f32.mrb[0].mxu0
  %1661 = vmatprep.mubr.bf16.mxu0 0
  %1662 = vmatmul.mubr.bf16.gmra.mrb[0].mxu0 %v1049
  %v1663 = vpop.f32.mrb[0].mxu0
  %v1664 = vadd.f32 %v280, %v1663
  %v1665 = vpop.f32.mrb[0].mxu0
  %v1666 = vpop.f32.mrb[0].mxu0
  %v1667 = vadd.f32 %v280, %v1666
  %v1668 = vpop.f32.mrb[0].mxu0
  %1669 = vmatprep.mubr.bf16.mxu0 0
  %1670 = vmatmul.mubr.bf16.gmra.mrb[0].mxu0 %v1052
  %v1671 = vpop.f32.mrb[0].mxu0
  %v1672 = vadd.f32 %v280, %v1671
  %v1673 = vpop.f32.mrb[0].mxu0
  %v1674 = vpop.f32.mrb[0].mxu0
  %v1675 = vadd.f32 %v280, %v1674
  %v1676 = vpop.f32.mrb[0].mxu0
  %1677 = vmatprep.mubr.bf16.mxu0 0
  %1678 = vmatmul.mubr.bf16.gmra.mrb[0].mxu0 %v1055
  %v1679 = vpop.f32.mrb[0].mxu0
  %v1680 = vadd.f32 %v280, %v1679
  %v1681 = vpop.f32.mrb[0].mxu0
  %v1682 = vpop.f32.mrb[0].mxu0
  %v1683 = vadd.f32 %v280, %v1682
  %v1684 = vpop.f32.mrb[0].mxu0
  %1685 = vmatprep.mubr.bf16.mxu0 0
  %1686 = vmatmul.mubr.bf16.gmra.mrb[0].mxu0 %v1058
  %v1687 = vpop.f32.mrb[0].mxu0
  %v1688 = vadd.f32 %v280, %v1687
  %v1689 = vpop.f32.mrb[0].mxu0
  %v1690 = vpop.f32.mrb[0].mxu0
  %v1691 = vadd.f32 %v280, %v1690
  %v1692 = vpop.f32.mrb[0].mxu0
  %1693 = vmatprep.mubr.bf16.mxu0 0
  %1694 = vmatmul.mubr.bf16.gmra.mrb[0].mxu0 %v1061
  %v1695 = vpop.f32.mrb[0].mxu0
  %v1696 = vadd.f32 %v280, %v1695
  %v1697 = vpop.f32.mrb[0].mxu0
  %v1698 = vpop.f32.mrb[0].mxu0
  %v1699 = vadd.f32 %v280, %v1698
  %v1700 = vpop.f32.mrb[0].mxu0
  %1701 = vmatprep.mubr.bf16.mxu0 0
  %1702 = vmatmul.mubr.bf16.gmra.mrb[0].mxu0 %v1064
  %v1703 = vpop.f32.mrb[0].mxu0
  %v1704 = vadd.f32 %v280, %v1703
  %v1705 = vpop.f32.mrb[0].mxu0
  %v1706 = vpop.f32.mrb[0].mxu0
  %v1707 = vadd.f32 %v280, %v1706
  %v1708 = vpop.f32.mrb[0].mxu0
  %1709 = vmatprep.mubr.bf16.mxu0 0
  %1710 = vmatmul.mubr.bf16.gmra.mrb[0].mxu0 %v1067
  %v1711 = vpop.f32.mrb[0].mxu0
  %v1712 = vadd.f32 %v280, %v1711
  %v1713 = vpop.f32.mrb[0].mxu0
  %v1714 = vpop.f32.mrb[0].mxu0
  %v1715 = vadd.f32 %v280, %v1714
  %v1716 = vpop.f32.mrb[0].mxu0
  %1717 = vmatprep.mubr.bf16.mxu0 0
  %1718 = vmatmul.mubr.bf16.gmra.mrb[0].mxu0 %v1070
  %v1719 = vpop.f32.mrb[0].mxu0
  %v1720 = vadd.f32 %v280, %v1719
  %v1721 = vpop.f32.mrb[0].mxu0
  %v1722 = vpop.f32.mrb[0].mxu0
  %v1723 = vadd.f32 %v280, %v1722
  %v1724 = vpop.f32.mrb[0].mxu0
  %1725 = vmatprep.mubr.bf16.mxu0 0
  %1726 = vmatmul.mubr.bf16.gmra.mrb[0].mxu0 %v1073
  %v1727 = vpop.f32.mrb[0].mxu0
  %v1728 = vadd.f32 %v280, %v1727
  %v1729 = vpop.f32.mrb[0].mxu0
  %v1730 = vpop.f32.mrb[0].mxu0
  %v1731 = vadd.f32 %v280, %v1730
  %v1732 = vpop.f32.mrb[0].mxu0
  %1733 = vmatprep.mubr.bf16.mxu0 0
  %1734 = vmatmul.mubr.bf16.gmra.mrb[0].mxu0 %v1076
  %v1735 = vpop.f32.mrb[0].mxu0
  %v1736 = vadd.f32 %v280, %v1735
  %v1737 = vpop.f32.mrb[0].mxu0
  %v1738 = vpop.f32.mrb[0].mxu0
  %v1739 = vadd.f32 %v280, %v1738
  %v1740 = vpop.f32.mrb[0].mxu0
  %1741 = vmatprep.mubr.bf16.mxu0 0
  %1742 = vmatmul.mubr.bf16.gmra.mrb[0].mxu0 %v1079
  %v1743 = vpop.f32.mrb[0].mxu0
  %v1744 = vadd.f32 %v280, %v1743
  %v1745 = vpop.f32.mrb[0].mxu0
  %v1746 = vpop.f32.mrb[0].mxu0
  %v1747 = vadd.f32 %v280, %v1746
  %v1748 = vpop.f32.mrb[0].mxu0
  %1749 = vmatprep.mubr.bf16.mxu0 0
  %1750 = vmatmul.mubr.bf16.gmra.mrb[0].mxu0 %v1082
  %v1751 = vpop.f32.mrb[0].mxu0
  %v1752 = vadd.f32 %v280, %v1751
  %v1753 = vpop.f32.mrb[0].mxu0
  %v1754 = vpop.f32.mrb[0].mxu0
  %v1755 = vadd.f32 %v280, %v1754
  %v1756 = vpop.f32.mrb[0].mxu0
  %1757 = vmatprep.mubr.bf16.mxu0 0
  %1758 = vmatmul.mubr.bf16.gmra.mrb[0].mxu0 %v1085
  %v1759 = vpop.f32.mrb[0].mxu0
  %v1760 = vadd.f32 %v280, %v1759
  %v1761 = vpop.f32.mrb[0].mxu0
  %v1762 = vpop.f32.mrb[0].mxu0
  %v1763 = vadd.f32 %v280, %v1762
  %v1764 = vpop.f32.mrb[0].mxu0
  %1765 = vmatprep.mubr.bf16.mxu0 0
  %1766 = vmatmul.mubr.bf16.gmra.mrb[0].mxu0 %v1088
  %v1767 = vpop.f32.mrb[0].mxu0
  %v1768 = vadd.f32 %v280, %v1767
  %v1769 = vpop.f32.mrb[0].mxu0
  %v1770 = vpop.f32.mrb[0].mxu0
  %v1771 = vadd.f32 %v280, %v1770
  %v1772 = vpop.f32.mrb[0].mxu0
  %1773 = vmatprep.mubr.bf16.mxu0 0
  %1774 = vmatmul.mubr.bf16.gmra.mrb[0].mxu0 %v1091
  %v1775 = vpop.f32.mrb[0].mxu0
  %v1776 = vadd.f32 %v280, %v1775
  %v1777 = vpop.f32.mrb[0].mxu0
  %v1778 = vpop.f32.mrb[0].mxu0
  %v1779 = vadd.f32 %v280, %v1778
  %v1780 = vpop.f32.mrb[0].mxu0
  %1781 = vmatprep.mubr.bf16.mxu0 0
  %1782 = vmatmul.mubr.bf16.gmra.mrb[0].mxu0 %v1094
  %v1783 = vpop.f32.mrb[0].mxu0
  %v1784 = vadd.f32 %v280, %v1783
  %v1785 = vpop.f32.mrb[0].mxu0
  %v1786 = vpop.f32.mrb[0].mxu0
  %v1787 = vadd.f32 %v280, %v1786
  %v1788 = vpop.f32.mrb[0].mxu0
  %1789 = vmatprep.mubr.bf16.mxu0 0
  %1790 = vmatmul.mubr.bf16.gmra.mrb[0].mxu0 %v1097
  %v1791 = vpop.f32.mrb[0].mxu0
  %v1792 = vadd.f32 %v280, %v1791
  %v1793 = vpop.f32.mrb[0].mxu0
  %v1794 = vpop.f32.mrb[0].mxu0
  %v1795 = vadd.f32 %v280, %v1794
  %v1796 = vpop.f32.mrb[0].mxu0
  %1797 = vmatprep.mubr.bf16.mxu0 0
  %1798 = vmatmul.mubr.bf16.gmra.mrb[0].mxu0 %v1100
  %v1799 = vpop.f32.mrb[0].mxu0
  %v1800 = vadd.f32 %v280, %v1799
  %v1801 = vpop.f32.mrb[0].mxu0
  %v1802 = vpop.f32.mrb[0].mxu0
  %v1803 = vadd.f32 %v280, %v1802
  %v1804 = vpop.f32.mrb[0].mxu0
  %1805 = vmatprep.mubr.bf16.mxu0 0
  %1806 = vmatmul.mubr.bf16.gmra.mrb[0].mxu0 %v1103
  %v1807 = vpop.f32.mrb[0].mxu0
  %v1808 = vadd.f32 %v280, %v1807
  %v1809 = vpop.f32.mrb[0].mxu0
  %v1810 = vpop.f32.mrb[0].mxu0
  %v1811 = vadd.f32 %v280, %v1810
  %v1812 = vpop.f32.mrb[0].mxu0
  %1813 = vmatprep.mubr.bf16.mxu0 0
  %1814 = vmatmul.mubr.bf16.gmra.mrb[0].mxu0 %v1106
  %v1815 = vpop.f32.mrb[0].mxu0
  %v1816 = vadd.f32 %v280, %v1815
  %v1817 = vpop.f32.mrb[0].mxu0
  %v1818 = vpop.f32.mrb[0].mxu0
  %v1819 = vadd.f32 %v280, %v1818
  %v1820 = vpop.f32.mrb[0].mxu0
  %1821 = vmatprep.mubr.bf16.mxu0 0
  %1822 = vmatmul.mubr.bf16.gmra.mrb[0].mxu0 %v1109
  %v1823 = vpop.f32.mrb[0].mxu0
  %v1824 = vadd.f32 %v280, %v1823
  %v1825 = vpop.f32.mrb[0].mxu0
  %v1826 = vpop.f32.mrb[0].mxu0
  %v1827 = vadd.f32 %v280, %v1826
  %v1828 = vpop.f32.mrb[0].mxu0
  %1829 = vmatprep.mubr.bf16.mxu0 0
  %1830 = vmatmul.mubr.bf16.gmra.mrb[0].mxu0 %v1112
  %v1831 = vpop.f32.mrb[0].mxu0
  %v1832 = vadd.f32 %v280, %v1831
  %v1833 = vpop.f32.mrb[0].mxu0
  %v1834 = vpop.f32.mrb[0].mxu0
  %v1835 = vadd.f32 %v280, %v1834
  %v1836 = vpop.f32.mrb[0].mxu0
  %1837 = vmatprep.mubr.bf16.mxu0 0
  %1838 = vmatmul.mubr.bf16.gmra.mrb[0].mxu0 %v1115
  %v1839 = vpop.f32.mrb[0].mxu0
  %v1840 = vadd.f32 %v280, %v1839
  %v1841 = vpop.f32.mrb[0].mxu0
  %v1842 = vpop.f32.mrb[0].mxu0
  %v1843 = vadd.f32 %v280, %v1842
  %v1844 = vpop.f32.mrb[0].mxu0
  %1845 = vmatprep.mubr.bf16.mxu0 0
  %1846 = vmatmul.mubr.bf16.gmra.mrb[0].mxu0 %v1118
  %v1847 = vpop.f32.mrb[0].mxu0
  %v1848 = vadd.f32 %v280, %v1847
  %v1849 = vpop.f32.mrb[0].mxu0
  %v1850 = vpop.f32.mrb[0].mxu0
  %v1851 = vadd.f32 %v280, %v1850
  %v1852 = vpop.f32.mrb[0].mxu0
  %1853 = vmatprep.mubr.bf16.mxu0 0
  %1854 = vmatmul.mubr.bf16.gmra.mrb[0].mxu0 %v1121
  %v1855 = vpop.f32.mrb[0].mxu0
  %v1856 = vadd.f32 %v280, %v1855
  %v1857 = vpop.f32.mrb[0].mxu0
  %v1858 = vpop.f32.mrb[0].mxu0
  %v1859 = vadd.f32 %v280, %v1858
  %v1860 = vpop.f32.mrb[0].mxu0
  %1861 = vmatprep.mubr.bf16.mxu0 0
  %1862 = vmatmul.mubr.bf16.gmra.mrb[0].mxu0 %v1124
  %v1863 = vpop.f32.mrb[0].mxu0
  %v1864 = vadd.f32 %v280, %v1863
  %v1865 = vpop.f32.mrb[0].mxu0
  %v1866 = vpop.f32.mrb[0].mxu0
  %v1867 = vadd.f32 %v280, %v1866
  %v1868 = vpop.f32.mrb[0].mxu0
  %1869 = vmatprep.mubr.bf16.mxu0 0
  %1870 = vmatmul.mubr.bf16.gmra.mrb[0].mxu0 %v1127
  %v1871 = vpop.f32.mrb[0].mxu0
  %v1872 = vadd.f32 %v280, %v1871
  %v1873 = vpop.f32.mrb[0].mxu0
  %v1874 = vpop.f32.mrb[0].mxu0
  %v1875 = vadd.f32 %v280, %v1874
  %v1876 = vpop.f32.mrb[0].mxu0
  %1877 = vmatprep.mubr.bf16.mxu0 0
  %1878 = vmatmul.mubr.bf16.gmra.mrb[0].mxu0 %v1130
  %v1879 = vpop.f32.mrb[0].mxu0
  %v1880 = vadd.f32 %v280, %v1879
  %v1881 = vpop.f32.mrb[0].mxu0
  %v1882 = vpop.f32.mrb[0].mxu0
  %v1883 = vadd.f32 %v280, %v1882
  %v1884 = vpop.f32.mrb[0].mxu0
  %1885 = vmatprep.mubr.bf16.mxu0 0
  %1886 = vmatmul.mubr.bf16.gmra.mrb[0].mxu0 %v1133
  %v1887 = vpop.f32.mrb[0].mxu0
  %v1888 = vadd.f32 %v280, %v1887
  %v1889 = vpop.f32.mrb[0].mxu0
  %v1890 = vpop.f32.mrb[0].mxu0
  %v1891 = vadd.f32 %v280, %v1890
  %v1892 = vpop.f32.mrb[0].mxu0
  %1893 = vmatprep.mubr.bf16.mxu0 0
  %1894 = vmatmul.mubr.bf16.gmra.mrb[0].mxu0 %v1136
  %v1895 = vpop.f32.mrb[0].mxu0
  %v1896 = vadd.f32 %v280, %v1895
  %v1897 = vpop.f32.mrb[0].mxu0
  %v1898 = vpop.f32.mrb[0].mxu0
  %v1899 = vadd.f32 %v280, %v1898
  %v1900 = vpop.f32.mrb[0].mxu0
  %1901 = vmatprep.mubr.bf16.mxu0 0
  %1902 = vmatmul.mubr.bf16.gmra.mrb[0].mxu0 %v1139
  %v1903 = vpop.f32.mrb[0].mxu0
  %v1904 = vadd.f32 %v280, %v1903
  %v1905 = vpop.f32.mrb[0].mxu0
  %v1906 = vpop.f32.mrb[0].mxu0
  %v1907 = vadd.f32 %v280, %v1906
  %v1908 = vpop.f32.mrb[0].mxu0
  %1909 = vmatprep.mubr.bf16.mxu0 0
  %1910 = vmatmul.mubr.bf16.gmra.mrb[0].mxu0 %v1142
  %v1911 = vpop.f32.mrb[0].mxu0
  %v1912 = vadd.f32 %v280, %v1911
  %v1913 = vpop.f32.mrb[0].mxu0
  %v1914 = vpop.f32.mrb[0].mxu0
  %v1915 = vadd.f32 %v280, %v1914
  %v1916 = vpop.f32.mrb[0].mxu0
  %1917 = vmatprep.mubr.bf16.mxu0 0
  %1918 = vmatmul.mubr.bf16.gmra.mrb[0].mxu0 %v1145
  %v1919 = vpop.f32.mrb[0].mxu0
  %v1920 = vadd.f32 %v280, %v1919
  %v1921 = vpop.f32.mrb[0].mxu0
  %v1922 = vpop.f32.mrb[0].mxu0
  %v1923 = vadd.f32 %v280, %v1922
  %v1924 = vpop.f32.mrb[0].mxu0
  %1925 = vmatprep.mubr.bf16.mxu0 0
  %1926 = vmatmul.mubr.bf16.gmra.mrb[0].mxu0 %v1148
  %v1927 = vpop.f32.mrb[0].mxu0
  %v1928 = vadd.f32 %v280, %v1927
  %v1929 = vpop.f32.mrb[0].mxu0
  %v1930 = vpop.f32.mrb[0].mxu0
  %v1931 = vadd.f32 %v280, %v1930
  %v1932 = vpop.f32.mrb[0].mxu0
  %1933 = vmatprep.mubr.bf16.mxu0 0
  %1934 = vmatmul.mubr.bf16.gmra.mrb[0].mxu0 %v1151
  %v1935 = vpop.f32.mrb[0].mxu0
  %v1936 = vadd.f32 %v280, %v1935
  %v1937 = vpop.f32.mrb[0].mxu0
  %v1938 = vpop.f32.mrb[0].mxu0
  %v1939 = vadd.f32 %v280, %v1938
  %v1940 = vpop.f32.mrb[0].mxu0
  %1941 = vmatprep.mubr.bf16.mxu0 0
  %1942 = vmatmul.mubr.bf16.gmra.mrb[0].mxu0 %v1154
  %v1943 = vpop.f32.mrb[0].mxu0
  %v1944 = vadd.f32 %v280, %v1943
  %v1945 = vpop.f32.mrb[0].mxu0
  %v1946 = vpop.f32.mrb[0].mxu0
  %v1947 = vadd.f32 %v280, %v1946
  %v1948 = vpop.f32.mrb[0].mxu0
  %1949 = vmatprep.mubr.bf16.mxu0 0
  %1950 = vmatmul.mubr.bf16.gmra.mrb[0].mxu0 %v1157
  %v1951 = vpop.f32.mrb[0].mxu0
  %v1952 = vadd.f32 %v280, %v1951
  %v1953 = vpop.f32.mrb[0].mxu0
  %v1954 = vpop.f32.mrb[0].mxu0
  %v1955 = vadd.f32 %v280, %v1954
  %v1956 = vpop.f32.mrb[0].mxu0
  %1957 = vmatprep.mubr.bf16.mxu0 0
  %1958 = vmatmul.mubr.bf16.gmra.mrb[0].mxu0 %v1160
  %v1959 = vpop.f32.mrb[0].mxu0
  %v1960 = vadd.f32 %v280, %v1959
  %v1961 = vpop.f32.mrb[0].mxu0
  %v1962 = vpop.f32.mrb[0].mxu0
  %v1963 = vadd.f32 %v280, %v1962
  %v1964 = vpop.f32.mrb[0].mxu0
  %1965 = vmatprep.mubr.bf16.mxu0 0
  %1966 = vmatmul.mubr.bf16.gmra.mrb[0].mxu0 %v1163
  %v1967 = vpop.f32.mrb[0].mxu0
  %v1968 = vadd.f32 %v280, %v1967
  %v1969 = vpop.f32.mrb[0].mxu0
  %v1970 = vpop.f32.mrb[0].mxu0
  %v1971 = vadd.f32 %v280, %v1970
  %v1972 = vpop.f32.mrb[0].mxu0
  %1973 = vmatprep.mubr.bf16.mxu0 0
  %1974 = vmatmul.mubr.bf16.gmra.mrb[0].mxu0 %v1166
  %v1975 = vpop.f32.mrb[0].mxu0
  %v1976 = vadd.f32 %v280, %v1975
  %v1977 = vpop.f32.mrb[0].mxu0
  %v1978 = vpop.f32.mrb[0].mxu0
  %v1979 = vadd.f32 %v280, %v1978
  %v1980 = vpop.f32.mrb[0].mxu0
  %1981 = vmatprep.mubr.bf16.mxu0 0
  %1982 = vmatmul.mubr.bf16.gmra.mrb[0].mxu0 %v1169
  %v1983 = vpop.f32.mrb[0].mxu0
  %v1984 = vadd.f32 %v280, %v1983
  %v1985 = vpop.f32.mrb[0].mxu0
  %v1986 = vpop.f32.mrb[0].mxu0
  %v1987 = vadd.f32 %v280, %v1986
  %v1988 = vpop.f32.mrb[0].mxu0
  %1989 = vmatprep.mubr.bf16.mxu0 0
  %1990 = vmatmul.mubr.bf16.gmra.mrb[0].mxu0 %v1172
  %v1991 = vpop.f32.mrb[0].mxu0
  %v1992 = vadd.f32 %v280, %v1991
  %v1993 = vpop.f32.mrb[0].mxu0
  %v1994 = vpop.f32.mrb[0].mxu0
  %v1995 = vadd.f32 %v280, %v1994
  %v1996 = vpop.f32.mrb[0].mxu0
  %1997 = vmatprep.mubr.bf16.mxu0 0
  %1998 = vmatmul.mubr.bf16.gmra.mrb[0].mxu0 %v1175
  %v1999 = vpop.f32.mrb[0].mxu0
  %v2000 = vadd.f32 %v280, %v1999
  %v2001 = vpop.f32.mrb[0].mxu0
  %v2002 = vpop.f32.mrb[0].mxu0
  %v2003 = vadd.f32 %v280, %v2002
  %v2004 = vpop.f32.mrb[0].mxu0
  %2005 = vmatprep.mubr.bf16.mxu0 0
  %2006 = vmatmul.mubr.bf16.gmra.mrb[0].mxu0 %v1178
  %v2007 = vpop.f32.mrb[0].mxu0
  %v2008 = vadd.f32 %v280, %v2007
  %v2009 = vpop.f32.mrb[0].mxu0
  %v2010 = vpop.f32.mrb[0].mxu0
  %v2011 = vadd.f32 %v280, %v2010
  %v2012 = vpop.f32.mrb[0].mxu0
  %2013 = vmatprep.mubr.bf16.mxu0 0
  %2014 = vmatmul.mubr.bf16.gmra.mrb[0].mxu0 %v1181
  %v2015 = vpop.f32.mrb[0].mxu0
  %v2016 = vadd.f32 %v280, %v2015
  %v2017 = vpop.f32.mrb[0].mxu0
  %v2018 = vpop.f32.mrb[0].mxu0
  %v2019 = vadd.f32 %v280, %v2018
  %v2020 = vpop.f32.mrb[0].mxu0
  %2021 = vmatprep.mubr.bf16.mxu0 0
  %2022 = vmatmul.mubr.bf16.gmra.mrb[0].mxu0 %v1184
  %v2023 = vpop.f32.mrb[0].mxu0
  %v2024 = vadd.f32 %v280, %v2023
  %v2025 = vpop.f32.mrb[0].mxu0
  %v2026 = vpop.f32.mrb[0].mxu0
  %v2027 = vadd.f32 %v280, %v2026
  %v2028 = vpop.f32.mrb[0].mxu0
  %2029 = vmatprep.mubr.bf16.mxu0 0
  %2030 = vmatmul.mubr.bf16.gmra.mrb[0].mxu0 %v1187
  %v2031 = vpop.f32.mrb[0].mxu0
  %v2032 = vadd.f32 %v280, %v2031
  %v2033 = vpop.f32.mrb[0].mxu0
  %v2034 = vpop.f32.mrb[0].mxu0
  %v2035 = vadd.f32 %v280, %v2034
  %v2036 = vpop.f32.mrb[0].mxu0
  %2037 = vmatprep.mubr.bf16.mxu0 0
  %2038 = vmatmul.mubr.bf16.gmra.mrb[0].mxu0 %v1190
  %v2039 = vpop.f32.mrb[0].mxu0
  %v2040 = vadd.f32 %v280, %v2039
  %v2041 = vpop.f32.mrb[0].mxu0
  %v2042 = vpop.f32.mrb[0].mxu0
  %v2043 = vadd.f32 %v280, %v2042
  %v2044 = vpop.f32.mrb[0].mxu0
  %2045 = vmatprep.mubr.bf16.mxu0 0
  %2046 = vmatmul.mubr.bf16.gmra.mrb[0].mxu0 %v1193
  %v2047 = vpop.f32.mrb[0].mxu0
  %v2048 = vadd.f32 %v280, %v2047
  %v2049 = vpop.f32.mrb[0].mxu0
  %v2050 = vpop.f32.mrb[0].mxu0
  %v2051 = vadd.f32 %v280, %v2050
  %v2052 = vpop.f32.mrb[0].mxu0
  %2053 = vmatprep.mubr.bf16.mxu0 0
  %2054 = vmatmul.mubr.bf16.gmra.mrb[0].mxu0 %v1196
  %v2055 = vpop.f32.mrb[0].mxu0
  %v2056 = vadd.f32 %v280, %v2055
  %v2057 = vpop.f32.mrb[0].mxu0
  %v2058 = vpop.f32.mrb[0].mxu0
  %v2059 = vadd.f32 %v280, %v2058
  %v2060 = vpop.f32.mrb[0].mxu0
  %2061 = vmatprep.mubr.bf16.mxu0 0
  %2062 = vmatmul.mubr.bf16.gmra.mrb[0].mxu0 %v1199
  %v2063 = vpop.f32.mrb[0].mxu0
  %v2064 = vadd.f32 %v280, %v2063
  %v2065 = vpop.f32.mrb[0].mxu0
  %v2066 = vpop.f32.mrb[0].mxu0
  %v2067 = vadd.f32 %v280, %v2066
  %v2068 = vpop.f32.mrb[0].mxu0
  %2069 = vmatprep.mubr.bf16.mxu0 0
  %2070 = vmatmul.mubr.bf16.gmra.mrb[0].mxu0 %v1202
  %v2071 = vpop.f32.mrb[0].mxu0
  %v2072 = vadd.f32 %v280, %v2071
  %v2073 = vpop.f32.mrb[0].mxu0
  %v2074 = vpop.f32.mrb[0].mxu0
  %v2075 = vadd.f32 %v280, %v2074
  %v2076 = vpop.f32.mrb[0].mxu0
  %2077 = vmatprep.mubr.bf16.mxu0 0
  %2078 = vmatmul.mubr.bf16.gmra.mrb[0].mxu0 %v1205
  %v2079 = vpop.f32.mrb[0].mxu0
  %v2080 = vadd.f32 %v280, %v2079
  %v2081 = vpop.f32.mrb[0].mxu0
  %v2082 = vpop.f32.mrb[0].mxu0
  %v2083 = vadd.f32 %v280, %v2082
  %v2084 = vpop.f32.mrb[0].mxu0
  %2085 = vmatprep.mubr.bf16.mxu0 0
  %2086 = vmatmul.mubr.bf16.gmra.mrb[0].mxu0 %v1208
  %v2087 = vpop.f32.mrb[0].mxu0
  %v2088 = vadd.f32 %v280, %v2087
  %v2089 = vpop.f32.mrb[0].mxu0
  %v2090 = vpop.f32.mrb[0].mxu0
  %v2091 = vadd.f32 %v280, %v2090
  %v2092 = vpop.f32.mrb[0].mxu0
  %2093 = vmatprep.mubr.bf16.mxu0 0
  %2094 = vmatmul.mubr.bf16.gmra.mrb[0].mxu0 %v1211
  %v2095 = vpop.f32.mrb[0].mxu0
  %v2096 = vadd.f32 %v280, %v2095
  %v2097 = vpop.f32.mrb[0].mxu0
  %v2098 = vpop.f32.mrb[0].mxu0
  %v2099 = vadd.f32 %v280, %v2098
  %v2100 = vpop.f32.mrb[0].mxu0
  %2101 = vmatprep.mubr.bf16.mxu0 0
  %2102 = vmatmul.mubr.bf16.gmra.mrb[0].mxu0 %v1214
  %v2103 = vpop.f32.mrb[0].mxu0
  %v2104 = vadd.f32 %v280, %v2103
  %v2105 = vpop.f32.mrb[0].mxu0
  %v2106 = vpop.f32.mrb[0].mxu0
  %v2107 = vadd.f32 %v280, %v2106
  %v2108 = vpop.f32.mrb[0].mxu0
  %2109 = vmatprep.mubr.bf16.mxu0 0
  %2110 = vmatmul.mubr.bf16.gmra.mrb[0].mxu0 %v1217
  %v2111 = vpop.f32.mrb[0].mxu0
  %v2112 = vadd.f32 %v280, %v2111
  %v2113 = vpop.f32.mrb[0].mxu0
  %v2114 = vpop.f32.mrb[0].mxu0
  %v2115 = vadd.f32 %v280, %v2114
  %v2116 = vpop.f32.mrb[0].mxu0
  %2117 = vmatprep.mubr.bf16.mxu0 0
  %2118 = vmatmul.mubr.bf16.gmra.mrb[0].mxu0 %v1220
  %v2119 = vpop.f32.mrb[0].mxu0
  %v2120 = vadd.f32 %v280, %v2119
  %v2121 = vpop.f32.mrb[0].mxu0
  %v2122 = vpop.f32.mrb[0].mxu0
  %v2123 = vadd.f32 %v280, %v2122
  %v2124 = vpop.f32.mrb[0].mxu0
  %2125 = vmatprep.mubr.bf16.mxu0 0
  %2126 = vmatmul.mubr.bf16.gmra.mrb[0].mxu0 %v1223
  %v2127 = vpop.f32.mrb[0].mxu0
  %v2128 = vadd.f32 %v280, %v2127
  %v2129 = vpop.f32.mrb[0].mxu0
  %v2130 = vpop.f32.mrb[0].mxu0
  %v2131 = vadd.f32 %v280, %v2130
  %v2132 = vpop.f32.mrb[0].mxu0
  %2133 = vmatprep.mubr.bf16.mxu0 0
  %2134 = vmatmul.mubr.bf16.gmra.mrb[0].mxu0 %v1226
  %v2135 = vpop.f32.mrb[0].mxu0
  %v2136 = vadd.f32 %v280, %v2135
  %v2137 = vpop.f32.mrb[0].mxu0
  %v2138 = vpop.f32.mrb[0].mxu0
  %v2139 = vadd.f32 %v280, %v2138
  %v2140 = vpop.f32.mrb[0].mxu0
  %2141 = vmatprep.mubr.bf16.mxu0 0
  %2142 = vmatmul.mubr.bf16.gmra.mrb[0].mxu0 %v1229
  %v2143 = vpop.f32.mrb[0].mxu0
  %v2144 = vadd.f32 %v280, %v2143
  %v2145 = vpop.f32.mrb[0].mxu0
  %v2146 = vpop.f32.mrb[0].mxu0
  %v2147 = vadd.f32 %v280, %v2146
  %v2148 = vpop.f32.mrb[0].mxu0
  %2149 = vmatprep.mubr.bf16.mxu0 0
  %2150 = vmatmul.mubr.bf16.gmra.mrb[0].mxu0 %v1232
  %v2151 = vpop.f32.mrb[0].mxu0
  %v2152 = vadd.f32 %v280, %v2151
  %v2153 = vpop.f32.mrb[0].mxu0
  %v2154 = vpop.f32.mrb[0].mxu0
  %v2155 = vadd.f32 %v280, %v2154
  %v2156 = vpop.f32.mrb[0].mxu0
  %2157 = vmatprep.mubr.bf16.mxu0 0
  %2158 = vmatmul.mubr.bf16.gmra.mrb[0].mxu0 %v1235
  %v2159 = vpop.f32.mrb[0].mxu0
  %v2160 = vadd.f32 %v280, %v2159
  %v2161 = vpop.f32.mrb[0].mxu0
  %v2162 = vpop.f32.mrb[0].mxu0
  %v2163 = vadd.f32 %v280, %v2162
  %v2164 = vpop.f32.mrb[0].mxu0
  %2165 = vmatprep.mubr.bf16.mxu0 0
  %2166 = vmatmul.mubr.bf16.gmra.mrb[0].mxu0 %v1238
  %v2167 = vpop.f32.mrb[0].mxu0
  %v2168 = vadd.f32 %v280, %v2167
  %v2169 = vpop.f32.mrb[0].mxu0
  %v2170 = vpop.f32.mrb[0].mxu0
  %v2171 = vadd.f32 %v280, %v2170
  %v2172 = vpop.f32.mrb[0].mxu0
  %2173 = vmatprep.mubr.bf16.mxu0 0
  %2174 = vmatmul.mubr.bf16.gmra.mrb[0].mxu0 %v1241
  %v2175 = vpop.f32.mrb[0].mxu0
  %v2176 = vadd.f32 %v280, %v2175
  %v2177 = vpop.f32.mrb[0].mxu0
  %v2178 = vpop.f32.mrb[0].mxu0
  %v2179 = vadd.f32 %v280, %v2178
  %v2180 = vpop.f32.mrb[0].mxu0
  %2181 = vmatprep.mubr.bf16.mxu0 0
  %2182 = vmatmul.mubr.bf16.gmra.mrb[0].mxu0 %v1244
  %v2183 = vpop.f32.mrb[0].mxu0
  %v2184 = vadd.f32 %v280, %v2183
  %v2185 = vpop.f32.mrb[0].mxu0
  %v2186 = vpop.f32.mrb[0].mxu0
  %v2187 = vadd.f32 %v280, %v2186
  %v2188 = vpop.f32.mrb[0].mxu0
  %2189 = vmatprep.mubr.bf16.mxu0 0
  %2190 = vmatmul.mubr.bf16.gmra.mrb[0].mxu0 %v1247
  %v2191 = vpop.f32.mrb[0].mxu0
  %v2192 = vadd.f32 %v280, %v2191
  %v2193 = vpop.f32.mrb[0].mxu0
  %v2194 = vpop.f32.mrb[0].mxu0
  %v2195 = vadd.f32 %v280, %v2194
  %v2196 = vpop.f32.mrb[0].mxu0
  %2197 = vmatprep.mubr.bf16.mxu0 0
  %2198 = vmatmul.mubr.bf16.gmra.mrb[0].mxu0 %v1250
  %v2199 = vpop.f32.mrb[0].mxu0
  %v2200 = vadd.f32 %v280, %v2199
  %v2201 = vpop.f32.mrb[0].mxu0
  %v2202 = vpop.f32.mrb[0].mxu0
  %v2203 = vadd.f32 %v280, %v2202
  %v2204 = vpop.f32.mrb[0].mxu0
  %2205 = vmatprep.mubr.bf16.mxu0 0
  %2206 = vmatmul.mubr.bf16.gmra.mrb[0].mxu0 %v1253
  %v2207 = vpop.f32.mrb[0].mxu0
  %v2208 = vadd.f32 %v280, %v2207
  %v2209 = vpop.f32.mrb[0].mxu0
  %v2210 = vpop.f32.mrb[0].mxu0
  %v2211 = vadd.f32 %v280, %v2210
  %v2212 = vpop.f32.mrb[0].mxu0
  %2213 = vmatprep.mubr.bf16.mxu0 0
  %2214 = vmatmul.mubr.bf16.gmra.mrb[0].mxu0 %v1256
  %v2215 = vpop.f32.mrb[0].mxu0
  %v2216 = vadd.f32 %v280, %v2215
  %v2217 = vpop.f32.mrb[0].mxu0
  %v2218 = vpop.f32.mrb[0].mxu0
  %v2219 = vadd.f32 %v280, %v2218
  %v2220 = vpop.f32.mrb[0].mxu0
  %2221 = vmatprep.mubr.bf16.mxu0 0
  %2222 = vmatmul.mubr.bf16.gmra.mrb[0].mxu0 %v1259
  %v2223 = vpop.f32.mrb[0].mxu0
  %v2224 = vadd.f32 %v280, %v2223
  %v2225 = vpop.f32.mrb[0].mxu0
  %v2226 = vpop.f32.mrb[0].mxu0
  %v2227 = vadd.f32 %v280, %v2226
  %v2228 = vpop.f32.mrb[0].mxu0
  %2229 = vmatprep.mubr.bf16.mxu0 0
  %2230 = vmatmul.mubr.bf16.gmra.mrb[0].mxu0 %v1262
  %v2231 = vpop.f32.mrb[0].mxu0
  %v2232 = vadd.f32 %v280, %v2231
  %v2233 = vpop.f32.mrb[0].mxu0
  %v2234 = vpop.f32.mrb[0].mxu0
  %v2235 = vadd.f32 %v280, %v2234
  %v2236 = vpop.f32.mrb[0].mxu0
  %2237 = vmatprep.mubr.bf16.mxu0 0
  %2238 = vmatmul.mubr.bf16.gmra.mrb[0].mxu0 %v1265
  %v2239 = vpop.f32.mrb[0].mxu0
  %v2240 = vadd.f32 %v280, %v2239
  %v2241 = vpop.f32.mrb[0].mxu0
  %v2242 = vpop.f32.mrb[0].mxu0
  %v2243 = vadd.f32 %v280, %v2242
  %v2244 = vpop.f32.mrb[0].mxu0
  %2245 = vmatprep.mubr.bf16.mxu0 0
  %2246 = vmatmul.mubr.bf16.gmra.mrb[0].mxu0 %v1268
  %v2247 = vpop.f32.mrb[0].mxu0
  %v2248 = vadd.f32 %v280, %v2247
  %v2249 = vpop.f32.mrb[0].mxu0
  %v2250 = vpop.f32.mrb[0].mxu0
  %v2251 = vadd.f32 %v280, %v2250
  %v2252 = vpop.f32.mrb[0].mxu0
  %2253 = vmatprep.mubr.bf16.mxu0 0
  %2254 = vmatmul.mubr.bf16.gmra.mrb[0].mxu0 %v1271
  %v2255 = vpop.f32.mrb[0].mxu0
  %v2256 = vadd.f32 %v280, %v2255
  %v2257 = vpop.f32.mrb[0].mxu0
  %v2258 = vpop.f32.mrb[0].mxu0
  %v2259 = vadd.f32 %v280, %v2258
  %v2260 = vpop.f32.mrb[0].mxu0
  %2261 = vmatprep.mubr.bf16.mxu0 0
  %2262 = vmatmul.mubr.bf16.gmra.mrb[0].mxu0 %v1274
  %v2263 = vpop.f32.mrb[0].mxu0
  %v2264 = vadd.f32 %v280, %v2263
  %v2265 = vpop.f32.mrb[0].mxu0
  %v2266 = vpop.f32.mrb[0].mxu0
  %v2267 = vadd.f32 %v280, %v2266
  %v2268 = vpop.f32.mrb[0].mxu0
  %2269 = vmatprep.mubr.bf16.mxu0 0
  %2270 = vmatmul.mubr.bf16.gmra.mrb[0].mxu0 %v1277
  %v2271 = vpop.f32.mrb[0].mxu0
  %v2272 = vadd.f32 %v280, %v2271
  %v2273 = vpop.f32.mrb[0].mxu0
  %v2274 = vpop.f32.mrb[0].mxu0
  %v2275 = vadd.f32 %v280, %v2274
  %v2276 = vpop.f32.mrb[0].mxu0
  %2277 = vmatprep.mubr.bf16.mxu0 0
  %2278 = vmatmul.mubr.bf16.gmra.mrb[0].mxu0 %v1280
  %v2279 = vpop.f32.mrb[0].mxu0
  %v2280 = vadd.f32 %v280, %v2279
  %v2281 = vpop.f32.mrb[0].mxu0
  %v2282 = vpop.f32.mrb[0].mxu0
  %v2283 = vadd.f32 %v280, %v2282
  %v2284 = vpop.f32.mrb[0].mxu0
  %2285 = vmatprep.mubr.bf16.mxu0 0
  %2286 = vmatmul.mubr.bf16.gmra.mrb[0].mxu0 %v1283
  %v2287 = vpop.f32.mrb[0].mxu0
  %v2288 = vadd.f32 %v280, %v2287
  %v2289 = vpop.f32.mrb[0].mxu0
  %v2290 = vpop.f32.mrb[0].mxu0
  %v2291 = vadd.f32 %v280, %v2290
  %v2292 = vpop.f32.mrb[0].mxu0
  %2293 = vmatprep.mubr.bf16.mxu0 0
  %2294 = vmatmul.mubr.bf16.gmra.mrb[0].mxu0 %v1286
  %v2295 = vpop.f32.mrb[0].mxu0
  %v2296 = vadd.f32 %v280, %v2295
  %v2297 = vpop.f32.mrb[0].mxu0
  %v2298 = vpop.f32.mrb[0].mxu0
  %v2299 = vadd.f32 %v280, %v2298
  %v2300 = vpop.f32.mrb[0].mxu0
  %2301 = vmatprep.mubr.bf16.mxu0 0
  %2302 = vmatmul.mubr.bf16.gmra.mrb[0].mxu0 %v1289
  %v2303 = vpop.f32.mrb[0].mxu0
  %v2304 = vadd.f32 %v280, %v2303
  %v2305 = vpop.f32.mrb[0].mxu0
  %v2306 = vpop.f32.mrb[0].mxu0
  %v2307 = vadd.f32 %v280, %v2306
  %v2308 = vpop.f32.mrb[0].mxu0
  %2309 = vmatprep.mubr.bf16.mxu0 0
  %2310 = vmatmul.mubr.bf16.gmra.mrb[0].mxu0 %v1292
  %v2311 = vpop.f32.mrb[0].mxu0
  %v2312 = vadd.f32 %v280, %v2311
  %v2313 = vpop.f32.mrb[0].mxu0
  %v2314 = vpop.f32.mrb[0].mxu0
  %v2315 = vadd.f32 %v280, %v2314
  %v2316 = vpop.f32.mrb[0].mxu0
  %2317 = vmatprep.mubr.bf16.mxu0 0
  %2318 = vmatmul.mubr.bf16.gmra.mrb[0].mxu0 %v1295
  %v2319 = vpop.f32.mrb[0].mxu0
  %v2320 = vadd.f32 %v280, %v2319
  %v2321 = vpop.f32.mrb[0].mxu0
  %v2322 = vpop.f32.mrb[0].mxu0
  %v2323 = vadd.f32 %v280, %v2322
  %v2324 = vpop.f32.mrb[0].mxu0
  %2325 = vmatprep.mubr.bf16.mxu0 0
  %2326 = vmatmul.mubr.bf16.gmra.mrb[0].mxu0 %v1298
  %v2327 = vpop.f32.mrb[0].mxu0
  %v2328 = vadd.f32 %v280, %v2327
  %v2329 = vpop.f32.mrb[0].mxu0
  %v2330 = vpop.f32.mrb[0].mxu0
  %v2331 = vadd.f32 %v280, %v2330
  %v2332 = vpop.f32.mrb[0].mxu0
  %2333 = vmatprep.mubr.bf16.mxu0 0
  %2334 = vmatmul.mubr.bf16.gmra.mrb[0].mxu0 %v1301
  %v2335 = vpop.f32.mrb[0].mxu0
  %v2336 = vadd.f32 %v280, %v2335
  %v2337 = vpop.f32.mrb[0].mxu0
  %v2338 = vpop.f32.mrb[0].mxu0
  %v2339 = vadd.f32 %v280, %v2338
  %v2340 = vpop.f32.mrb[0].mxu0
  %2341 = vmatprep.mubr.bf16.mxu0 0
  %2342 = vmatmul.mubr.bf16.gmra.mrb[0].mxu0 %v1304
  %v2343 = vpop.f32.mrb[0].mxu0
  %v2344 = vadd.f32 %v280, %v2343
  %v2345 = vpop.f32.mrb[0].mxu0
  %v2346 = vpop.f32.mrb[0].mxu0
  %v2347 = vadd.f32 %v280, %v2346
  %v2348 = vpop.f32.mrb[0].mxu0
  %2349 = vmatprep.mubr.bf16.mxu0 0
  %2350 = vmatmul.mubr.bf16.gmra.mrb[0].mxu0 %v1307
  %v2351 = vpop.f32.mrb[0].mxu0
  %v2352 = vadd.f32 %v280, %v2351
  %v2353 = vpop.f32.mrb[0].mxu0
  %v2354 = vpop.f32.mrb[0].mxu0
  %v2355 = vadd.f32 %v280, %v2354
  %v2356 = vpop.f32.mrb[0].mxu0
  %2357 = vmatprep.mubr.bf16.mxu0 0
  %2358 = vmatmul.mubr.bf16.gmra.mrb[0].mxu0 %v1310
  %v2359 = vpop.f32.mrb[0].mxu0
  %v2360 = vadd.f32 %v280, %v2359
  %v2361 = vpop.f32.mrb[0].mxu0
  %v2362 = vpop.f32.mrb[0].mxu0
  %v2363 = vadd.f32 %v280, %v2362
  %v2364 = vpop.f32.mrb[0].mxu0
  %2365 = vmatprep.mubr.bf16.mxu0 0
  %2366 = vmatmul.mubr.bf16.gmra.mrb[0].mxu0 %v1313
  %v2367 = vpop.f32.mrb[0].mxu0
  %v2368 = vadd.f32 %v280, %v2367
  %v2369 = vpop.f32.mrb[0].mxu0
  %v2370 = vpop.f32.mrb[0].mxu0
  %v2371 = vadd.f32 %v280, %v2370
  %v2372 = vpop.f32.mrb[0].mxu0
  %2373 = vmatprep.mubr.bf16.mxu0 0
  %2374 = vmatmul.mubr.bf16.gmra.mrb[0].mxu0 %v1316
  %v2375 = vpop.f32.mrb[0].mxu0
  %v2376 = vadd.f32 %v280, %v2375
  %v2377 = vpop.f32.mrb[0].mxu0
  %v2378 = vpop.f32.mrb[0].mxu0
  %v2379 = vadd.f32 %v280, %v2378
  %v2380 = vpop.f32.mrb[0].mxu0
  %2381 = vdwg.mxu0
  %vm2382 = vcmp.gt.f32.partialorder %v1360, 0.0
  %vm2383 = vcmp.gt.f32.partialorder %v1363, 0.0
  %vm2384 = vcmp.gt.f32.partialorder %v1368, 0.0
  %vm2385 = vcmp.gt.f32.partialorder %v1371, 0.0
  %vm2386 = vcmp.gt.f32.partialorder %v1376, 0.0
  %vm2387 = vcmp.gt.f32.partialorder %v1379, 0.0
  %vm2388 = vcmp.gt.f32.partialorder %v1384, 0.0
  %vm2389 = vcmp.gt.f32.partialorder %v1387, 0.0
  %vm2390 = vcmp.gt.f32.partialorder %v1392, 0.0
  %vm2391 = vcmp.gt.f32.partialorder %v1395, 0.0
  %vm2392 = vcmp.gt.f32.partialorder %v1400, 0.0
  %vm2393 = vcmp.gt.f32.partialorder %v1403, 0.0
  %vm2394 = vcmp.gt.f32.partialorder %v1408, 0.0
  %vm2395 = vcmp.gt.f32.partialorder %v1411, 0.0
  %vm2396 = vcmp.gt.f32.partialorder %v1416, 0.0
  %vm2397 = vcmp.gt.f32.partialorder %v1419, 0.0
  %vm2398 = vcmp.gt.f32.partialorder %v1424, 0.0
  %vm2399 = vcmp.gt.f32.partialorder %v1427, 0.0
  %vm2400 = vcmp.gt.f32.partialorder %v1432, 0.0
  %vm2401 = vcmp.gt.f32.partialorder %v1435, 0.0
  %vm2402 = vcmp.gt.f32.partialorder %v1440, 0.0
  %vm2403 = vcmp.gt.f32.partialorder %v1443, 0.0
  %vm2404 = vcmp.gt.f32.partialorder %v1448, 0.0
  %vm2405 = vcmp.gt.f32.partialorder %v1451, 0.0
  %vm2406 = vcmp.gt.f32.partialorder %v1456, 0.0
  %vm2407 = vcmp.gt.f32.partialorder %v1459, 0.0
  %vm2408 = vcmp.gt.f32.partialorder %v1464, 0.0
  %vm2409 = vcmp.gt.f32.partialorder %v1467, 0.0
  %vm2410 = vcmp.gt.f32.partialorder %v1472, 0.0
  %vm2411 = vcmp.gt.f32.partialorder %v1475, 0.0
  %vm2412 = vcmp.gt.f32.partialorder %v1480, 0.0
  %vm2413 = vcmp.gt.f32.partialorder %v1483, 0.0
  %vm2414 = vcmp.gt.f32.partialorder %v1488, 0.0
  %vm2415 = vcmp.gt.f32.partialorder %v1491, 0.0
  %vm2416 = vcmp.gt.f32.partialorder %v1496, 0.0
  %vm2417 = vcmp.gt.f32.partialorder %v1499, 0.0
  %vm2418 = vcmp.gt.f32.partialorder %v1504, 0.0
  %vm2419 = vcmp.gt.f32.partialorder %v1507, 0.0
  %vm2420 = vcmp.gt.f32.partialorder %v1512, 0.0
  %vm2421 = vcmp.gt.f32.partialorder %v1515, 0.0
  %vm2422 = vcmp.gt.f32.partialorder %v1520, 0.0
  %vm2423 = vcmp.gt.f32.partialorder %v1523, 0.0
  %vm2424 = vcmp.gt.f32.partialorder %v1528, 0.0
  %vm2425 = vcmp.gt.f32.partialorder %v1531, 0.0
  %vm2426 = vcmp.gt.f32.partialorder %v1536, 0.0
  %vm2427 = vcmp.gt.f32.partialorder %v1539, 0.0
  %vm2428 = vcmp.gt.f32.partialorder %v1544, 0.0
  %vm2429 = vcmp.gt.f32.partialorder %v1547, 0.0
  %vm2430 = vcmp.gt.f32.partialorder %v1552, 0.0
  %vm2431 = vcmp.gt.f32.partialorder %v1555, 0.0
  %vm2432 = vcmp.gt.f32.partialorder %v1560, 0.0
  %vm2433 = vcmp.gt.f32.partialorder %v1563, 0.0
  %vm2434 = vcmp.gt.f32.partialorder %v1568, 0.0
  %vm2435 = vcmp.gt.f32.partialorder %v1571, 0.0
  %vm2436 = vcmp.gt.f32.partialorder %v1576, 0.0
  %vm2437 = vcmp.gt.f32.partialorder %v1579, 0.0
  %vm2438 = vcmp.gt.f32.partialorder %v1584, 0.0
  %vm2439 = vcmp.gt.f32.partialorder %v1587, 0.0
  %vm2440 = vcmp.gt.f32.partialorder %v1592, 0.0
  %vm2441 = vcmp.gt.f32.partialorder %v1595, 0.0
  %vm2442 = vcmp.gt.f32.partialorder %v1600, 0.0
  %vm2443 = vcmp.gt.f32.partialorder %v1603, 0.0
  %vm2444 = vcmp.gt.f32.partialorder %v1608, 0.0
  %vm2445 = vcmp.gt.f32.partialorder %v1611, 0.0
  %vm2446 = vcmp.gt.f32.partialorder %v1616, 0.0
  %vm2447 = vcmp.gt.f32.partialorder %v1619, 0.0
  %vm2448 = vcmp.gt.f32.partialorder %v1624, 0.0
  %vm2449 = vcmp.gt.f32.partialorder %v1627, 0.0
  %vm2450 = vcmp.gt.f32.partialorder %v1632, 0.0
  %vm2451 = vcmp.gt.f32.partialorder %v1635, 0.0
  %vm2452 = vcmp.gt.f32.partialorder %v1640, 0.0
  %vm2453 = vcmp.gt.f32.partialorder %v1643, 0.0
  %vm2454 = vcmp.gt.f32.partialorder %v1648, 0.0
  %vm2455 = vcmp.gt.f32.partialorder %v1651, 0.0
  %vm2456 = vcmp.gt.f32.partialorder %v1656, 0.0
  %vm2457 = vcmp.gt.f32.partialorder %v1659, 0.0
  %vm2458 = vcmp.gt.f32.partialorder %v1664, 0.0
  %vm2459 = vcmp.gt.f32.partialorder %v1667, 0.0
  %vm2460 = vcmp.gt.f32.partialorder %v1672, 0.0
  %vm2461 = vcmp.gt.f32.partialorder %v1675, 0.0
  %vm2462 = vcmp.gt.f32.partialorder %v1680, 0.0
  %vm2463 = vcmp.gt.f32.partialorder %v1683, 0.0
  %vm2464 = vcmp.gt.f32.partialorder %v1688, 0.0
  %vm2465 = vcmp.gt.f32.partialorder %v1691, 0.0
  %vm2466 = vcmp.gt.f32.partialorder %v1696, 0.0
  %vm2467 = vcmp.gt.f32.partialorder %v1699, 0.0
  %vm2468 = vcmp.gt.f32.partialorder %v1704, 0.0
  %vm2469 = vcmp.gt.f32.partialorder %v1707, 0.0
  %vm2470 = vcmp.gt.f32.partialorder %v1712, 0.0
  %vm2471 = vcmp.gt.f32.partialorder %v1715, 0.0
  %vm2472 = vcmp.gt.f32.partialorder %v1720, 0.0
  %vm2473 = vcmp.gt.f32.partialorder %v1723, 0.0
  %vm2474 = vcmp.gt.f32.partialorder %v1728, 0.0
  %vm2475 = vcmp.gt.f32.partialorder %v1731, 0.0
  %vm2476 = vcmp.gt.f32.partialorder %v1736, 0.0
  %vm2477 = vcmp.gt.f32.partialorder %v1739, 0.0
  %vm2478 = vcmp.gt.f32.partialorder %v1744, 0.0
  %vm2479 = vcmp.gt.f32.partialorder %v1747, 0.0
  %vm2480 = vcmp.gt.f32.partialorder %v1752, 0.0
  %vm2481 = vcmp.gt.f32.partialorder %v1755, 0.0
  %vm2482 = vcmp.gt.f32.partialorder %v1760, 0.0
  %vm2483 = vcmp.gt.f32.partialorder %v1763, 0.0
  %vm2484 = vcmp.gt.f32.partialorder %v1768, 0.0
  %vm2485 = vcmp.gt.f32.partialorder %v1771, 0.0
  %vm2486 = vcmp.gt.f32.partialorder %v1776, 0.0
  %vm2487 = vcmp.gt.f32.partialorder %v1779, 0.0
  %vm2488 = vcmp.gt.f32.partialorder %v1784, 0.0
  %vm2489 = vcmp.gt.f32.partialorder %v1787, 0.0
  %vm2490 = vcmp.gt.f32.partialorder %v1792, 0.0
  %vm2491 = vcmp.gt.f32.partialorder %v1795, 0.0
  %vm2492 = vcmp.gt.f32.partialorder %v1800, 0.0
  %vm2493 = vcmp.gt.f32.partialorder %v1803, 0.0
  %vm2494 = vcmp.gt.f32.partialorder %v1808, 0.0
  %vm2495 = vcmp.gt.f32.partialorder %v1811, 0.0
  %vm2496 = vcmp.gt.f32.partialorder %v1816, 0.0
  %vm2497 = vcmp.gt.f32.partialorder %v1819, 0.0
  %vm2498 = vcmp.gt.f32.partialorder %v1824, 0.0
  %vm2499 = vcmp.gt.f32.partialorder %v1827, 0.0
  %vm2500 = vcmp.gt.f32.partialorder %v1832, 0.0
  %vm2501 = vcmp.gt.f32.partialorder %v1835, 0.0
  %vm2502 = vcmp.gt.f32.partialorder %v1840, 0.0
  %vm2503 = vcmp.gt.f32.partialorder %v1843, 0.0
  %vm2504 = vcmp.gt.f32.partialorder %v1848, 0.0
  %vm2505 = vcmp.gt.f32.partialorder %v1851, 0.0
  %vm2506 = vcmp.gt.f32.partialorder %v1856, 0.0
  %vm2507 = vcmp.gt.f32.partialorder %v1859, 0.0
  %vm2508 = vcmp.gt.f32.partialorder %v1864, 0.0
  %vm2509 = vcmp.gt.f32.partialorder %v1867, 0.0
  %vm2510 = vcmp.gt.f32.partialorder %v1872, 0.0
  %vm2511 = vcmp.gt.f32.partialorder %v1875, 0.0
  %vm2512 = vcmp.gt.f32.partialorder %v1880, 0.0
  %vm2513 = vcmp.gt.f32.partialorder %v1883, 0.0
  %vm2514 = vcmp.gt.f32.partialorder %v1888, 0.0
  %vm2515 = vcmp.gt.f32.partialorder %v1891, 0.0
  %vm2516 = vcmp.gt.f32.partialorder %v1896, 0.0
  %vm2517 = vcmp.gt.f32.partialorder %v1899, 0.0
  %vm2518 = vcmp.gt.f32.partialorder %v1904, 0.0
  %vm2519 = vcmp.gt.f32.partialorder %v1907, 0.0
  %vm2520 = vcmp.gt.f32.partialorder %v1912, 0.0
  %vm2521 = vcmp.gt.f32.partialorder %v1915, 0.0
  %vm2522 = vcmp.gt.f32.partialorder %v1920, 0.0
  %vm2523 = vcmp.gt.f32.partialorder %v1923, 0.0
  %vm2524 = vcmp.gt.f32.partialorder %v1928, 0.0
  %vm2525 = vcmp.gt.f32.partialorder %v1931, 0.0
  %vm2526 = vcmp.gt.f32.partialorder %v1936, 0.0
  %vm2527 = vcmp.gt.f32.partialorder %v1939, 0.0
  %vm2528 = vcmp.gt.f32.partialorder %v1944, 0.0
  %vm2529 = vcmp.gt.f32.partialorder %v1947, 0.0
  %vm2530 = vcmp.gt.f32.partialorder %v1952, 0.0
  %vm2531 = vcmp.gt.f32.partialorder %v1955, 0.0
  %vm2532 = vcmp.gt.f32.partialorder %v1960, 0.0
  %vm2533 = vcmp.gt.f32.partialorder %v1963, 0.0
  %vm2534 = vcmp.gt.f32.partialorder %v1968, 0.0
  %vm2535 = vcmp.gt.f32.partialorder %v1971, 0.0
  %vm2536 = vcmp.gt.f32.partialorder %v1976, 0.0
  %vm2537 = vcmp.gt.f32.partialorder %v1979, 0.0
  %vm2538 = vcmp.gt.f32.partialorder %v1984, 0.0
  %vm2539 = vcmp.gt.f32.partialorder %v1987, 0.0
  %vm2540 = vcmp.gt.f32.partialorder %v1992, 0.0
  %vm2541 = vcmp.gt.f32.partialorder %v1995, 0.0
  %vm2542 = vcmp.gt.f32.partialorder %v2000, 0.0
  %vm2543 = vcmp.gt.f32.partialorder %v2003, 0.0
  %vm2544 = vcmp.gt.f32.partialorder %v2008, 0.0
  %vm2545 = vcmp.gt.f32.partialorder %v2011, 0.0
  %vm2546 = vcmp.gt.f32.partialorder %v2016, 0.0
  %vm2547 = vcmp.gt.f32.partialorder %v2019, 0.0
  %vm2548 = vcmp.gt.f32.partialorder %v2024, 0.0
  %vm2549 = vcmp.gt.f32.partialorder %v2027, 0.0
  %vm2550 = vcmp.gt.f32.partialorder %v2032, 0.0
  %vm2551 = vcmp.gt.f32.partialorder %v2035, 0.0
  %vm2552 = vcmp.gt.f32.partialorder %v2040, 0.0
  %vm2553 = vcmp.gt.f32.partialorder %v2043, 0.0
  %vm2554 = vcmp.gt.f32.partialorder %v2048, 0.0
  %vm2555 = vcmp.gt.f32.partialorder %v2051, 0.0
  %vm2556 = vcmp.gt.f32.partialorder %v2056, 0.0
  %vm2557 = vcmp.gt.f32.partialorder %v2059, 0.0
  %vm2558 = vcmp.gt.f32.partialorder %v2064, 0.0
  %vm2559 = vcmp.gt.f32.partialorder %v2067, 0.0
  %vm2560 = vcmp.gt.f32.partialorder %v2072, 0.0
  %vm2561 = vcmp.gt.f32.partialorder %v2075, 0.0
  %vm2562 = vcmp.gt.f32.partialorder %v2080, 0.0
  %vm2563 = vcmp.gt.f32.partialorder %v2083, 0.0
  %vm2564 = vcmp.gt.f32.partialorder %v2088, 0.0
  %vm2565 = vcmp.gt.f32.partialorder %v2091, 0.0
  %vm2566 = vcmp.gt.f32.partialorder %v2096, 0.0
  %vm2567 = vcmp.gt.f32.partialorder %v2099, 0.0
  %vm2568 = vcmp.gt.f32.partialorder %v2104, 0.0
  %vm2569 = vcmp.gt.f32.partialorder %v2107, 0.0
  %vm2570 = vcmp.gt.f32.partialorder %v2112, 0.0
  %vm2571 = vcmp.gt.f32.partialorder %v2115, 0.0
  %vm2572 = vcmp.gt.f32.partialorder %v2120, 0.0
  %vm2573 = vcmp.gt.f32.partialorder %v2123, 0.0
  %vm2574 = vcmp.gt.f32.partialorder %v2128, 0.0
  %vm2575 = vcmp.gt.f32.partialorder %v2131, 0.0
  %vm2576 = vcmp.gt.f32.partialorder %v2136, 0.0
  %vm2577 = vcmp.gt.f32.partialorder %v2139, 0.0
  %vm2578 = vcmp.gt.f32.partialorder %v2144, 0.0
  %vm2579 = vcmp.gt.f32.partialorder %v2147, 0.0
  %vm2580 = vcmp.gt.f32.partialorder %v2152, 0.0
  %vm2581 = vcmp.gt.f32.partialorder %v2155, 0.0
  %vm2582 = vcmp.gt.f32.partialorder %v2160, 0.0
  %vm2583 = vcmp.gt.f32.partialorder %v2163, 0.0
  %vm2584 = vcmp.gt.f32.partialorder %v2168, 0.0
  %vm2585 = vcmp.gt.f32.partialorder %v2171, 0.0
  %vm2586 = vcmp.gt.f32.partialorder %v2176, 0.0
  %vm2587 = vcmp.gt.f32.partialorder %v2179, 0.0
  %vm2588 = vcmp.gt.f32.partialorder %v2184, 0.0
  %vm2589 = vcmp.gt.f32.partialorder %v2187, 0.0
  %vm2590 = vcmp.gt.f32.partialorder %v2192, 0.0
  %vm2591 = vcmp.gt.f32.partialorder %v2195, 0.0
  %vm2592 = vcmp.gt.f32.partialorder %v2200, 0.0
  %vm2593 = vcmp.gt.f32.partialorder %v2203, 0.0
  %vm2594 = vcmp.gt.f32.partialorder %v2208, 0.0
  %vm2595 = vcmp.gt.f32.partialorder %v2211, 0.0
  %vm2596 = vcmp.gt.f32.partialorder %v2216, 0.0
  %vm2597 = vcmp.gt.f32.partialorder %v2219, 0.0
  %vm2598 = vcmp.gt.f32.partialorder %v2224, 0.0
  %vm2599 = vcmp.gt.f32.partialorder %v2227, 0.0
  %vm2600 = vcmp.gt.f32.partialorder %v2232, 0.0
  %vm2601 = vcmp.gt.f32.partialorder %v2235, 0.0
  %vm2602 = vcmp.gt.f32.partialorder %v2240, 0.0
  %vm2603 = vcmp.gt.f32.partialorder %v2243, 0.0
  %vm2604 = vcmp.gt.f32.partialorder %v2248, 0.0
  %vm2605 = vcmp.gt.f32.partialorder %v2251, 0.0
  %vm2606 = vcmp.gt.f32.partialorder %v2256, 0.0
  %vm2607 = vcmp.gt.f32.partialorder %v2259, 0.0
  %vm2608 = vcmp.gt.f32.partialorder %v2264, 0.0
  %vm2609 = vcmp.gt.f32.partialorder %v2267, 0.0
  %vm2610 = vcmp.gt.f32.partialorder %v2272, 0.0
  %vm2611 = vcmp.gt.f32.partialorder %v2275, 0.0
  %vm2612 = vcmp.gt.f32.partialorder %v2280, 0.0
  %vm2613 = vcmp.gt.f32.partialorder %v2283, 0.0
  %vm2614 = vcmp.gt.f32.partialorder %v2288, 0.0
  %vm2615 = vcmp.gt.f32.partialorder %v2291, 0.0
  %vm2616 = vcmp.gt.f32.partialorder %v2296, 0.0
  %vm2617 = vcmp.gt.f32.partialorder %v2299, 0.0
  %vm2618 = vcmp.gt.f32.partialorder %v2304, 0.0
  %vm2619 = vcmp.gt.f32.partialorder %v2307, 0.0
  %vm2620 = vcmp.gt.f32.partialorder %v2312, 0.0
  %vm2621 = vcmp.gt.f32.partialorder %v2315, 0.0
  %vm2622 = vcmp.gt.f32.partialorder %v2320, 0.0
  %vm2623 = vcmp.gt.f32.partialorder %v2323, 0.0
  %vm2624 = vcmp.gt.f32.partialorder %v2328, 0.0
  %vm2625 = vcmp.gt.f32.partialorder %v2331, 0.0
  %vm2626 = vcmp.gt.f32.partialorder %v2336, 0.0
  %vm2627 = vcmp.gt.f32.partialorder %v2339, 0.0
  %vm2628 = vcmp.gt.f32.partialorder %v2344, 0.0
  %vm2629 = vcmp.gt.f32.partialorder %v2347, 0.0
  %vm2630 = vcmp.gt.f32.partialorder %v2352, 0.0
  %vm2631 = vcmp.gt.f32.partialorder %v2355, 0.0
  %vm2632 = vcmp.gt.f32.partialorder %v2360, 0.0
  %vm2633 = vcmp.gt.f32.partialorder %v2363, 0.0
  %vm2634 = vcmp.gt.f32.partialorder %v2368, 0.0
  %vm2635 = vcmp.gt.f32.partialorder %v2371, 0.0
  %vm2636 = vcmp.gt.f32.partialorder %v2376, 0.0
  %vm2637 = vcmp.gt.f32.partialorder %v2379, 0.0
  %v2638 = vmul.f32 %v1360, 0.01
  %v2639 = vmul.f32 %v1363, 0.01
  %v2640 = vmul.f32 %v1368, 0.01
  %v2641 = vmul.f32 %v1371, 0.01
  %v2642 = vmul.f32 %v1376, 0.01
  %v2643 = vmul.f32 %v1379, 0.01
  %v2644 = vmul.f32 %v1384, 0.01
  %v2645 = vmul.f32 %v1387, 0.01
  %v2646 = vmul.f32 %v1392, 0.01
  %v2647 = vmul.f32 %v1395, 0.01
  %v2648 = vmul.f32 %v1400, 0.01
  %v2649 = vmul.f32 %v1403, 0.01
  %v2650 = vmul.f32 %v1408, 0.01
  %v2651 = vmul.f32 %v1411, 0.01
  %v2652 = vmul.f32 %v1416, 0.01
  %v2653 = vmul.f32 %v1419, 0.01
  %v2654 = vmul.f32 %v1424, 0.01
  %v2655 = vmul.f32 %v1427, 0.01
  %v2656 = vmul.f32 %v1432, 0.01
  %v2657 = vmul.f32 %v1435, 0.01
  %v2658 = vmul.f32 %v1440, 0.01
  %v2659 = vmul.f32 %v1443, 0.01
  %v2660 = vmul.f32 %v1448, 0.01
  %v2661 = vmul.f32 %v1451, 0.01
  %v2662 = vmul.f32 %v1456, 0.01
  %v2663 = vmul.f32 %v1459, 0.01
  %v2664 = vmul.f32 %v1464, 0.01
  %v2665 = vmul.f32 %v1467, 0.01
  %v2666 = vmul.f32 %v1472, 0.01
  %v2667 = vmul.f32 %v1475, 0.01
  %v2668 = vmul.f32 %v1480, 0.01
  %v2669 = vmul.f32 %v1483, 0.01
  %v2670 = vmul.f32 %v1488, 0.01
  %v2671 = vmul.f32 %v1491, 0.01
  %v2672 = vmul.f32 %v1496, 0.01
  %v2673 = vmul.f32 %v1499, 0.01
  %v2674 = vmul.f32 %v1504, 0.01
  %v2675 = vmul.f32 %v1507, 0.01
  %v2676 = vmul.f32 %v1512, 0.01
  %v2677 = vmul.f32 %v1515, 0.01
  %v2678 = vmul.f32 %v1520, 0.01
  %v2679 = vmul.f32 %v1523, 0.01
  %v2680 = vmul.f32 %v1528, 0.01
  %v2681 = vmul.f32 %v1531, 0.01
  %v2682 = vmul.f32 %v1536, 0.01
  %v2683 = vmul.f32 %v1539, 0.01
  %v2684 = vmul.f32 %v1544, 0.01
  %v2685 = vmul.f32 %v1547, 0.01
  %v2686 = vmul.f32 %v1552, 0.01
  %v2687 = vmul.f32 %v1555, 0.01
  %v2688 = vmul.f32 %v1560, 0.01
  %v2689 = vmul.f32 %v1563, 0.01
  %v2690 = vmul.f32 %v1568, 0.01
  %v2691 = vmul.f32 %v1571, 0.01
  %v2692 = vmul.f32 %v1576, 0.01
  %v2693 = vmul.f32 %v1579, 0.01
  %v2694 = vmul.f32 %v1584, 0.01
  %v2695 = vmul.f32 %v1587, 0.01
  %v2696 = vmul.f32 %v1592, 0.01
  %v2697 = vmul.f32 %v1595, 0.01
  %v2698 = vmul.f32 %v1600, 0.01
  %v2699 = vmul.f32 %v1603, 0.01
  %v2700 = vmul.f32 %v1608, 0.01
  %v2701 = vmul.f32 %v1611, 0.01
  %v2702 = vmul.f32 %v1616, 0.01
  %v2703 = vmul.f32 %v1619, 0.01
  %v2704 = vmul.f32 %v1624, 0.01
  %v2705 = vmul.f32 %v1627, 0.01
  %v2706 = vmul.f32 %v1632, 0.01
  %v2707 = vmul.f32 %v1635, 0.01
  %v2708 = vmul.f32 %v1640, 0.01
  %v2709 = vmul.f32 %v1643, 0.01
  %v2710 = vmul.f32 %v1648, 0.01
  %v2711 = vmul.f32 %v1651, 0.01
  %v2712 = vmul.f32 %v1656, 0.01
  %v2713 = vmul.f32 %v1659, 0.01
  %v2714 = vmul.f32 %v1664, 0.01
  %v2715 = vmul.f32 %v1667, 0.01
  %v2716 = vmul.f32 %v1672, 0.01
  %v2717 = vmul.f32 %v1675, 0.01
  %v2718 = vmul.f32 %v1680, 0.01
  %v2719 = vmul.f32 %v1683, 0.01
  %v2720 = vmul.f32 %v1688, 0.01
  %v2721 = vmul.f32 %v1691, 0.01
  %v2722 = vmul.f32 %v1696, 0.01
  %v2723 = vmul.f32 %v1699, 0.01
  %v2724 = vmul.f32 %v1704, 0.01
  %v2725 = vmul.f32 %v1707, 0.01
  %v2726 = vmul.f32 %v1712, 0.01
  %v2727 = vmul.f32 %v1715, 0.01
  %v2728 = vmul.f32 %v1720, 0.01
  %v2729 = vmul.f32 %v1723, 0.01
  %v2730 = vmul.f32 %v1728, 0.01
  %v2731 = vmul.f32 %v1731, 0.01
  %v2732 = vmul.f32 %v1736, 0.01
  %v2733 = vmul.f32 %v1739, 0.01
  %v2734 = vmul.f32 %v1744, 0.01
  %v2735 = vmul.f32 %v1747, 0.01
  %v2736 = vmul.f32 %v1752, 0.01
  %v2737 = vmul.f32 %v1755, 0.01
  %v2738 = vmul.f32 %v1760, 0.01
  %v2739 = vmul.f32 %v1763, 0.01
  %v2740 = vmul.f32 %v1768, 0.01
  %v2741 = vmul.f32 %v1771, 0.01
  %v2742 = vmul.f32 %v1776, 0.01
  %v2743 = vmul.f32 %v1779, 0.01
  %v2744 = vmul.f32 %v1784, 0.01
  %v2745 = vmul.f32 %v1787, 0.01
  %v2746 = vmul.f32 %v1792, 0.01
  %v2747 = vmul.f32 %v1795, 0.01
  %v2748 = vmul.f32 %v1800, 0.01
  %v2749 = vmul.f32 %v1803, 0.01
  %v2750 = vmul.f32 %v1808, 0.01
  %v2751 = vmul.f32 %v1811, 0.01
  %v2752 = vmul.f32 %v1816, 0.01
  %v2753 = vmul.f32 %v1819, 0.01
  %v2754 = vmul.f32 %v1824, 0.01
  %v2755 = vmul.f32 %v1827, 0.01
  %v2756 = vmul.f32 %v1832, 0.01
  %v2757 = vmul.f32 %v1835, 0.01
  %v2758 = vmul.f32 %v1840, 0.01
  %v2759 = vmul.f32 %v1843, 0.01
  %v2760 = vmul.f32 %v1848, 0.01
  %v2761 = vmul.f32 %v1851, 0.01
  %v2762 = vmul.f32 %v1856, 0.01
  %v2763 = vmul.f32 %v1859, 0.01
  %v2764 = vmul.f32 %v1864, 0.01
  %v2765 = vmul.f32 %v1867, 0.01
  %v2766 = vmul.f32 %v1872, 0.01
  %v2767 = vmul.f32 %v1875, 0.01
  %v2768 = vmul.f32 %v1880, 0.01
  %v2769 = vmul.f32 %v1883, 0.01
  %v2770 = vmul.f32 %v1888, 0.01
  %v2771 = vmul.f32 %v1891, 0.01
  %v2772 = vmul.f32 %v1896, 0.01
  %v2773 = vmul.f32 %v1899, 0.01
  %v2774 = vmul.f32 %v1904, 0.01
  %v2775 = vmul.f32 %v1907, 0.01
  %v2776 = vmul.f32 %v1912, 0.01
  %v2777 = vmul.f32 %v1915, 0.01
  %v2778 = vmul.f32 %v1920, 0.01
  %v2779 = vmul.f32 %v1923, 0.01
  %v2780 = vmul.f32 %v1928, 0.01
  %v2781 = vmul.f32 %v1931, 0.01
  %v2782 = vmul.f32 %v1936, 0.01
  %v2783 = vmul.f32 %v1939, 0.01
  %v2784 = vmul.f32 %v1944, 0.01
  %v2785 = vmul.f32 %v1947, 0.01
  %v2786 = vmul.f32 %v1952, 0.01
  %v2787 = vmul.f32 %v1955, 0.01
  %v2788 = vmul.f32 %v1960, 0.01
  %v2789 = vmul.f32 %v1963, 0.01
  %v2790 = vmul.f32 %v1968, 0.01
  %v2791 = vmul.f32 %v1971, 0.01
  %v2792 = vmul.f32 %v1976, 0.01
  %v2793 = vmul.f32 %v1979, 0.01
  %v2794 = vmul.f32 %v1984, 0.01
  %v2795 = vmul.f32 %v1987, 0.01
  %v2796 = vmul.f32 %v1992, 0.01
  %v2797 = vmul.f32 %v1995, 0.01
  %v2798 = vmul.f32 %v2000, 0.01
  %v2799 = vmul.f32 %v2003, 0.01
  %v2800 = vmul.f32 %v2008, 0.01
  %v2801 = vmul.f32 %v2011, 0.01
  %v2802 = vmul.f32 %v2016, 0.01
  %v2803 = vmul.f32 %v2019, 0.01
  %v2804 = vmul.f32 %v2024, 0.01
  %v2805 = vmul.f32 %v2027, 0.01
  %v2806 = vmul.f32 %v2032, 0.01
  %v2807 = vmul.f32 %v2035, 0.01
  %v2808 = vmul.f32 %v2040, 0.01
  %v2809 = vmul.f32 %v2043, 0.01
  %v2810 = vmul.f32 %v2048, 0.01
  %v2811 = vmul.f32 %v2051, 0.01
  %v2812 = vmul.f32 %v2056, 0.01
  %v2813 = vmul.f32 %v2059, 0.01
  %v2814 = vmul.f32 %v2064, 0.01
  %v2815 = vmul.f32 %v2067, 0.01
  %v2816 = vmul.f32 %v2072, 0.01
  %v2817 = vmul.f32 %v2075, 0.01
  %v2818 = vmul.f32 %v2080, 0.01
  %v2819 = vmul.f32 %v2083, 0.01
  %v2820 = vmul.f32 %v2088, 0.01
  %v2821 = vmul.f32 %v2091, 0.01
  %v2822 = vmul.f32 %v2096, 0.01
  %v2823 = vmul.f32 %v2099, 0.01
  %v2824 = vmul.f32 %v2104, 0.01
  %v2825 = vmul.f32 %v2107, 0.01
  %v2826 = vmul.f32 %v2112, 0.01
  %v2827 = vmul.f32 %v2115, 0.01
  %v2828 = vmul.f32 %v2120, 0.01
  %v2829 = vmul.f32 %v2123, 0.01
  %v2830 = vmul.f32 %v2128, 0.01
  %v2831 = vmul.f32 %v2131, 0.01
  %v2832 = vmul.f32 %v2136, 0.01
  %v2833 = vmul.f32 %v2139, 0.01
  %v2834 = vmul.f32 %v2144, 0.01
  %v2835 = vmul.f32 %v2147, 0.01
  %v2836 = vmul.f32 %v2152, 0.01
  %v2837 = vmul.f32 %v2155, 0.01
  %v2838 = vmul.f32 %v2160, 0.01
  %v2839 = vmul.f32 %v2163, 0.01
  %v2840 = vmul.f32 %v2168, 0.01
  %v2841 = vmul.f32 %v2171, 0.01
  %v2842 = vmul.f32 %v2176, 0.01
  %v2843 = vmul.f32 %v2179, 0.01
  %v2844 = vmul.f32 %v2184, 0.01
  %v2845 = vmul.f32 %v2187, 0.01
  %v2846 = vmul.f32 %v2192, 0.01
  %v2847 = vmul.f32 %v2195, 0.01
  %v2848 = vmul.f32 %v2200, 0.01
  %v2849 = vmul.f32 %v2203, 0.01
  %v2850 = vmul.f32 %v2208, 0.01
  %v2851 = vmul.f32 %v2211, 0.01
  %v2852 = vmul.f32 %v2216, 0.01
  %v2853 = vmul.f32 %v2219, 0.01
  %v2854 = vmul.f32 %v2224, 0.01
  %v2855 = vmul.f32 %v2227, 0.01
  %v2856 = vmul.f32 %v2232, 0.01
  %v2857 = vmul.f32 %v2235, 0.01
  %v2858 = vmul.f32 %v2240, 0.01
  %v2859 = vmul.f32 %v2243, 0.01
  %v2860 = vmul.f32 %v2248, 0.01
  %v2861 = vmul.f32 %v2251, 0.01
  %v2862 = vmul.f32 %v2256, 0.01
  %v2863 = vmul.f32 %v2259, 0.01
  %v2864 = vmul.f32 %v2264, 0.01
  %v2865 = vmul.f32 %v2267, 0.01
  %v2866 = vmul.f32 %v2272, 0.01
  %v2867 = vmul.f32 %v2275, 0.01
  %v2868 = vmul.f32 %v2280, 0.01
  %v2869 = vmul.f32 %v2283, 0.01
  %v2870 = vmul.f32 %v2288, 0.01
  %v2871 = vmul.f32 %v2291, 0.01
  %v2872 = vmul.f32 %v2296, 0.01
  %v2873 = vmul.f32 %v2299, 0.01
  %v2874 = vmul.f32 %v2304, 0.01
  %v2875 = vmul.f32 %v2307, 0.01
  %v2876 = vmul.f32 %v2312, 0.01
  %v2877 = vmul.f32 %v2315, 0.01
  %v2878 = vmul.f32 %v2320, 0.01
  %v2879 = vmul.f32 %v2323, 0.01
  %v2880 = vmul.f32 %v2328, 0.01
  %v2881 = vmul.f32 %v2331, 0.01
  %v2882 = vmul.f32 %v2336, 0.01
  %v2883 = vmul.f32 %v2339, 0.01
  %v2884 = vmul.f32 %v2344, 0.01
  %v2885 = vmul.f32 %v2347, 0.01
  %v2886 = vmul.f32 %v2352, 0.01
  %v2887 = vmul.f32 %v2355, 0.01
  %v2888 = vmul.f32 %v2360, 0.01
  %v2889 = vmul.f32 %v2363, 0.01
  %v2890 = vmul.f32 %v2368, 0.01
  %v2891 = vmul.f32 %v2371, 0.01
  %v2892 = vmul.f32 %v2376, 0.01
  %v2893 = vmul.f32 %v2379, 0.01
  %v2894 = vsel %vm2382, %v1360, %v2638
  %v2895 = vsel %vm2383, %v1363, %v2639
  %v2896 = vsel %vm2384, %v1368, %v2640
  %v2897 = vsel %vm2385, %v1371, %v2641
  %v2898 = vsel %vm2386, %v1376, %v2642
  %v2899 = vsel %vm2387, %v1379, %v2643
  %v2900 = vsel %vm2388, %v1384, %v2644
  %v2901 = vsel %vm2389, %v1387, %v2645
  %v2902 = vsel %vm2390, %v1392, %v2646
  %v2903 = vsel %vm2391, %v1395, %v2647
  %v2904 = vsel %vm2392, %v1400, %v2648
  %v2905 = vsel %vm2393, %v1403, %v2649
  %v2906 = vsel %vm2394, %v1408, %v2650
  %v2907 = vsel %vm2395, %v1411, %v2651
  %v2908 = vsel %vm2396, %v1416, %v2652
  %v2909 = vsel %vm2397, %v1419, %v2653
  %v2910 = vsel %vm2398, %v1424, %v2654
  %v2911 = vsel %vm2399, %v1427, %v2655
  %v2912 = vsel %vm2400, %v1432, %v2656
  %v2913 = vsel %vm2401, %v1435, %v2657
  %v2914 = vsel %vm2402, %v1440, %v2658
  %v2915 = vsel %vm2403, %v1443, %v2659
  %v2916 = vsel %vm2404, %v1448, %v2660
  %v2917 = vsel %vm2405, %v1451, %v2661
  %v2918 = vsel %vm2406, %v1456, %v2662
  %v2919 = vsel %vm2407, %v1459, %v2663
  %v2920 = vsel %vm2408, %v1464, %v2664
  %v2921 = vsel %vm2409, %v1467, %v2665
  %v2922 = vsel %vm2410, %v1472, %v2666
  %v2923 = vsel %vm2411, %v1475, %v2667
  %v2924 = vsel %vm2412, %v1480, %v2668
  %v2925 = vsel %vm2413, %v1483, %v2669
  %v2926 = vsel %vm2414, %v1488, %v2670
  %v2927 = vsel %vm2415, %v1491, %v2671
  %v2928 = vsel %vm2416, %v1496, %v2672
  %v2929 = vsel %vm2417, %v1499, %v2673
  %v2930 = vsel %vm2418, %v1504, %v2674
  %v2931 = vsel %vm2419, %v1507, %v2675
  %v2932 = vsel %vm2420, %v1512, %v2676
  %v2933 = vsel %vm2421, %v1515, %v2677
  %v2934 = vsel %vm2422, %v1520, %v2678
  %v2935 = vsel %vm2423, %v1523, %v2679
  %v2936 = vsel %vm2424, %v1528, %v2680
  %v2937 = vsel %vm2425, %v1531, %v2681
  %v2938 = vsel %vm2426, %v1536, %v2682
  %v2939 = vsel %vm2427, %v1539, %v2683
  %v2940 = vsel %vm2428, %v1544, %v2684
  %v2941 = vsel %vm2429, %v1547, %v2685
  %v2942 = vsel %vm2430, %v1552, %v2686
  %v2943 = vsel %vm2431, %v1555, %v2687
  %v2944 = vsel %vm2432, %v1560, %v2688
  %v2945 = vsel %vm2433, %v1563, %v2689
  %v2946 = vsel %vm2434, %v1568, %v2690
  %v2947 = vsel %vm2435, %v1571, %v2691
  %v2948 = vsel %vm2436, %v1576, %v2692
  %v2949 = vsel %vm2437, %v1579, %v2693
  %v2950 = vsel %vm2438, %v1584, %v2694
  %v2951 = vsel %vm2439, %v1587, %v2695
  %v2952 = vsel %vm2440, %v1592, %v2696
  %v2953 = vsel %vm2441, %v1595, %v2697
  %v2954 = vsel %vm2442, %v1600, %v2698
  %v2955 = vsel %vm2443, %v1603, %v2699
  %v2956 = vsel %vm2444, %v1608, %v2700
  %v2957 = vsel %vm2445, %v1611, %v2701
  %v2958 = vsel %vm2446, %v1616, %v2702
  %v2959 = vsel %vm2447, %v1619, %v2703
  %v2960 = vsel %vm2448, %v1624, %v2704
  %v2961 = vsel %vm2449, %v1627, %v2705
  %v2962 = vsel %vm2450, %v1632, %v2706
  %v2963 = vsel %vm2451, %v1635, %v2707
  %v2964 = vsel %vm2452, %v1640, %v2708
  %v2965 = vsel %vm2453, %v1643, %v2709
  %v2966 = vsel %vm2454, %v1648, %v2710
  %v2967 = vsel %vm2455, %v1651, %v2711
  %v2968 = vsel %vm2456, %v1656, %v2712
  %v2969 = vsel %vm2457, %v1659, %v2713
  %v2970 = vsel %vm2458, %v1664, %v2714
  %v2971 = vsel %vm2459, %v1667, %v2715
  %v2972 = vsel %vm2460, %v1672, %v2716
  %v2973 = vsel %vm2461, %v1675, %v2717
  %v2974 = vsel %vm2462, %v1680, %v2718
  %v2975 = vsel %vm2463, %v1683, %v2719
  %v2976 = vsel %vm2464, %v1688, %v2720
  %v2977 = vsel %vm2465, %v1691, %v2721
  %v2978 = vsel %vm2466, %v1696, %v2722
  %v2979 = vsel %vm2467, %v1699, %v2723
  %v2980 = vsel %vm2468, %v1704, %v2724
  %v2981 = vsel %vm2469, %v1707, %v2725
  %v2982 = vsel %vm2470, %v1712, %v2726
  %v2983 = vsel %vm2471, %v1715, %v2727
  %v2984 = vsel %vm2472, %v1720, %v2728
  %v2985 = vsel %vm2473, %v1723, %v2729
  %v2986 = vsel %vm2474, %v1728, %v2730
  %v2987 = vsel %vm2475, %v1731, %v2731
  %v2988 = vsel %vm2476, %v1736, %v2732
  %v2989 = vsel %vm2477, %v1739, %v2733
  %v2990 = vsel %vm2478, %v1744, %v2734
  %v2991 = vsel %vm2479, %v1747, %v2735
  %v2992 = vsel %vm2480, %v1752, %v2736
  %v2993 = vsel %vm2481, %v1755, %v2737
  %v2994 = vsel %vm2482, %v1760, %v2738
  %v2995 = vsel %vm2483, %v1763, %v2739
  %v2996 = vsel %vm2484, %v1768, %v2740
  %v2997 = vsel %vm2485, %v1771, %v2741
  %v2998 = vsel %vm2486, %v1776, %v2742
  %v2999 = vsel %vm2487, %v1779, %v2743
  %v3000 = vsel %vm2488, %v1784, %v2744
  %v3001 = vsel %vm2489, %v1787, %v2745
  %v3002 = vsel %vm2490, %v1792, %v2746
  %v3003 = vsel %vm2491, %v1795, %v2747
  %v3004 = vsel %vm2492, %v1800, %v2748
  %v3005 = vsel %vm2493, %v1803, %v2749
  %v3006 = vsel %vm2494, %v1808, %v2750
  %v3007 = vsel %vm2495, %v1811, %v2751
  %v3008 = vsel %vm2496, %v1816, %v2752
  %v3009 = vsel %vm2497, %v1819, %v2753
  %v3010 = vsel %vm2498, %v1824, %v2754
  %v3011 = vsel %vm2499, %v1827, %v2755
  %v3012 = vsel %vm2500, %v1832, %v2756
  %v3013 = vsel %vm2501, %v1835, %v2757
  %v3014 = vsel %vm2502, %v1840, %v2758
  %v3015 = vsel %vm2503, %v1843, %v2759
  %v3016 = vsel %vm2504, %v1848, %v2760
  %v3017 = vsel %vm2505, %v1851, %v2761
  %v3018 = vsel %vm2506, %v1856, %v2762
  %v3019 = vsel %vm2507, %v1859, %v2763
  %v3020 = vsel %vm2508, %v1864, %v2764
  %v3021 = vsel %vm2509, %v1867, %v2765
  %v3022 = vsel %vm2510, %v1872, %v2766
  %v3023 = vsel %vm2511, %v1875, %v2767
  %v3024 = vsel %vm2512, %v1880, %v2768
  %v3025 = vsel %vm2513, %v1883, %v2769
  %v3026 = vsel %vm2514, %v1888, %v2770
  %v3027 = vsel %vm2515, %v1891, %v2771
  %v3028 = vsel %vm2516, %v1896, %v2772
  %v3029 = vsel %vm2517, %v1899, %v2773
  %v3030 = vsel %vm2518, %v1904, %v2774
  %v3031 = vsel %vm2519, %v1907, %v2775
  %v3032 = vsel %vm2520, %v1912, %v2776
  %v3033 = vsel %vm2521, %v1915, %v2777
  %v3034 = vsel %vm2522, %v1920, %v2778
  %v3035 = vsel %vm2523, %v1923, %v2779
  %v3036 = vsel %vm2524, %v1928, %v2780
  %v3037 = vsel %vm2525, %v1931, %v2781
  %v3038 = vsel %vm2526, %v1936, %v2782
  %v3039 = vsel %vm2527, %v1939, %v2783
  %v3040 = vsel %vm2528, %v1944, %v2784
  %v3041 = vsel %vm2529, %v1947, %v2785
  %v3042 = vsel %vm2530, %v1952, %v2786
  %v3043 = vsel %vm2531, %v1955, %v2787
  %v3044 = vsel %vm2532, %v1960, %v2788
  %v3045 = vsel %vm2533, %v1963, %v2789
  %v3046 = vsel %vm2534, %v1968, %v2790
  %v3047 = vsel %vm2535, %v1971, %v2791
  %v3048 = vsel %vm2536, %v1976, %v2792
  %v3049 = vsel %vm2537, %v1979, %v2793
  %v3050 = vsel %vm2538, %v1984, %v2794
  %v3051 = vsel %vm2539, %v1987, %v2795
  %v3052 = vsel %vm2540, %v1992, %v2796
  %v3053 = vsel %vm2541, %v1995, %v2797
  %v3054 = vsel %vm2542, %v2000, %v2798
  %v3055 = vsel %vm2543, %v2003, %v2799
  %v3056 = vsel %vm2544, %v2008, %v2800
  %v3057 = vsel %vm2545, %v2011, %v2801
  %v3058 = vsel %vm2546, %v2016, %v2802
  %v3059 = vsel %vm2547, %v2019, %v2803
  %v3060 = vsel %vm2548, %v2024, %v2804
  %v3061 = vsel %vm2549, %v2027, %v2805
  %v3062 = vsel %vm2550, %v2032, %v2806
  %v3063 = vsel %vm2551, %v2035, %v2807
  %v3064 = vsel %vm2552, %v2040, %v2808
  %v3065 = vsel %vm2553, %v2043, %v2809
  %v3066 = vsel %vm2554, %v2048, %v2810
  %v3067 = vsel %vm2555, %v2051, %v2811
  %v3068 = vsel %vm2556, %v2056, %v2812
  %v3069 = vsel %vm2557, %v2059, %v2813
  %v3070 = vsel %vm2558, %v2064, %v2814
  %v3071 = vsel %vm2559, %v2067, %v2815
  %v3072 = vsel %vm2560, %v2072, %v2816
  %v3073 = vsel %vm2561, %v2075, %v2817
  %v3074 = vsel %vm2562, %v2080, %v2818
  %v3075 = vsel %vm2563, %v2083, %v2819
  %v3076 = vsel %vm2564, %v2088, %v2820
  %v3077 = vsel %vm2565, %v2091, %v2821
  %v3078 = vsel %vm2566, %v2096, %v2822
  %v3079 = vsel %vm2567, %v2099, %v2823
  %v3080 = vsel %vm2568, %v2104, %v2824
  %v3081 = vsel %vm2569, %v2107, %v2825
  %v3082 = vsel %vm2570, %v2112, %v2826
  %v3083 = vsel %vm2571, %v2115, %v2827
  %v3084 = vsel %vm2572, %v2120, %v2828
  %v3085 = vsel %vm2573, %v2123, %v2829
  %v3086 = vsel %vm2574, %v2128, %v2830
  %v3087 = vsel %vm2575, %v2131, %v2831
  %v3088 = vsel %vm2576, %v2136, %v2832
  %v3089 = vsel %vm2577, %v2139, %v2833
  %v3090 = vsel %vm2578, %v2144, %v2834
  %v3091 = vsel %vm2579, %v2147, %v2835
  %v3092 = vsel %vm2580, %v2152, %v2836
  %v3093 = vsel %vm2581, %v2155, %v2837
  %v3094 = vsel %vm2582, %v2160, %v2838
  %v3095 = vsel %vm2583, %v2163, %v2839
  %v3096 = vsel %vm2584, %v2168, %v2840
  %v3097 = vsel %vm2585, %v2171, %v2841
  %v3098 = vsel %vm2586, %v2176, %v2842
  %v3099 = vsel %vm2587, %v2179, %v2843
  %v3100 = vsel %vm2588, %v2184, %v2844
  %v3101 = vsel %vm2589, %v2187, %v2845
  %v3102 = vsel %vm2590, %v2192, %v2846
  %v3103 = vsel %vm2591, %v2195, %v2847
  %v3104 = vsel %vm2592, %v2200, %v2848
  %v3105 = vsel %vm2593, %v2203, %v2849
  %v3106 = vsel %vm2594, %v2208, %v2850
  %v3107 = vsel %vm2595, %v2211, %v2851
  %v3108 = vsel %vm2596, %v2216, %v2852
  %v3109 = vsel %vm2597, %v2219, %v2853
  %v3110 = vsel %vm2598, %v2224, %v2854
  %v3111 = vsel %vm2599, %v2227, %v2855
  %v3112 = vsel %vm2600, %v2232, %v2856
  %v3113 = vsel %vm2601, %v2235, %v2857
  %v3114 = vsel %vm2602, %v2240, %v2858
  %v3115 = vsel %vm2603, %v2243, %v2859
  %v3116 = vsel %vm2604, %v2248, %v2860
  %v3117 = vsel %vm2605, %v2251, %v2861
  %v3118 = vsel %vm2606, %v2256, %v2862
  %v3119 = vsel %vm2607, %v2259, %v2863
  %v3120 = vsel %vm2608, %v2264, %v2864
  %v3121 = vsel %vm2609, %v2267, %v2865
  %v3122 = vsel %vm2610, %v2272, %v2866
  %v3123 = vsel %vm2611, %v2275, %v2867
  %v3124 = vsel %vm2612, %v2280, %v2868
  %v3125 = vsel %vm2613, %v2283, %v2869
  %v3126 = vsel %vm2614, %v2288, %v2870
  %v3127 = vsel %vm2615, %v2291, %v2871
  %v3128 = vsel %vm2616, %v2296, %v2872
  %v3129 = vsel %vm2617, %v2299, %v2873
  %v3130 = vsel %vm2618, %v2304, %v2874
  %v3131 = vsel %vm2619, %v2307, %v2875
  %v3132 = vsel %vm2620, %v2312, %v2876
  %v3133 = vsel %vm2621, %v2315, %v2877
  %v3134 = vsel %vm2622, %v2320, %v2878
  %v3135 = vsel %vm2623, %v2323, %v2879
  %v3136 = vsel %vm2624, %v2328, %v2880
  %v3137 = vsel %vm2625, %v2331, %v2881
  %v3138 = vsel %vm2626, %v2336, %v2882
  %v3139 = vsel %vm2627, %v2339, %v2883
  %v3140 = vsel %vm2628, %v2344, %v2884
  %v3141 = vsel %vm2629, %v2347, %v2885
  %v3142 = vsel %vm2630, %v2352, %v2886
  %v3143 = vsel %vm2631, %v2355, %v2887
  %v3144 = vsel %vm2632, %v2360, %v2888
  %v3145 = vsel %vm2633, %v2363, %v2889
  %v3146 = vsel %vm2634, %v2368, %v2890
  %v3147 = vsel %vm2635, %v2371, %v2891
  %v3148 = vsel %vm2636, %v2376, %v2892
  %v3149 = vsel %vm2637, %v2379, %v2893
  %vm3150 = vcmask 523264
  %3151 = vst.msk [vmem:[%s3] sm:$0xff] %vm3150, %v2894
  %3152 = vst.msk [vmem:[%s3 + $0x8] sm:$0xff] %vm3150, %v2895
  %3153 = vst.msk [vmem:[%s3 + $0x10] sm:$0xff] %vm3150, %v2896
  %3154 = vst.msk [vmem:[%s3 + $0x18] sm:$0xff] %vm3150, %v2897
  %3155 = vst.msk [vmem:[%s3 + $0x20] sm:$0xff] %vm3150, %v2898
  %3156 = vst.msk [vmem:[%s3 + $0x28] sm:$0xff] %vm3150, %v2899
  %3157 = vst.msk [vmem:[%s3 + $0x30] sm:$0xff] %vm3150, %v2900
  %3158 = vst.msk [vmem:[%s3 + $0x38] sm:$0xff] %vm3150, %v2901
  %3159 = vst.msk [vmem:[%s3 + $0x40] sm:$0xff] %vm3150, %v2902
  %3160 = vst.msk [vmem:[%s3 + $0x48] sm:$0xff] %vm3150, %v2903
  %3161 = vst.msk [vmem:[%s3 + $0x50] sm:$0xff] %vm3150, %v2904
  %3162 = vst.msk [vmem:[%s3 + $0x58] sm:$0xff] %vm3150, %v2905
  %3163 = vst.msk [vmem:[%s3 + $0x60] sm:$0xff] %vm3150, %v2906
  %3164 = vst.msk [vmem:[%s3 + $0x68] sm:$0xff] %vm3150, %v2907
  %3165 = vst.msk [vmem:[%s3 + $0x70] sm:$0xff] %vm3150, %v2908
  %3166 = vst.msk [vmem:[%s3 + $0x78] sm:$0xff] %vm3150, %v2909
  %3167 = vst.msk [vmem:[%s3 + $0x80] sm:$0xff] %vm3150, %v2910
  %3168 = vst.msk [vmem:[%s3 + $0x88] sm:$0xff] %vm3150, %v2911
  %3169 = vst.msk [vmem:[%s3 + $0x90] sm:$0xff] %vm3150, %v2912
  %3170 = vst.msk [vmem:[%s3 + $0x98] sm:$0xff] %vm3150, %v2913
  %3171 = vst.msk [vmem:[%s3 + $0xa0] sm:$0xff] %vm3150, %v2914
  %3172 = vst.msk [vmem:[%s3 + $0xa8] sm:$0xff] %vm3150, %v2915
  %3173 = vst.msk [vmem:[%s3 + $0xb0] sm:$0xff] %vm3150, %v2916
  %3174 = vst.msk [vmem:[%s3 + $0xb8] sm:$0xff] %vm3150, %v2917
  %3175 = vst.msk [vmem:[%s3 + $0xc0] sm:$0xff] %vm3150, %v2918
  %3176 = vst.msk [vmem:[%s3 + $0xc8] sm:$0xff] %vm3150, %v2919
  %3177 = vst.msk [vmem:[%s3 + $0xd0] sm:$0xff] %vm3150, %v2920
  %3178 = vst.msk [vmem:[%s3 + $0xd8] sm:$0xff] %vm3150, %v2921
  %3179 = vst.msk [vmem:[%s3 + $0xe0] sm:$0xff] %vm3150, %v2922
  %3180 = vst.msk [vmem:[%s3 + $0xe8] sm:$0xff] %vm3150, %v2923
  %3181 = vst.msk [vmem:[%s3 + $0xf0] sm:$0xff] %vm3150, %v2924
  %3182 = vst.msk [vmem:[%s3 + $0xf8] sm:$0xff] %vm3150, %v2925
  %3183 = vst.msk [vmem:[%s3 + $0x100] sm:$0xff] %vm3150, %v2926
  %3184 = vst.msk [vmem:[%s3 + $0x108] sm:$0xff] %vm3150, %v2927
  %3185 = vst.msk [vmem:[%s3 + $0x110] sm:$0xff] %vm3150, %v2928
  %3186 = vst.msk [vmem:[%s3 + $0x118] sm:$0xff] %vm3150, %v2929
  %3187 = vst.msk [vmem:[%s3 + $0x120] sm:$0xff] %vm3150, %v2930
  %3188 = vst.msk [vmem:[%s3 + $0x128] sm:$0xff] %vm3150, %v2931
  %3189 = vst.msk [vmem:[%s3 + $0x130] sm:$0xff] %vm3150, %v2932
  %3190 = vst.msk [vmem:[%s3 + $0x138] sm:$0xff] %vm3150, %v2933
  %3191 = vst.msk [vmem:[%s3 + $0x140] sm:$0xff] %vm3150, %v2934
  %3192 = vst.msk [vmem:[%s3 + $0x148] sm:$0xff] %vm3150, %v2935
  %3193 = vst.msk [vmem:[%s3 + $0x150] sm:$0xff] %vm3150, %v2936
  %3194 = vst.msk [vmem:[%s3 + $0x158] sm:$0xff] %vm3150, %v2937
  %3195 = vst.msk [vmem:[%s3 + $0x160] sm:$0xff] %vm3150, %v2938
  %3196 = vst.msk [vmem:[%s3 + $0x168] sm:$0xff] %vm3150, %v2939
  %3197 = vst.msk [vmem:[%s3 + $0x170] sm:$0xff] %vm3150, %v2940
  %3198 = vst.msk [vmem:[%s3 + $0x178] sm:$0xff] %vm3150, %v2941
  %3199 = vst.msk [vmem:[%s3 + $0x180] sm:$0xff] %vm3150, %v2942
  %3200 = vst.msk [vmem:[%s3 + $0x188] sm:$0xff] %vm3150, %v2943
  %3201 = vst.msk [vmem:[%s3 + $0x190] sm:$0xff] %vm3150, %v2944
  %3202 = vst.msk [vmem:[%s3 + $0x198] sm:$0xff] %vm3150, %v2945
  %3203 = vst.msk [vmem:[%s3 + $0x1a0] sm:$0xff] %vm3150, %v2946
  %3204 = vst.msk [vmem:[%s3 + $0x1a8] sm:$0xff] %vm3150, %v2947
  %3205 = vst.msk [vmem:[%s3 + $0x1b0] sm:$0xff] %vm3150, %v2948
  %3206 = vst.msk [vmem:[%s3 + $0x1b8] sm:$0xff] %vm3150, %v2949
  %3207 = vst.msk [vmem:[%s3 + $0x1c0] sm:$0xff] %vm3150, %v2950
  %3208 = vst.msk [vmem:[%s3 + $0x1c8] sm:$0xff] %vm3150, %v2951
  %3209 = vst.msk [vmem:[%s3 + $0x1d0] sm:$0xff] %vm3150, %v2952
  %3210 = vst.msk [vmem:[%s3 + $0x1d8] sm:$0xff] %vm3150, %v2953
  %3211 = vst.msk [vmem:[%s3 + $0x1e0] sm:$0xff] %vm3150, %v2954
  %3212 = vst.msk [vmem:[%s3 + $0x1e8] sm:$0xff] %vm3150, %v2955
  %3213 = vst.msk [vmem:[%s3 + $0x1f0] sm:$0xff] %vm3150, %v2956
  %3214 = vst.msk [vmem:[%s3 + $0x1f8] sm:$0xff] %vm3150, %v2957
  %3215 = vst.msk [vmem:[%s3 + $0x200] sm:$0xff] %vm3150, %v2958
  %3216 = vst.msk [vmem:[%s3 + $0x208] sm:$0xff] %vm3150, %v2959
  %3217 = vst.msk [vmem:[%s3 + $0x210] sm:$0xff] %vm3150, %v2960
  %3218 = vst.msk [vmem:[%s3 + $0x218] sm:$0xff] %vm3150, %v2961
  %3219 = vst.msk [vmem:[%s3 + $0x220] sm:$0xff] %vm3150, %v2962
  %3220 = vst.msk [vmem:[%s3 + $0x228] sm:$0xff] %vm3150, %v2963
  %3221 = vst.msk [vmem:[%s3 + $0x230] sm:$0xff] %vm3150, %v2964
  %3222 = vst.msk [vmem:[%s3 + $0x238] sm:$0xff] %vm3150, %v2965
  %3223 = vst.msk [vmem:[%s3 + $0x240] sm:$0xff] %vm3150, %v2966
  %3224 = vst.msk [vmem:[%s3 + $0x248] sm:$0xff] %vm3150, %v2967
  %3225 = vst.msk [vmem:[%s3 + $0x250] sm:$0xff] %vm3150, %v2968
  %3226 = vst.msk [vmem:[%s3 + $0x258] sm:$0xff] %vm3150, %v2969
  %3227 = vst.msk [vmem:[%s3 + $0x260] sm:$0xff] %vm3150, %v2970
  %3228 = vst.msk [vmem:[%s3 + $0x268] sm:$0xff] %vm3150, %v2971
  %3229 = vst.msk [vmem:[%s3 + $0x270] sm:$0xff] %vm3150, %v2972
  %3230 = vst.msk [vmem:[%s3 + $0x278] sm:$0xff] %vm3150, %v2973
  %3231 = vst.msk [vmem:[%s3 + $0x280] sm:$0xff] %vm3150, %v2974
  %3232 = vst.msk [vmem:[%s3 + $0x288] sm:$0xff] %vm3150, %v2975
  %3233 = vst.msk [vmem:[%s3 + $0x290] sm:$0xff] %vm3150, %v2976
  %3234 = vst.msk [vmem:[%s3 + $0x298] sm:$0xff] %vm3150, %v2977
  %3235 = vst.msk [vmem:[%s3 + $0x2a0] sm:$0xff] %vm3150, %v2978
  %3236 = vst.msk [vmem:[%s3 + $0x2a8] sm:$0xff] %vm3150, %v2979
  %3237 = vst.msk [vmem:[%s3 + $0x2b0] sm:$0xff] %vm3150, %v2980
  %3238 = vst.msk [vmem:[%s3 + $0x2b8] sm:$0xff] %vm3150, %v2981
  %3239 = vst.msk [vmem:[%s3 + $0x2c0] sm:$0xff] %vm3150, %v2982
  %3240 = vst.msk [vmem:[%s3 + $0x2c8] sm:$0xff] %vm3150, %v2983
  %3241 = vst.msk [vmem:[%s3 + $0x2d0] sm:$0xff] %vm3150, %v2984
  %3242 = vst.msk [vmem:[%s3 + $0x2d8] sm:$0xff] %vm3150, %v2985
  %3243 = vst.msk [vmem:[%s3 + $0x2e0] sm:$0xff] %vm3150, %v2986
  %3244 = vst.msk [vmem:[%s3 + $0x2e8] sm:$0xff] %vm3150, %v2987
  %3245 = vst.msk [vmem:[%s3 + $0x2f0] sm:$0xff] %vm3150, %v2988
  %3246 = vst.msk [vmem:[%s3 + $0x2f8] sm:$0xff] %vm3150, %v2989
  %3247 = vst.msk [vmem:[%s3 + $0x300] sm:$0xff] %vm3150, %v2990
  %3248 = vst.msk [vmem:[%s3 + $0x308] sm:$0xff] %vm3150, %v2991
  %3249 = vst.msk [vmem:[%s3 + $0x310] sm:$0xff] %vm3150, %v2992
  %3250 = vst.msk [vmem:[%s3 + $0x318] sm:$0xff] %vm3150, %v2993
  %3251 = vst.msk [vmem:[%s3 + $0x320] sm:$0xff] %vm3150, %v2994
  %3252 = vst.msk [vmem:[%s3 + $0x328] sm:$0xff] %vm3150, %v2995
  %3253 = vst.msk [vmem:[%s3 + $0x330] sm:$0xff] %vm3150, %v2996
  %3254 = vst.msk [vmem:[%s3 + $0x338] sm:$0xff] %vm3150, %v2997
  %3255 = vst.msk [vmem:[%s3 + $0x340] sm:$0xff] %vm3150, %v2998
  %3256 = vst.msk [vmem:[%s3 + $0x348] sm:$0xff] %vm3150, %v2999
  %3257 = vst.msk [vmem:[%s3 + $0x350] sm:$0xff] %vm3150, %v3000
  %3258 = vst.msk [vmem:[%s3 + $0x358] sm:$0xff] %vm3150, %v3001
  %3259 = vst.msk [vmem:[%s3 + $0x360] sm:$0xff] %vm3150, %v3002
  %3260 = vst.msk [vmem:[%s3 + $0x368] sm:$0xff] %vm3150, %v3003
  %3261 = vst.msk [vmem:[%s3 + $0x370] sm:$0xff] %vm3150, %v3004
  %3262 = vst.msk [vmem:[%s3 + $0x378] sm:$0xff] %vm3150, %v3005
  %3263 = vst.msk [vmem:[%s3 + $0x380] sm:$0xff] %vm3150, %v3006
  %3264 = vst.msk [vmem:[%s3 + $0x388] sm:$0xff] %vm3150, %v3007
  %3265 = vst.msk [vmem:[%s3 + $0x390] sm:$0xff] %vm3150, %v3008
  %3266 = vst.msk [vmem:[%s3 + $0x398] sm:$0xff] %vm3150, %v3009
  %3267 = vst.msk [vmem:[%s3 + $0x3a0] sm:$0xff] %vm3150, %v3010
  %3268 = vst.msk [vmem:[%s3 + $0x3a8] sm:$0xff] %vm3150, %v3011
  %3269 = vst.msk [vmem:[%s3 + $0x3b0] sm:$0xff] %vm3150, %v3012
  %3270 = vst.msk [vmem:[%s3 + $0x3b8] sm:$0xff] %vm3150, %v3013
  %3271 = vst.msk [vmem:[%s3 + $0x3c0] sm:$0xff] %vm3150, %v3014
  %3272 = vst.msk [vmem:[%s3 + $0x3c8] sm:$0xff] %vm3150, %v3015
  %3273 = vst.msk [vmem:[%s3 + $0x3d0] sm:$0xff] %vm3150, %v3016
  %3274 = vst.msk [vmem:[%s3 + $0x3d8] sm:$0xff] %vm3150, %v3017
  %3275 = vst.msk [vmem:[%s3 + $0x3e0] sm:$0xff] %vm3150, %v3018
  %3276 = vst.msk [vmem:[%s3 + $0x3e8] sm:$0xff] %vm3150, %v3019
  %3277 = vst.msk [vmem:[%s3 + $0x3f0] sm:$0xff] %vm3150, %v3020
  %3278 = vst.msk [vmem:[%s3 + $0x3f8] sm:$0xff] %vm3150, %v3021
  %3279 = vst.msk [vmem:[%s3 + $0x400] sm:$0xff] %vm3150, %v3022
  %3280 = vst.msk [vmem:[%s3 + $0x408] sm:$0xff] %vm3150, %v3023
  %3281 = vst.msk [vmem:[%s3 + $0x410] sm:$0xff] %vm3150, %v3024
  %3282 = vst.msk [vmem:[%s3 + $0x418] sm:$0xff] %vm3150, %v3025
  %3283 = vst.msk [vmem:[%s3 + $0x420] sm:$0xff] %vm3150, %v3026
  %3284 = vst.msk [vmem:[%s3 + $0x428] sm:$0xff] %vm3150, %v3027
  %3285 = vst.msk [vmem:[%s3 + $0x430] sm:$0xff] %vm3150, %v3028
  %3286 = vst.msk [vmem:[%s3 + $0x438] sm:$0xff] %vm3150, %v3029
  %3287 = vst.msk [vmem:[%s3 + $0x440] sm:$0xff] %vm3150, %v3030
  %3288 = vst.msk [vmem:[%s3 + $0x448] sm:$0xff] %vm3150, %v3031
  %3289 = vst.msk [vmem:[%s3 + $0x450] sm:$0xff] %vm3150, %v3032
  %3290 = vst.msk [vmem:[%s3 + $0x458] sm:$0xff] %vm3150, %v3033
  %3291 = vst.msk [vmem:[%s3 + $0x460] sm:$0xff] %vm3150, %v3034
  %3292 = vst.msk [vmem:[%s3 + $0x468] sm:$0xff] %vm3150, %v3035
  %3293 = vst.msk [vmem:[%s3 + $0x470] sm:$0xff] %vm3150, %v3036
  %3294 = vst.msk [vmem:[%s3 + $0x478] sm:$0xff] %vm3150, %v3037
  %3295 = vst.msk [vmem:[%s3 + $0x480] sm:$0xff] %vm3150, %v3038
  %3296 = vst.msk [vmem:[%s3 + $0x488] sm:$0xff] %vm3150, %v3039
  %3297 = vst.msk [vmem:[%s3 + $0x490] sm:$0xff] %vm3150, %v3040
  %3298 = vst.msk [vmem:[%s3 + $0x498] sm:$0xff] %vm3150, %v3041
  %3299 = vst.msk [vmem:[%s3 + $0x4a0] sm:$0xff] %vm3150, %v3042
  %3300 = vst.msk [vmem:[%s3 + $0x4a8] sm:$0xff] %vm3150, %v3043
  %3301 = vst.msk [vmem:[%s3 + $0x4b0] sm:$0xff] %vm3150, %v3044
  %3302 = vst.msk [vmem:[%s3 + $0x4b8] sm:$0xff] %vm3150, %v3045
  %3303 = vst.msk [vmem:[%s3 + $0x4c0] sm:$0xff] %vm3150, %v3046
  %3304 = vst.msk [vmem:[%s3 + $0x4c8] sm:$0xff] %vm3150, %v3047
  %3305 = vst.msk [vmem:[%s3 + $0x4d0] sm:$0xff] %vm3150, %v3048
  %3306 = vst.msk [vmem:[%s3 + $0x4d8] sm:$0xff] %vm3150, %v3049
  %3307 = vst.msk [vmem:[%s3 + $0x4e0] sm:$0xff] %vm3150, %v3050
  %3308 = vst.msk [vmem:[%s3 + $0x4e8] sm:$0xff] %vm3150, %v3051
  %3309 = vst.msk [vmem:[%s3 + $0x4f0] sm:$0xff] %vm3150, %v3052
  %3310 = vst.msk [vmem:[%s3 + $0x4f8] sm:$0xff] %vm3150, %v3053
  %3311 = vst.msk [vmem:[%s3 + $0x500] sm:$0xff] %vm3150, %v3054
  %3312 = vst.msk [vmem:[%s3 + $0x508] sm:$0xff] %vm3150, %v3055
  %3313 = vst.msk [vmem:[%s3 + $0x510] sm:$0xff] %vm3150, %v3056
  %3314 = vst.msk [vmem:[%s3 + $0x518] sm:$0xff] %vm3150, %v3057
  %3315 = vst.msk [vmem:[%s3 + $0x520] sm:$0xff] %vm3150, %v3058
  %3316 = vst.msk [vmem:[%s3 + $0x528] sm:$0xff] %vm3150, %v3059
  %3317 = vst.msk [vmem:[%s3 + $0x530] sm:$0xff] %vm3150, %v3060
  %3318 = vst.msk [vmem:[%s3 + $0x538] sm:$0xff] %vm3150, %v3061
  %3319 = vst.msk [vmem:[%s3 + $0x540] sm:$0xff] %vm3150, %v3062
  %3320 = vst.msk [vmem:[%s3 + $0x548] sm:$0xff] %vm3150, %v3063
  %3321 = vst.msk [vmem:[%s3 + $0x550] sm:$0xff] %vm3150, %v3064
  %3322 = vst.msk [vmem:[%s3 + $0x558] sm:$0xff] %vm3150, %v3065
  %3323 = vst.msk [vmem:[%s3 + $0x560] sm:$0xff] %vm3150, %v3066
  %3324 = vst.msk [vmem:[%s3 + $0x568] sm:$0xff] %vm3150, %v3067
  %3325 = vst.msk [vmem:[%s3 + $0x570] sm:$0xff] %vm3150, %v3068
  %3326 = vst.msk [vmem:[%s3 + $0x578] sm:$0xff] %vm3150, %v3069
  %3327 = vst.msk [vmem:[%s3 + $0x580] sm:$0xff] %vm3150, %v3070
  %3328 = vst.msk [vmem:[%s3 + $0x588] sm:$0xff] %vm3150, %v3071
  %3329 = vst.msk [vmem:[%s3 + $0x590] sm:$0xff] %vm3150, %v3072
  %3330 = vst.msk [vmem:[%s3 + $0x598] sm:$0xff] %vm3150, %v3073
  %3331 = vst.msk [vmem:[%s3 + $0x5a0] sm:$0xff] %vm3150, %v3074
  %3332 = vst.msk [vmem:[%s3 + $0x5a8] sm:$0xff] %vm3150, %v3075
  %3333 = vst.msk [vmem:[%s3 + $0x5b0] sm:$0xff] %vm3150, %v3076
  %3334 = vst.msk [vmem:[%s3 + $0x5b8] sm:$0xff] %vm3150, %v3077
  %3335 = vst.msk [vmem:[%s3 + $0x5c0] sm:$0xff] %vm3150, %v3078
  %3336 = vst.msk [vmem:[%s3 + $0x5c8] sm:$0xff] %vm3150, %v3079
  %3337 = vst.msk [vmem:[%s3 + $0x5d0] sm:$0xff] %vm3150, %v3080
  %3338 = vst.msk [vmem:[%s3 + $0x5d8] sm:$0xff] %vm3150, %v3081
  %3339 = vst.msk [vmem:[%s3 + $0x5e0] sm:$0xff] %vm3150, %v3082
  %3340 = vst.msk [vmem:[%s3 + $0x5e8] sm:$0xff] %vm3150, %v3083
  %3341 = vst.msk [vmem:[%s3 + $0x5f0] sm:$0xff] %vm3150, %v3084
  %3342 = vst.msk [vmem:[%s3 + $0x5f8] sm:$0xff] %vm3150, %v3085
  %3343 = vst.msk [vmem:[%s3 + $0x600] sm:$0xff] %vm3150, %v3086
  %3344 = vst.msk [vmem:[%s3 + $0x608] sm:$0xff] %vm3150, %v3087
  %3345 = vst.msk [vmem:[%s3 + $0x610] sm:$0xff] %vm3150, %v3088
  %3346 = vst.msk [vmem:[%s3 + $0x618] sm:$0xff] %vm3150, %v3089
  %3347 = vst.msk [vmem:[%s3 + $0x620] sm:$0xff] %vm3150, %v3090
  %3348 = vst.msk [vmem:[%s3 + $0x628] sm:$0xff] %vm3150, %v3091
  %3349 = vst.msk [vmem:[%s3 + $0x630] sm:$0xff] %vm3150, %v3092
  %3350 = vst.msk [vmem:[%s3 + $0x638] sm:$0xff] %vm3150, %v3093
  %3351 = vst.msk [vmem:[%s3 + $0x640] sm:$0xff] %vm3150, %v3094
  %3352 = vst.msk [vmem:[%s3 + $0x648] sm:$0xff] %vm3150, %v3095
  %3353 = vst.msk [vmem:[%s3 + $0x650] sm:$0xff] %vm3150, %v3096
  %3354 = vst.msk [vmem:[%s3 + $0x658] sm:$0xff] %vm3150, %v3097
  %3355 = vst.msk [vmem:[%s3 + $0x660] sm:$0xff] %vm3150, %v3098
  %3356 = vst.msk [vmem:[%s3 + $0x668] sm:$0xff] %vm3150, %v3099
  %3357 = vst.msk [vmem:[%s3 + $0x670] sm:$0xff] %vm3150, %v3100
  %3358 = vst.msk [vmem:[%s3 + $0x678] sm:$0xff] %vm3150, %v3101
  %3359 = vst.msk [vmem:[%s3 + $0x680] sm:$0xff] %vm3150, %v3102
  %3360 = vst.msk [vmem:[%s3 + $0x688] sm:$0xff] %vm3150, %v3103
  %3361 = vst.msk [vmem:[%s3 + $0x690] sm:$0xff] %vm3150, %v3104
  %3362 = vst.msk [vmem:[%s3 + $0x698] sm:$0xff] %vm3150, %v3105
  %3363 = vst.msk [vmem:[%s3 + $0x6a0] sm:$0xff] %vm3150, %v3106
  %3364 = vst.msk [vmem:[%s3 + $0x6a8] sm:$0xff] %vm3150, %v3107
  %3365 = vst.msk [vmem:[%s3 + $0x6b0] sm:$0xff] %vm3150, %v3108
  %3366 = vst.msk [vmem:[%s3 + $0x6b8] sm:$0xff] %vm3150, %v3109
  %3367 = vst.msk [vmem:[%s3 + $0x6c0] sm:$0xff] %vm3150, %v3110
  %3368 = vst.msk [vmem:[%s3 + $0x6c8] sm:$0xff] %vm3150, %v3111
  %3369 = vst.msk [vmem:[%s3 + $0x6d0] sm:$0xff] %vm3150, %v3112
  %3370 = vst.msk [vmem:[%s3 + $0x6d8] sm:$0xff] %vm3150, %v3113
  %3371 = vst.msk [vmem:[%s3 + $0x6e0] sm:$0xff] %vm3150, %v3114
  %3372 = vst.msk [vmem:[%s3 + $0x6e8] sm:$0xff] %vm3150, %v3115
  %3373 = vst.msk [vmem:[%s3 + $0x6f0] sm:$0xff] %vm3150, %v3116
  %3374 = vst.msk [vmem:[%s3 + $0x6f8] sm:$0xff] %vm3150, %v3117
  %3375 = vst.msk [vmem:[%s3 + $0x700] sm:$0xff] %vm3150, %v3118
  %3376 = vst.msk [vmem:[%s3 + $0x708] sm:$0xff] %vm3150, %v3119
  %3377 = vst.msk [vmem:[%s3 + $0x710] sm:$0xff] %vm3150, %v3120
  %3378 = vst.msk [vmem:[%s3 + $0x718] sm:$0xff] %vm3150, %v3121
  %3379 = vst.msk [vmem:[%s3 + $0x720] sm:$0xff] %vm3150, %v3122
  %3380 = vst.msk [vmem:[%s3 + $0x728] sm:$0xff] %vm3150, %v3123
  %3381 = vst.msk [vmem:[%s3 + $0x730] sm:$0xff] %vm3150, %v3124
  %3382 = vst.msk [vmem:[%s3 + $0x738] sm:$0xff] %vm3150, %v3125
  %3383 = vst.msk [vmem:[%s3 + $0x740] sm:$0xff] %vm3150, %v3126
  %3384 = vst.msk [vmem:[%s3 + $0x748] sm:$0xff] %vm3150, %v3127
  %3385 = vst.msk [vmem:[%s3 + $0x750] sm:$0xff] %vm3150, %v3128
  %3386 = vst.msk [vmem:[%s3 + $0x758] sm:$0xff] %vm3150, %v3129
  %3387 = vst.msk [vmem:[%s3 + $0x760] sm:$0xff] %vm3150, %v3130
  %3388 = vst.msk [vmem:[%s3 + $0x768] sm:$0xff] %vm3150, %v3131
  %3389 = vst.msk [vmem:[%s3 + $0x770] sm:$0xff] %vm3150, %v3132
  %3390 = vst.msk [vmem:[%s3 + $0x778] sm:$0xff] %vm3150, %v3133
  %3391 = vst.msk [vmem:[%s3 + $0x780] sm:$0xff] %vm3150, %v3134
  %3392 = vst.msk [vmem:[%s3 + $0x788] sm:$0xff] %vm3150, %v3135
  %3393 = vst.msk [vmem:[%s3 + $0x790] sm:$0xff] %vm3150, %v3136
  %3394 = vst.msk [vmem:[%s3 + $0x798] sm:$0xff] %vm3150, %v3137
  %3395 = vst.msk [vmem:[%s3 + $0x7a0] sm:$0xff] %vm3150, %v3138
  %3396 = vst.msk [vmem:[%s3 + $0x7a8] sm:$0xff] %vm3150, %v3139
  %3397 = vst.msk [vmem:[%s3 + $0x7b0] sm:$0xff] %vm3150, %v3140
  %3398 = vst.msk [vmem:[%s3 + $0x7b8] sm:$0xff] %vm3150, %v3141
  %3399 = vst.msk [vmem:[%s3 + $0x7c0] sm:$0xff] %vm3150, %v3142
  %3400 = vst.msk [vmem:[%s3 + $0x7c8] sm:$0xff] %vm3150, %v3143
  %3401 = vst.msk [vmem:[%s3 + $0x7d0] sm:$0xff] %vm3150, %v3144
  %3402 = vst.msk [vmem:[%s3 + $0x7d8] sm:$0xff] %vm3150, %v3145
  %3403 = vst.msk [vmem:[%s3 + $0x7e0] sm:$0xff] %vm3150, %v3146
  %3404 = vst.msk [vmem:[%s3 + $0x7e8] sm:$0xff] %vm3150, %v3147
  %3405 = vst.msk [vmem:[%s3 + $0x7f0] sm:$0xff] %vm3150, %v3148
  %3406 = vst.msk [vmem:[%s3 + $0x7f8] sm:$0xff] %vm3150, %v3149
  // Predicated region
  $region14: #{model_forward.7} parent=0 // pred_check
    _
  $region15: #{model_forward.7} parent=0 // pred_check_branch
    %3408 = sbr.rel (0) target = $region17
  $region16: #{model_forward.7} parent=0 // pred_region
    _
  $region17: #{model_forward.7} parent=0 // pred_fallthru
    _
  // Predicated region
  $region18: #{model_forward.7} parent=0 // pred_check
    _
  $region19: #{model_forward.7} parent=0 // pred_check_branch
    %3410 = sbr.rel (0) target = $region21
  $region20: #{model_forward.7} parent=0 // pred_region
    _
  $region21: #{model_forward.7} parent=0 // pred_fallthru
    _

// kernel: model_forward.9
$region0: #{model_forward.9}
  #allocation0 [shape = 'u32[]', space=smem, size = 0x4, offset = 0x4, fixed_abs, tag = 'smem constant byte address 0x4 - core index']
  #allocation1 [shape = 'u32[144,128]{1,0:T(1,128)}', space=vmem, size = 0x12000, scoped, tag = 'internal scratch']
  %s0 = inlined_call_operand.vmem [shape: bf16[128,576], index: 0, kind: input, shape index: {}]
  %s1 = inlined_call_operand.vmem [shape: bf16[576,128], index: 1, kind: input, shape index: {}]
  %s2 = inlined_call_operand.vmem [shape: f32[1,128], index: 2, kind: input, shape index: {}]
  %s3 = inlined_call_operand.vmem [shape: f32[128,128], index: 3, kind: output, shape index: {}]
  %s4 = sld [smem:[#allocation0]]
  $region22: #{model_forward.9} parent=0
    _
  %s6 = ssub.s32 1, %s4
  %s7 = scalar_select 0, %s6, %s4
  // Predicated region
  $region2: #{model_forward.9} parent=0 // pred_check
    _
  $region3: #{model_forward.9} parent=0 // pred_check_branch
    %9 = sbr.rel (0) target = $region5
  $region4: #{model_forward.9} parent=0 // pred_region
    _
  $region5: #{model_forward.9} parent=0 // pred_fallthru
    _
  // Predicated region
  $region6: #{model_forward.9} parent=0 // pred_check
    _
  $region7: #{model_forward.9} parent=0 // pred_check_branch
    %11 = sbr.rel (0) target = $region9
  $region8: #{model_forward.9} parent=0 // pred_region
    _
  $region9: #{model_forward.9} parent=0 // pred_fallthru
    _
  // Predicated region
  $region10: #{model_forward.9} parent=0 // pred_check
    _
  $region11: #{model_forward.9} parent=0 // pred_check_branch
    %13 = sbr.rel (0) target = $region13
  $region12: #{model_forward.9} parent=0 // pred_region
    _
  $region13: #{model_forward.9} parent=0 // pred_fallthru
    _
  %v15 = vld [vmem:[%s0] sm:$0xff]
  %v16 = vld [vmem:[%s0 + $0x8] sm:$0xff]
  %v17 = vld [vmem:[%s0 + $0x10] sm:$0xf]
  %v18 = vld [vmem:[%s0 + $0x14] sm:$0xff]
  %v19 = vld [vmem:[%s0 + $0x1c] sm:$0xff]
  %v20 = vld [vmem:[%s0 + $0x24] sm:$0xf]
  %v21 = vld [vmem:[%s0 + $0x28] sm:$0xff]
  %v22 = vld [vmem:[%s0 + $0x30] sm:$0xff]
  %v23 = vld [vmem:[%s0 + $0x38] sm:$0xf]
  %v24 = vld [vmem:[%s0 + $0x3c] sm:$0xff]
  %v25 = vld [vmem:[%s0 + $0x44] sm:$0xff]
  %v26 = vld [vmem:[%s0 + $0x4c] sm:$0xf]
  %v27 = vld [vmem:[%s0 + $0x50] sm:$0xff]
  %v28 = vld [vmem:[%s0 + $0x58] sm:$0xff]
  %v29 = vld [vmem:[%s0 + $0x60] sm:$0xf]
  %v30 = vld [vmem:[%s0 + $0x64] sm:$0xff]
  %v31 = vld [vmem:[%s0 + $0x6c] sm:$0xff]
  %v32 = vld [vmem:[%s0 + $0x74] sm:$0xf]
  %v33 = vld [vmem:[%s0 + $0x78] sm:$0xff]
  %v34 = vld [vmem:[%s0 + $0x80] sm:$0xff]
  %v35 = vld [vmem:[%s0 + $0x88] sm:$0xf]
  %v36 = vld [vmem:[%s0 + $0x8c] sm:$0xff]
  %v37 = vld [vmem:[%s0 + $0x94] sm:$0xff]
  %v38 = vld [vmem:[%s0 + $0x9c] sm:$0xf]
  %v39 = vld [vmem:[%s0 + $0xa0] sm:$0xff]
  %v40 = vld [vmem:[%s0 + $0xa8] sm:$0xff]
  %v41 = vld [vmem:[%s0 + $0xb0] sm:$0xf]
  %v42 = vld [vmem:[%s0 + $0xb4] sm:$0xff]
  %v43 = vld [vmem:[%s0 + $0xbc] sm:$0xff]
  %v44 = vld [vmem:[%s0 + $0xc4] sm:$0xf]
  %v45 = vld [vmem:[%s0 + $0xc8] sm:$0xff]
  %v46 = vld [vmem:[%s0 + $0xd0] sm:$0xff]
  %v47 = vld [vmem:[%s0 + $0xd8] sm:$0xf]
  %v48 = vld [vmem:[%s0 + $0xdc] sm:$0xff]
  %v49 = vld [vmem:[%s0 + $0xe4] sm:$0xff]
  %v50 = vld [vmem:[%s0 + $0xec] sm:$0xf]
  %v51 = vld [vmem:[%s0 + $0xf0] sm:$0xff]
  %v52 = vld [vmem:[%s0 + $0xf8] sm:$0xff]
  %v53 = vld [vmem:[%s0 + $0x100] sm:$0xf]
  %v54 = vld [vmem:[%s0 + $0x104] sm:$0xff]
  %v55 = vld [vmem:[%s0 + $0x10c] sm:$0xff]
  %v56 = vld [vmem:[%s0 + $0x114] sm:$0xf]
  %v57 = vld [vmem:[%s0 + $0x118] sm:$0xff]
  %v58 = vld [vmem:[%s0 + $0x120] sm:$0xff]
  %v59 = vld [vmem:[%s0 + $0x128] sm:$0xf]
  %v60 = vld [vmem:[%s0 + $0x12c] sm:$0xff]
  %v61 = vld [vmem:[%s0 + $0x134] sm:$0xff]
  %v62 = vld [vmem:[%s0 + $0x13c] sm:$0xf]
  %v63 = vld [vmem:[%s1] sm:$0xf]
  %v64 = vld [vmem:[%s1 + $0x4] sm:$0xf]
  %v65 = vld [vmem:[%s1 + $0x8] sm:$0xf]
  %v66 = vld [vmem:[%s1 + $0xc] sm:$0xf]
  %v67 = vld [vmem:[%s1 + $0x10] sm:$0xf]
  %v68 = vld [vmem:[%s1 + $0x14] sm:$0xf]
  %v69 = vld [vmem:[%s1 + $0x18] sm:$0xf]
  %v70 = vld [vmem:[%s1 + $0x1c] sm:$0xf]
  %v71 = vld [vmem:[%s1 + $0x20] sm:$0xf]
  %v72 = vld [vmem:[%s1 + $0x24] sm:$0xf]
  %v73 = vld [vmem:[%s1 + $0x28] sm:$0xf]
  %v74 = vld [vmem:[%s1 + $0x2c] sm:$0xf]
  %v75 = vld [vmem:[%s1 + $0x30] sm:$0xf]
  %v76 = vld [vmem:[%s1 + $0x34] sm:$0xf]
  %v77 = vld [vmem:[%s1 + $0x38] sm:$0xf]
  %v78 = vld [vmem:[%s1 + $0x3c] sm:$0xf]
  %v79 = vld [vmem:[%s1 + $0x40] sm:$0xf]
  %v80 = vld [vmem:[%s1 + $0x44] sm:$0xf]
  %v81 = vld [vmem:[%s1 + $0x48] sm:$0xf]
  %v82 = vld [vmem:[%s1 + $0x4c] sm:$0xf]
  %v83 = vld [vmem:[%s1 + $0x50] sm:$0xf]
  %v84 = vld [vmem:[%s1 + $0x54] sm:$0xf]
  %v85 = vld [vmem:[%s1 + $0x58] sm:$0xf]
  %v86 = vld [vmem:[%s1 + $0x5c] sm:$0xf]
  %v87 = vld [vmem:[%s1 + $0x60] sm:$0xf]
  %v88 = vld [vmem:[%s1 + $0x64] sm:$0xf]
  %v89 = vld [vmem:[%s1 + $0x68] sm:$0xf]
  %v90 = vld [vmem:[%s1 + $0x6c] sm:$0xf]
  %v91 = vld [vmem:[%s1 + $0x70] sm:$0xf]
  %v92 = vld [vmem:[%s1 + $0x74] sm:$0xf]
  %v93 = vld [vmem:[%s1 + $0x78] sm:$0xf]
  %v94 = vld [vmem:[%s1 + $0x7c] sm:$0xf]
  %v95 = vld [vmem:[%s1 + $0x80] sm:$0xf]
  %v96 = vld [vmem:[%s1 + $0x84] sm:$0xf]
  %v97 = vld [vmem:[%s1 + $0x88] sm:$0xf]
  %v98 = vld [vmem:[%s1 + $0x8c] sm:$0xf]
  %v99 = vld [vmem:[%s1 + $0x90] sm:$0xf]
  %v100 = vld [vmem:[%s1 + $0x94] sm:$0xf]
  %v101 = vld [vmem:[%s1 + $0x98] sm:$0xf]
  %v102 = vld [vmem:[%s1 + $0x9c] sm:$0xf]
  %v103 = vld [vmem:[%s1 + $0xa0] sm:$0xf]
  %v104 = vld [vmem:[%s1 + $0xa4] sm:$0xf]
  %v105 = vld [vmem:[%s1 + $0xa8] sm:$0xf]
  %v106 = vld [vmem:[%s1 + $0xac] sm:$0xf]
  %v107 = vld [vmem:[%s1 + $0xb0] sm:$0xf]
  %v108 = vld [vmem:[%s1 + $0xb4] sm:$0xf]
  %v109 = vld [vmem:[%s1 + $0xb8] sm:$0xf]
  %v110 = vld [vmem:[%s1 + $0xbc] sm:$0xf]
  %v111 = vld [vmem:[%s1 + $0xc0] sm:$0xf]
  %v112 = vld [vmem:[%s1 + $0xc4] sm:$0xf]
  %v113 = vld [vmem:[%s1 + $0xc8] sm:$0xf]
  %v114 = vld [vmem:[%s1 + $0xcc] sm:$0xf]
  %v115 = vld [vmem:[%s1 + $0xd0] sm:$0xf]
  %v116 = vld [vmem:[%s1 + $0xd4] sm:$0xf]
  %v117 = vld [vmem:[%s1 + $0xd8] sm:$0xf]
  %v118 = vld [vmem:[%s1 + $0xdc] sm:$0xf]
  %v119 = vld [vmem:[%s1 + $0xe0] sm:$0xf]
  %v120 = vld [vmem:[%s1 + $0xe4] sm:$0xf]
  %v121 = vld [vmem:[%s1 + $0xe8] sm:$0xf]
  %v122 = vld [vmem:[%s1 + $0xec] sm:$0xf]
  %v123 = vld [vmem:[%s1 + $0xf0] sm:$0xf]
  %v124 = vld [vmem:[%s1 + $0xf4] sm:$0xf]
  %v125 = vld [vmem:[%s1 + $0xf8] sm:$0xf]
  %v126 = vld [vmem:[%s1 + $0xfc] sm:$0xf]
  %v127 = vld [vmem:[%s1 + $0x100] sm:$0xf]
  %v128 = vld [vmem:[%s1 + $0x104] sm:$0xf]
  %v129 = vld [vmem:[%s1 + $0x108] sm:$0xf]
  %v130 = vld [vmem:[%s1 + $0x10c] sm:$0xf]
  %v131 = vld [vmem:[%s1 + $0x110] sm:$0xf]
  %v132 = vld [vmem:[%s1 + $0x114] sm:$0xf]
  %v133 = vld [vmem:[%s1 + $0x118] sm:$0xf]
  %v134 = vld [vmem:[%s1 + $0x11c] sm:$0xf]
  %v135 = vld [vmem:[%s2] sm:$0x1]
  %v137 = vlaneseq
  %v138 = vshrl.u32 %v137, 7
  %v139 = vsub.s32 0, %v138
  %v140 = vrot.slane %v135, %v139
  %v190 = vunpack.c.l.b16 %v15
  %v191 = vunpack.c.h.b16 %v15
  %v192 = vunpack.c.l.b16 %v16
  %v193 = vunpack.c.h.b16 %v16
  %v194 = vunpack.c.l.b16 %v17
  %v195 = vunpack.c.l.b16 %v18
  %v196 = vunpack.c.h.b16 %v18
  %v197 = vunpack.c.l.b16 %v19
  %v198 = vunpack.c.h.b16 %v19
  %v199 = vunpack.c.l.b16 %v20
  %v200 = vunpack.c.l.b16 %v21
  %v201 = vunpack.c.h.b16 %v21
  %v202 = vunpack.c.l.b16 %v22
  %v203 = vunpack.c.h.b16 %v22
  %v204 = vunpack.c.l.b16 %v23
  %v205 = vunpack.c.l.b16 %v24
  %v206 = vunpack.c.h.b16 %v24
  %v207 = vunpack.c.l.b16 %v25
  %v208 = vunpack.c.h.b16 %v25
  %v209 = vunpack.c.l.b16 %v26
  %v210 = vunpack.c.l.b16 %v27
  %v211 = vunpack.c.h.b16 %v27
  %v212 = vunpack.c.l.b16 %v28
  %v213 = vunpack.c.h.b16 %v28
  %v214 = vunpack.c.l.b16 %v29
  %v215 = vunpack.c.l.b16 %v30
  %v216 = vunpack.c.h.b16 %v30
  %v217 = vunpack.c.l.b16 %v31
  %v218 = vunpack.c.h.b16 %v31
  %v219 = vunpack.c.l.b16 %v32
  %v220 = vunpack.c.l.b16 %v33
  %v221 = vunpack.c.h.b16 %v33
  %v222 = vunpack.c.l.b16 %v34
  %v223 = vunpack.c.h.b16 %v34
  %v224 = vunpack.c.l.b16 %v35
  %v225 = vunpack.c.l.b16 %v36
  %v226 = vunpack.c.h.b16 %v36
  %v227 = vunpack.c.l.b16 %v37
  %v228 = vunpack.c.h.b16 %v37
  %v229 = vunpack.c.l.b16 %v38
  %v230 = vunpack.c.l.b16 %v39
  %v231 = vunpack.c.h.b16 %v39
  %v232 = vunpack.c.l.b16 %v40
  %v233 = vunpack.c.h.b16 %v40
  %v234 = vunpack.c.l.b16 %v41
  %v235 = vunpack.c.l.b16 %v42
  %v236 = vunpack.c.h.b16 %v42
  %v237 = vunpack.c.l.b16 %v43
  %v238 = vunpack.c.h.b16 %v43
  %v239 = vunpack.c.l.b16 %v44
  %v240 = vunpack.c.l.b16 %v45
  %v241 = vunpack.c.h.b16 %v45
  %v242 = vunpack.c.l.b16 %v46
  %v243 = vunpack.c.h.b16 %v46
  %v244 = vunpack.c.l.b16 %v47
  %v245 = vunpack.c.l.b16 %v48
  %v246 = vunpack.c.h.b16 %v48
  %v247 = vunpack.c.l.b16 %v49
  %v248 = vunpack.c.h.b16 %v49
  %v249 = vunpack.c.l.b16 %v50
  %v250 = vunpack.c.l.b16 %v51
  %v251 = vunpack.c.h.b16 %v51
  %v252 = vunpack.c.l.b16 %v52
  %v253 = vunpack.c.h.b16 %v52
  %v254 = vunpack.c.l.b16 %v53
  %v255 = vunpack.c.l.b16 %v54
  %v256 = vunpack.c.h.b16 %v54
  %v257 = vunpack.c.l.b16 %v55
  %v258 = vunpack.c.h.b16 %v55
  %v259 = vunpack.c.l.b16 %v56
  %v260 = vunpack.c.l.b16 %v57
  %v261 = vunpack.c.h.b16 %v57
  %v262 = vunpack.c.l.b16 %v58
  %v263 = vunpack.c.h.b16 %v58
  %v264 = vunpack.c.l.b16 %v59
  %v265 = vunpack.c.l.b16 %v60
  %v266 = vunpack.c.h.b16 %v60
  %v267 = vunpack.c.l.b16 %v61
  %v268 = vunpack.c.h.b16 %v61
  %v269 = vunpack.c.l.b16 %v62
  %v270 = vpack.c.b16 %v195, %v190
  %v271 = vpack.c.b16 %v196, %v191
  %v272 = vpack.c.b16 %v197, %v192
  %v273 = vpack.c.b16 %v198, %v193
  %v274 = vpack.c.b16 %v199, %v194
  %v275 = vpack.c.b16 %v205, %v200
  %v276 = vpack.c.b16 %v206, %v201
  %v277 = vpack.c.b16 %v207, %v202
  %v278 = vpack.c.b16 %v208, %v203
  %v279 = vpack.c.b16 %v209, %v204
  %v280 = vpack.c.b16 %v215, %v210
  %v281 = vpack.c.b16 %v216, %v211
  %v282 = vpack.c.b16 %v217, %v212
  %v283 = vpack.c.b16 %v218, %v213
  %v284 = vpack.c.b16 %v219, %v214
  %v285 = vpack.c.b16 %v225, %v220
  %v286 = vpack.c.b16 %v226, %v221
  %v287 = vpack.c.b16 %v227, %v222
  %v288 = vpack.c.b16 %v228, %v223
  %v289 = vpack.c.b16 %v229, %v224
  %v290 = vpack.c.b16 %v235, %v230
  %v291 = vpack.c.b16 %v236, %v231
  %v292 = vpack.c.b16 %v237, %v232
  %v293 = vpack.c.b16 %v238, %v233
  %v294 = vpack.c.b16 %v239, %v234
  %v295 = vpack.c.b16 %v245, %v240
  %v296 = vpack.c.b16 %v246, %v241
  %v297 = vpack.c.b16 %v247, %v242
  %v298 = vpack.c.b16 %v248, %v243
  %v299 = vpack.c.b16 %v249, %v244
  %v300 = vpack.c.b16 %v255, %v250
  %v301 = vpack.c.b16 %v256, %v251
  %v302 = vpack.c.b16 %v257, %v252
  %v303 = vpack.c.b16 %v258, %v253
  %v304 = vpack.c.b16 %v259, %v254
  %v305 = vpack.c.b16 %v265, %v260
  %v306 = vpack.c.b16 %v266, %v261
  %v307 = vpack.c.b16 %v267, %v262
  %v308 = vpack.c.b16 %v268, %v263
  %v309 = vpack.c.b16 %v269, %v264
  %v414 = vunpack.c.l.b16 %v63
  %v415 = vunpack.c.l.b16 %v64
  %v416 = vunpack.c.l.b16 %v65
  %v417 = vunpack.c.l.b16 %v66
  %v418 = vunpack.c.l.b16 %v67
  %v419 = vunpack.c.l.b16 %v68
  %v420 = vunpack.c.l.b16 %v69
  %v421 = vunpack.c.l.b16 %v70
  %v422 = vunpack.c.l.b16 %v71
  %v423 = vunpack.c.l.b16 %v72
  %v424 = vunpack.c.l.b16 %v73
  %v425 = vunpack.c.l.b16 %v74
  %v426 = vunpack.c.l.b16 %v75
  %v427 = vunpack.c.l.b16 %v76
  %v428 = vunpack.c.l.b16 %v77
  %v429 = vunpack.c.l.b16 %v78
  %v430 = vunpack.c.l.b16 %v79
  %v431 = vunpack.c.l.b16 %v80
  %v432 = vunpack.c.l.b16 %v81
  %v433 = vunpack.c.l.b16 %v82
  %v434 = vunpack.c.l.b16 %v83
  %v435 = vunpack.c.l.b16 %v84
  %v436 = vunpack.c.l.b16 %v85
  %v437 = vunpack.c.l.b16 %v86
  %v438 = vunpack.c.l.b16 %v87
  %v439 = vunpack.c.l.b16 %v88
  %v440 = vunpack.c.l.b16 %v89
  %v441 = vunpack.c.l.b16 %v90
  %v442 = vunpack.c.l.b16 %v91
  %v443 = vunpack.c.l.b16 %v92
  %v444 = vunpack.c.l.b16 %v93
  %v445 = vunpack.c.l.b16 %v94
  %v446 = vunpack.c.l.b16 %v95
  %v447 = vunpack.c.l.b16 %v96
  %v448 = vunpack.c.l.b16 %v97
  %v449 = vunpack.c.l.b16 %v98
  %v450 = vunpack.c.l.b16 %v99
  %v451 = vunpack.c.l.b16 %v100
  %v452 = vunpack.c.l.b16 %v101
  %v453 = vunpack.c.l.b16 %v102
  %v454 = vunpack.c.l.b16 %v103
  %v455 = vunpack.c.l.b16 %v104
  %v456 = vunpack.c.l.b16 %v105
  %v457 = vunpack.c.l.b16 %v106
  %v458 = vunpack.c.l.b16 %v107
  %v459 = vunpack.c.l.b16 %v108
  %v460 = vunpack.c.l.b16 %v109
  %v461 = vunpack.c.l.b16 %v110
  %v462 = vunpack.c.l.b16 %v111
  %v463 = vunpack.c.l.b16 %v112
  %v464 = vunpack.c.l.b16 %v113
  %v465 = vunpack.c.l.b16 %v114
  %v466 = vunpack.c.l.b16 %v115
  %v467 = vunpack.c.l.b16 %v116
  %v468 = vunpack.c.l.b16 %v117
  %v469 = vunpack.c.l.b16 %v118
  %v470 = vunpack.c.l.b16 %v119
  %v471 = vunpack.c.l.b16 %v120
  %v472 = vunpack.c.l.b16 %v121
  %v473 = vunpack.c.l.b16 %v122
  %v474 = vunpack.c.l.b16 %v123
  %v475 = vunpack.c.l.b16 %v124
  %v476 = vunpack.c.l.b16 %v125
  %v477 = vunpack.c.l.b16 %v126
  %v478 = vunpack.c.l.b16 %v127
  %v479 = vunpack.c.l.b16 %v128
  %v480 = vunpack.c.l.b16 %v129
  %v481 = vunpack.c.l.b16 %v130
  %v482 = vunpack.c.l.b16 %v131
  %v483 = vunpack.c.l.b16 %v132
  %v484 = vunpack.c.l.b16 %v133
  %v485 = vunpack.c.l.b16 %v134
  %v486 = vpack.c.b16 %v415, %v414
  %v487 = vpack.c.b16 %v417, %v416
  %v488 = vpack.c.b16 %v419, %v418
  %v489 = vpack.c.b16 %v421, %v420
  %v490 = vpack.c.b16 %v423, %v422
  %v491 = vpack.c.b16 %v425, %v424
  %v492 = vpack.c.b16 %v427, %v426
  %v493 = vpack.c.b16 %v429, %v428
  %v494 = vpack.c.b16 %v431, %v430
  %v495 = vpack.c.b16 %v433, %v432
  %v496 = vpack.c.b16 %v435, %v434
  %v497 = vpack.c.b16 %v437, %v436
  %v498 = vpack.c.b16 %v439, %v438
  %v499 = vpack.c.b16 %v441, %v440
  %v500 = vpack.c.b16 %v443, %v442
  %v501 = vpack.c.b16 %v445, %v444
  %v502 = vpack.c.b16 %v447, %v446
  %v503 = vpack.c.b16 %v449, %v448
  %v504 = vpack.c.b16 %v451, %v450
  %v505 = vpack.c.b16 %v453, %v452
  %v506 = vpack.c.b16 %v455, %v454
  %v507 = vpack.c.b16 %v457, %v456
  %v508 = vpack.c.b16 %v459, %v458
  %v509 = vpack.c.b16 %v461, %v460
  %v510 = vpack.c.b16 %v463, %v462
  %v511 = vpack.c.b16 %v465, %v464
  %v512 = vpack.c.b16 %v467, %v466
  %v513 = vpack.c.b16 %v469, %v468
  %v514 = vpack.c.b16 %v471, %v470
  %v515 = vpack.c.b16 %v473, %v472
  %v516 = vpack.c.b16 %v475, %v474
  %v517 = vpack.c.b16 %v477, %v476
  %v518 = vpack.c.b16 %v479, %v478
  %v519 = vpack.c.b16 %v481, %v480
  %v520 = vpack.c.b16 %v483, %v482
  %v521 = vpack.c.b16 %v485, %v484
  %vm558 = vcmask 523264
  %v560 = vsel %vm558, %v274, 0
  %v563 = vsel %vm558, %v279, 0
  %v566 = vsel %vm558, %v284, 0
  %v569 = vsel %vm558, %v289, 0
  %v572 = vsel %vm558, %v294, 0
  %v575 = vsel %vm558, %v299, 0
  %v578 = vsel %vm558, %v304, 0
  %v581 = vsel %vm558, %v309, 0
  %583 = vmatprep.subr.bf16.mxu0 0
  %584 = vmatpush1.bf16.msra.mxu0 %v486
  %585 = vmatprep.subr.bf16.mxu0 0
  %586 = vmatpush1.bf16.msra.mxu0 %v487
  %587 = vmatprep.subr.bf16.mxu0 0
  %588 = vmatpush1.bf16.msra.mxu0 %v488
  %589 = vmatprep.subr.bf16.mxu0 0
  %590 = vmatpush1.bf16.msra.mxu0 %v489
  %591 = vmatprep.subr.bf16.mxu0 0
  %592 = vmatpush1.bf16.msra.mxu0 %v490
  %593 = vmatprep.subr.bf16.mxu0 0
  %594 = vmatpush1.bf16.msra.mxu0 %v491
  %595 = vmatprep.subr.bf16.mxu0 0
  %596 = vmatpush1.bf16.msra.mxu0 %v492
  %597 = vmatprep.subr.bf16.mxu0 0
  %598 = vmatpush1.bf16.msra.mxu0 %v493
  %599 = vmatprep.subr.bf16.mxu0 0
  %600 = vmatpush1.bf16.msra.mxu0 %v494
  %601 = vmatprep.subr.bf16.mxu0 0
  %602 = vmatpush1.bf16.msra.mxu0 %v495
  %603 = vmatprep.subr.bf16.mxu0 0
  %604 = vmatpush1.bf16.msra.mxu0 %v496
  %605 = vmatprep.subr.bf16.mxu0 0
  %606 = vmatpush1.bf16.msra.mxu0 %v497
  %607 = vmatprep.subr.bf16.mxu0 0
  %608 = vmatpush1.bf16.msra.mxu0 %v498
  %609 = vmatprep.subr.bf16.mxu0 0
  %610 = vmatpush1.bf16.msra.mxu0 %v499
  %611 = vmatprep.subr.bf16.mxu0 0
  %612 = vmatpush1.bf16.msra.mxu0 %v500
  %613 = vmatprep.subr.bf16.mxu0 0
  %614 = vmatpush1.bf16.msra.mxu0 %v501
  %615 = vmatprep.mubr.bf16.mxu0 %v271
  %616 = vmatmul.mubr.bf16.gmra.mrb[0].mxu0 %v270
  %v617 = vpop.f32.mrb[0].mxu0
  %v618 = vadd.f32 %v140, %v617
  %v619 = vpop.f32.mrb[0].mxu0
  %v620 = vpop.f32.mrb[0].mxu0
  %v621 = vadd.f32 %v140, %v620
  %v622 = vpop.f32.mrb[0].mxu0
  %623 = vmatprep.mubr.bf16.mxu0 %v276
  %624 = vmatmul.mubr.bf16.gmra.mrb[0].mxu0 %v275
  %v625 = vpop.f32.mrb[0].mxu0
  %v626 = vadd.f32 %v140, %v625
  %v627 = vpop.f32.mrb[0].mxu0
  %v628 = vpop.f32.mrb[0].mxu0
  %v629 = vadd.f32 %v140, %v628
  %v630 = vpop.f32.mrb[0].mxu0
  %631 = vmatprep.mubr.bf16.mxu0 %v281
  %632 = vmatmul.mubr.bf16.gmra.mrb[0].mxu0 %v280
  %v633 = vpop.f32.mrb[0].mxu0
  %v634 = vadd.f32 %v140, %v633
  %v635 = vpop.f32.mrb[0].mxu0
  %v636 = vpop.f32.mrb[0].mxu0
  %v637 = vadd.f32 %v140, %v636
  %v638 = vpop.f32.mrb[0].mxu0
  %639 = vmatprep.mubr.bf16.mxu0 %v286
  %640 = vmatmul.mubr.bf16.gmra.mrb[0].mxu0 %v285
  %v641 = vpop.f32.mrb[0].mxu0
  %v642 = vadd.f32 %v140, %v641
  %v643 = vpop.f32.mrb[0].mxu0
  %v644 = vpop.f32.mrb[0].mxu0
  %v645 = vadd.f32 %v140, %v644
  %v646 = vpop.f32.mrb[0].mxu0
  %647 = vmatprep.mubr.bf16.mxu0 %v291
  %648 = vmatmul.mubr.bf16.gmra.mrb[0].mxu0 %v290
  %v649 = vpop.f32.mrb[0].mxu0
  %v650 = vadd.f32 %v140, %v649
  %v651 = vpop.f32.mrb[0].mxu0
  %v652 = vpop.f32.mrb[0].mxu0
  %v653 = vadd.f32 %v140, %v652
  %v654 = vpop.f32.mrb[0].mxu0
  %655 = vmatprep.mubr.bf16.mxu0 %v296
  %656 = vmatmul.mubr.bf16.gmra.mrb[0].mxu0 %v295
  %v657 = vpop.f32.mrb[0].mxu0
  %v658 = vadd.f32 %v140, %v657
  %v659 = vpop.f32.mrb[0].mxu0
  %v660 = vpop.f32.mrb[0].mxu0
  %v661 = vadd.f32 %v140, %v660
  %v662 = vpop.f32.mrb[0].mxu0
  %663 = vmatprep.mubr.bf16.mxu0 %v301
  %664 = vmatmul.mubr.bf16.gmra.mrb[0].mxu0 %v300
  %v665 = vpop.f32.mrb[0].mxu0
  %v666 = vadd.f32 %v140, %v665
  %v667 = vpop.f32.mrb[0].mxu0
  %v668 = vpop.f32.mrb[0].mxu0
  %v669 = vadd.f32 %v140, %v668
  %v670 = vpop.f32.mrb[0].mxu0
  %671 = vmatprep.mubr.bf16.mxu0 %v306
  %672 = vmatmul.mubr.bf16.gmra.mrb[0].mxu0 %v305
  %v673 = vpop.f32.mrb[0].mxu0
  %v674 = vadd.f32 %v140, %v673
  %v675 = vpop.f32.mrb[0].mxu0
  %v676 = vpop.f32.mrb[0].mxu0
  %v677 = vadd.f32 %v140, %v676
  %v678 = vpop.f32.mrb[0].mxu0
  %679 = vdwg.mxu0
  %680 = vmatprep.subr.bf16.mxu0 0
  %681 = vmatpush1.bf16.msra.mxu0 %v502
  %682 = vmatprep.subr.bf16.mxu0 0
  %683 = vmatpush1.bf16.msra.mxu0 %v503
  %684 = vmatprep.subr.bf16.mxu0 0
  %685 = vmatpush1.bf16.msra.mxu0 %v504
  %686 = vmatprep.subr.bf16.mxu0 0
  %687 = vmatpush1.bf16.msra.mxu0 %v505
  %688 = vmatprep.subr.bf16.mxu0 0
  %689 = vmatpush1.bf16.msra.mxu0 %v506
  %690 = vmatprep.subr.bf16.mxu0 0
  %691 = vmatpush1.bf16.msra.mxu0 %v507
  %692 = vmatprep.subr.bf16.mxu0 0
  %693 = vmatpush1.bf16.msra.mxu0 %v508
  %694 = vmatprep.subr.bf16.mxu0 0
  %695 = vmatpush1.bf16.msra.mxu0 %v509
  %696 = vmatprep.subr.bf16.mxu0 0
  %697 = vmatpush1.bf16.msra.mxu0 %v510
  %698 = vmatprep.subr.bf16.mxu0 0
  %699 = vmatpush1.bf16.msra.mxu0 %v511
  %700 = vmatprep.subr.bf16.mxu0 0
  %701 = vmatpush1.bf16.msra.mxu0 %v512
  %702 = vmatprep.subr.bf16.mxu0 0
  %703 = vmatpush1.bf16.msra.mxu0 %v513
  %704 = vmatprep.subr.bf16.mxu0 0
  %705 = vmatpush1.bf16.msra.mxu0 %v514
  %706 = vmatprep.subr.bf16.mxu0 0
  %707 = vmatpush1.bf16.msra.mxu0 %v515
  %708 = vmatprep.subr.bf16.mxu0 0
  %709 = vmatpush1.bf16.msra.mxu0 %v516
  %710 = vmatprep.subr.bf16.mxu0 0
  %711 = vmatpush1.bf16.msra.mxu0 %v517
  %712 = vmatprep.mubr.bf16.mxu0 %v273
  %713 = vmatmul.mubr.bf16.gmra.mrb[0].mxu0 %v272
  %v714 = vpop.f32.mrb[0].mxu0
  %v715 = vadd.f32 %v618, %v714
  %v716 = vpop.f32.mrb[0].mxu0
  %v717 = vpop.f32.mrb[0].mxu0
  %v718 = vadd.f32 %v621, %v717
  %v719 = vpop.f32.mrb[0].mxu0
  %720 = vmatprep.mubr.bf16.mxu0 %v278
  %721 = vmatmul.mubr.bf16.gmra.mrb[0].mxu0 %v277
  %v722 = vpop.f32.mrb[0].mxu0
  %v723 = vadd.f32 %v626, %v722
  %v724 = vpop.f32.mrb[0].mxu0
  %v725 = vpop.f32.mrb[0].mxu0
  %v726 = vadd.f32 %v629, %v725
  %v727 = vpop.f32.mrb[0].mxu0
  %728 = vmatprep.mubr.bf16.mxu0 %v283
  %729 = vmatmul.mubr.bf16.gmra.mrb[0].mxu0 %v282
  %v730 = vpop.f32.mrb[0].mxu0
  %v731 = vadd.f32 %v634, %v730
  %v732 = vpop.f32.mrb[0].mxu0
  %v733 = vpop.f32.mrb[0].mxu0
  %v734 = vadd.f32 %v637, %v733
  %v735 = vpop.f32.mrb[0].mxu0
  %736 = vmatprep.mubr.bf16.mxu0 %v288
  %737 = vmatmul.mubr.bf16.gmra.mrb[0].mxu0 %v287
  %v738 = vpop.f32.mrb[0].mxu0
  %v739 = vadd.f32 %v642, %v738
  %v740 = vpop.f32.mrb[0].mxu0
  %v741 = vpop.f32.mrb[0].mxu0
  %v742 = vadd.f32 %v645, %v741
  %v743 = vpop.f32.mrb[0].mxu0
  %744 = vmatprep.mubr.bf16.mxu0 %v293
  %745 = vmatmul.mubr.bf16.gmra.mrb[0].mxu0 %v292
  %v746 = vpop.f32.mrb[0].mxu0
  %v747 = vadd.f32 %v650, %v746
  %v748 = vpop.f32.mrb[0].mxu0
  %v749 = vpop.f32.mrb[0].mxu0
  %v750 = vadd.f32 %v653, %v749
  %v751 = vpop.f32.mrb[0].mxu0
  %752 = vmatprep.mubr.bf16.mxu0 %v298
  %753 = vmatmul.mubr.bf16.gmra.mrb[0].mxu0 %v297
  %v754 = vpop.f32.mrb[0].mxu0
  %v755 = vadd.f32 %v658, %v754
  %v756 = vpop.f32.mrb[0].mxu0
  %v757 = vpop.f32.mrb[0].mxu0
  %v758 = vadd.f32 %v661, %v757
  %v759 = vpop.f32.mrb[0].mxu0
  %760 = vmatprep.mubr.bf16.mxu0 %v303
  %761 = vmatmul.mubr.bf16.gmra.mrb[0].mxu0 %v302
  %v762 = vpop.f32.mrb[0].mxu0
  %v763 = vadd.f32 %v666, %v762
  %v764 = vpop.f32.mrb[0].mxu0
  %v765 = vpop.f32.mrb[0].mxu0
  %v766 = vadd.f32 %v669, %v765
  %v767 = vpop.f32.mrb[0].mxu0
  %768 = vmatprep.mubr.bf16.mxu0 %v308
  %769 = vmatmul.mubr.bf16.gmra.mrb[0].mxu0 %v307
  %v770 = vpop.f32.mrb[0].mxu0
  %v771 = vadd.f32 %v674, %v770
  %v772 = vpop.f32.mrb[0].mxu0
  %v773 = vpop.f32.mrb[0].mxu0
  %v774 = vadd.f32 %v677, %v773
  %v775 = vpop.f32.mrb[0].mxu0
  %776 = vdwg.mxu0
  %777 = vmatprep.subr.bf16.mxu0 0
  %778 = vmatpush1.bf16.msra.mxu0 %v518
  %779 = vmatprep.subr.bf16.mxu0 0
  %780 = vmatpush1.bf16.msra.mxu0 %v519
  %781 = vmatprep.subr.bf16.mxu0 0
  %782 = vmatpush1.bf16.msra.mxu0 %v520
  %783 = vmatprep.subr.bf16.mxu0 0
  %784 = vmatpush1.bf16.msra.mxu0 %v521
  %785 = vmatprep.subr.bf16.mxu0 0
  %786 = vmatpush1.bf16.msra.mxu0 0
  %787 = vmatprep.subr.bf16.mxu0 0
  %788 = vmatpush1.bf16.msra.mxu0 0
  %789 = vmatprep.subr.bf16.mxu0 0
  %790 = vmatpush1.bf16.msra.mxu0 0
  %791 = vmatprep.subr.bf16.mxu0 0
  %792 = vmatpush1.bf16.msra.mxu0 0
  %793 = vmatprep.subr.bf16.mxu0 0
  %794 = vmatpush1.bf16.msra.mxu0 0
  %795 = vmatprep.subr.bf16.mxu0 0
  %796 = vmatpush1.bf16.msra.mxu0 0
  %797 = vmatprep.subr.bf16.mxu0 0
  %798 = vmatpush1.bf16.msra.mxu0 0
  %799 = vmatprep.subr.bf16.mxu0 0
  %800 = vmatpush1.bf16.msra.mxu0 0
  %801 = vmatprep.subr.bf16.mxu0 0
  %802 = vmatpush1.bf16.msra.mxu0 0
  %803 = vmatprep.subr.bf16.mxu0 0
  %804 = vmatpush1.bf16.msra.mxu0 0
  %805 = vmatprep.subr.bf16.mxu0 0
  %806 = vmatpush1.bf16.msra.mxu0 0
  %807 = vmatprep.subr.bf16.mxu0 0
  %808 = vmatpush1.bf16.msra.mxu0 0
  %809 = vmatprep.mubr.bf16.mxu0 0
  %810 = vmatmul.mubr.bf16.gmra.mrb[0].mxu0 %v560
  %v811 = vpop.f32.mrb[0].mxu0
  %v812 = vadd.f32 %v715, %v811
  %v813 = vpop.f32.mrb[0].mxu0
  %v814 = vpop.f32.mrb[0].mxu0
  %v815 = vadd.f32 %v718, %v814
  %v816 = vpop.f32.mrb[0].mxu0
  %817 = vmatprep.mubr.bf16.mxu0 0
  %818 = vmatmul.mubr.bf16.gmra.mrb[0].mxu0 %v563
  %v819 = vpop.f32.mrb[0].mxu0
  %v820 = vadd.f32 %v723, %v819
  %v821 = vpop.f32.mrb[0].mxu0
  %v822 = vpop.f32.mrb[0].mxu0
  %v823 = vadd.f32 %v726, %v822
  %v824 = vpop.f32.mrb[0].mxu0
  %825 = vmatprep.mubr.bf16.mxu0 0
  %826 = vmatmul.mubr.bf16.gmra.mrb[0].mxu0 %v566
  %v827 = vpop.f32.mrb[0].mxu0
  %v828 = vadd.f32 %v731, %v827
  %v829 = vpop.f32.mrb[0].mxu0
  %v830 = vpop.f32.mrb[0].mxu0
  %v831 = vadd.f32 %v734, %v830
  %v832 = vpop.f32.mrb[0].mxu0
  %833 = vmatprep.mubr.bf16.mxu0 0
  %834 = vmatmul.mubr.bf16.gmra.mrb[0].mxu0 %v569
  %v835 = vpop.f32.mrb[0].mxu0
  %v836 = vadd.f32 %v739, %v835
  %v837 = vpop.f32.mrb[0].mxu0
  %v838 = vpop.f32.mrb[0].mxu0
  %v839 = vadd.f32 %v742, %v838
  %v840 = vpop.f32.mrb[0].mxu0
  %841 = vmatprep.mubr.bf16.mxu0 0
  %842 = vmatmul.mubr.bf16.gmra.mrb[0].mxu0 %v572
  %v843 = vpop.f32.mrb[0].mxu0
  %v844 = vadd.f32 %v747, %v843
  %v845 = vpop.f32.mrb[0].mxu0
  %v846 = vpop.f32.mrb[0].mxu0
  %v847 = vadd.f32 %v750, %v846
  %v848 = vpop.f32.mrb[0].mxu0
  %849 = vmatprep.mubr.bf16.mxu0 0
  %850 = vmatmul.mubr.bf16.gmra.mrb[0].mxu0 %v575
  %v851 = vpop.f32.mrb[0].mxu0
  %v852 = vadd.f32 %v755, %v851
  %v853 = vpop.f32.mrb[0].mxu0
  %v854 = vpop.f32.mrb[0].mxu0
  %v855 = vadd.f32 %v758, %v854
  %v856 = vpop.f32.mrb[0].mxu0
  %857 = vmatprep.mubr.bf16.mxu0 0
  %858 = vmatmul.mubr.bf16.gmra.mrb[0].mxu0 %v578
  %v859 = vpop.f32.mrb[0].mxu0
  %v860 = vadd.f32 %v763, %v859
  %v861 = vpop.f32.mrb[0].mxu0
  %v862 = vpop.f32.mrb[0].mxu0
  %v863 = vadd.f32 %v766, %v862
  %v864 = vpop.f32.mrb[0].mxu0
  %865 = vmatprep.mubr.bf16.mxu0 0
  %866 = vmatmul.mubr.bf16.gmra.mrb[0].mxu0 %v581
  %v867 = vpop.f32.mrb[0].mxu0
  %v868 = vadd.f32 %v771, %v867
  %v869 = vpop.f32.mrb[0].mxu0
  %v870 = vpop.f32.mrb[0].mxu0
  %v871 = vadd.f32 %v774, %v870
  %v872 = vpop.f32.mrb[0].mxu0
  %873 = vdwg.mxu0
  %vm874 = vcmp.gt.f32.partialorder %v812, 0.0
  %vm875 = vcmp.gt.f32.partialorder %v815, 0.0
  %vm876 = vcmp.gt.f32.partialorder %v820, 0.0
  %vm877 = vcmp.gt.f32.partialorder %v823, 0.0
  %vm878 = vcmp.gt.f32.partialorder %v828, 0.0
  %vm879 = vcmp.gt.f32.partialorder %v831, 0.0
  %vm880 = vcmp.gt.f32.partialorder %v836, 0.0
  %vm881 = vcmp.gt.f32.partialorder %v839, 0.0
  %vm882 = vcmp.gt.f32.partialorder %v844, 0.0
  %vm883 = vcmp.gt.f32.partialorder %v847, 0.0
  %vm884 = vcmp.gt.f32.partialorder %v852, 0.0
  %vm885 = vcmp.gt.f32.partialorder %v855, 0.0
  %vm886 = vcmp.gt.f32.partialorder %v860, 0.0
  %vm887 = vcmp.gt.f32.partialorder %v863, 0.0
  %vm888 = vcmp.gt.f32.partialorder %v868, 0.0
  %vm889 = vcmp.gt.f32.partialorder %v871, 0.0
  %v890 = vmul.f32 %v812, 0.01
  %v891 = vmul.f32 %v815, 0.01
  %v892 = vmul.f32 %v820, 0.01
  %v893 = vmul.f32 %v823, 0.01
  %v894 = vmul.f32 %v828, 0.01
  %v895 = vmul.f32 %v831, 0.01
  %v896 = vmul.f32 %v836, 0.01
  %v897 = vmul.f32 %v839, 0.01
  %v898 = vmul.f32 %v844, 0.01
  %v899 = vmul.f32 %v847, 0.01
  %v900 = vmul.f32 %v852, 0.01
  %v901 = vmul.f32 %v855, 0.01
  %v902 = vmul.f32 %v860, 0.01
  %v903 = vmul.f32 %v863, 0.01
  %v904 = vmul.f32 %v868, 0.01
  %v905 = vmul.f32 %v871, 0.01
  %v906 = vsel %vm874, %v812, %v890
  %v907 = vsel %vm875, %v815, %v891
  %v908 = vsel %vm876, %v820, %v892
  %v909 = vsel %vm877, %v823, %v893
  %v910 = vsel %vm878, %v828, %v894
  %v911 = vsel %vm879, %v831, %v895
  %v912 = vsel %vm880, %v836, %v896
  %v913 = vsel %vm881, %v839, %v897
  %v914 = vsel %vm882, %v844, %v898
  %v915 = vsel %vm883, %v847, %v899
  %v916 = vsel %vm884, %v852, %v900
  %v917 = vsel %vm885, %v855, %v901
  %v918 = vsel %vm886, %v860, %v902
  %v919 = vsel %vm887, %v863, %v903
  %v920 = vsel %vm888, %v868, %v904
  %v921 = vsel %vm889, %v871, %v905
  %922 = vst [vmem:[%s3] sm:$0xff] %v906
  %923 = vst [vmem:[%s3 + $0x8] sm:$0xff] %v907
  %924 = vst [vmem:[%s3 + $0x10] sm:$0xff] %v908
  %925 = vst [vmem:[%s3 + $0x18] sm:$0xff] %v909
  %926 = vst [vmem:[%s3 + $0x20] sm:$0xff] %v910
  %927 = vst [vmem:[%s3 + $0x28] sm:$0xff] %v911
  %928 = vst [vmem:[%s3 + $0x30] sm:$0xff] %v912
  %929 = vst [vmem:[%s3 + $0x38] sm:$0xff] %v913
  %930 = vst [vmem:[%s3 + $0x40] sm:$0xff] %v914
  %931 = vst [vmem:[%s3 + $0x48] sm:$0xff] %v915
  %932 = vst [vmem:[%s3 + $0x50] sm:$0xff] %v916
  %933 = vst [vmem:[%s3 + $0x58] sm:$0xff] %v917
  %934 = vst [vmem:[%s3 + $0x60] sm:$0xff] %v918
  %935 = vst [vmem:[%s3 + $0x68] sm:$0xff] %v919
  %936 = vst [vmem:[%s3 + $0x70] sm:$0xff] %v920
  %937 = vst [vmem:[%s3 + $0x78] sm:$0xff] %v921
  // Predicated region
  $region14: #{model_forward.9} parent=0 // pred_check
    _
  $region15: #{model_forward.9} parent=0 // pred_check_branch
    %939 = sbr.rel (0) target = $region17
  $region16: #{model_forward.9} parent=0 // pred_region
    _
  $region17: #{model_forward.9} parent=0 // pred_fallthru
    _
  // Predicated region
  $region18: #{model_forward.9} parent=0 // pred_check
    _
  $region19: #{model_forward.9} parent=0 // pred_check_branch
    %941 = sbr.rel (0) target = $region21
  $region20: #{model_forward.9} parent=0 // pred_region
    _
  $region21: #{model_forward.9} parent=0 // pred_fallthru
    _

// kernel: model_forward.10
$region0: #{model_forward.10}
  #allocation0 [shape = 'u32[]', space=smem, size = 0x4, offset = 0x4, fixed_abs, tag = 'smem constant byte address 0x4 - core index']
  #allocation1 [shape = 'u32[144,128]{1,0:T(1,128)}', space=vmem, size = 0x12000, scoped, tag = 'internal scratch']
  %s0 = inlined_call_operand.vmem [shape: f32[32,128], index: 0, kind: input, shape index: {}]
  %s1 = inlined_call_operand.vmem [shape: f32[32,128], index: 1, kind: input, shape index: {}]
  %s2 = inlined_call_operand.vmem [shape: f32[32,128], index: 2, kind: input, shape index: {}]
  %s3 = inlined_call_operand.vmem [shape: f32[32,128], index: 3, kind: input, shape index: {}]
  %s4 = inlined_call_operand.vmem [shape: f32[32,128], index: 4, kind: output, shape index: {}]
  %s5 = sld [smem:[#allocation0]]
  $region26: #{model_forward.10} parent=0
    _
  %s7 = ssub.s32 1, %s5
  %s8 = scalar_select 0, %s7, %s5
  // Predicated region
  $region2: #{model_forward.10} parent=0 // pred_check
    _
  $region3: #{model_forward.10} parent=0 // pred_check_branch
    %10 = sbr.rel (0) target = $region5
  $region4: #{model_forward.10} parent=0 // pred_region
    _
  $region5: #{model_forward.10} parent=0 // pred_fallthru
    _
  // Predicated region
  $region6: #{model_forward.10} parent=0 // pred_check
    _
  $region7: #{model_forward.10} parent=0 // pred_check_branch
    %12 = sbr.rel (0) target = $region9
  $region8: #{model_forward.10} parent=0 // pred_region
    _
  $region9: #{model_forward.10} parent=0 // pred_fallthru
    _
  // Predicated region
  $region10: #{model_forward.10} parent=0 // pred_check
    _
  $region11: #{model_forward.10} parent=0 // pred_check_branch
    %14 = sbr.rel (0) target = $region13
  $region12: #{model_forward.10} parent=0 // pred_region
    _
  $region13: #{model_forward.10} parent=0 // pred_fallthru
    _
  // Predicated region
  $region14: #{model_forward.10} parent=0 // pred_check
    _
  $region15: #{model_forward.10} parent=0 // pred_check_branch
    %16 = sbr.rel (0) target = $region17
  $region16: #{model_forward.10} parent=0 // pred_region
    _
  $region17: #{model_forward.10} parent=0 // pred_fallthru
    _
  %v17 = vld [vmem:[%s0] sm:$0xff]
  %v18 = vld [vmem:[%s0 + $0x8] sm:$0xff]
  %v19 = vld [vmem:[%s0 + $0x10] sm:$0xff]
  %v20 = vld [vmem:[%s0 + $0x18] sm:$0xff]
  %v21 = vld [vmem:[%s1] sm:$0xff]
  %v22 = vld [vmem:[%s1 + $0x8] sm:$0xff]
  %v23 = vld [vmem:[%s1 + $0x10] sm:$0xff]
  %v24 = vld [vmem:[%s1 + $0x18] sm:$0xff]
  %v25 = vmax.f32 %v17, %v21
  %v26 = vmax.f32 %v18, %v22
  %v27 = vmax.f32 %v19, %v23
  %v28 = vmax.f32 %v20, %v24
  %v29 = vld [vmem:[%s2] sm:$0xff]
  %v30 = vld [vmem:[%s2 + $0x8] sm:$0xff]
  %v31 = vld [vmem:[%s2 + $0x10] sm:$0xff]
  %v32 = vld [vmem:[%s2 + $0x18] sm:$0xff]
  %v33 = vld [vmem:[%s3] sm:$0xff]
  %v34 = vld [vmem:[%s3 + $0x8] sm:$0xff]
  %v35 = vld [vmem:[%s3 + $0x10] sm:$0xff]
  %v36 = vld [vmem:[%s3 + $0x18] sm:$0xff]
  %v37 = vmax.f32 %v29, %v33
  %v38 = vmax.f32 %v30, %v34
  %v39 = vmax.f32 %v31, %v35
  %v40 = vmax.f32 %v32, %v36
  %v41 = vmax.f32 %v25, %v37
  %v42 = vmax.f32 %v26, %v38
  %v43 = vmax.f32 %v27, %v39
  %v44 = vmax.f32 %v28, %v40
  %45 = vst [vmem:[%s4] sm:$0xff] %v41
  %46 = vst [vmem:[%s4 + $0x8] sm:$0xff] %v42
  %47 = vst [vmem:[%s4 + $0x10] sm:$0xff] %v43
  %48 = vst [vmem:[%s4 + $0x18] sm:$0xff] %v44
  // Predicated region
  $region18: #{model_forward.10} parent=0 // pred_check
    _
  $region19: #{model_forward.10} parent=0 // pred_check_branch
    %50 = sbr.rel (0) target = $region21
  $region20: #{model_forward.10} parent=0 // pred_region
    _
  $region21: #{model_forward.10} parent=0 // pred_fallthru
    _
  // Predicated region
  $region22: #{model_forward.10} parent=0 // pred_check
    _
  $region23: #{model_forward.10} parent=0 // pred_check_branch
    %52 = sbr.rel (0) target = $region25
  $region24: #{model_forward.10} parent=0 // pred_region
    _
  $region25: #{model_forward.10} parent=0 // pred_fallthru
    _

// kernel: model_forward.12
$region0: #{model_forward.12}
  #allocation0 [shape = 'u32[]', space=smem, size = 0x4, offset = 0x4, fixed_abs, tag = 'smem constant byte address 0x4 - core index']
  #allocation1 [shape = 'u32[144,128]{1,0:T(1,128)}', space=vmem, size = 0x12000, scoped, tag = 'internal scratch']
  %s0 = inlined_call_operand.vmem [shape: f32[4,128], index: 0, kind: input, shape index: {}]
  %s1 = inlined_call_operand.vmem [shape: f32[4,128], index: 1, kind: input, shape index: {}]
  %s2 = inlined_call_operand.vmem [shape: f32[4,128], index: 2, kind: input, shape index: {}]
  %s3 = inlined_call_operand.vmem [shape: f32[4,128], index: 3, kind: input, shape index: {}]
  %s4 = inlined_call_operand.vmem [shape: f32[4,128], index: 4, kind: output, shape index: {}]
  %s5 = sld [smem:[#allocation0]]
  $region26: #{model_forward.12} parent=0
    _
  %s7 = ssub.s32 1, %s5
  %s8 = scalar_select 0, %s7, %s5
  // Predicated region
  $region2: #{model_forward.12} parent=0 // pred_check
    _
  $region3: #{model_forward.12} parent=0 // pred_check_branch
    %10 = sbr.rel (0) target = $region5
  $region4: #{model_forward.12} parent=0 // pred_region
    _
  $region5: #{model_forward.12} parent=0 // pred_fallthru
    _
  // Predicated region
  $region6: #{model_forward.12} parent=0 // pred_check
    _
  $region7: #{model_forward.12} parent=0 // pred_check_branch
    %12 = sbr.rel (0) target = $region9
  $region8: #{model_forward.12} parent=0 // pred_region
    _
  $region9: #{model_forward.12} parent=0 // pred_fallthru
    _
  // Predicated region
  $region10: #{model_forward.12} parent=0 // pred_check
    _
  $region11: #{model_forward.12} parent=0 // pred_check_branch
    %14 = sbr.rel (0) target = $region13
  $region12: #{model_forward.12} parent=0 // pred_region
    _
  $region13: #{model_forward.12} parent=0 // pred_fallthru
    _
  // Predicated region
  $region14: #{model_forward.12} parent=0 // pred_check
    _
  $region15: #{model_forward.12} parent=0 // pred_check_branch
    %16 = sbr.rel (0) target = $region17
  $region16: #{model_forward.12} parent=0 // pred_region
    _
  $region17: #{model_forward.12} parent=0 // pred_fallthru
    _
  %v17 = vld [vmem:[%s0] sm:$0xf]
  %v18 = vld [vmem:[%s1] sm:$0xf]
  %v19 = vmax.f32 %v17, %v18
  %v20 = vld [vmem:[%s2] sm:$0xf]
  %v21 = vld [vmem:[%s3] sm:$0xf]
  %v22 = vmax.f32 %v20, %v21
  %v23 = vmax.f32 %v19, %v22
  %24 = vst [vmem:[%s4] sm:$0xf] %v23
  // Predicated region
  $region18: #{model_forward.12} parent=0 // pred_check
    _
  $region19: #{model_forward.12} parent=0 // pred_check_branch
    %26 = sbr.rel (0) target = $region21
  $region20: #{model_forward.12} parent=0 // pred_region
    _
  $region21: #{model_forward.12} parent=0 // pred_fallthru
    _
  // Predicated region
  $region22: #{model_forward.12} parent=0 // pred_check
    _
  $region23: #{model_forward.12} parent=0 // pred_check_branch
    %28 = sbr.rel (0) target = $region25
  $region24: #{model_forward.12} parent=0 // pred_region
    _
  $region25: #{model_forward.12} parent=0 // pred_fallthru
    _

// kernel: model_forward.11
$region0: #{model_forward.11}
  #allocation0 [shape = 'u32[]', space=smem, size = 0x4, offset = 0x4, fixed_abs, tag = 'smem constant byte address 0x4 - core index']
  #allocation1 [shape = 'u32[144,128]{1,0:T(1,128)}', space=vmem, size = 0x12000, scoped, tag = 'internal scratch']
  %s0 = inlined_call_operand.vmem [shape: bf16[8,1152], index: 0, kind: input, shape index: {}]
  %s1 = inlined_call_operand.vmem [shape: bf16[1152,256], index: 1, kind: input, shape index: {}]
  %s2 = inlined_call_operand.vmem [shape: f32[1,256], index: 2, kind: input, shape index: {}]
  %s3 = inlined_call_operand.vmem [shape: f32[8,256], index: 3, kind: output, shape index: {}]
  %s4 = sld [smem:[#allocation0]]
  $region22: #{model_forward.11} parent=0
    _
  %s6 = ssub.s32 1, %s4
  %s7 = scalar_select 0, %s6, %s4
  // Predicated region
  $region2: #{model_forward.11} parent=0 // pred_check
    _
  $region3: #{model_forward.11} parent=0 // pred_check_branch
    %9 = sbr.rel (0) target = $region5
  $region4: #{model_forward.11} parent=0 // pred_region
    _
  $region5: #{model_forward.11} parent=0 // pred_fallthru
    _
  // Predicated region
  $region6: #{model_forward.11} parent=0 // pred_check
    _
  $region7: #{model_forward.11} parent=0 // pred_check_branch
    %11 = sbr.rel (0) target = $region9
  $region8: #{model_forward.11} parent=0 // pred_region
    _
  $region9: #{model_forward.11} parent=0 // pred_fallthru
    _
  // Predicated region
  $region10: #{model_forward.11} parent=0 // pred_check
    _
  $region11: #{model_forward.11} parent=0 // pred_check_branch
    %13 = sbr.rel (0) target = $region13
  $region12: #{model_forward.11} parent=0 // pred_region
    _
  $region13: #{model_forward.11} parent=0 // pred_fallthru
    _
  %v15 = vld [vmem:[%s0] sm:$0xff]
  %v16 = vld [vmem:[%s0 + $0x8] sm:$0xff]
  %v17 = vld [vmem:[%s0 + $0x10] sm:$0xff]
  %v18 = vld [vmem:[%s0 + $0x18] sm:$0xff]
  %v19 = vld [vmem:[%s0 + $0x20] sm:$0xf]
  %v20 = vld [vmem:[%s1] sm:$0xff]
  %v21 = vld [vmem:[%s1 + $0x8] sm:$0xff]
  %v22 = vld [vmem:[%s1 + $0x10] sm:$0xff]
  %v23 = vld [vmem:[%s1 + $0x18] sm:$0xff]
  %v24 = vld [vmem:[%s1 + $0x20] sm:$0xff]
  %v25 = vld [vmem:[%s1 + $0x28] sm:$0xff]
  %v26 = vld [vmem:[%s1 + $0x30] sm:$0xff]
  %v27 = vld [vmem:[%s1 + $0x38] sm:$0xff]
  %v28 = vld [vmem:[%s1 + $0x40] sm:$0xff]
  %v29 = vld [vmem:[%s1 + $0x48] sm:$0xff]
  %v30 = vld [vmem:[%s1 + $0x50] sm:$0xff]
  %v31 = vld [vmem:[%s1 + $0x58] sm:$0xff]
  %v32 = vld [vmem:[%s1 + $0x60] sm:$0xff]
  %v33 = vld [vmem:[%s1 + $0x68] sm:$0xff]
  %v34 = vld [vmem:[%s1 + $0x70] sm:$0xff]
  %v35 = vld [vmem:[%s1 + $0x78] sm:$0xff]
  %v36 = vld [vmem:[%s1 + $0x80] sm:$0xff]
  %v37 = vld [vmem:[%s1 + $0x88] sm:$0xff]
  %v38 = vld [vmem:[%s1 + $0x90] sm:$0xff]
  %v39 = vld [vmem:[%s1 + $0x98] sm:$0xff]
  %v40 = vld [vmem:[%s1 + $0xa0] sm:$0xff]
  %v41 = vld [vmem:[%s1 + $0xa8] sm:$0xff]
  %v42 = vld [vmem:[%s1 + $0xb0] sm:$0xff]
  %v43 = vld [vmem:[%s1 + $0xb8] sm:$0xff]
  %v44 = vld [vmem:[%s1 + $0xc0] sm:$0xff]
  %v45 = vld [vmem:[%s1 + $0xc8] sm:$0xff]
  %v46 = vld [vmem:[%s1 + $0xd0] sm:$0xff]
  %v47 = vld [vmem:[%s1 + $0xd8] sm:$0xff]
  %v48 = vld [vmem:[%s1 + $0xe0] sm:$0xff]
  %v49 = vld [vmem:[%s1 + $0xe8] sm:$0xff]
  %v50 = vld [vmem:[%s1 + $0xf0] sm:$0xff]
  %v51 = vld [vmem:[%s1 + $0xf8] sm:$0xff]
  %v52 = vld [vmem:[%s1 + $0x100] sm:$0xff]
  %v53 = vld [vmem:[%s1 + $0x108] sm:$0xff]
  %v54 = vld [vmem:[%s1 + $0x110] sm:$0xff]
  %v55 = vld [vmem:[%s1 + $0x118] sm:$0xff]
  %v56 = vld [vmem:[%s1 + $0x120] sm:$0xff]
  %v57 = vld [vmem:[%s1 + $0x128] sm:$0xff]
  %v58 = vld [vmem:[%s1 + $0x130] sm:$0xff]
  %v59 = vld [vmem:[%s1 + $0x138] sm:$0xff]
  %v60 = vld [vmem:[%s1 + $0x140] sm:$0xff]
  %v61 = vld [vmem:[%s1 + $0x148] sm:$0xff]
  %v62 = vld [vmem:[%s1 + $0x150] sm:$0xff]
  %v63 = vld [vmem:[%s1 + $0x158] sm:$0xff]
  %v64 = vld [vmem:[%s1 + $0x160] sm:$0xff]
  %v65 = vld [vmem:[%s1 + $0x168] sm:$0xff]
  %v66 = vld [vmem:[%s1 + $0x170] sm:$0xff]
  %v67 = vld [vmem:[%s1 + $0x178] sm:$0xff]
  %v68 = vld [vmem:[%s1 + $0x180] sm:$0xff]
  %v69 = vld [vmem:[%s1 + $0x188] sm:$0xff]
  %v70 = vld [vmem:[%s1 + $0x190] sm:$0xff]
  %v71 = vld [vmem:[%s1 + $0x198] sm:$0xff]
  %v72 = vld [vmem:[%s1 + $0x1a0] sm:$0xff]
  %v73 = vld [vmem:[%s1 + $0x1a8] sm:$0xff]
  %v74 = vld [vmem:[%s1 + $0x1b0] sm:$0xff]
  %v75 = vld [vmem:[%s1 + $0x1b8] sm:$0xff]
  %v76 = vld [vmem:[%s1 + $0x1c0] sm:$0xff]
  %v77 = vld [vmem:[%s1 + $0x1c8] sm:$0xff]
  %v78 = vld [vmem:[%s1 + $0x1d0] sm:$0xff]
  %v79 = vld [vmem:[%s1 + $0x1d8] sm:$0xff]
  %v80 = vld [vmem:[%s1 + $0x1e0] sm:$0xff]
  %v81 = vld [vmem:[%s1 + $0x1e8] sm:$0xff]
  %v82 = vld [vmem:[%s1 + $0x1f0] sm:$0xff]
  %v83 = vld [vmem:[%s1 + $0x1f8] sm:$0xff]
  %v84 = vld [vmem:[%s1 + $0x200] sm:$0xff]
  %v85 = vld [vmem:[%s1 + $0x208] sm:$0xff]
  %v86 = vld [vmem:[%s1 + $0x210] sm:$0xff]
  %v87 = vld [vmem:[%s1 + $0x218] sm:$0xff]
  %v88 = vld [vmem:[%s1 + $0x220] sm:$0xff]
  %v89 = vld [vmem:[%s1 + $0x228] sm:$0xff]
  %v90 = vld [vmem:[%s1 + $0x230] sm:$0xff]
  %v91 = vld [vmem:[%s1 + $0x238] sm:$0xff]
  %v92 = vld [vmem:[%s1 + $0x240] sm:$0xff]
  %v93 = vld [vmem:[%s1 + $0x248] sm:$0xff]
  %v94 = vld [vmem:[%s1 + $0x250] sm:$0xff]
  %v95 = vld [vmem:[%s1 + $0x258] sm:$0xff]
  %v96 = vld [vmem:[%s1 + $0x260] sm:$0xff]
  %v97 = vld [vmem:[%s1 + $0x268] sm:$0xff]
  %v98 = vld [vmem:[%s1 + $0x270] sm:$0xff]
  %v99 = vld [vmem:[%s1 + $0x278] sm:$0xff]
  %v100 = vld [vmem:[%s1 + $0x280] sm:$0xff]
  %v101 = vld [vmem:[%s1 + $0x288] sm:$0xff]
  %v102 = vld [vmem:[%s1 + $0x290] sm:$0xff]
  %v103 = vld [vmem:[%s1 + $0x298] sm:$0xff]
  %v104 = vld [vmem:[%s1 + $0x2a0] sm:$0xff]
  %v105 = vld [vmem:[%s1 + $0x2a8] sm:$0xff]
  %v106 = vld [vmem:[%s1 + $0x2b0] sm:$0xff]
  %v107 = vld [vmem:[%s1 + $0x2b8] sm:$0xff]
  %v108 = vld [vmem:[%s1 + $0x2c0] sm:$0xff]
  %v109 = vld [vmem:[%s1 + $0x2c8] sm:$0xff]
  %v110 = vld [vmem:[%s1 + $0x2d0] sm:$0xff]
  %v111 = vld [vmem:[%s1 + $0x2d8] sm:$0xff]
  %v112 = vld [vmem:[%s1 + $0x2e0] sm:$0xff]
  %v113 = vld [vmem:[%s1 + $0x2e8] sm:$0xff]
  %v114 = vld [vmem:[%s1 + $0x2f0] sm:$0xff]
  %v115 = vld [vmem:[%s1 + $0x2f8] sm:$0xff]
  %v116 = vld [vmem:[%s1 + $0x300] sm:$0xff]
  %v117 = vld [vmem:[%s1 + $0x308] sm:$0xff]
  %v118 = vld [vmem:[%s1 + $0x310] sm:$0xff]
  %v119 = vld [vmem:[%s1 + $0x318] sm:$0xff]
  %v120 = vld [vmem:[%s1 + $0x320] sm:$0xff]
  %v121 = vld [vmem:[%s1 + $0x328] sm:$0xff]
  %v122 = vld [vmem:[%s1 + $0x330] sm:$0xff]
  %v123 = vld [vmem:[%s1 + $0x338] sm:$0xff]
  %v124 = vld [vmem:[%s1 + $0x340] sm:$0xff]
  %v125 = vld [vmem:[%s1 + $0x348] sm:$0xff]
  %v126 = vld [vmem:[%s1 + $0x350] sm:$0xff]
  %v127 = vld [vmem:[%s1 + $0x358] sm:$0xff]
  %v128 = vld [vmem:[%s1 + $0x360] sm:$0xff]
  %v129 = vld [vmem:[%s1 + $0x368] sm:$0xff]
  %v130 = vld [vmem:[%s1 + $0x370] sm:$0xff]
  %v131 = vld [vmem:[%s1 + $0x378] sm:$0xff]
  %v132 = vld [vmem:[%s1 + $0x380] sm:$0xff]
  %v133 = vld [vmem:[%s1 + $0x388] sm:$0xff]
  %v134 = vld [vmem:[%s1 + $0x390] sm:$0xff]
  %v135 = vld [vmem:[%s1 + $0x398] sm:$0xff]
  %v136 = vld [vmem:[%s1 + $0x3a0] sm:$0xff]
  %v137 = vld [vmem:[%s1 + $0x3a8] sm:$0xff]
  %v138 = vld [vmem:[%s1 + $0x3b0] sm:$0xff]
  %v139 = vld [vmem:[%s1 + $0x3b8] sm:$0xff]
  %v140 = vld [vmem:[%s1 + $0x3c0] sm:$0xff]
  %v141 = vld [vmem:[%s1 + $0x3c8] sm:$0xff]
  %v142 = vld [vmem:[%s1 + $0x3d0] sm:$0xff]
  %v143 = vld [vmem:[%s1 + $0x3d8] sm:$0xff]
  %v144 = vld [vmem:[%s1 + $0x3e0] sm:$0xff]
  %v145 = vld [vmem:[%s1 + $0x3e8] sm:$0xff]
  %v146 = vld [vmem:[%s1 + $0x3f0] sm:$0xff]
  %v147 = vld [vmem:[%s1 + $0x3f8] sm:$0xff]
  %v148 = vld [vmem:[%s1 + $0x400] sm:$0xff]
  %v149 = vld [vmem:[%s1 + $0x408] sm:$0xff]
  %v150 = vld [vmem:[%s1 + $0x410] sm:$0xff]
  %v151 = vld [vmem:[%s1 + $0x418] sm:$0xff]
  %v152 = vld [vmem:[%s1 + $0x420] sm:$0xff]
  %v153 = vld [vmem:[%s1 + $0x428] sm:$0xff]
  %v154 = vld [vmem:[%s1 + $0x430] sm:$0xff]
  %v155 = vld [vmem:[%s1 + $0x438] sm:$0xff]
  %v156 = vld [vmem:[%s1 + $0x440] sm:$0xff]
  %v157 = vld [vmem:[%s1 + $0x448] sm:$0xff]
  %v158 = vld [vmem:[%s1 + $0x450] sm:$0xff]
  %v159 = vld [vmem:[%s1 + $0x458] sm:$0xff]
  %v160 = vld [vmem:[%s1 + $0x460] sm:$0xff]
  %v161 = vld [vmem:[%s1 + $0x468] sm:$0xff]
  %v162 = vld [vmem:[%s1 + $0x470] sm:$0xff]
  %v163 = vld [vmem:[%s1 + $0x478] sm:$0xff]
  %v164 = vld [vmem:[%s2] sm:$0x3]
  %v166 = vlaneseq
  %v167 = vshrl.u32 %v166, 7
  %v168 = vsub.s32 0, %v167
  %v169 = vrot.slane %v164, %v168
  %v170 = vlaneseq
  %v171 = vshrl.u32 %v170, 7
  %v172 = vsub.s32 1, %v171
  %v173 = vrot.slane %v164, %v172
  %v181 = vunpack.c.l.b16 %v15
  %v182 = vunpack.c.h.b16 %v15
  %v183 = vunpack.c.l.b16 %v16
  %v184 = vunpack.c.h.b16 %v16
  %v185 = vunpack.c.l.b16 %v17
  %v186 = vunpack.c.h.b16 %v17
  %v187 = vunpack.c.l.b16 %v18
  %v188 = vunpack.c.h.b16 %v18
  %v189 = vunpack.c.l.b16 %v19
  %v190 = vpack.c.b16 %v181, %v181
  %v191 = vpack.c.b16 %v182, %v182
  %v192 = vpack.c.b16 %v183, %v183
  %v193 = vpack.c.b16 %v184, %v184
  %v194 = vpack.c.b16 %v185, %v185
  %v195 = vpack.c.b16 %v186, %v186
  %v196 = vpack.c.b16 %v187, %v187
  %v197 = vpack.c.b16 %v188, %v188
  %v198 = vpack.c.b16 %v189, %v189
  %v352 = vunpack.c.l.b16 %v20
  %v353 = vunpack.c.h.b16 %v20
  %v354 = vunpack.c.l.b16 %v21
  %v355 = vunpack.c.h.b16 %v21
  %v356 = vunpack.c.l.b16 %v22
  %v357 = vunpack.c.h.b16 %v22
  %v358 = vunpack.c.l.b16 %v23
  %v359 = vunpack.c.h.b16 %v23
  %v360 = vunpack.c.l.b16 %v24
  %v361 = vunpack.c.h.b16 %v24
  %v362 = vunpack.c.l.b16 %v25
  %v363 = vunpack.c.h.b16 %v25
  %v364 = vunpack.c.l.b16 %v26
  %v365 = vunpack.c.h.b16 %v26
  %v366 = vunpack.c.l.b16 %v27
  %v367 = vunpack.c.h.b16 %v27
  %v368 = vunpack.c.l.b16 %v28
  %v369 = vunpack.c.h.b16 %v28
  %v370 = vunpack.c.l.b16 %v29
  %v371 = vunpack.c.h.b16 %v29
  %v372 = vunpack.c.l.b16 %v30
  %v373 = vunpack.c.h.b16 %v30
  %v374 = vunpack.c.l.b16 %v31
  %v375 = vunpack.c.h.b16 %v31
  %v376 = vunpack.c.l.b16 %v32
  %v377 = vunpack.c.h.b16 %v32
  %v378 = vunpack.c.l.b16 %v33
  %v379 = vunpack.c.h.b16 %v33
  %v380 = vunpack.c.l.b16 %v34
  %v381 = vunpack.c.h.b16 %v34
  %v382 = vunpack.c.l.b16 %v35
  %v383 = vunpack.c.h.b16 %v35
  %v384 = vunpack.c.l.b16 %v36
  %v385 = vunpack.c.h.b16 %v36
  %v386 = vunpack.c.l.b16 %v37
  %v387 = vunpack.c.h.b16 %v37
  %v388 = vunpack.c.l.b16 %v38
  %v389 = vunpack.c.h.b16 %v38
  %v390 = vunpack.c.l.b16 %v39
  %v391 = vunpack.c.h.b16 %v39
  %v392 = vunpack.c.l.b16 %v40
  %v393 = vunpack.c.h.b16 %v40
  %v394 = vunpack.c.l.b16 %v41
  %v395 = vunpack.c.h.b16 %v41
  %v396 = vunpack.c.l.b16 %v42
  %v397 = vunpack.c.h.b16 %v42
  %v398 = vunpack.c.l.b16 %v43
  %v399 = vunpack.c.h.b16 %v43
  %v400 = vunpack.c.l.b16 %v44
  %v401 = vunpack.c.h.b16 %v44
  %v402 = vunpack.c.l.b16 %v45
  %v403 = vunpack.c.h.b16 %v45
  %v404 = vunpack.c.l.b16 %v46
  %v405 = vunpack.c.h.b16 %v46
  %v406 = vunpack.c.l.b16 %v47
  %v407 = vunpack.c.h.b16 %v47
  %v408 = vunpack.c.l.b16 %v48
  %v409 = vunpack.c.h.b16 %v48
  %v410 = vunpack.c.l.b16 %v49
  %v411 = vunpack.c.h.b16 %v49
  %v412 = vunpack.c.l.b16 %v50
  %v413 = vunpack.c.h.b16 %v50
  %v414 = vunpack.c.l.b16 %v51
  %v415 = vunpack.c.h.b16 %v51
  %v416 = vunpack.c.l.b16 %v52
  %v417 = vunpack.c.h.b16 %v52
  %v418 = vunpack.c.l.b16 %v53
  %v419 = vunpack.c.h.b16 %v53
  %v420 = vunpack.c.l.b16 %v54
  %v421 = vunpack.c.h.b16 %v54
  %v422 = vunpack.c.l.b16 %v55
  %v423 = vunpack.c.h.b16 %v55
  %v424 = vunpack.c.l.b16 %v56
  %v425 = vunpack.c.h.b16 %v56
  %v426 = vunpack.c.l.b16 %v57
  %v427 = vunpack.c.h.b16 %v57
  %v428 = vunpack.c.l.b16 %v58
  %v429 = vunpack.c.h.b16 %v58
  %v430 = vunpack.c.l.b16 %v59
  %v431 = vunpack.c.h.b16 %v59
  %v432 = vunpack.c.l.b16 %v60
  %v433 = vunpack.c.h.b16 %v60
  %v434 = vunpack.c.l.b16 %v61
  %v435 = vunpack.c.h.b16 %v61
  %v436 = vunpack.c.l.b16 %v62
  %v437 = vunpack.c.h.b16 %v62
  %v438 = vunpack.c.l.b16 %v63
  %v439 = vunpack.c.h.b16 %v63
  %v440 = vunpack.c.l.b16 %v64
  %v441 = vunpack.c.h.b16 %v64
  %v442 = vunpack.c.l.b16 %v65
  %v443 = vunpack.c.h.b16 %v65
  %v444 = vunpack.c.l.b16 %v66
  %v445 = vunpack.c.h.b16 %v66
  %v446 = vunpack.c.l.b16 %v67
  %v447 = vunpack.c.h.b16 %v67
  %v448 = vunpack.c.l.b16 %v68
  %v449 = vunpack.c.h.b16 %v68
  %v450 = vunpack.c.l.b16 %v69
  %v451 = vunpack.c.h.b16 %v69
  %v452 = vunpack.c.l.b16 %v70
  %v453 = vunpack.c.h.b16 %v70
  %v454 = vunpack.c.l.b16 %v71
  %v455 = vunpack.c.h.b16 %v71
  %v456 = vunpack.c.l.b16 %v72
  %v457 = vunpack.c.h.b16 %v72
  %v458 = vunpack.c.l.b16 %v73
  %v459 = vunpack.c.h.b16 %v73
  %v460 = vunpack.c.l.b16 %v74
  %v461 = vunpack.c.h.b16 %v74
  %v462 = vunpack.c.l.b16 %v75
  %v463 = vunpack.c.h.b16 %v75
  %v464 = vunpack.c.l.b16 %v76
  %v465 = vunpack.c.h.b16 %v76
  %v466 = vunpack.c.l.b16 %v77
  %v467 = vunpack.c.h.b16 %v77
  %v468 = vunpack.c.l.b16 %v78
  %v469 = vunpack.c.h.b16 %v78
  %v470 = vunpack.c.l.b16 %v79
  %v471 = vunpack.c.h.b16 %v79
  %v472 = vunpack.c.l.b16 %v80
  %v473 = vunpack.c.h.b16 %v80
  %v474 = vunpack.c.l.b16 %v81
  %v475 = vunpack.c.h.b16 %v81
  %v476 = vunpack.c.l.b16 %v82
  %v477 = vunpack.c.h.b16 %v82
  %v478 = vunpack.c.l.b16 %v83
  %v479 = vunpack.c.h.b16 %v83
  %v480 = vunpack.c.l.b16 %v84
  %v481 = vunpack.c.h.b16 %v84
  %v482 = vunpack.c.l.b16 %v85
  %v483 = vunpack.c.h.b16 %v85
  %v484 = vunpack.c.l.b16 %v86
  %v485 = vunpack.c.h.b16 %v86
  %v486 = vunpack.c.l.b16 %v87
  %v487 = vunpack.c.h.b16 %v87
  %v488 = vunpack.c.l.b16 %v88
  %v489 = vunpack.c.h.b16 %v88
  %v490 = vunpack.c.l.b16 %v89
  %v491 = vunpack.c.h.b16 %v89
  %v492 = vunpack.c.l.b16 %v90
  %v493 = vunpack.c.h.b16 %v90
  %v494 = vunpack.c.l.b16 %v91
  %v495 = vunpack.c.h.b16 %v91
  %v496 = vunpack.c.l.b16 %v92
  %v497 = vunpack.c.h.b16 %v92
  %v498 = vunpack.c.l.b16 %v93
  %v499 = vunpack.c.h.b16 %v93
  %v500 = vunpack.c.l.b16 %v94
  %v501 = vunpack.c.h.b16 %v94
  %v502 = vunpack.c.l.b16 %v95
  %v503 = vunpack.c.h.b16 %v95
  %v504 = vunpack.c.l.b16 %v96
  %v505 = vunpack.c.h.b16 %v96
  %v506 = vunpack.c.l.b16 %v97
  %v507 = vunpack.c.h.b16 %v97
  %v508 = vunpack.c.l.b16 %v98
  %v509 = vunpack.c.h.b16 %v98
  %v510 = vunpack.c.l.b16 %v99
  %v511 = vunpack.c.h.b16 %v99
  %v512 = vunpack.c.l.b16 %v100
  %v513 = vunpack.c.h.b16 %v100
  %v514 = vunpack.c.l.b16 %v101
  %v515 = vunpack.c.h.b16 %v101
  %v516 = vunpack.c.l.b16 %v102
  %v517 = vunpack.c.h.b16 %v102
  %v518 = vunpack.c.l.b16 %v103
  %v519 = vunpack.c.h.b16 %v103
  %v520 = vunpack.c.l.b16 %v104
  %v521 = vunpack.c.h.b16 %v104
  %v522 = vunpack.c.l.b16 %v105
  %v523 = vunpack.c.h.b16 %v105
  %v524 = vunpack.c.l.b16 %v106
  %v525 = vunpack.c.h.b16 %v106
  %v526 = vunpack.c.l.b16 %v107
  %v527 = vunpack.c.h.b16 %v107
  %v528 = vunpack.c.l.b16 %v108
  %v529 = vunpack.c.h.b16 %v108
  %v530 = vunpack.c.l.b16 %v109
  %v531 = vunpack.c.h.b16 %v109
  %v532 = vunpack.c.l.b16 %v110
  %v533 = vunpack.c.h.b16 %v110
  %v534 = vunpack.c.l.b16 %v111
  %v535 = vunpack.c.h.b16 %v111
  %v536 = vunpack.c.l.b16 %v112
  %v537 = vunpack.c.h.b16 %v112
  %v538 = vunpack.c.l.b16 %v113
  %v539 = vunpack.c.h.b16 %v113
  %v540 = vunpack.c.l.b16 %v114
  %v541 = vunpack.c.h.b16 %v114
  %v542 = vunpack.c.l.b16 %v115
  %v543 = vunpack.c.h.b16 %v115
  %v544 = vunpack.c.l.b16 %v116
  %v545 = vunpack.c.h.b16 %v116
  %v546 = vunpack.c.l.b16 %v117
  %v547 = vunpack.c.h.b16 %v117
  %v548 = vunpack.c.l.b16 %v118
  %v549 = vunpack.c.h.b16 %v118
  %v550 = vunpack.c.l.b16 %v119
  %v551 = vunpack.c.h.b16 %v119
  %v552 = vunpack.c.l.b16 %v120
  %v553 = vunpack.c.h.b16 %v120
  %v554 = vunpack.c.l.b16 %v121
  %v555 = vunpack.c.h.b16 %v121
  %v556 = vunpack.c.l.b16 %v122
  %v557 = vunpack.c.h.b16 %v122
  %v558 = vunpack.c.l.b16 %v123
  %v559 = vunpack.c.h.b16 %v123
  %v560 = vunpack.c.l.b16 %v124
  %v561 = vunpack.c.h.b16 %v124
  %v562 = vunpack.c.l.b16 %v125
  %v563 = vunpack.c.h.b16 %v125
  %v564 = vunpack.c.l.b16 %v126
  %v565 = vunpack.c.h.b16 %v126
  %v566 = vunpack.c.l.b16 %v127
  %v567 = vunpack.c.h.b16 %v127
  %v568 = vunpack.c.l.b16 %v128
  %v569 = vunpack.c.h.b16 %v128
  %v570 = vunpack.c.l.b16 %v129
  %v571 = vunpack.c.h.b16 %v129
  %v572 = vunpack.c.l.b16 %v130
  %v573 = vunpack.c.h.b16 %v130
  %v574 = vunpack.c.l.b16 %v131
  %v575 = vunpack.c.h.b16 %v131
  %v576 = vunpack.c.l.b16 %v132
  %v577 = vunpack.c.h.b16 %v132
  %v578 = vunpack.c.l.b16 %v133
  %v579 = vunpack.c.h.b16 %v133
  %v580 = vunpack.c.l.b16 %v134
  %v581 = vunpack.c.h.b16 %v134
  %v582 = vunpack.c.l.b16 %v135
  %v583 = vunpack.c.h.b16 %v135
  %v584 = vunpack.c.l.b16 %v136
  %v585 = vunpack.c.h.b16 %v136
  %v586 = vunpack.c.l.b16 %v137
  %v587 = vunpack.c.h.b16 %v137
  %v588 = vunpack.c.l.b16 %v138
  %v589 = vunpack.c.h.b16 %v138
  %v590 = vunpack.c.l.b16 %v139
  %v591 = vunpack.c.h.b16 %v139
  %v592 = vunpack.c.l.b16 %v140
  %v593 = vunpack.c.h.b16 %v140
  %v594 = vunpack.c.l.b16 %v141
  %v595 = vunpack.c.h.b16 %v141
  %v596 = vunpack.c.l.b16 %v142
  %v597 = vunpack.c.h.b16 %v142
  %v598 = vunpack.c.l.b16 %v143
  %v599 = vunpack.c.h.b16 %v143
  %v600 = vunpack.c.l.b16 %v144
  %v601 = vunpack.c.h.b16 %v144
  %v602 = vunpack.c.l.b16 %v145
  %v603 = vunpack.c.h.b16 %v145
  %v604 = vunpack.c.l.b16 %v146
  %v605 = vunpack.c.h.b16 %v146
  %v606 = vunpack.c.l.b16 %v147
  %v607 = vunpack.c.h.b16 %v147
  %v608 = vunpack.c.l.b16 %v148
  %v609 = vunpack.c.h.b16 %v148
  %v610 = vunpack.c.l.b16 %v149
  %v611 = vunpack.c.h.b16 %v149
  %v612 = vunpack.c.l.b16 %v150
  %v613 = vunpack.c.h.b16 %v150
  %v614 = vunpack.c.l.b16 %v151
  %v615 = vunpack.c.h.b16 %v151
  %v616 = vunpack.c.l.b16 %v152
  %v617 = vunpack.c.h.b16 %v152
  %v618 = vunpack.c.l.b16 %v153
  %v619 = vunpack.c.h.b16 %v153
  %v620 = vunpack.c.l.b16 %v154
  %v621 = vunpack.c.h.b16 %v154
  %v622 = vunpack.c.l.b16 %v155
  %v623 = vunpack.c.h.b16 %v155
  %v624 = vunpack.c.l.b16 %v156
  %v625 = vunpack.c.h.b16 %v156
  %v626 = vunpack.c.l.b16 %v157
  %v627 = vunpack.c.h.b16 %v157
  %v628 = vunpack.c.l.b16 %v158
  %v629 = vunpack.c.h.b16 %v158
  %v630 = vunpack.c.l.b16 %v159
  %v631 = vunpack.c.h.b16 %v159
  %v632 = vunpack.c.l.b16 %v160
  %v633 = vunpack.c.h.b16 %v160
  %v634 = vunpack.c.l.b16 %v161
  %v635 = vunpack.c.h.b16 %v161
  %v636 = vunpack.c.l.b16 %v162
  %v637 = vunpack.c.h.b16 %v162
  %v638 = vunpack.c.l.b16 %v163
  %v639 = vunpack.c.h.b16 %v163
  %v640 = vpack.c.b16 %v354, %v352
  %v641 = vpack.c.b16 %v355, %v353
  %v642 = vpack.c.b16 %v358, %v356
  %v643 = vpack.c.b16 %v359, %v357
  %v644 = vpack.c.b16 %v362, %v360
  %v645 = vpack.c.b16 %v363, %v361
  %v646 = vpack.c.b16 %v366, %v364
  %v647 = vpack.c.b16 %v367, %v365
  %v648 = vpack.c.b16 %v370, %v368
  %v649 = vpack.c.b16 %v371, %v369
  %v650 = vpack.c.b16 %v374, %v372
  %v651 = vpack.c.b16 %v375, %v373
  %v652 = vpack.c.b16 %v378, %v376
  %v653 = vpack.c.b16 %v379, %v377
  %v654 = vpack.c.b16 %v382, %v380
  %v655 = vpack.c.b16 %v383, %v381
  %v656 = vpack.c.b16 %v386, %v384
  %v657 = vpack.c.b16 %v387, %v385
  %v658 = vpack.c.b16 %v390, %v388
  %v659 = vpack.c.b16 %v391, %v389
  %v660 = vpack.c.b16 %v394, %v392
  %v661 = vpack.c.b16 %v395, %v393
  %v662 = vpack.c.b16 %v398, %v396
  %v663 = vpack.c.b16 %v399, %v397
  %v664 = vpack.c.b16 %v402, %v400
  %v665 = vpack.c.b16 %v403, %v401
  %v666 = vpack.c.b16 %v406, %v404
  %v667 = vpack.c.b16 %v407, %v405
  %v668 = vpack.c.b16 %v410, %v408
  %v669 = vpack.c.b16 %v411, %v409
  %v670 = vpack.c.b16 %v414, %v412
  %v671 = vpack.c.b16 %v415, %v413
  %v672 = vpack.c.b16 %v418, %v416
  %v673 = vpack.c.b16 %v419, %v417
  %v674 = vpack.c.b16 %v422, %v420
  %v675 = vpack.c.b16 %v423, %v421
  %v676 = vpack.c.b16 %v426, %v424
  %v677 = vpack.c.b16 %v427, %v425
  %v678 = vpack.c.b16 %v430, %v428
  %v679 = vpack.c.b16 %v431, %v429
  %v680 = vpack.c.b16 %v434, %v432
  %v681 = vpack.c.b16 %v435, %v433
  %v682 = vpack.c.b16 %v438, %v436
  %v683 = vpack.c.b16 %v439, %v437
  %v684 = vpack.c.b16 %v442, %v440
  %v685 = vpack.c.b16 %v443, %v441
  %v686 = vpack.c.b16 %v446, %v444
  %v687 = vpack.c.b16 %v447, %v445
  %v688 = vpack.c.b16 %v450, %v448
  %v689 = vpack.c.b16 %v451, %v449
  %v690 = vpack.c.b16 %v454, %v452
  %v691 = vpack.c.b16 %v455, %v453
  %v692 = vpack.c.b16 %v458, %v456
  %v693 = vpack.c.b16 %v459, %v457
  %v694 = vpack.c.b16 %v462, %v460
  %v695 = vpack.c.b16 %v463, %v461
  %v696 = vpack.c.b16 %v466, %v464
  %v697 = vpack.c.b16 %v467, %v465
  %v698 = vpack.c.b16 %v470, %v468
  %v699 = vpack.c.b16 %v471, %v469
  %v700 = vpack.c.b16 %v474, %v472
  %v701 = vpack.c.b16 %v475, %v473
  %v702 = vpack.c.b16 %v478, %v476
  %v703 = vpack.c.b16 %v479, %v477
  %v704 = vpack.c.b16 %v482, %v480
  %v705 = vpack.c.b16 %v483, %v481
  %v706 = vpack.c.b16 %v486, %v484
  %v707 = vpack.c.b16 %v487, %v485
  %v708 = vpack.c.b16 %v490, %v488
  %v709 = vpack.c.b16 %v491, %v489
  %v710 = vpack.c.b16 %v494, %v492
  %v711 = vpack.c.b16 %v495, %v493
  %v712 = vpack.c.b16 %v498, %v496
  %v713 = vpack.c.b16 %v499, %v497
  %v714 = vpack.c.b16 %v502, %v500
  %v715 = vpack.c.b16 %v503, %v501
  %v716 = vpack.c.b16 %v506, %v504
  %v717 = vpack.c.b16 %v507, %v505
  %v718 = vpack.c.b16 %v510, %v508
  %v719 = vpack.c.b16 %v511, %v509
  %v720 = vpack.c.b16 %v514, %v512
  %v721 = vpack.c.b16 %v515, %v513
  %v722 = vpack.c.b16 %v518, %v516
  %v723 = vpack.c.b16 %v519, %v517
  %v724 = vpack.c.b16 %v522, %v520
  %v725 = vpack.c.b16 %v523, %v521
  %v726 = vpack.c.b16 %v526, %v524
  %v727 = vpack.c.b16 %v527, %v525
  %v728 = vpack.c.b16 %v530, %v528
  %v729 = vpack.c.b16 %v531, %v529
  %v730 = vpack.c.b16 %v534, %v532
  %v731 = vpack.c.b16 %v535, %v533
  %v732 = vpack.c.b16 %v538, %v536
  %v733 = vpack.c.b16 %v539, %v537
  %v734 = vpack.c.b16 %v542, %v540
  %v735 = vpack.c.b16 %v543, %v541
  %v736 = vpack.c.b16 %v546, %v544
  %v737 = vpack.c.b16 %v547, %v545
  %v738 = vpack.c.b16 %v550, %v548
  %v739 = vpack.c.b16 %v551, %v549
  %v740 = vpack.c.b16 %v554, %v552
  %v741 = vpack.c.b16 %v555, %v553
  %v742 = vpack.c.b16 %v558, %v556
  %v743 = vpack.c.b16 %v559, %v557
  %v744 = vpack.c.b16 %v562, %v560
  %v745 = vpack.c.b16 %v563, %v561
  %v746 = vpack.c.b16 %v566, %v564
  %v747 = vpack.c.b16 %v567, %v565
  %v748 = vpack.c.b16 %v570, %v568
  %v749 = vpack.c.b16 %v571, %v569
  %v750 = vpack.c.b16 %v574, %v572
  %v751 = vpack.c.b16 %v575, %v573
  %v752 = vpack.c.b16 %v578, %v576
  %v753 = vpack.c.b16 %v579, %v577
  %v754 = vpack.c.b16 %v582, %v580
  %v755 = vpack.c.b16 %v583, %v581
  %v756 = vpack.c.b16 %v586, %v584
  %v757 = vpack.c.b16 %v587, %v585
  %v758 = vpack.c.b16 %v590, %v588
  %v759 = vpack.c.b16 %v591, %v589
  %v760 = vpack.c.b16 %v594, %v592
  %v761 = vpack.c.b16 %v595, %v593
  %v762 = vpack.c.b16 %v598, %v596
  %v763 = vpack.c.b16 %v599, %v597
  %v764 = vpack.c.b16 %v602, %v600
  %v765 = vpack.c.b16 %v603, %v601
  %v766 = vpack.c.b16 %v606, %v604
  %v767 = vpack.c.b16 %v607, %v605
  %v768 = vpack.c.b16 %v610, %v608
  %v769 = vpack.c.b16 %v611, %v609
  %v770 = vpack.c.b16 %v614, %v612
  %v771 = vpack.c.b16 %v615, %v613
  %v772 = vpack.c.b16 %v618, %v616
  %v773 = vpack.c.b16 %v619, %v617
  %v774 = vpack.c.b16 %v622, %v620
  %v775 = vpack.c.b16 %v623, %v621
  %v776 = vpack.c.b16 %v626, %v624
  %v777 = vpack.c.b16 %v627, %v625
  %v778 = vpack.c.b16 %v630, %v628
  %v779 = vpack.c.b16 %v631, %v629
  %v780 = vpack.c.b16 %v634, %v632
  %v781 = vpack.c.b16 %v635, %v633
  %v782 = vpack.c.b16 %v638, %v636
  %v783 = vpack.c.b16 %v639, %v637
  %928 = vmatprep.subr.bf16.mxu0 %v641
  %929 = vmatpush1.bf16.msra.mxu0 %v640
  %930 = vmatprep.subr.bf16.mxu0 %v643
  %931 = vmatpush1.bf16.msra.mxu0 %v642
  %932 = vmatprep.subr.bf16.mxu0 %v645
  %933 = vmatpush1.bf16.msra.mxu0 %v644
  %934 = vmatprep.subr.bf16.mxu0 %v647
  %935 = vmatpush1.bf16.msra.mxu0 %v646
  %936 = vmatprep.subr.bf16.mxu0 %v649
  %937 = vmatpush1.bf16.msra.mxu0 %v648
  %938 = vmatprep.subr.bf16.mxu0 %v651
  %939 = vmatpush1.bf16.msra.mxu0 %v650
  %940 = vmatprep.subr.bf16.mxu0 %v653
  %941 = vmatpush1.bf16.msra.mxu0 %v652
  %942 = vmatprep.subr.bf16.mxu0 %v655
  %943 = vmatpush1.bf16.msra.mxu0 %v654
  %944 = vmatprep.subr.bf16.mxu0 %v657
  %945 = vmatpush1.bf16.msra.mxu0 %v656
  %946 = vmatprep.subr.bf16.mxu0 %v659
  %947 = vmatpush1.bf16.msra.mxu0 %v658
  %948 = vmatprep.subr.bf16.mxu0 %v661
  %949 = vmatpush1.bf16.msra.mxu0 %v660
  %950 = vmatprep.subr.bf16.mxu0 %v663
  %951 = vmatpush1.bf16.msra.mxu0 %v662
  %952 = vmatprep.subr.bf16.mxu0 %v665
  %953 = vmatpush1.bf16.msra.mxu0 %v664
  %954 = vmatprep.subr.bf16.mxu0 %v667
  %955 = vmatpush1.bf16.msra.mxu0 %v666
  %956 = vmatprep.subr.bf16.mxu0 %v669
  %957 = vmatpush1.bf16.msra.mxu0 %v668
  %958 = vmatprep.subr.bf16.mxu0 %v671
  %959 = vmatpush1.bf16.msra.mxu0 %v670
  %960 = vmatprep.mubr.bf16.mxu0 %v191
  %961 = vmatmul.mubr.bf16.gmra.mrb[0].mxu0 %v190
  %v962 = vpop.f32.mrb[0].mxu0
  %v963 = vadd.f32 %v169, %v962
  %v964 = vpop.f32.mrb[0].mxu0
  %v965 = vadd.f32 %v173, %v964
  %v966 = vpop.f32.mrb[0].mxu0
  %v967 = vpop.f32.mrb[0].mxu0
  %968 = vdwg.mxu0
  %969 = vmatprep.subr.bf16.mxu0 %v673
  %970 = vmatpush1.bf16.msra.mxu0 %v672
  %971 = vmatprep.subr.bf16.mxu0 %v675
  %972 = vmatpush1.bf16.msra.mxu0 %v674
  %973 = vmatprep.subr.bf16.mxu0 %v677
  %974 = vmatpush1.bf16.msra.mxu0 %v676
  %975 = vmatprep.subr.bf16.mxu0 %v679
  %976 = vmatpush1.bf16.msra.mxu0 %v678
  %977 = vmatprep.subr.bf16.mxu0 %v681
  %978 = vmatpush1.bf16.msra.mxu0 %v680
  %979 = vmatprep.subr.bf16.mxu0 %v683
  %980 = vmatpush1.bf16.msra.mxu0 %v682
  %981 = vmatprep.subr.bf16.mxu0 %v685
  %982 = vmatpush1.bf16.msra.mxu0 %v684
  %983 = vmatprep.subr.bf16.mxu0 %v687
  %984 = vmatpush1.bf16.msra.mxu0 %v686
  %985 = vmatprep.subr.bf16.mxu0 %v689
  %986 = vmatpush1.bf16.msra.mxu0 %v688
  %987 = vmatprep.subr.bf16.mxu0 %v691
  %988 = vmatpush1.bf16.msra.mxu0 %v690
  %989 = vmatprep.subr.bf16.mxu0 %v693
  %990 = vmatpush1.bf16.msra.mxu0 %v692
  %991 = vmatprep.subr.bf16.mxu0 %v695
  %992 = vmatpush1.bf16.msra.mxu0 %v694
  %993 = vmatprep.subr.bf16.mxu0 %v697
  %994 = vmatpush1.bf16.msra.mxu0 %v696
  %995 = vmatprep.subr.bf16.mxu0 %v699
  %996 = vmatpush1.bf16.msra.mxu0 %v698
  %997 = vmatprep.subr.bf16.mxu0 %v701
  %998 = vmatpush1.bf16.msra.mxu0 %v700
  %999 = vmatprep.subr.bf16.mxu0 %v703
  %1000 = vmatpush1.bf16.msra.mxu0 %v702
  %1001 = vmatprep.mubr.bf16.mxu0 %v193
  %1002 = vmatmul.mubr.bf16.gmra.mrb[0].mxu0 %v192
  %v1003 = vpop.f32.mrb[0].mxu0
  %v1004 = vadd.f32 %v963, %v1003
  %v1005 = vpop.f32.mrb[0].mxu0
  %v1006 = vadd.f32 %v965, %v1005
  %v1007 = vpop.f32.mrb[0].mxu0
  %v1008 = vpop.f32.mrb[0].mxu0
  %1009 = vdwg.mxu0
  %1010 = vmatprep.subr.bf16.mxu0 %v705
  %1011 = vmatpush1.bf16.msra.mxu0 %v704
  %1012 = vmatprep.subr.bf16.mxu0 %v707
  %1013 = vmatpush1.bf16.msra.mxu0 %v706
  %1014 = vmatprep.subr.bf16.mxu0 %v709
  %1015 = vmatpush1.bf16.msra.mxu0 %v708
  %1016 = vmatprep.subr.bf16.mxu0 %v711
  %1017 = vmatpush1.bf16.msra.mxu0 %v710
  %1018 = vmatprep.subr.bf16.mxu0 %v713
  %1019 = vmatpush1.bf16.msra.mxu0 %v712
  %1020 = vmatprep.subr.bf16.mxu0 %v715
  %1021 = vmatpush1.bf16.msra.mxu0 %v714
  %1022 = vmatprep.subr.bf16.mxu0 %v717
  %1023 = vmatpush1.bf16.msra.mxu0 %v716
  %1024 = vmatprep.subr.bf16.mxu0 %v719
  %1025 = vmatpush1.bf16.msra.mxu0 %v718
  %1026 = vmatprep.subr.bf16.mxu0 %v721
  %1027 = vmatpush1.bf16.msra.mxu0 %v720
  %1028 = vmatprep.subr.bf16.mxu0 %v723
  %1029 = vmatpush1.bf16.msra.mxu0 %v722
  %1030 = vmatprep.subr.bf16.mxu0 %v725
  %1031 = vmatpush1.bf16.msra.mxu0 %v724
  %1032 = vmatprep.subr.bf16.mxu0 %v727
  %1033 = vmatpush1.bf16.msra.mxu0 %v726
  %1034 = vmatprep.subr.bf16.mxu0 %v729
  %1035 = vmatpush1.bf16.msra.mxu0 %v728
  %1036 = vmatprep.subr.bf16.mxu0 %v731
  %1037 = vmatpush1.bf16.msra.mxu0 %v730
  %1038 = vmatprep.subr.bf16.mxu0 %v733
  %1039 = vmatpush1.bf16.msra.mxu0 %v732
  %1040 = vmatprep.subr.bf16.mxu0 %v735
  %1041 = vmatpush1.bf16.msra.mxu0 %v734
  %1042 = vmatprep.mubr.bf16.mxu0 %v195
  %1043 = vmatmul.mubr.bf16.gmra.mrb[0].mxu0 %v194
  %v1044 = vpop.f32.mrb[0].mxu0
  %v1045 = vadd.f32 %v1004, %v1044
  %v1046 = vpop.f32.mrb[0].mxu0
  %v1047 = vadd.f32 %v1006, %v1046
  %v1048 = vpop.f32.mrb[0].mxu0
  %v1049 = vpop.f32.mrb[0].mxu0
  %1050 = vdwg.mxu0
  %1051 = vmatprep.subr.bf16.mxu0 %v737
  %1052 = vmatpush1.bf16.msra.mxu0 %v736
  %1053 = vmatprep.subr.bf16.mxu0 %v739
  %1054 = vmatpush1.bf16.msra.mxu0 %v738
  %1055 = vmatprep.subr.bf16.mxu0 %v741
  %1056 = vmatpush1.bf16.msra.mxu0 %v740
  %1057 = vmatprep.subr.bf16.mxu0 %v743
  %1058 = vmatpush1.bf16.msra.mxu0 %v742
  %1059 = vmatprep.subr.bf16.mxu0 %v745
  %1060 = vmatpush1.bf16.msra.mxu0 %v744
  %1061 = vmatprep.subr.bf16.mxu0 %v747
  %1062 = vmatpush1.bf16.msra.mxu0 %v746
  %1063 = vmatprep.subr.bf16.mxu0 %v749
  %1064 = vmatpush1.bf16.msra.mxu0 %v748
  %1065 = vmatprep.subr.bf16.mxu0 %v751
  %1066 = vmatpush1.bf16.msra.mxu0 %v750
  %1067 = vmatprep.subr.bf16.mxu0 %v753
  %1068 = vmatpush1.bf16.msra.mxu0 %v752
  %1069 = vmatprep.subr.bf16.mxu0 %v755
  %1070 = vmatpush1.bf16.msra.mxu0 %v754
  %1071 = vmatprep.subr.bf16.mxu0 %v757
  %1072 = vmatpush1.bf16.msra.mxu0 %v756
  %1073 = vmatprep.subr.bf16.mxu0 %v759
  %1074 = vmatpush1.bf16.msra.mxu0 %v758
  %1075 = vmatprep.subr.bf16.mxu0 %v761
  %1076 = vmatpush1.bf16.msra.mxu0 %v760
  %1077 = vmatprep.subr.bf16.mxu0 %v763
  %1078 = vmatpush1.bf16.msra.mxu0 %v762
  %1079 = vmatprep.subr.bf16.mxu0 %v765
  %1080 = vmatpush1.bf16.msra.mxu0 %v764
  %1081 = vmatprep.subr.bf16.mxu0 %v767
  %1082 = vmatpush1.bf16.msra.mxu0 %v766
  %1083 = vmatprep.mubr.bf16.mxu0 %v197
  %1084 = vmatmul.mubr.bf16.gmra.mrb[0].mxu0 %v196
  %v1085 = vpop.f32.mrb[0].mxu0
  %v1086 = vadd.f32 %v1045, %v1085
  %v1087 = vpop.f32.mrb[0].mxu0
  %v1088 = vadd.f32 %v1047, %v1087
  %v1089 = vpop.f32.mrb[0].mxu0
  %v1090 = vpop.f32.mrb[0].mxu0
  %1091 = vdwg.mxu0
  %1092 = vmatprep.subr.bf16.mxu0 %v769
  %1093 = vmatpush1.bf16.msra.mxu0 %v768
  %1094 = vmatprep.subr.bf16.mxu0 %v771
  %1095 = vmatpush1.bf16.msra.mxu0 %v770
  %1096 = vmatprep.subr.bf16.mxu0 %v773
  %1097 = vmatpush1.bf16.msra.mxu0 %v772
  %1098 = vmatprep.subr.bf16.mxu0 %v775
  %1099 = vmatpush1.bf16.msra.mxu0 %v774
  %1100 = vmatprep.subr.bf16.mxu0 %v777
  %1101 = vmatpush1.bf16.msra.mxu0 %v776
  %1102 = vmatprep.subr.bf16.mxu0 %v779
  %1103 = vmatpush1.bf16.msra.mxu0 %v778
  %1104 = vmatprep.subr.bf16.mxu0 %v781
  %1105 = vmatpush1.bf16.msra.mxu0 %v780
  %1106 = vmatprep.subr.bf16.mxu0 %v783
  %1107 = vmatpush1.bf16.msra.mxu0 %v782
  %1108 = vmatprep.subr.bf16.mxu0 0
  %1109 = vmatpush1.bf16.msra.mxu0 0
  %1110 = vmatprep.subr.bf16.mxu0 0
  %1111 = vmatpush1.bf16.msra.mxu0 0
  %1112 = vmatprep.subr.bf16.mxu0 0
  %1113 = vmatpush1.bf16.msra.mxu0 0
  %1114 = vmatprep.subr.bf16.mxu0 0
  %1115 = vmatpush1.bf16.msra.mxu0 0
  %1116 = vmatprep.subr.bf16.mxu0 0
  %1117 = vmatpush1.bf16.msra.mxu0 0
  %1118 = vmatprep.subr.bf16.mxu0 0
  %1119 = vmatpush1.bf16.msra.mxu0 0
  %1120 = vmatprep.subr.bf16.mxu0 0
  %1121 = vmatpush1.bf16.msra.mxu0 0
  %1122 = vmatprep.subr.bf16.mxu0 0
  %1123 = vmatpush1.bf16.msra.mxu0 0
  %1124 = vmatprep.mubr.bf16.mxu0 0
  %1125 = vmatmul.mubr.bf16.gmra.mrb[0].mxu0 %v198
  %v1126 = vpop.f32.mrb[0].mxu0
  %v1127 = vadd.f32 %v1086, %v1126
  %v1128 = vpop.f32.mrb[0].mxu0
  %v1129 = vadd.f32 %v1088, %v1128
  %v1130 = vpop.f32.mrb[0].mxu0
  %v1131 = vpop.f32.mrb[0].mxu0
  %1132 = vdwg.mxu0
  %vm1133 = vcmp.gt.f32.partialorder %v1127, 0.0
  %vm1134 = vcmp.gt.f32.partialorder %v1129, 0.0
  %v1135 = vmul.f32 %v1127, 0.01
  %v1136 = vmul.f32 %v1129, 0.01
  %v1137 = vsel %vm1133, %v1127, %v1135
  %v1138 = vsel %vm1134, %v1129, %v1136
  %1139 = vst [vmem:[%s3] sm:$0xff] %v1137
  %1140 = vst [vmem:[%s3 + $0x8] sm:$0xff] %v1138
  // Predicated region
  $region14: #{model_forward.11} parent=0 // pred_check
    _
  $region15: #{model_forward.11} parent=0 // pred_check_branch
    %1142 = sbr.rel (0) target = $region17
  $region16: #{model_forward.11} parent=0 // pred_region
    _
  $region17: #{model_forward.11} parent=0 // pred_fallthru
    _
  // Predicated region
  $region18: #{model_forward.11} parent=0 // pred_check
    _
  $region19: #{model_forward.11} parent=0 // pred_check_branch
    %1144 = sbr.rel (0) target = $region21
  $region20: #{model_forward.11} parent=0 // pred_region
    _
  $region21: #{model_forward.11} parent=0 // pred_fallthru
    _

// kernel: model_forward.13
$region0: #{model_forward.13}
  #allocation0 [shape = 'u32[]', space=smem, size = 0x4, offset = 0x4, fixed_abs, tag = 'smem constant byte address 0x4 - core index']
  #allocation1 [shape = 'u32[144,128]{1,0:T(1,128)}', space=vmem, size = 0x12000, scoped, tag = 'internal scratch']
  #allocation2 [shape = 'f32[1,1]{1,0:T(1,128)S(1)}', space=vmem, size = 0x200, scoped, tag = 'scoped memory for model_forward.13']
  %s0 = inlined_call_operand.vmem [shape: bf16[1,2304], index: 0, kind: input, shape index: {}]
  %s1 = inlined_call_operand.vmem [shape: bf16[1,2304], index: 1, kind: input, shape index: {}]
  %s2 = inlined_call_operand.vmem [shape: bf16[2304,256], index: 2, kind: input, shape index: {}]
  %s3 = inlined_call_operand.vmem [shape: f32[1,256], index: 3, kind: input, shape index: {}]
  %s4 = inlined_call_operand.vmem [shape: bf16[256,512], index: 4, kind: input, shape index: {}]
  %s5 = inlined_call_operand.vmem [shape: bf16[256,512], index: 5, kind: input, shape index: {}]
  %s6 = inlined_call_operand.vmem [shape: f32[1,512], index: 6, kind: input, shape index: {}]
  %s7 = inlined_call_operand.vmem [shape: bf16[512,256], index: 7, kind: input, shape index: {}]
  %s8 = inlined_call_operand.vmem [shape: f32[1,256], index: 8, kind: input, shape index: {}]
  %s9 = inlined_call_operand.vmem [shape: bf16[256,64], index: 9, kind: input, shape index: {}]
  %s10 = inlined_call_operand.vmem [shape: f32[1,64], index: 10, kind: input, shape index: {}]
  %s11 = inlined_call_operand.vmem [shape: bf16[64,1], index: 11, kind: input, shape index: {}]
  %s12 = inlined_call_operand.<no memory space> [shape: f32[1,1], index: 12, kind: input, shape index: {}]
  %s13 = inlined_call_operand.hbm [shape: f32[1,1], index: 13, kind: output, shape index: {}]
  %s14 = sld [smem:[#allocation0]]
  $region62: #{model_forward.13} parent=0
    _
  %s16 = ssub.s32 1, %s14
  %s17 = scalar_select 0, %s16, %s14
  %v18 = vstv %s12
  %19 = vst [vmem:[#allocation2] sm:$0x1] %v18
  $region1: #{model_forward.13} parent=0
    #allocation3 [shape = 'u8[512]{0}', space=vmem, size = 0x400, scoped, tag = 'output window, operand 0, single buffered']
    #allocation4 [shape = 's32[1]{0}', space=sflag, size = 0x4, scoped, tag = 'scoped memory for model_forward.13']
    %20 = vsyncpa [#allocation4], 0
    // Predicated region
    $region2: #{model_forward.13} parent=1 // pred_check
      _
    $region3: #{model_forward.13} parent=1 // pred_check_branch
      %22 = sbr.rel (0) target = $region5
    $region4: #{model_forward.13} parent=1 // pred_region
      _
    $region5: #{model_forward.13} parent=1 // pred_fallthru
      _
    // Predicated region
    $region6: #{model_forward.13} parent=1 // pred_check
      _
    $region7: #{model_forward.13} parent=1 // pred_check_branch
      %24 = sbr.rel (0) target = $region9
    $region8: #{model_forward.13} parent=1 // pred_region
      _
    $region9: #{model_forward.13} parent=1 // pred_fallthru
      _
    // Predicated region
    $region10: #{model_forward.13} parent=1 // pred_check
      _
    $region11: #{model_forward.13} parent=1 // pred_check_branch
      %26 = sbr.rel (0) target = $region13
    $region12: #{model_forward.13} parent=1 // pred_region
      _
    $region13: #{model_forward.13} parent=1 // pred_fallthru
      _
    // Predicated region
    $region14: #{model_forward.13} parent=1 // pred_check
      _
    $region15: #{model_forward.13} parent=1 // pred_check_branch
      %28 = sbr.rel (0) target = $region17
    $region16: #{model_forward.13} parent=1 // pred_region
      _
    $region17: #{model_forward.13} parent=1 // pred_fallthru
      _
    // Predicated region
    $region18: #{model_forward.13} parent=1 // pred_check
      _
    $region19: #{model_forward.13} parent=1 // pred_check_branch
      %30 = sbr.rel (0) target = $region21
    $region20: #{model_forward.13} parent=1 // pred_region
      _
    $region21: #{model_forward.13} parent=1 // pred_fallthru
      _
    // Predicated region
    $region22: #{model_forward.13} parent=1 // pred_check
      _
    $region23: #{model_forward.13} parent=1 // pred_check_branch
      %32 = sbr.rel (0) target = $region25
    $region24: #{model_forward.13} parent=1 // pred_region
      _
    $region25: #{model_forward.13} parent=1 // pred_fallthru
      _
    // Predicated region
    $region26: #{model_forward.13} parent=1 // pred_check
      _
    $region27: #{model_forward.13} parent=1 // pred_check_branch
      %34 = sbr.rel (0) target = $region29
    $region28: #{model_forward.13} parent=1 // pred_region
      _
    $region29: #{model_forward.13} parent=1 // pred_fallthru
      _
    // Predicated region
    $region30: #{model_forward.13} parent=1 // pred_check
      _
    $region31: #{model_forward.13} parent=1 // pred_check_branch
      %36 = sbr.rel (0) target = $region33
    $region32: #{model_forward.13} parent=1 // pred_region
      _
    $region33: #{model_forward.13} parent=1 // pred_fallthru
      _
    // Predicated region
    $region34: #{model_forward.13} parent=1 // pred_check
      _
    $region35: #{model_forward.13} parent=1 // pred_check_branch
      %38 = sbr.rel (0) target = $region37
    $region36: #{model_forward.13} parent=1 // pred_region
      _
    $region37: #{model_forward.13} parent=1 // pred_fallthru
      _
    // Predicated region
    $region38: #{model_forward.13} parent=1 // pred_check
      _
    $region39: #{model_forward.13} parent=1 // pred_check_branch
      %40 = sbr.rel (0) target = $region41
    $region40: #{model_forward.13} parent=1 // pred_region
      _
    $region41: #{model_forward.13} parent=1 // pred_fallthru
      _
    // Predicated region
    $region42: #{model_forward.13} parent=1 // pred_check
      _
    $region43: #{model_forward.13} parent=1 // pred_check_branch
      %42 = sbr.rel (0) target = $region45
    $region44: #{model_forward.13} parent=1 // pred_region
      _
    $region45: #{model_forward.13} parent=1 // pred_fallthru
      _
    // Predicated region
    $region46: #{model_forward.13} parent=1 // pred_check
      _
    $region47: #{model_forward.13} parent=1 // pred_check_branch
      %44 = sbr.rel (0) target = $region49
    $region48: #{model_forward.13} parent=1 // pred_region
      _
    $region49: #{model_forward.13} parent=1 // pred_fallthru
      _
    // Predicated region
    $region50: #{model_forward.13} parent=1 // pred_check
      _
    $region51: #{model_forward.13} parent=1 // pred_check_branch
      %46 = sbr.rel (0) target = $region53
    $region52: #{model_forward.13} parent=1 // pred_region
      _
    $region53: #{model_forward.13} parent=1 // pred_fallthru
      _
    %v48 = vld [vmem:[%s0] sm:$0xff]
    %v49 = vld [vmem:[%s0 + $0x8] sm:$0xff]
    %v50 = vld [vmem:[%s0 + $0x10] sm:$0x3]
    %v51 = vld [vmem:[%s2] sm:$0xff]
    %v52 = vld [vmem:[%s2 + $0x8] sm:$0xff]
    %v53 = vld [vmem:[%s2 + $0x10] sm:$0xff]
    %v54 = vld [vmem:[%s2 + $0x18] sm:$0xff]
    %v55 = vld [vmem:[%s2 + $0x20] sm:$0xff]
    %v56 = vld [vmem:[%s2 + $0x28] sm:$0xff]
    %v57 = vld [vmem:[%s2 + $0x30] sm:$0xff]
    %v58 = vld [vmem:[%s2 + $0x38] sm:$0xff]
    %v59 = vld [vmem:[%s2 + $0x40] sm:$0xff]
    %v60 = vld [vmem:[%s2 + $0x48] sm:$0xff]
    %v61 = vld [vmem:[%s2 + $0x50] sm:$0xff]
    %v62 = vld [vmem:[%s2 + $0x58] sm:$0xff]
    %v63 = vld [vmem:[%s2 + $0x60] sm:$0xff]
    %v64 = vld [vmem:[%s2 + $0x68] sm:$0xff]
    %v65 = vld [vmem:[%s2 + $0x70] sm:$0xff]
    %v66 = vld [vmem:[%s2 + $0x78] sm:$0xff]
    %v67 = vld [vmem:[%s2 + $0x80] sm:$0xff]
    %v68 = vld [vmem:[%s2 + $0x88] sm:$0xff]
    %v69 = vld [vmem:[%s2 + $0x90] sm:$0xff]
    %v70 = vld [vmem:[%s2 + $0x98] sm:$0xff]
    %v71 = vld [vmem:[%s2 + $0xa0] sm:$0xff]
    %v72 = vld [vmem:[%s2 + $0xa8] sm:$0xff]
    %v73 = vld [vmem:[%s2 + $0xb0] sm:$0xff]
    %v74 = vld [vmem:[%s2 + $0xb8] sm:$0xff]
    %v75 = vld [vmem:[%s2 + $0xc0] sm:$0xff]
    %v76 = vld [vmem:[%s2 + $0xc8] sm:$0xff]
    %v77 = vld [vmem:[%s2 + $0xd0] sm:$0xff]
    %v78 = vld [vmem:[%s2 + $0xd8] sm:$0xff]
    %v79 = vld [vmem:[%s2 + $0xe0] sm:$0xff]
    %v80 = vld [vmem:[%s2 + $0xe8] sm:$0xff]
    %v81 = vld [vmem:[%s2 + $0xf0] sm:$0xff]
    %v82 = vld [vmem:[%s2 + $0xf8] sm:$0xff]
    %v83 = vld [vmem:[%s2 + $0x100] sm:$0xff]
    %v84 = vld [vmem:[%s2 + $0x108] sm:$0xff]
    %v85 = vld [vmem:[%s2 + $0x110] sm:$0xff]
    %v86 = vld [vmem:[%s2 + $0x118] sm:$0xff]
    %v87 = vld [vmem:[%s2 + $0x120] sm:$0xff]
    %v88 = vld [vmem:[%s2 + $0x128] sm:$0xff]
    %v89 = vld [vmem:[%s2 + $0x130] sm:$0xff]
    %v90 = vld [vmem:[%s2 + $0x138] sm:$0xff]
    %v91 = vld [vmem:[%s2 + $0x140] sm:$0xff]
    %v92 = vld [vmem:[%s2 + $0x148] sm:$0xff]
    %v93 = vld [vmem:[%s2 + $0x150] sm:$0xff]
    %v94 = vld [vmem:[%s2 + $0x158] sm:$0xff]
    %v95 = vld [vmem:[%s2 + $0x160] sm:$0xff]
    %v96 = vld [vmem:[%s2 + $0x168] sm:$0xff]
    %v97 = vld [vmem:[%s2 + $0x170] sm:$0xff]
    %v98 = vld [vmem:[%s2 + $0x178] sm:$0xff]
    %v99 = vld [vmem:[%s2 + $0x180] sm:$0xff]
    %v100 = vld [vmem:[%s2 + $0x188] sm:$0xff]
    %v101 = vld [vmem:[%s2 + $0x190] sm:$0xff]
    %v102 = vld [vmem:[%s2 + $0x198] sm:$0xff]
    %v103 = vld [vmem:[%s2 + $0x1a0] sm:$0xff]
    %v104 = vld [vmem:[%s2 + $0x1a8] sm:$0xff]
    %v105 = vld [vmem:[%s2 + $0x1b0] sm:$0xff]
    %v106 = vld [vmem:[%s2 + $0x1b8] sm:$0xff]
    %v107 = vld [vmem:[%s2 + $0x1c0] sm:$0xff]
    %v108 = vld [vmem:[%s2 + $0x1c8] sm:$0xff]
    %v109 = vld [vmem:[%s2 + $0x1d0] sm:$0xff]
    %v110 = vld [vmem:[%s2 + $0x1d8] sm:$0xff]
    %v111 = vld [vmem:[%s2 + $0x1e0] sm:$0xff]
    %v112 = vld [vmem:[%s2 + $0x1e8] sm:$0xff]
    %v113 = vld [vmem:[%s2 + $0x1f0] sm:$0xff]
    %v114 = vld [vmem:[%s2 + $0x1f8] sm:$0xff]
    %v115 = vld [vmem:[%s2 + $0x200] sm:$0xff]
    %v116 = vld [vmem:[%s2 + $0x208] sm:$0xff]
    %v117 = vld [vmem:[%s2 + $0x210] sm:$0xff]
    %v118 = vld [vmem:[%s2 + $0x218] sm:$0xff]
    %v119 = vld [vmem:[%s2 + $0x220] sm:$0xff]
    %v120 = vld [vmem:[%s2 + $0x228] sm:$0xff]
    %v121 = vld [vmem:[%s2 + $0x230] sm:$0xff]
    %v122 = vld [vmem:[%s2 + $0x238] sm:$0xff]
    %v123 = vld [vmem:[%s2 + $0x240] sm:$0xff]
    %v124 = vld [vmem:[%s2 + $0x248] sm:$0xff]
    %v125 = vld [vmem:[%s2 + $0x250] sm:$0xff]
    %v126 = vld [vmem:[%s2 + $0x258] sm:$0xff]
    %v127 = vld [vmem:[%s2 + $0x260] sm:$0xff]
    %v128 = vld [vmem:[%s2 + $0x268] sm:$0xff]
    %v129 = vld [vmem:[%s2 + $0x270] sm:$0xff]
    %v130 = vld [vmem:[%s2 + $0x278] sm:$0xff]
    %v131 = vld [vmem:[%s2 + $0x280] sm:$0xff]
    %v132 = vld [vmem:[%s2 + $0x288] sm:$0xff]
    %v133 = vld [vmem:[%s2 + $0x290] sm:$0xff]
    %v134 = vld [vmem:[%s2 + $0x298] sm:$0xff]
    %v135 = vld [vmem:[%s2 + $0x2a0] sm:$0xff]
    %v136 = vld [vmem:[%s2 + $0x2a8] sm:$0xff]
    %v137 = vld [vmem:[%s2 + $0x2b0] sm:$0xff]
    %v138 = vld [vmem:[%s2 + $0x2b8] sm:$0xff]
    %v139 = vld [vmem:[%s2 + $0x2c0] sm:$0xff]
    %v140 = vld [vmem:[%s2 + $0x2c8] sm:$0xff]
    %v141 = vld [vmem:[%s2 + $0x2d0] sm:$0xff]
    %v142 = vld [vmem:[%s2 + $0x2d8] sm:$0xff]
    %v143 = vld [vmem:[%s2 + $0x2e0] sm:$0xff]
    %v144 = vld [vmem:[%s2 + $0x2e8] sm:$0xff]
    %v145 = vld [vmem:[%s2 + $0x2f0] sm:$0xff]
    %v146 = vld [vmem:[%s2 + $0x2f8] sm:$0xff]
    %v147 = vld [vmem:[%s2 + $0x300] sm:$0xff]
    %v148 = vld [vmem:[%s2 + $0x308] sm:$0xff]
    %v149 = vld [vmem:[%s2 + $0x310] sm:$0xff]
    %v150 = vld [vmem:[%s2 + $0x318] sm:$0xff]
    %v151 = vld [vmem:[%s2 + $0x320] sm:$0xff]
    %v152 = vld [vmem:[%s2 + $0x328] sm:$0xff]
    %v153 = vld [vmem:[%s2 + $0x330] sm:$0xff]
    %v154 = vld [vmem:[%s2 + $0x338] sm:$0xff]
    %v155 = vld [vmem:[%s2 + $0x340] sm:$0xff]
    %v156 = vld [vmem:[%s2 + $0x348] sm:$0xff]
    %v157 = vld [vmem:[%s2 + $0x350] sm:$0xff]
    %v158 = vld [vmem:[%s2 + $0x358] sm:$0xff]
    %v159 = vld [vmem:[%s2 + $0x360] sm:$0xff]
    %v160 = vld [vmem:[%s2 + $0x368] sm:$0xff]
    %v161 = vld [vmem:[%s2 + $0x370] sm:$0xff]
    %v162 = vld [vmem:[%s2 + $0x378] sm:$0xff]
    %v163 = vld [vmem:[%s2 + $0x380] sm:$0xff]
    %v164 = vld [vmem:[%s2 + $0x388] sm:$0xff]
    %v165 = vld [vmem:[%s2 + $0x390] sm:$0xff]
    %v166 = vld [vmem:[%s2 + $0x398] sm:$0xff]
    %v167 = vld [vmem:[%s2 + $0x3a0] sm:$0xff]
    %v168 = vld [vmem:[%s2 + $0x3a8] sm:$0xff]
    %v169 = vld [vmem:[%s2 + $0x3b0] sm:$0xff]
    %v170 = vld [vmem:[%s2 + $0x3b8] sm:$0xff]
    %v171 = vld [vmem:[%s2 + $0x3c0] sm:$0xff]
    %v172 = vld [vmem:[%s2 + $0x3c8] sm:$0xff]
    %v173 = vld [vmem:[%s2 + $0x3d0] sm:$0xff]
    %v174 = vld [vmem:[%s2 + $0x3d8] sm:$0xff]
    %v175 = vld [vmem:[%s2 + $0x3e0] sm:$0xff]
    %v176 = vld [vmem:[%s2 + $0x3e8] sm:$0xff]
    %v177 = vld [vmem:[%s2 + $0x3f0] sm:$0xff]
    %v178 = vld [vmem:[%s2 + $0x3f8] sm:$0xff]
    %v179 = vld [vmem:[%s2 + $0x400] sm:$0xff]
    %v180 = vld [vmem:[%s2 + $0x408] sm:$0xff]
    %v181 = vld [vmem:[%s2 + $0x410] sm:$0xff]
    %v182 = vld [vmem:[%s2 + $0x418] sm:$0xff]
    %v183 = vld [vmem:[%s2 + $0x420] sm:$0xff]
    %v184 = vld [vmem:[%s2 + $0x428] sm:$0xff]
    %v185 = vld [vmem:[%s2 + $0x430] sm:$0xff]
    %v186 = vld [vmem:[%s2 + $0x438] sm:$0xff]
    %v187 = vld [vmem:[%s2 + $0x440] sm:$0xff]
    %v188 = vld [vmem:[%s2 + $0x448] sm:$0xff]
    %v189 = vld [vmem:[%s2 + $0x450] sm:$0xff]
    %v190 = vld [vmem:[%s2 + $0x458] sm:$0xff]
    %v191 = vld [vmem:[%s2 + $0x460] sm:$0xff]
    %v192 = vld [vmem:[%s2 + $0x468] sm:$0xff]
    %v193 = vld [vmem:[%s2 + $0x470] sm:$0xff]
    %v194 = vld [vmem:[%s2 + $0x478] sm:$0xff]
    %v195 = vld [vmem:[%s2 + $0x480] sm:$0xff]
    %v196 = vld [vmem:[%s2 + $0x488] sm:$0xff]
    %v197 = vld [vmem:[%s2 + $0x490] sm:$0xff]
    %v198 = vld [vmem:[%s2 + $0x498] sm:$0xff]
    %v199 = vld [vmem:[%s2 + $0x4a0] sm:$0xff]
    %v200 = vld [vmem:[%s2 + $0x4a8] sm:$0xff]
    %v201 = vld [vmem:[%s2 + $0x4b0] sm:$0xff]
    %v202 = vld [vmem:[%s2 + $0x4b8] sm:$0xff]
    %v203 = vld [vmem:[%s2 + $0x4c0] sm:$0xff]
    %v204 = vld [vmem:[%s2 + $0x4c8] sm:$0xff]
    %v205 = vld [vmem:[%s2 + $0x4d0] sm:$0xff]
    %v206 = vld [vmem:[%s2 + $0x4d8] sm:$0xff]
    %v207 = vld [vmem:[%s2 + $0x4e0] sm:$0xff]
    %v208 = vld [vmem:[%s2 + $0x4e8] sm:$0xff]
    %v209 = vld [vmem:[%s2 + $0x4f0] sm:$0xff]
    %v210 = vld [vmem:[%s2 + $0x4f8] sm:$0xff]
    %v211 = vld [vmem:[%s2 + $0x500] sm:$0xff]
    %v212 = vld [vmem:[%s2 + $0x508] sm:$0xff]
    %v213 = vld [vmem:[%s2 + $0x510] sm:$0xff]
    %v214 = vld [vmem:[%s2 + $0x518] sm:$0xff]
    %v215 = vld [vmem:[%s2 + $0x520] sm:$0xff]
    %v216 = vld [vmem:[%s2 + $0x528] sm:$0xff]
    %v217 = vld [vmem:[%s2 + $0x530] sm:$0xff]
    %v218 = vld [vmem:[%s2 + $0x538] sm:$0xff]
    %v219 = vld [vmem:[%s2 + $0x540] sm:$0xff]
    %v220 = vld [vmem:[%s2 + $0x548] sm:$0xff]
    %v221 = vld [vmem:[%s2 + $0x550] sm:$0xff]
    %v222 = vld [vmem:[%s2 + $0x558] sm:$0xff]
    %v223 = vld [vmem:[%s2 + $0x560] sm:$0xff]
    %v224 = vld [vmem:[%s2 + $0x568] sm:$0xff]
    %v225 = vld [vmem:[%s2 + $0x570] sm:$0xff]
    %v226 = vld [vmem:[%s2 + $0x578] sm:$0xff]
    %v227 = vld [vmem:[%s2 + $0x580] sm:$0xff]
    %v228 = vld [vmem:[%s2 + $0x588] sm:$0xff]
    %v229 = vld [vmem:[%s2 + $0x590] sm:$0xff]
    %v230 = vld [vmem:[%s2 + $0x598] sm:$0xff]
    %v231 = vld [vmem:[%s2 + $0x5a0] sm:$0xff]
    %v232 = vld [vmem:[%s2 + $0x5a8] sm:$0xff]
    %v233 = vld [vmem:[%s2 + $0x5b0] sm:$0xff]
    %v234 = vld [vmem:[%s2 + $0x5b8] sm:$0xff]
    %v235 = vld [vmem:[%s2 + $0x5c0] sm:$0xff]
    %v236 = vld [vmem:[%s2 + $0x5c8] sm:$0xff]
    %v237 = vld [vmem:[%s2 + $0x5d0] sm:$0xff]
    %v238 = vld [vmem:[%s2 + $0x5d8] sm:$0xff]
    %v239 = vld [vmem:[%s2 + $0x5e0] sm:$0xff]
    %v240 = vld [vmem:[%s2 + $0x5e8] sm:$0xff]
    %v241 = vld [vmem:[%s2 + $0x5f0] sm:$0xff]
    %v242 = vld [vmem:[%s2 + $0x5f8] sm:$0xff]
    %v243 = vld [vmem:[%s2 + $0x600] sm:$0xff]
    %v244 = vld [vmem:[%s2 + $0x608] sm:$0xff]
    %v245 = vld [vmem:[%s2 + $0x610] sm:$0xff]
    %v246 = vld [vmem:[%s2 + $0x618] sm:$0xff]
    %v247 = vld [vmem:[%s2 + $0x620] sm:$0xff]
    %v248 = vld [vmem:[%s2 + $0x628] sm:$0xff]
    %v249 = vld [vmem:[%s2 + $0x630] sm:$0xff]
    %v250 = vld [vmem:[%s2 + $0x638] sm:$0xff]
    %v251 = vld [vmem:[%s2 + $0x640] sm:$0xff]
    %v252 = vld [vmem:[%s2 + $0x648] sm:$0xff]
    %v253 = vld [vmem:[%s2 + $0x650] sm:$0xff]
    %v254 = vld [vmem:[%s2 + $0x658] sm:$0xff]
    %v255 = vld [vmem:[%s2 + $0x660] sm:$0xff]
    %v256 = vld [vmem:[%s2 + $0x668] sm:$0xff]
    %v257 = vld [vmem:[%s2 + $0x670] sm:$0xff]
    %v258 = vld [vmem:[%s2 + $0x678] sm:$0xff]
    %v259 = vld [vmem:[%s2 + $0x680] sm:$0xff]
    %v260 = vld [vmem:[%s2 + $0x688] sm:$0xff]
    %v261 = vld [vmem:[%s2 + $0x690] sm:$0xff]
    %v262 = vld [vmem:[%s2 + $0x698] sm:$0xff]
    %v263 = vld [vmem:[%s2 + $0x6a0] sm:$0xff]
    %v264 = vld [vmem:[%s2 + $0x6a8] sm:$0xff]
    %v265 = vld [vmem:[%s2 + $0x6b0] sm:$0xff]
    %v266 = vld [vmem:[%s2 + $0x6b8] sm:$0xff]
    %v267 = vld [vmem:[%s2 + $0x6c0] sm:$0xff]
    %v268 = vld [vmem:[%s2 + $0x6c8] sm:$0xff]
    %v269 = vld [vmem:[%s2 + $0x6d0] sm:$0xff]
    %v270 = vld [vmem:[%s2 + $0x6d8] sm:$0xff]
    %v271 = vld [vmem:[%s2 + $0x6e0] sm:$0xff]
    %v272 = vld [vmem:[%s2 + $0x6e8] sm:$0xff]
    %v273 = vld [vmem:[%s2 + $0x6f0] sm:$0xff]
    %v274 = vld [vmem:[%s2 + $0x6f8] sm:$0xff]
    %v275 = vld [vmem:[%s2 + $0x700] sm:$0xff]
    %v276 = vld [vmem:[%s2 + $0x708] sm:$0xff]
    %v277 = vld [vmem:[%s2 + $0x710] sm:$0xff]
    %v278 = vld [vmem:[%s2 + $0x718] sm:$0xff]
    %v279 = vld [vmem:[%s2 + $0x720] sm:$0xff]
    %v280 = vld [vmem:[%s2 + $0x728] sm:$0xff]
    %v281 = vld [vmem:[%s2 + $0x730] sm:$0xff]
    %v282 = vld [vmem:[%s2 + $0x738] sm:$0xff]
    %v283 = vld [vmem:[%s2 + $0x740] sm:$0xff]
    %v284 = vld [vmem:[%s2 + $0x748] sm:$0xff]
    %v285 = vld [vmem:[%s2 + $0x750] sm:$0xff]
    %v286 = vld [vmem:[%s2 + $0x758] sm:$0xff]
    %v287 = vld [vmem:[%s2 + $0x760] sm:$0xff]
    %v288 = vld [vmem:[%s2 + $0x768] sm:$0xff]
    %v289 = vld [vmem:[%s2 + $0x770] sm:$0xff]
    %v290 = vld [vmem:[%s2 + $0x778] sm:$0xff]
    %v291 = vld [vmem:[%s2 + $0x780] sm:$0xff]
    %v292 = vld [vmem:[%s2 + $0x788] sm:$0xff]
    %v293 = vld [vmem:[%s2 + $0x790] sm:$0xff]
    %v294 = vld [vmem:[%s2 + $0x798] sm:$0xff]
    %v295 = vld [vmem:[%s2 + $0x7a0] sm:$0xff]
    %v296 = vld [vmem:[%s2 + $0x7a8] sm:$0xff]
    %v297 = vld [vmem:[%s2 + $0x7b0] sm:$0xff]
    %v298 = vld [vmem:[%s2 + $0x7b8] sm:$0xff]
    %v299 = vld [vmem:[%s2 + $0x7c0] sm:$0xff]
    %v300 = vld [vmem:[%s2 + $0x7c8] sm:$0xff]
    %v301 = vld [vmem:[%s2 + $0x7d0] sm:$0xff]
    %v302 = vld [vmem:[%s2 + $0x7d8] sm:$0xff]
    %v303 = vld [vmem:[%s2 + $0x7e0] sm:$0xff]
    %v304 = vld [vmem:[%s2 + $0x7e8] sm:$0xff]
    %v305 = vld [vmem:[%s2 + $0x7f0] sm:$0xff]
    %v306 = vld [vmem:[%s2 + $0x7f8] sm:$0xff]
    %v307 = vld [vmem:[%s2 + $0x800] sm:$0xff]
    %v308 = vld [vmem:[%s2 + $0x808] sm:$0xff]
    %v309 = vld [vmem:[%s2 + $0x810] sm:$0xff]
    %v310 = vld [vmem:[%s2 + $0x818] sm:$0xff]
    %v311 = vld [vmem:[%s2 + $0x820] sm:$0xff]
    %v312 = vld [vmem:[%s2 + $0x828] sm:$0xff]
    %v313 = vld [vmem:[%s2 + $0x830] sm:$0xff]
    %v314 = vld [vmem:[%s2 + $0x838] sm:$0xff]
    %v315 = vld [vmem:[%s2 + $0x840] sm:$0xff]
    %v316 = vld [vmem:[%s2 + $0x848] sm:$0xff]
    %v317 = vld [vmem:[%s2 + $0x850] sm:$0xff]
    %v318 = vld [vmem:[%s2 + $0x858] sm:$0xff]
    %v319 = vld [vmem:[%s2 + $0x860] sm:$0xff]
    %v320 = vld [vmem:[%s2 + $0x868] sm:$0xff]
    %v321 = vld [vmem:[%s2 + $0x870] sm:$0xff]
    %v322 = vld [vmem:[%s2 + $0x878] sm:$0xff]
    %v323 = vld [vmem:[%s2 + $0x880] sm:$0xff]
    %v324 = vld [vmem:[%s2 + $0x888] sm:$0xff]
    %v325 = vld [vmem:[%s2 + $0x890] sm:$0xff]
    %v326 = vld [vmem:[%s2 + $0x898] sm:$0xff]
    %v327 = vld [vmem:[%s2 + $0x8a0] sm:$0xff]
    %v328 = vld [vmem:[%s2 + $0x8a8] sm:$0xff]
    %v329 = vld [vmem:[%s2 + $0x8b0] sm:$0xff]
    %v330 = vld [vmem:[%s2 + $0x8b8] sm:$0xff]
    %v331 = vld [vmem:[%s2 + $0x8c0] sm:$0xff]
    %v332 = vld [vmem:[%s2 + $0x8c8] sm:$0xff]
    %v333 = vld [vmem:[%s2 + $0x8d0] sm:$0xff]
    %v334 = vld [vmem:[%s2 + $0x8d8] sm:$0xff]
    %v335 = vld [vmem:[%s2 + $0x8e0] sm:$0xff]
    %v336 = vld [vmem:[%s2 + $0x8e8] sm:$0xff]
    %v337 = vld [vmem:[%s2 + $0x8f0] sm:$0xff]
    %v338 = vld [vmem:[%s2 + $0x8f8] sm:$0xff]
    %v339 = vld [vmem:[%s3] sm:$0x3]
    %v343 = vcombine.high %v48, %v48
    %v345 = vunpack.c.l.s4 1966171168
    %v346 = vunpack.c.0.s8 %v345
    %v347 = vlaneseq
    %v348 = vshrl.u32 %v347, 7
    %v349 = vsub.s32 %v346, %v348
    %v350 = vrot.slane %v48, %v349
    %v352 = vunpack.c.l.s4 1966171168
    %v353 = vunpack.c.0.s8 %v352
    %v354 = vlaneseq
    %v355 = vshrl.u32 %v354, 7
    %v356 = vsub.s32 %v353, %v355
    %v357 = vrot.slane %v343, %v356
    %v358 = vcombine.high %v350, %v350
    %v359 = vcombine.high %v357, %v357
    %v361 = vunpack.c.l.s4 1966171168
    %v362 = vunpack.c.0.s8 %v361
    %v363 = vlaneseq
    %v364 = vshrl.u32 %v363, 7
    %v365 = vsub.s32 %v362, %v364
    %v366 = vrot.slane %v350, %v365
    %v368 = vunpack.c.l.s4 1966171168
    %v369 = vunpack.c.0.s8 %v368
    %v370 = vlaneseq
    %v371 = vshrl.u32 %v370, 7
    %v372 = vsub.s32 %v369, %v371
    %v373 = vrot.slane %v357, %v372
    %v375 = vunpack.c.l.s4 1966171168
    %v376 = vunpack.c.0.s8 %v375
    %v377 = vlaneseq
    %v378 = vshrl.u32 %v377, 7
    %v379 = vsub.s32 %v376, %v378
    %v380 = vrot.slane %v358, %v379
    %v382 = vunpack.c.l.s4 1966171168
    %v383 = vunpack.c.0.s8 %v382
    %v384 = vlaneseq
    %v385 = vshrl.u32 %v384, 7
    %v386 = vsub.s32 %v383, %v385
    %v387 = vrot.slane %v359, %v386
    %v388 = vcombine.high %v366, %v366
    %v389 = vcombine.high %v373, %v373
    %v390 = vcombine.high %v380, %v380
    %v391 = vcombine.high %v387, %v387
    %v392 = vcombine.high %v49, %v49
    %v394 = vunpack.c.l.s4 1966171168
    %v395 = vunpack.c.0.s8 %v394
    %v396 = vlaneseq
    %v397 = vshrl.u32 %v396, 7
    %v398 = vsub.s32 %v395, %v397
    %v399 = vrot.slane %v49, %v398
    %v401 = vunpack.c.l.s4 1966171168
    %v402 = vunpack.c.0.s8 %v401
    %v403 = vlaneseq
    %v404 = vshrl.u32 %v403, 7
    %v405 = vsub.s32 %v402, %v404
    %v406 = vrot.slane %v392, %v405
    %v407 = vcombine.high %v399, %v399
    %v408 = vcombine.high %v406, %v406
    %v410 = vunpack.c.l.s4 1966171168
    %v411 = vunpack.c.0.s8 %v410
    %v412 = vlaneseq
    %v413 = vshrl.u32 %v412, 7
    %v414 = vsub.s32 %v411, %v413
    %v415 = vrot.slane %v399, %v414
    %v417 = vunpack.c.l.s4 1966171168
    %v418 = vunpack.c.0.s8 %v417
    %v419 = vlaneseq
    %v420 = vshrl.u32 %v419, 7
    %v421 = vsub.s32 %v418, %v420
    %v422 = vrot.slane %v406, %v421
    %v424 = vunpack.c.l.s4 1966171168
    %v425 = vunpack.c.0.s8 %v424
    %v426 = vlaneseq
    %v427 = vshrl.u32 %v426, 7
    %v428 = vsub.s32 %v425, %v427
    %v429 = vrot.slane %v407, %v428
    %v431 = vunpack.c.l.s4 1966171168
    %v432 = vunpack.c.0.s8 %v431
    %v433 = vlaneseq
    %v434 = vshrl.u32 %v433, 7
    %v435 = vsub.s32 %v432, %v434
    %v436 = vrot.slane %v408, %v435
    %v437 = vcombine.high %v415, %v415
    %v438 = vcombine.high %v422, %v422
    %v439 = vcombine.high %v429, %v429
    %v440 = vcombine.high %v436, %v436
    %v442 = vunpack.c.l.s4 1966171168
    %v443 = vunpack.c.0.s8 %v442
    %v444 = vlaneseq
    %v445 = vshrl.u32 %v444, 7
    %v446 = vsub.s32 %v443, %v445
    %v447 = vrot.slane %v50, %v446
    %v448 = vcombine.high %v447, %v447
    %v450 = vunpack.c.l.s4 1966171168
    %v451 = vunpack.c.0.s8 %v450
    %v452 = vlaneseq
    %v453 = vshrl.u32 %v452, 7
    %v454 = vsub.s32 %v451, %v453
    %v455 = vrot.slane %v447, %v454
    %v457 = vunpack.c.l.s4 1966171168
    %v458 = vunpack.c.0.s8 %v457
    %v459 = vlaneseq
    %v460 = vshrl.u32 %v459, 7
    %v461 = vsub.s32 %v458, %v460
    %v462 = vrot.slane %v448, %v461
    %v769 = vunpack.c.l.b16 %v51
    %v770 = vunpack.c.h.b16 %v51
    %v771 = vunpack.c.l.b16 %v52
    %v772 = vunpack.c.h.b16 %v52
    %v773 = vunpack.c.l.b16 %v53
    %v774 = vunpack.c.h.b16 %v53
    %v775 = vunpack.c.l.b16 %v54
    %v776 = vunpack.c.h.b16 %v54
    %v777 = vunpack.c.l.b16 %v55
    %v778 = vunpack.c.h.b16 %v55
    %v779 = vunpack.c.l.b16 %v56
    %v780 = vunpack.c.h.b16 %v56
    %v781 = vunpack.c.l.b16 %v57
    %v782 = vunpack.c.h.b16 %v57
    %v783 = vunpack.c.l.b16 %v58
    %v784 = vunpack.c.h.b16 %v58
    %v785 = vunpack.c.l.b16 %v59
    %v786 = vunpack.c.h.b16 %v59
    %v787 = vunpack.c.l.b16 %v60
    %v788 = vunpack.c.h.b16 %v60
    %v789 = vunpack.c.l.b16 %v61
    %v790 = vunpack.c.h.b16 %v61
    %v791 = vunpack.c.l.b16 %v62
    %v792 = vunpack.c.h.b16 %v62
    %v793 = vunpack.c.l.b16 %v63
    %v794 = vunpack.c.h.b16 %v63
    %v795 = vunpack.c.l.b16 %v64
    %v796 = vunpack.c.h.b16 %v64
    %v797 = vunpack.c.l.b16 %v65
    %v798 = vunpack.c.h.b16 %v65
    %v799 = vunpack.c.l.b16 %v66
    %v800 = vunpack.c.h.b16 %v66
    %v801 = vunpack.c.l.b16 %v67
    %v802 = vunpack.c.h.b16 %v67
    %v803 = vunpack.c.l.b16 %v68
    %v804 = vunpack.c.h.b16 %v68
    %v805 = vunpack.c.l.b16 %v69
    %v806 = vunpack.c.h.b16 %v69
    %v807 = vunpack.c.l.b16 %v70
    %v808 = vunpack.c.h.b16 %v70
    %v809 = vunpack.c.l.b16 %v71
    %v810 = vunpack.c.h.b16 %v71
    %v811 = vunpack.c.l.b16 %v72
    %v812 = vunpack.c.h.b16 %v72
    %v813 = vunpack.c.l.b16 %v73
    %v814 = vunpack.c.h.b16 %v73
    %v815 = vunpack.c.l.b16 %v74
    %v816 = vunpack.c.h.b16 %v74
    %v817 = vunpack.c.l.b16 %v75
    %v818 = vunpack.c.h.b16 %v75
    %v819 = vunpack.c.l.b16 %v76
    %v820 = vunpack.c.h.b16 %v76
    %v821 = vunpack.c.l.b16 %v77
    %v822 = vunpack.c.h.b16 %v77
    %v823 = vunpack.c.l.b16 %v78
    %v824 = vunpack.c.h.b16 %v78
    %v825 = vunpack.c.l.b16 %v79
    %v826 = vunpack.c.h.b16 %v79
    %v827 = vunpack.c.l.b16 %v80
    %v828 = vunpack.c.h.b16 %v80
    %v829 = vunpack.c.l.b16 %v81
    %v830 = vunpack.c.h.b16 %v81
    %v831 = vunpack.c.l.b16 %v82
    %v832 = vunpack.c.h.b16 %v82
    %v833 = vunpack.c.l.b16 %v83
    %v834 = vunpack.c.h.b16 %v83
    %v835 = vunpack.c.l.b16 %v84
    %v836 = vunpack.c.h.b16 %v84
    %v837 = vunpack.c.l.b16 %v85
    %v838 = vunpack.c.h.b16 %v85
    %v839 = vunpack.c.l.b16 %v86
    %v840 = vunpack.c.h.b16 %v86
    %v841 = vunpack.c.l.b16 %v87
    %v842 = vunpack.c.h.b16 %v87
    %v843 = vunpack.c.l.b16 %v88
    %v844 = vunpack.c.h.b16 %v88
    %v845 = vunpack.c.l.b16 %v89
    %v846 = vunpack.c.h.b16 %v89
    %v847 = vunpack.c.l.b16 %v90
    %v848 = vunpack.c.h.b16 %v90
    %v849 = vunpack.c.l.b16 %v91
    %v850 = vunpack.c.h.b16 %v91
    %v851 = vunpack.c.l.b16 %v92
    %v852 = vunpack.c.h.b16 %v92
    %v853 = vunpack.c.l.b16 %v93
    %v854 = vunpack.c.h.b16 %v93
    %v855 = vunpack.c.l.b16 %v94
    %v856 = vunpack.c.h.b16 %v94
    %v857 = vunpack.c.l.b16 %v95
    %v858 = vunpack.c.h.b16 %v95
    %v859 = vunpack.c.l.b16 %v96
    %v860 = vunpack.c.h.b16 %v96
    %v861 = vunpack.c.l.b16 %v97
    %v862 = vunpack.c.h.b16 %v97
    %v863 = vunpack.c.l.b16 %v98
    %v864 = vunpack.c.h.b16 %v98
    %v865 = vunpack.c.l.b16 %v99
    %v866 = vunpack.c.h.b16 %v99
    %v867 = vunpack.c.l.b16 %v100
    %v868 = vunpack.c.h.b16 %v100
    %v869 = vunpack.c.l.b16 %v101
    %v870 = vunpack.c.h.b16 %v101
    %v871 = vunpack.c.l.b16 %v102
    %v872 = vunpack.c.h.b16 %v102
    %v873 = vunpack.c.l.b16 %v103
    %v874 = vunpack.c.h.b16 %v103
    %v875 = vunpack.c.l.b16 %v104
    %v876 = vunpack.c.h.b16 %v104
    %v877 = vunpack.c.l.b16 %v105
    %v878 = vunpack.c.h.b16 %v105
    %v879 = vunpack.c.l.b16 %v106
    %v880 = vunpack.c.h.b16 %v106
    %v881 = vunpack.c.l.b16 %v107
    %v882 = vunpack.c.h.b16 %v107
    %v883 = vunpack.c.l.b16 %v108
    %v884 = vunpack.c.h.b16 %v108
    %v885 = vunpack.c.l.b16 %v109
    %v886 = vunpack.c.h.b16 %v109
    %v887 = vunpack.c.l.b16 %v110
    %v888 = vunpack.c.h.b16 %v110
    %v889 = vunpack.c.l.b16 %v111
    %v890 = vunpack.c.h.b16 %v111
    %v891 = vunpack.c.l.b16 %v112
    %v892 = vunpack.c.h.b16 %v112
    %v893 = vunpack.c.l.b16 %v113
    %v894 = vunpack.c.h.b16 %v113
    %v895 = vunpack.c.l.b16 %v114
    %v896 = vunpack.c.h.b16 %v114
    %v897 = vunpack.c.l.b16 %v115
    %v898 = vunpack.c.h.b16 %v115
    %v899 = vunpack.c.l.b16 %v116
    %v900 = vunpack.c.h.b16 %v116
    %v901 = vunpack.c.l.b16 %v117
    %v902 = vunpack.c.h.b16 %v117
    %v903 = vunpack.c.l.b16 %v118
    %v904 = vunpack.c.h.b16 %v118
    %v905 = vunpack.c.l.b16 %v119
    %v906 = vunpack.c.h.b16 %v119
    %v907 = vunpack.c.l.b16 %v120
    %v908 = vunpack.c.h.b16 %v120
    %v909 = vunpack.c.l.b16 %v121
    %v910 = vunpack.c.h.b16 %v121
    %v911 = vunpack.c.l.b16 %v122
    %v912 = vunpack.c.h.b16 %v122
    %v913 = vunpack.c.l.b16 %v123
    %v914 = vunpack.c.h.b16 %v123
    %v915 = vunpack.c.l.b16 %v124
    %v916 = vunpack.c.h.b16 %v124
    %v917 = vunpack.c.l.b16 %v125
    %v918 = vunpack.c.h.b16 %v125
    %v919 = vunpack.c.l.b16 %v126
    %v920 = vunpack.c.h.b16 %v126
    %v921 = vunpack.c.l.b16 %v127
    %v922 = vunpack.c.h.b16 %v127
    %v923 = vunpack.c.l.b16 %v128
    %v924 = vunpack.c.h.b16 %v128
    %v925 = vunpack.c.l.b16 %v129
    %v926 = vunpack.c.h.b16 %v129
    %v927 = vunpack.c.l.b16 %v130
    %v928 = vunpack.c.h.b16 %v130
    %v929 = vunpack.c.l.b16 %v131
    %v930 = vunpack.c.h.b16 %v131
    %v931 = vunpack.c.l.b16 %v132
    %v932 = vunpack.c.h.b16 %v132
    %v933 = vunpack.c.l.b16 %v133
    %v934 = vunpack.c.h.b16 %v133
    %v935 = vunpack.c.l.b16 %v134
    %v936 = vunpack.c.h.b16 %v134
    %v937 = vunpack.c.l.b16 %v135
    %v938 = vunpack.c.h.b16 %v135
    %v939 = vunpack.c.l.b16 %v136
    %v940 = vunpack.c.h.b16 %v136
    %v941 = vunpack.c.l.b16 %v137
    %v942 = vunpack.c.h.b16 %v137
    %v943 = vunpack.c.l.b16 %v138
    %v944 = vunpack.c.h.b16 %v138
    %v945 = vunpack.c.l.b16 %v139
    %v946 = vunpack.c.h.b16 %v139
    %v947 = vunpack.c.l.b16 %v140
    %v948 = vunpack.c.h.b16 %v140
    %v949 = vunpack.c.l.b16 %v141
    %v950 = vunpack.c.h.b16 %v141
    %v951 = vunpack.c.l.b16 %v142
    %v952 = vunpack.c.h.b16 %v142
    %v953 = vunpack.c.l.b16 %v143
    %v954 = vunpack.c.h.b16 %v143
    %v955 = vunpack.c.l.b16 %v144
    %v956 = vunpack.c.h.b16 %v144
    %v957 = vunpack.c.l.b16 %v145
    %v958 = vunpack.c.h.b16 %v145
    %v959 = vunpack.c.l.b16 %v146
    %v960 = vunpack.c.h.b16 %v146
    %v961 = vunpack.c.l.b16 %v147
    %v962 = vunpack.c.h.b16 %v147
    %v963 = vunpack.c.l.b16 %v148
    %v964 = vunpack.c.h.b16 %v148
    %v965 = vunpack.c.l.b16 %v149
    %v966 = vunpack.c.h.b16 %v149
    %v967 = vunpack.c.l.b16 %v150
    %v968 = vunpack.c.h.b16 %v150
    %v969 = vunpack.c.l.b16 %v151
    %v970 = vunpack.c.h.b16 %v151
    %v971 = vunpack.c.l.b16 %v152
    %v972 = vunpack.c.h.b16 %v152
    %v973 = vunpack.c.l.b16 %v153
    %v974 = vunpack.c.h.b16 %v153
    %v975 = vunpack.c.l.b16 %v154
    %v976 = vunpack.c.h.b16 %v154
    %v977 = vunpack.c.l.b16 %v155
    %v978 = vunpack.c.h.b16 %v155
    %v979 = vunpack.c.l.b16 %v156
    %v980 = vunpack.c.h.b16 %v156
    %v981 = vunpack.c.l.b16 %v157
    %v982 = vunpack.c.h.b16 %v157
    %v983 = vunpack.c.l.b16 %v158
    %v984 = vunpack.c.h.b16 %v158
    %v985 = vunpack.c.l.b16 %v159
    %v986 = vunpack.c.h.b16 %v159
    %v987 = vunpack.c.l.b16 %v160
    %v988 = vunpack.c.h.b16 %v160
    %v989 = vunpack.c.l.b16 %v161
    %v990 = vunpack.c.h.b16 %v161
    %v991 = vunpack.c.l.b16 %v162
    %v992 = vunpack.c.h.b16 %v162
    %v993 = vunpack.c.l.b16 %v163
    %v994 = vunpack.c.h.b16 %v163
    %v995 = vunpack.c.l.b16 %v164
    %v996 = vunpack.c.h.b16 %v164
    %v997 = vunpack.c.l.b16 %v165
    %v998 = vunpack.c.h.b16 %v165
    %v999 = vunpack.c.l.b16 %v166
    %v1000 = vunpack.c.h.b16 %v166
    %v1001 = vunpack.c.l.b16 %v167
    %v1002 = vunpack.c.h.b16 %v167
    %v1003 = vunpack.c.l.b16 %v168
    %v1004 = vunpack.c.h.b16 %v168
    %v1005 = vunpack.c.l.b16 %v169
    %v1006 = vunpack.c.h.b16 %v169
    %v1007 = vunpack.c.l.b16 %v170
    %v1008 = vunpack.c.h.b16 %v170
    %v1009 = vunpack.c.l.b16 %v171
    %v1010 = vunpack.c.h.b16 %v171
    %v1011 = vunpack.c.l.b16 %v172
    %v1012 = vunpack.c.h.b16 %v172
    %v1013 = vunpack.c.l.b16 %v173
    %v1014 = vunpack.c.h.b16 %v173
    %v1015 = vunpack.c.l.b16 %v174
    %v1016 = vunpack.c.h.b16 %v174
    %v1017 = vunpack.c.l.b16 %v175
    %v1018 = vunpack.c.h.b16 %v175
    %v1019 = vunpack.c.l.b16 %v176
    %v1020 = vunpack.c.h.b16 %v176
    %v1021 = vunpack.c.l.b16 %v177
    %v1022 = vunpack.c.h.b16 %v177
    %v1023 = vunpack.c.l.b16 %v178
    %v1024 = vunpack.c.h.b16 %v178
    %v1025 = vunpack.c.l.b16 %v179
    %v1026 = vunpack.c.h.b16 %v179
    %v1027 = vunpack.c.l.b16 %v180
    %v1028 = vunpack.c.h.b16 %v180
    %v1029 = vunpack.c.l.b16 %v181
    %v1030 = vunpack.c.h.b16 %v181
    %v1031 = vunpack.c.l.b16 %v182
    %v1032 = vunpack.c.h.b16 %v182
    %v1033 = vunpack.c.l.b16 %v183
    %v1034 = vunpack.c.h.b16 %v183
    %v1035 = vunpack.c.l.b16 %v184
    %v1036 = vunpack.c.h.b16 %v184
    %v1037 = vunpack.c.l.b16 %v185
    %v1038 = vunpack.c.h.b16 %v185
    %v1039 = vunpack.c.l.b16 %v186
    %v1040 = vunpack.c.h.b16 %v186
    %v1041 = vunpack.c.l.b16 %v187
    %v1042 = vunpack.c.h.b16 %v187
    %v1043 = vunpack.c.l.b16 %v188
    %v1044 = vunpack.c.h.b16 %v188
    %v1045 = vunpack.c.l.b16 %v189
    %v1046 = vunpack.c.h.b16 %v189
    %v1047 = vunpack.c.l.b16 %v190
    %v1048 = vunpack.c.h.b16 %v190
    %v1049 = vunpack.c.l.b16 %v191
    %v1050 = vunpack.c.h.b16 %v191
    %v1051 = vunpack.c.l.b16 %v192
    %v1052 = vunpack.c.h.b16 %v192
    %v1053 = vunpack.c.l.b16 %v193
    %v1054 = vunpack.c.h.b16 %v193
    %v1055 = vunpack.c.l.b16 %v194
    %v1056 = vunpack.c.h.b16 %v194
    %v1057 = vunpack.c.l.b16 %v195
    %v1058 = vunpack.c.h.b16 %v195
    %v1059 = vunpack.c.l.b16 %v196
    %v1060 = vunpack.c.h.b16 %v196
    %v1061 = vunpack.c.l.b16 %v197
    %v1062 = vunpack.c.h.b16 %v197
    %v1063 = vunpack.c.l.b16 %v198
    %v1064 = vunpack.c.h.b16 %v198
    %v1065 = vunpack.c.l.b16 %v199
    %v1066 = vunpack.c.h.b16 %v199
    %v1067 = vunpack.c.l.b16 %v200
    %v1068 = vunpack.c.h.b16 %v200
    %v1069 = vunpack.c.l.b16 %v201
    %v1070 = vunpack.c.h.b16 %v201
    %v1071 = vunpack.c.l.b16 %v202
    %v1072 = vunpack.c.h.b16 %v202
    %v1073 = vunpack.c.l.b16 %v203
    %v1074 = vunpack.c.h.b16 %v203
    %v1075 = vunpack.c.l.b16 %v204
    %v1076 = vunpack.c.h.b16 %v204
    %v1077 = vunpack.c.l.b16 %v205
    %v1078 = vunpack.c.h.b16 %v205
    %v1079 = vunpack.c.l.b16 %v206
    %v1080 = vunpack.c.h.b16 %v206
    %v1081 = vunpack.c.l.b16 %v207
    %v1082 = vunpack.c.h.b16 %v207
    %v1083 = vunpack.c.l.b16 %v208
    %v1084 = vunpack.c.h.b16 %v208
    %v1085 = vunpack.c.l.b16 %v209
    %v1086 = vunpack.c.h.b16 %v209
    %v1087 = vunpack.c.l.b16 %v210
    %v1088 = vunpack.c.h.b16 %v210
    %v1089 = vunpack.c.l.b16 %v211
    %v1090 = vunpack.c.h.b16 %v211
    %v1091 = vunpack.c.l.b16 %v212
    %v1092 = vunpack.c.h.b16 %v212
    %v1093 = vunpack.c.l.b16 %v213
    %v1094 = vunpack.c.h.b16 %v213
    %v1095 = vunpack.c.l.b16 %v214
    %v1096 = vunpack.c.h.b16 %v214
    %v1097 = vunpack.c.l.b16 %v215
    %v1098 = vunpack.c.h.b16 %v215
    %v1099 = vunpack.c.l.b16 %v216
    %v1100 = vunpack.c.h.b16 %v216
    %v1101 = vunpack.c.l.b16 %v217
    %v1102 = vunpack.c.h.b16 %v217
    %v1103 = vunpack.c.l.b16 %v218
    %v1104 = vunpack.c.h.b16 %v218
    %v1105 = vunpack.c.l.b16 %v219
    %v1106 = vunpack.c.h.b16 %v219
    %v1107 = vunpack.c.l.b16 %v220
    %v1108 = vunpack.c.h.b16 %v220
    %v1109 = vunpack.c.l.b16 %v221
    %v1110 = vunpack.c.h.b16 %v221
    %v1111 = vunpack.c.l.b16 %v222
    %v1112 = vunpack.c.h.b16 %v222
    %v1113 = vunpack.c.l.b16 %v223
    %v1114 = vunpack.c.h.b16 %v223
    %v1115 = vunpack.c.l.b16 %v224
    %v1116 = vunpack.c.h.b16 %v224
    %v1117 = vunpack.c.l.b16 %v225
    %v1118 = vunpack.c.h.b16 %v225
    %v1119 = vunpack.c.l.b16 %v226
    %v1120 = vunpack.c.h.b16 %v226
    %v1121 = vunpack.c.l.b16 %v227
    %v1122 = vunpack.c.h.b16 %v227
    %v1123 = vunpack.c.l.b16 %v228
    %v1124 = vunpack.c.h.b16 %v228
    %v1125 = vunpack.c.l.b16 %v229
    %v1126 = vunpack.c.h.b16 %v229
    %v1127 = vunpack.c.l.b16 %v230
    %v1128 = vunpack.c.h.b16 %v230
    %v1129 = vunpack.c.l.b16 %v231
    %v1130 = vunpack.c.h.b16 %v231
    %v1131 = vunpack.c.l.b16 %v232
    %v1132 = vunpack.c.h.b16 %v232
    %v1133 = vunpack.c.l.b16 %v233
    %v1134 = vunpack.c.h.b16 %v233
    %v1135 = vunpack.c.l.b16 %v234
    %v1136 = vunpack.c.h.b16 %v234
    %v1137 = vunpack.c.l.b16 %v235
    %v1138 = vunpack.c.h.b16 %v235
    %v1139 = vunpack.c.l.b16 %v236
    %v1140 = vunpack.c.h.b16 %v236
    %v1141 = vunpack.c.l.b16 %v237
    %v1142 = vunpack.c.h.b16 %v237
    %v1143 = vunpack.c.l.b16 %v238
    %v1144 = vunpack.c.h.b16 %v238
    %v1145 = vunpack.c.l.b16 %v239
    %v1146 = vunpack.c.h.b16 %v239
    %v1147 = vunpack.c.l.b16 %v240
    %v1148 = vunpack.c.h.b16 %v240
    %v1149 = vunpack.c.l.b16 %v241
    %v1150 = vunpack.c.h.b16 %v241
    %v1151 = vunpack.c.l.b16 %v242
    %v1152 = vunpack.c.h.b16 %v242
    %v1153 = vunpack.c.l.b16 %v243
    %v1154 = vunpack.c.h.b16 %v243
    %v1155 = vunpack.c.l.b16 %v244
    %v1156 = vunpack.c.h.b16 %v244
    %v1157 = vunpack.c.l.b16 %v245
    %v1158 = vunpack.c.h.b16 %v245
    %v1159 = vunpack.c.l.b16 %v246
    %v1160 = vunpack.c.h.b16 %v246
    %v1161 = vunpack.c.l.b16 %v247
    %v1162 = vunpack.c.h.b16 %v247
    %v1163 = vunpack.c.l.b16 %v248
    %v1164 = vunpack.c.h.b16 %v248
    %v1165 = vunpack.c.l.b16 %v249
    %v1166 = vunpack.c.h.b16 %v249
    %v1167 = vunpack.c.l.b16 %v250
    %v1168 = vunpack.c.h.b16 %v250
    %v1169 = vunpack.c.l.b16 %v251
    %v1170 = vunpack.c.h.b16 %v251
    %v1171 = vunpack.c.l.b16 %v252
    %v1172 = vunpack.c.h.b16 %v252
    %v1173 = vunpack.c.l.b16 %v253
    %v1174 = vunpack.c.h.b16 %v253
    %v1175 = vunpack.c.l.b16 %v254
    %v1176 = vunpack.c.h.b16 %v254
    %v1177 = vunpack.c.l.b16 %v255
    %v1178 = vunpack.c.h.b16 %v255
    %v1179 = vunpack.c.l.b16 %v256
    %v1180 = vunpack.c.h.b16 %v256
    %v1181 = vunpack.c.l.b16 %v257
    %v1182 = vunpack.c.h.b16 %v257
    %v1183 = vunpack.c.l.b16 %v258
    %v1184 = vunpack.c.h.b16 %v258
    %v1185 = vunpack.c.l.b16 %v259
    %v1186 = vunpack.c.h.b16 %v259
    %v1187 = vunpack.c.l.b16 %v260
    %v1188 = vunpack.c.h.b16 %v260
    %v1189 = vunpack.c.l.b16 %v261
    %v1190 = vunpack.c.h.b16 %v261
    %v1191 = vunpack.c.l.b16 %v262
    %v1192 = vunpack.c.h.b16 %v262
    %v1193 = vunpack.c.l.b16 %v263
    %v1194 = vunpack.c.h.b16 %v263
    %v1195 = vunpack.c.l.b16 %v264
    %v1196 = vunpack.c.h.b16 %v264
    %v1197 = vunpack.c.l.b16 %v265
    %v1198 = vunpack.c.h.b16 %v265
    %v1199 = vunpack.c.l.b16 %v266
    %v1200 = vunpack.c.h.b16 %v266
    %v1201 = vunpack.c.l.b16 %v267
    %v1202 = vunpack.c.h.b16 %v267
    %v1203 = vunpack.c.l.b16 %v268
    %v1204 = vunpack.c.h.b16 %v268
    %v1205 = vunpack.c.l.b16 %v269
    %v1206 = vunpack.c.h.b16 %v269
    %v1207 = vunpack.c.l.b16 %v270
    %v1208 = vunpack.c.h.b16 %v270
    %v1209 = vunpack.c.l.b16 %v271
    %v1210 = vunpack.c.h.b16 %v271
    %v1211 = vunpack.c.l.b16 %v272
    %v1212 = vunpack.c.h.b16 %v272
    %v1213 = vunpack.c.l.b16 %v273
    %v1214 = vunpack.c.h.b16 %v273
    %v1215 = vunpack.c.l.b16 %v274
    %v1216 = vunpack.c.h.b16 %v274
    %v1217 = vunpack.c.l.b16 %v275
    %v1218 = vunpack.c.h.b16 %v275
    %v1219 = vunpack.c.l.b16 %v276
    %v1220 = vunpack.c.h.b16 %v276
    %v1221 = vunpack.c.l.b16 %v277
    %v1222 = vunpack.c.h.b16 %v277
    %v1223 = vunpack.c.l.b16 %v278
    %v1224 = vunpack.c.h.b16 %v278
    %v1225 = vunpack.c.l.b16 %v279
    %v1226 = vunpack.c.h.b16 %v279
    %v1227 = vunpack.c.l.b16 %v280
    %v1228 = vunpack.c.h.b16 %v280
    %v1229 = vunpack.c.l.b16 %v281
    %v1230 = vunpack.c.h.b16 %v281
    %v1231 = vunpack.c.l.b16 %v282
    %v1232 = vunpack.c.h.b16 %v282
    %v1233 = vunpack.c.l.b16 %v283
    %v1234 = vunpack.c.h.b16 %v283
    %v1235 = vunpack.c.l.b16 %v284
    %v1236 = vunpack.c.h.b16 %v284
    %v1237 = vunpack.c.l.b16 %v285
    %v1238 = vunpack.c.h.b16 %v285
    %v1239 = vunpack.c.l.b16 %v286
    %v1240 = vunpack.c.h.b16 %v286
    %v1241 = vunpack.c.l.b16 %v287
    %v1242 = vunpack.c.h.b16 %v287
    %v1243 = vunpack.c.l.b16 %v288
    %v1244 = vunpack.c.h.b16 %v288
    %v1245 = vunpack.c.l.b16 %v289
    %v1246 = vunpack.c.h.b16 %v289
    %v1247 = vunpack.c.l.b16 %v290
    %v1248 = vunpack.c.h.b16 %v290
    %v1249 = vunpack.c.l.b16 %v291
    %v1250 = vunpack.c.h.b16 %v291
    %v1251 = vunpack.c.l.b16 %v292
    %v1252 = vunpack.c.h.b16 %v292
    %v1253 = vunpack.c.l.b16 %v293
    %v1254 = vunpack.c.h.b16 %v293
    %v1255 = vunpack.c.l.b16 %v294
    %v1256 = vunpack.c.h.b16 %v294
    %v1257 = vunpack.c.l.b16 %v295
    %v1258 = vunpack.c.h.b16 %v295
    %v1259 = vunpack.c.l.b16 %v296
    %v1260 = vunpack.c.h.b16 %v296
    %v1261 = vunpack.c.l.b16 %v297
    %v1262 = vunpack.c.h.b16 %v297
    %v1263 = vunpack.c.l.b16 %v298
    %v1264 = vunpack.c.h.b16 %v298
    %v1265 = vunpack.c.l.b16 %v299
    %v1266 = vunpack.c.h.b16 %v299
    %v1267 = vunpack.c.l.b16 %v300
    %v1268 = vunpack.c.h.b16 %v300
    %v1269 = vunpack.c.l.b16 %v301
    %v1270 = vunpack.c.h.b16 %v301
    %v1271 = vunpack.c.l.b16 %v302
    %v1272 = vunpack.c.h.b16 %v302
    %v1273 = vunpack.c.l.b16 %v303
    %v1274 = vunpack.c.h.b16 %v303
    %v1275 = vunpack.c.l.b16 %v304
    %v1276 = vunpack.c.h.b16 %v304
    %v1277 = vunpack.c.l.b16 %v305
    %v1278 = vunpack.c.h.b16 %v305
    %v1279 = vunpack.c.l.b16 %v306
    %v1280 = vunpack.c.h.b16 %v306
    %v1281 = vunpack.c.l.b16 %v307
    %v1282 = vunpack.c.h.b16 %v307
    %v1283 = vunpack.c.l.b16 %v308
    %v1284 = vunpack.c.h.b16 %v308
    %v1285 = vunpack.c.l.b16 %v309
    %v1286 = vunpack.c.h.b16 %v309
    %v1287 = vunpack.c.l.b16 %v310
    %v1288 = vunpack.c.h.b16 %v310
    %v1289 = vunpack.c.l.b16 %v311
    %v1290 = vunpack.c.h.b16 %v311
    %v1291 = vunpack.c.l.b16 %v312
    %v1292 = vunpack.c.h.b16 %v312
    %v1293 = vunpack.c.l.b16 %v313
    %v1294 = vunpack.c.h.b16 %v313
    %v1295 = vunpack.c.l.b16 %v314
    %v1296 = vunpack.c.h.b16 %v314
    %v1297 = vunpack.c.l.b16 %v315
    %v1298 = vunpack.c.h.b16 %v315
    %v1299 = vunpack.c.l.b16 %v316
    %v1300 = vunpack.c.h.b16 %v316
    %v1301 = vunpack.c.l.b16 %v317
    %v1302 = vunpack.c.h.b16 %v317
    %v1303 = vunpack.c.l.b16 %v318
    %v1304 = vunpack.c.h.b16 %v318
    %v1305 = vunpack.c.l.b16 %v319
    %v1306 = vunpack.c.h.b16 %v319
    %v1307 = vunpack.c.l.b16 %v320
    %v1308 = vunpack.c.h.b16 %v320
    %v1309 = vunpack.c.l.b16 %v321
    %v1310 = vunpack.c.h.b16 %v321
    %v1311 = vunpack.c.l.b16 %v322
    %v1312 = vunpack.c.h.b16 %v322
    %v1313 = vunpack.c.l.b16 %v323
    %v1314 = vunpack.c.h.b16 %v323
    %v1315 = vunpack.c.l.b16 %v324
    %v1316 = vunpack.c.h.b16 %v324
    %v1317 = vunpack.c.l.b16 %v325
    %v1318 = vunpack.c.h.b16 %v325
    %v1319 = vunpack.c.l.b16 %v326
    %v1320 = vunpack.c.h.b16 %v326
    %v1321 = vunpack.c.l.b16 %v327
    %v1322 = vunpack.c.h.b16 %v327
    %v1323 = vunpack.c.l.b16 %v328
    %v1324 = vunpack.c.h.b16 %v328
    %v1325 = vunpack.c.l.b16 %v329
    %v1326 = vunpack.c.h.b16 %v329
    %v1327 = vunpack.c.l.b16 %v330
    %v1328 = vunpack.c.h.b16 %v330
    %v1329 = vunpack.c.l.b16 %v331
    %v1330 = vunpack.c.h.b16 %v331
    %v1331 = vunpack.c.l.b16 %v332
    %v1332 = vunpack.c.h.b16 %v332
    %v1333 = vunpack.c.l.b16 %v333
    %v1334 = vunpack.c.h.b16 %v333
    %v1335 = vunpack.c.l.b16 %v334
    %v1336 = vunpack.c.h.b16 %v334
    %v1337 = vunpack.c.l.b16 %v335
    %v1338 = vunpack.c.h.b16 %v335
    %v1339 = vunpack.c.l.b16 %v336
    %v1340 = vunpack.c.h.b16 %v336
    %v1341 = vunpack.c.l.b16 %v337
    %v1342 = vunpack.c.h.b16 %v337
    %v1343 = vunpack.c.l.b16 %v338
    %v1344 = vunpack.c.h.b16 %v338
    %v1345 = vpack.c.b16 %v771, %v769
    %v1346 = vpack.c.b16 %v772, %v770
    %v1347 = vpack.c.b16 %v775, %v773
    %v1348 = vpack.c.b16 %v776, %v774
    %v1349 = vpack.c.b16 %v779, %v777
    %v1350 = vpack.c.b16 %v780, %v778
    %v1351 = vpack.c.b16 %v783, %v781
    %v1352 = vpack.c.b16 %v784, %v782
    %v1353 = vpack.c.b16 %v787, %v785
    %v1354 = vpack.c.b16 %v788, %v786
    %v1355 = vpack.c.b16 %v791, %v789
    %v1356 = vpack.c.b16 %v792, %v790
    %v1357 = vpack.c.b16 %v795, %v793
    %v1358 = vpack.c.b16 %v796, %v794
    %v1359 = vpack.c.b16 %v799, %v797
    %v1360 = vpack.c.b16 %v800, %v798
    %v1361 = vpack.c.b16 %v803, %v801
    %v1362 = vpack.c.b16 %v804, %v802
    %v1363 = vpack.c.b16 %v807, %v805
    %v1364 = vpack.c.b16 %v808, %v806
    %v1365 = vpack.c.b16 %v811, %v809
    %v1366 = vpack.c.b16 %v812, %v810
    %v1367 = vpack.c.b16 %v815, %v813
    %v1368 = vpack.c.b16 %v816, %v814
    %v1369 = vpack.c.b16 %v819, %v817
    %v1370 = vpack.c.b16 %v820, %v818
    %v1371 = vpack.c.b16 %v823, %v821
    %v1372 = vpack.c.b16 %v824, %v822
    %v1373 = vpack.c.b16 %v827, %v825
    %v1374 = vpack.c.b16 %v828, %v826
    %v1375 = vpack.c.b16 %v831, %v829
    %v1376 = vpack.c.b16 %v832, %v830
    %v1377 = vpack.c.b16 %v835, %v833
    %v1378 = vpack.c.b16 %v836, %v834
    %v1379 = vpack.c.b16 %v839, %v837
    %v1380 = vpack.c.b16 %v840, %v838
    %v1381 = vpack.c.b16 %v843, %v841
    %v1382 = vpack.c.b16 %v844, %v842
    %v1383 = vpack.c.b16 %v847, %v845
    %v1384 = vpack.c.b16 %v848, %v846
    %v1385 = vpack.c.b16 %v851, %v849
    %v1386 = vpack.c.b16 %v852, %v850
    %v1387 = vpack.c.b16 %v855, %v853
    %v1388 = vpack.c.b16 %v856, %v854
    %v1389 = vpack.c.b16 %v859, %v857
    %v1390 = vpack.c.b16 %v860, %v858
    %v1391 = vpack.c.b16 %v863, %v861
    %v1392 = vpack.c.b16 %v864, %v862
    %v1393 = vpack.c.b16 %v867, %v865
    %v1394 = vpack.c.b16 %v868, %v866
    %v1395 = vpack.c.b16 %v871, %v869
    %v1396 = vpack.c.b16 %v872, %v870
    %v1397 = vpack.c.b16 %v875, %v873
    %v1398 = vpack.c.b16 %v876, %v874
    %v1399 = vpack.c.b16 %v879, %v877
    %v1400 = vpack.c.b16 %v880, %v878
    %v1401 = vpack.c.b16 %v883, %v881
    %v1402 = vpack.c.b16 %v884, %v882
    %v1403 = vpack.c.b16 %v887, %v885
    %v1404 = vpack.c.b16 %v888, %v886
    %v1405 = vpack.c.b16 %v891, %v889
    %v1406 = vpack.c.b16 %v892, %v890
    %v1407 = vpack.c.b16 %v895, %v893
    %v1408 = vpack.c.b16 %v896, %v894
    %v1409 = vpack.c.b16 %v899, %v897
    %v1410 = vpack.c.b16 %v900, %v898
    %v1411 = vpack.c.b16 %v903, %v901
    %v1412 = vpack.c.b16 %v904, %v902
    %v1413 = vpack.c.b16 %v907, %v905
    %v1414 = vpack.c.b16 %v908, %v906
    %v1415 = vpack.c.b16 %v911, %v909
    %v1416 = vpack.c.b16 %v912, %v910
    %v1417 = vpack.c.b16 %v915, %v913
    %v1418 = vpack.c.b16 %v916, %v914
    %v1419 = vpack.c.b16 %v919, %v917
    %v1420 = vpack.c.b16 %v920, %v918
    %v1421 = vpack.c.b16 %v923, %v921
    %v1422 = vpack.c.b16 %v924, %v922
    %v1423 = vpack.c.b16 %v927, %v925
    %v1424 = vpack.c.b16 %v928, %v926
    %v1425 = vpack.c.b16 %v931, %v929
    %v1426 = vpack.c.b16 %v932, %v930
    %v1427 = vpack.c.b16 %v935, %v933
    %v1428 = vpack.c.b16 %v936, %v934
    %v1429 = vpack.c.b16 %v939, %v937
    %v1430 = vpack.c.b16 %v940, %v938
    %v1431 = vpack.c.b16 %v943, %v941
    %v1432 = vpack.c.b16 %v944, %v942
    %v1433 = vpack.c.b16 %v947, %v945
    %v1434 = vpack.c.b16 %v948, %v946
    %v1435 = vpack.c.b16 %v951, %v949
    %v1436 = vpack.c.b16 %v952, %v950
    %v1437 = vpack.c.b16 %v955, %v953
    %v1438 = vpack.c.b16 %v956, %v954
    %v1439 = vpack.c.b16 %v959, %v957
    %v1440 = vpack.c.b16 %v960, %v958
    %v1441 = vpack.c.b16 %v963, %v961
    %v1442 = vpack.c.b16 %v964, %v962
    %v1443 = vpack.c.b16 %v967, %v965
    %v1444 = vpack.c.b16 %v968, %v966
    %v1445 = vpack.c.b16 %v971, %v969
    %v1446 = vpack.c.b16 %v972, %v970
    %v1447 = vpack.c.b16 %v975, %v973
    %v1448 = vpack.c.b16 %v976, %v974
    %v1449 = vpack.c.b16 %v979, %v977
    %v1450 = vpack.c.b16 %v980, %v978
    %v1451 = vpack.c.b16 %v983, %v981
    %v1452 = vpack.c.b16 %v984, %v982
    %v1453 = vpack.c.b16 %v987, %v985
    %v1454 = vpack.c.b16 %v988, %v986
    %v1455 = vpack.c.b16 %v991, %v989
    %v1456 = vpack.c.b16 %v992, %v990
    %v1457 = vpack.c.b16 %v995, %v993
    %v1458 = vpack.c.b16 %v996, %v994
    %v1459 = vpack.c.b16 %v999, %v997
    %v1460 = vpack.c.b16 %v1000, %v998
    %v1461 = vpack.c.b16 %v1003, %v1001
    %v1462 = vpack.c.b16 %v1004, %v1002
    %v1463 = vpack.c.b16 %v1007, %v1005
    %v1464 = vpack.c.b16 %v1008, %v1006
    %v1465 = vpack.c.b16 %v1011, %v1009
    %v1466 = vpack.c.b16 %v1012, %v1010
    %v1467 = vpack.c.b16 %v1015, %v1013
    %v1468 = vpack.c.b16 %v1016, %v1014
    %v1469 = vpack.c.b16 %v1019, %v1017
    %v1470 = vpack.c.b16 %v1020, %v1018
    %v1471 = vpack.c.b16 %v1023, %v1021
    %v1472 = vpack.c.b16 %v1024, %v1022
    %v1473 = vpack.c.b16 %v1027, %v1025
    %v1474 = vpack.c.b16 %v1028, %v1026
    %v1475 = vpack.c.b16 %v1031, %v1029
    %v1476 = vpack.c.b16 %v1032, %v1030
    %v1477 = vpack.c.b16 %v1035, %v1033
    %v1478 = vpack.c.b16 %v1036, %v1034
    %v1479 = vpack.c.b16 %v1039, %v1037
    %v1480 = vpack.c.b16 %v1040, %v1038
    %v1481 = vpack.c.b16 %v1043, %v1041
    %v1482 = vpack.c.b16 %v1044, %v1042
    %v1483 = vpack.c.b16 %v1047, %v1045
    %v1484 = vpack.c.b16 %v1048, %v1046
    %v1485 = vpack.c.b16 %v1051, %v1049
    %v1486 = vpack.c.b16 %v1052, %v1050
    %v1487 = vpack.c.b16 %v1055, %v1053
    %v1488 = vpack.c.b16 %v1056, %v1054
    %v1489 = vpack.c.b16 %v1059, %v1057
    %v1490 = vpack.c.b16 %v1060, %v1058
    %v1491 = vpack.c.b16 %v1063, %v1061
    %v1492 = vpack.c.b16 %v1064, %v1062
    %v1493 = vpack.c.b16 %v1067, %v1065
    %v1494 = vpack.c.b16 %v1068, %v1066
    %v1495 = vpack.c.b16 %v1071, %v1069
    %v1496 = vpack.c.b16 %v1072, %v1070
    %v1497 = vpack.c.b16 %v1075, %v1073
    %v1498 = vpack.c.b16 %v1076, %v1074
    %v1499 = vpack.c.b16 %v1079, %v1077
    %v1500 = vpack.c.b16 %v1080, %v1078
    %v1501 = vpack.c.b16 %v1083, %v1081
    %v1502 = vpack.c.b16 %v1084, %v1082
    %v1503 = vpack.c.b16 %v1087, %v1085
    %v1504 = vpack.c.b16 %v1088, %v1086
    %v1505 = vpack.c.b16 %v1091, %v1089
    %v1506 = vpack.c.b16 %v1092, %v1090
    %v1507 = vpack.c.b16 %v1095, %v1093
    %v1508 = vpack.c.b16 %v1096, %v1094
    %v1509 = vpack.c.b16 %v1099, %v1097
    %v1510 = vpack.c.b16 %v1100, %v1098
    %v1511 = vpack.c.b16 %v1103, %v1101
    %v1512 = vpack.c.b16 %v1104, %v1102
    %v1513 = vpack.c.b16 %v1107, %v1105
    %v1514 = vpack.c.b16 %v1108, %v1106
    %v1515 = vpack.c.b16 %v1111, %v1109
    %v1516 = vpack.c.b16 %v1112, %v1110
    %v1517 = vpack.c.b16 %v1115, %v1113
    %v1518 = vpack.c.b16 %v1116, %v1114
    %v1519 = vpack.c.b16 %v1119, %v1117
    %v1520 = vpack.c.b16 %v1120, %v1118
    %v1521 = vpack.c.b16 %v1123, %v1121
    %v1522 = vpack.c.b16 %v1124, %v1122
    %v1523 = vpack.c.b16 %v1127, %v1125
    %v1524 = vpack.c.b16 %v1128, %v1126
    %v1525 = vpack.c.b16 %v1131, %v1129
    %v1526 = vpack.c.b16 %v1132, %v1130
    %v1527 = vpack.c.b16 %v1135, %v1133
    %v1528 = vpack.c.b16 %v1136, %v1134
    %v1529 = vpack.c.b16 %v1139, %v1137
    %v1530 = vpack.c.b16 %v1140, %v1138
    %v1531 = vpack.c.b16 %v1143, %v1141
    %v1532 = vpack.c.b16 %v1144, %v1142
    %v1533 = vpack.c.b16 %v1147, %v1145
    %v1534 = vpack.c.b16 %v1148, %v1146
    %v1535 = vpack.c.b16 %v1151, %v1149
    %v1536 = vpack.c.b16 %v1152, %v1150
    %v1537 = vpack.c.b16 %v1155, %v1153
    %v1538 = vpack.c.b16 %v1156, %v1154
    %v1539 = vpack.c.b16 %v1159, %v1157
    %v1540 = vpack.c.b16 %v1160, %v1158
    %v1541 = vpack.c.b16 %v1163, %v1161
    %v1542 = vpack.c.b16 %v1164, %v1162
    %v1543 = vpack.c.b16 %v1167, %v1165
    %v1544 = vpack.c.b16 %v1168, %v1166
    %v1545 = vpack.c.b16 %v1171, %v1169
    %v1546 = vpack.c.b16 %v1172, %v1170
    %v1547 = vpack.c.b16 %v1175, %v1173
    %v1548 = vpack.c.b16 %v1176, %v1174
    %v1549 = vpack.c.b16 %v1179, %v1177
    %v1550 = vpack.c.b16 %v1180, %v1178
    %v1551 = vpack.c.b16 %v1183, %v1181
    %v1552 = vpack.c.b16 %v1184, %v1182
    %v1553 = vpack.c.b16 %v1187, %v1185
    %v1554 = vpack.c.b16 %v1188, %v1186
    %v1555 = vpack.c.b16 %v1191, %v1189
    %v1556 = vpack.c.b16 %v1192, %v1190
    %v1557 = vpack.c.b16 %v1195, %v1193
    %v1558 = vpack.c.b16 %v1196, %v1194
    %v1559 = vpack.c.b16 %v1199, %v1197
    %v1560 = vpack.c.b16 %v1200, %v1198
    %v1561 = vpack.c.b16 %v1203, %v1201
    %v1562 = vpack.c.b16 %v1204, %v1202
    %v1563 = vpack.c.b16 %v1207, %v1205
    %v1564 = vpack.c.b16 %v1208, %v1206
    %v1565 = vpack.c.b16 %v1211, %v1209
    %v1566 = vpack.c.b16 %v1212, %v1210
    %v1567 = vpack.c.b16 %v1215, %v1213
    %v1568 = vpack.c.b16 %v1216, %v1214
    %v1569 = vpack.c.b16 %v1219, %v1217
    %v1570 = vpack.c.b16 %v1220, %v1218
    %v1571 = vpack.c.b16 %v1223, %v1221
    %v1572 = vpack.c.b16 %v1224, %v1222
    %v1573 = vpack.c.b16 %v1227, %v1225
    %v1574 = vpack.c.b16 %v1228, %v1226
    %v1575 = vpack.c.b16 %v1231, %v1229
    %v1576 = vpack.c.b16 %v1232, %v1230
    %v1577 = vpack.c.b16 %v1235, %v1233
    %v1578 = vpack.c.b16 %v1236, %v1234
    %v1579 = vpack.c.b16 %v1239, %v1237
    %v1580 = vpack.c.b16 %v1240, %v1238
    %v1581 = vpack.c.b16 %v1243, %v1241
    %v1582 = vpack.c.b16 %v1244, %v1242
    %v1583 = vpack.c.b16 %v1247, %v1245
    %v1584 = vpack.c.b16 %v1248, %v1246
    %v1585 = vpack.c.b16 %v1251, %v1249
    %v1586 = vpack.c.b16 %v1252, %v1250
    %v1587 = vpack.c.b16 %v1255, %v1253
    %v1588 = vpack.c.b16 %v1256, %v1254
    %v1589 = vpack.c.b16 %v1259, %v1257
    %v1590 = vpack.c.b16 %v1260, %v1258
    %v1591 = vpack.c.b16 %v1263, %v1261
    %v1592 = vpack.c.b16 %v1264, %v1262
    %v1593 = vpack.c.b16 %v1267, %v1265
    %v1594 = vpack.c.b16 %v1268, %v1266
    %v1595 = vpack.c.b16 %v1271, %v1269
    %v1596 = vpack.c.b16 %v1272, %v1270
    %v1597 = vpack.c.b16 %v1275, %v1273
    %v1598 = vpack.c.b16 %v1276, %v1274
    %v1599 = vpack.c.b16 %v1279, %v1277
    %v1600 = vpack.c.b16 %v1280, %v1278
    %v1601 = vpack.c.b16 %v1283, %v1281
    %v1602 = vpack.c.b16 %v1284, %v1282
    %v1603 = vpack.c.b16 %v1287, %v1285
    %v1604 = vpack.c.b16 %v1288, %v1286
    %v1605 = vpack.c.b16 %v1291, %v1289
    %v1606 = vpack.c.b16 %v1292, %v1290
    %v1607 = vpack.c.b16 %v1295, %v1293
    %v1608 = vpack.c.b16 %v1296, %v1294
    %v1609 = vpack.c.b16 %v1299, %v1297
    %v1610 = vpack.c.b16 %v1300, %v1298
    %v1611 = vpack.c.b16 %v1303, %v1301
    %v1612 = vpack.c.b16 %v1304, %v1302
    %v1613 = vpack.c.b16 %v1307, %v1305
    %v1614 = vpack.c.b16 %v1308, %v1306
    %v1615 = vpack.c.b16 %v1311, %v1309
    %v1616 = vpack.c.b16 %v1312, %v1310
    %v1617 = vpack.c.b16 %v1315, %v1313
    %v1618 = vpack.c.b16 %v1316, %v1314
    %v1619 = vpack.c.b16 %v1319, %v1317
    %v1620 = vpack.c.b16 %v1320, %v1318
    %v1621 = vpack.c.b16 %v1323, %v1321
    %v1622 = vpack.c.b16 %v1324, %v1322
    %v1623 = vpack.c.b16 %v1327, %v1325
    %v1624 = vpack.c.b16 %v1328, %v1326
    %v1625 = vpack.c.b16 %v1331, %v1329
    %v1626 = vpack.c.b16 %v1332, %v1330
    %v1627 = vpack.c.b16 %v1335, %v1333
    %v1628 = vpack.c.b16 %v1336, %v1334
    %v1629 = vpack.c.b16 %v1339, %v1337
    %v1630 = vpack.c.b16 %v1340, %v1338
    %v1631 = vpack.c.b16 %v1343, %v1341
    %v1632 = vpack.c.b16 %v1344, %v1342
    %v1922 = vlaneseq
    %v1923 = vshrl.u32 %v1922, 7
    %v1924 = vsub.s32 0, %v1923
    %v1925 = vrot.slane %v339, %v1924
    %v1926 = vlaneseq
    %v1927 = vshrl.u32 %v1926, 7
    %v1928 = vsub.s32 1, %v1927
    %v1929 = vrot.slane %v339, %v1928
    %1932 = vmatprep.subr.bf16.mxu0 %v1346
    %1933 = vmatpush1.bf16.msra.mxu0 %v1345
    %1934 = vmatprep.subr.bf16.mxu0 %v1348
    %1935 = vmatpush1.bf16.msra.mxu0 %v1347
    %1936 = vmatprep.subr.bf16.mxu0 %v1350
    %1937 = vmatpush1.bf16.msra.mxu0 %v1349
    %1938 = vmatprep.subr.bf16.mxu0 %v1352
    %1939 = vmatpush1.bf16.msra.mxu0 %v1351
    %1940 = vmatprep.subr.bf16.mxu0 %v1354
    %1941 = vmatpush1.bf16.msra.mxu0 %v1353
    %1942 = vmatprep.subr.bf16.mxu0 %v1356
    %1943 = vmatpush1.bf16.msra.mxu0 %v1355
    %1944 = vmatprep.subr.bf16.mxu0 %v1358
    %1945 = vmatpush1.bf16.msra.mxu0 %v1357
    %1946 = vmatprep.subr.bf16.mxu0 %v1360
    %1947 = vmatpush1.bf16.msra.mxu0 %v1359
    %1948 = vmatprep.subr.bf16.mxu0 %v1362
    %1949 = vmatpush1.bf16.msra.mxu0 %v1361
    %1950 = vmatprep.subr.bf16.mxu0 %v1364
    %1951 = vmatpush1.bf16.msra.mxu0 %v1363
    %1952 = vmatprep.subr.bf16.mxu0 %v1366
    %1953 = vmatpush1.bf16.msra.mxu0 %v1365
    %1954 = vmatprep.subr.bf16.mxu0 %v1368
    %1955 = vmatpush1.bf16.msra.mxu0 %v1367
    %1956 = vmatprep.subr.bf16.mxu0 %v1370
    %1957 = vmatpush1.bf16.msra.mxu0 %v1369
    %1958 = vmatprep.subr.bf16.mxu0 %v1372
    %1959 = vmatpush1.bf16.msra.mxu0 %v1371
    %1960 = vmatprep.subr.bf16.mxu0 %v1374
    %1961 = vmatpush1.bf16.msra.mxu0 %v1373
    %1962 = vmatprep.subr.bf16.mxu0 %v1376
    %1963 = vmatpush1.bf16.msra.mxu0 %v1375
    %1964 = vmatprep.mubr.bf16.mxu0 %v380
    %1965 = vmatmul.mubr.bf16.gmra.mrb[0].mxu0 %v366
    %v1966 = vpop.f32.mrb[0].mxu0
    %v1967 = vadd.f32 %v1925, %v1966
    %v1968 = vpop.f32.mrb[0].mxu0
    %v1969 = vadd.f32 %v1929, %v1968
    %v1970 = vpop.f32.mrb[0].mxu0
    %v1971 = vpop.f32.mrb[0].mxu0
    %1972 = vdwg.mxu0
    %1973 = vmatprep.subr.bf16.mxu0 %v1378
    %1974 = vmatpush1.bf16.msra.mxu0 %v1377
    %1975 = vmatprep.subr.bf16.mxu0 %v1380
    %1976 = vmatpush1.bf16.msra.mxu0 %v1379
    %1977 = vmatprep.subr.bf16.mxu0 %v1382
    %1978 = vmatpush1.bf16.msra.mxu0 %v1381
    %1979 = vmatprep.subr.bf16.mxu0 %v1384
    %1980 = vmatpush1.bf16.msra.mxu0 %v1383
    %1981 = vmatprep.subr.bf16.mxu0 %v1386
    %1982 = vmatpush1.bf16.msra.mxu0 %v1385
    %1983 = vmatprep.subr.bf16.mxu0 %v1388
    %1984 = vmatpush1.bf16.msra.mxu0 %v1387
    %1985 = vmatprep.subr.bf16.mxu0 %v1390
    %1986 = vmatpush1.bf16.msra.mxu0 %v1389
    %1987 = vmatprep.subr.bf16.mxu0 %v1392
    %1988 = vmatpush1.bf16.msra.mxu0 %v1391
    %1989 = vmatprep.subr.bf16.mxu0 %v1394
    %1990 = vmatpush1.bf16.msra.mxu0 %v1393
    %1991 = vmatprep.subr.bf16.mxu0 %v1396
    %1992 = vmatpush1.bf16.msra.mxu0 %v1395
    %1993 = vmatprep.subr.bf16.mxu0 %v1398
    %1994 = vmatpush1.bf16.msra.mxu0 %v1397
    %1995 = vmatprep.subr.bf16.mxu0 %v1400
    %1996 = vmatpush1.bf16.msra.mxu0 %v1399
    %1997 = vmatprep.subr.bf16.mxu0 %v1402
    %1998 = vmatpush1.bf16.msra.mxu0 %v1401
    %1999 = vmatprep.subr.bf16.mxu0 %v1404
    %2000 = vmatpush1.bf16.msra.mxu0 %v1403
    %2001 = vmatprep.subr.bf16.mxu0 %v1406
    %2002 = vmatpush1.bf16.msra.mxu0 %v1405
    %2003 = vmatprep.subr.bf16.mxu0 %v1408
    %2004 = vmatpush1.bf16.msra.mxu0 %v1407
    %2005 = vmatprep.mubr.bf16.mxu0 %v390
    %2006 = vmatmul.mubr.bf16.gmra.mrb[0].mxu0 %v388
    %v2007 = vpop.f32.mrb[0].mxu0
    %v2008 = vadd.f32 %v1967, %v2007
    %v2009 = vpop.f32.mrb[0].mxu0
    %v2010 = vadd.f32 %v1969, %v2009
    %v2011 = vpop.f32.mrb[0].mxu0
    %v2012 = vpop.f32.mrb[0].mxu0
    %2013 = vdwg.mxu0
    %2014 = vmatprep.subr.bf16.mxu0 %v1410
    %2015 = vmatpush1.bf16.msra.mxu0 %v1409
    %2016 = vmatprep.subr.bf16.mxu0 %v1412
    %2017 = vmatpush1.bf16.msra.mxu0 %v1411
    %2018 = vmatprep.subr.bf16.mxu0 %v1414
    %2019 = vmatpush1.bf16.msra.mxu0 %v1413
    %2020 = vmatprep.subr.bf16.mxu0 %v1416
    %2021 = vmatpush1.bf16.msra.mxu0 %v1415
    %2022 = vmatprep.subr.bf16.mxu0 %v1418
    %2023 = vmatpush1.bf16.msra.mxu0 %v1417
    %2024 = vmatprep.subr.bf16.mxu0 %v1420
    %2025 = vmatpush1.bf16.msra.mxu0 %v1419
    %2026 = vmatprep.subr.bf16.mxu0 %v1422
    %2027 = vmatpush1.bf16.msra.mxu0 %v1421
    %2028 = vmatprep.subr.bf16.mxu0 %v1424
    %2029 = vmatpush1.bf16.msra.mxu0 %v1423
    %2030 = vmatprep.subr.bf16.mxu0 %v1426
    %2031 = vmatpush1.bf16.msra.mxu0 %v1425
    %2032 = vmatprep.subr.bf16.mxu0 %v1428
    %2033 = vmatpush1.bf16.msra.mxu0 %v1427
    %2034 = vmatprep.subr.bf16.mxu0 %v1430
    %2035 = vmatpush1.bf16.msra.mxu0 %v1429
    %2036 = vmatprep.subr.bf16.mxu0 %v1432
    %2037 = vmatpush1.bf16.msra.mxu0 %v1431
    %2038 = vmatprep.subr.bf16.mxu0 %v1434
    %2039 = vmatpush1.bf16.msra.mxu0 %v1433
    %2040 = vmatprep.subr.bf16.mxu0 %v1436
    %2041 = vmatpush1.bf16.msra.mxu0 %v1435
    %2042 = vmatprep.subr.bf16.mxu0 %v1438
    %2043 = vmatpush1.bf16.msra.mxu0 %v1437
    %2044 = vmatprep.subr.bf16.mxu0 %v1440
    %2045 = vmatpush1.bf16.msra.mxu0 %v1439
    %2046 = vmatprep.mubr.bf16.mxu0 %v387
    %2047 = vmatmul.mubr.bf16.gmra.mrb[0].mxu0 %v373
    %v2048 = vpop.f32.mrb[0].mxu0
    %v2049 = vadd.f32 %v2008, %v2048
    %v2050 = vpop.f32.mrb[0].mxu0
    %v2051 = vadd.f32 %v2010, %v2050
    %v2052 = vpop.f32.mrb[0].mxu0
    %v2053 = vpop.f32.mrb[0].mxu0
    %2054 = vdwg.mxu0
    %2055 = vmatprep.subr.bf16.mxu0 %v1442
    %2056 = vmatpush1.bf16.msra.mxu0 %v1441
    %2057 = vmatprep.subr.bf16.mxu0 %v1444
    %2058 = vmatpush1.bf16.msra.mxu0 %v1443
    %2059 = vmatprep.subr.bf16.mxu0 %v1446
    %2060 = vmatpush1.bf16.msra.mxu0 %v1445
    %2061 = vmatprep.subr.bf16.mxu0 %v1448
    %2062 = vmatpush1.bf16.msra.mxu0 %v1447
    %2063 = vmatprep.subr.bf16.mxu0 %v1450
    %2064 = vmatpush1.bf16.msra.mxu0 %v1449
    %2065 = vmatprep.subr.bf16.mxu0 %v1452
    %2066 = vmatpush1.bf16.msra.mxu0 %v1451
    %2067 = vmatprep.subr.bf16.mxu0 %v1454
    %2068 = vmatpush1.bf16.msra.mxu0 %v1453
    %2069 = vmatprep.subr.bf16.mxu0 %v1456
    %2070 = vmatpush1.bf16.msra.mxu0 %v1455
    %2071 = vmatprep.subr.bf16.mxu0 %v1458
    %2072 = vmatpush1.bf16.msra.mxu0 %v1457
    %2073 = vmatprep.subr.bf16.mxu0 %v1460
    %2074 = vmatpush1.bf16.msra.mxu0 %v1459
    %2075 = vmatprep.subr.bf16.mxu0 %v1462
    %2076 = vmatpush1.bf16.msra.mxu0 %v1461
    %2077 = vmatprep.subr.bf16.mxu0 %v1464
    %2078 = vmatpush1.bf16.msra.mxu0 %v1463
    %2079 = vmatprep.subr.bf16.mxu0 %v1466
    %2080 = vmatpush1.bf16.msra.mxu0 %v1465
    %2081 = vmatprep.subr.bf16.mxu0 %v1468
    %2082 = vmatpush1.bf16.msra.mxu0 %v1467
    %2083 = vmatprep.subr.bf16.mxu0 %v1470
    %2084 = vmatpush1.bf16.msra.mxu0 %v1469
    %2085 = vmatprep.subr.bf16.mxu0 %v1472
    %2086 = vmatpush1.bf16.msra.mxu0 %v1471
    %2087 = vmatprep.mubr.bf16.mxu0 %v391
    %2088 = vmatmul.mubr.bf16.gmra.mrb[0].mxu0 %v389
    %v2089 = vpop.f32.mrb[0].mxu0
    %v2090 = vadd.f32 %v2049, %v2089
    %v2091 = vpop.f32.mrb[0].mxu0
    %v2092 = vadd.f32 %v2051, %v2091
    %v2093 = vpop.f32.mrb[0].mxu0
    %v2094 = vpop.f32.mrb[0].mxu0
    %2095 = vdwg.mxu0
    %2096 = vmatprep.subr.bf16.mxu0 %v1474
    %2097 = vmatpush1.bf16.msra.mxu0 %v1473
    %2098 = vmatprep.subr.bf16.mxu0 %v1476
    %2099 = vmatpush1.bf16.msra.mxu0 %v1475
    %2100 = vmatprep.subr.bf16.mxu0 %v1478
    %2101 = vmatpush1.bf16.msra.mxu0 %v1477
    %2102 = vmatprep.subr.bf16.mxu0 %v1480
    %2103 = vmatpush1.bf16.msra.mxu0 %v1479
    %2104 = vmatprep.subr.bf16.mxu0 %v1482
    %2105 = vmatpush1.bf16.msra.mxu0 %v1481
    %2106 = vmatprep.subr.bf16.mxu0 %v1484
    %2107 = vmatpush1.bf16.msra.mxu0 %v1483
    %2108 = vmatprep.subr.bf16.mxu0 %v1486
    %2109 = vmatpush1.bf16.msra.mxu0 %v1485
    %2110 = vmatprep.subr.bf16.mxu0 %v1488
    %2111 = vmatpush1.bf16.msra.mxu0 %v1487
    %2112 = vmatprep.subr.bf16.mxu0 %v1490
    %2113 = vmatpush1.bf16.msra.mxu0 %v1489
    %2114 = vmatprep.subr.bf16.mxu0 %v1492
    %2115 = vmatpush1.bf16.msra.mxu0 %v1491
    %2116 = vmatprep.subr.bf16.mxu0 %v1494
    %2117 = vmatpush1.bf16.msra.mxu0 %v1493
    %2118 = vmatprep.subr.bf16.mxu0 %v1496
    %2119 = vmatpush1.bf16.msra.mxu0 %v1495
    %2120 = vmatprep.subr.bf16.mxu0 %v1498
    %2121 = vmatpush1.bf16.msra.mxu0 %v1497
    %2122 = vmatprep.subr.bf16.mxu0 %v1500
    %2123 = vmatpush1.bf16.msra.mxu0 %v1499
    %2124 = vmatprep.subr.bf16.mxu0 %v1502
    %2125 = vmatpush1.bf16.msra.mxu0 %v1501
    %2126 = vmatprep.subr.bf16.mxu0 %v1504
    %2127 = vmatpush1.bf16.msra.mxu0 %v1503
    %2128 = vmatprep.mubr.bf16.mxu0 %v429
    %2129 = vmatmul.mubr.bf16.gmra.mrb[0].mxu0 %v415
    %v2130 = vpop.f32.mrb[0].mxu0
    %v2131 = vadd.f32 %v2090, %v2130
    %v2132 = vpop.f32.mrb[0].mxu0
    %v2133 = vadd.f32 %v2092, %v2132
    %v2134 = vpop.f32.mrb[0].mxu0
    %v2135 = vpop.f32.mrb[0].mxu0
    %2136 = vdwg.mxu0
    %2137 = vmatprep.subr.bf16.mxu0 %v1506
    %2138 = vmatpush1.bf16.msra.mxu0 %v1505
    %2139 = vmatprep.subr.bf16.mxu0 %v1508
    %2140 = vmatpush1.bf16.msra.mxu0 %v1507
    %2141 = vmatprep.subr.bf16.mxu0 %v1510
    %2142 = vmatpush1.bf16.msra.mxu0 %v1509
    %2143 = vmatprep.subr.bf16.mxu0 %v1512
    %2144 = vmatpush1.bf16.msra.mxu0 %v1511
    %2145 = vmatprep.subr.bf16.mxu0 %v1514
    %2146 = vmatpush1.bf16.msra.mxu0 %v1513
    %2147 = vmatprep.subr.bf16.mxu0 %v1516
    %2148 = vmatpush1.bf16.msra.mxu0 %v1515
    %2149 = vmatprep.subr.bf16.mxu0 %v1518
    %2150 = vmatpush1.bf16.msra.mxu0 %v1517
    %2151 = vmatprep.subr.bf16.mxu0 %v1520
    %2152 = vmatpush1.bf16.msra.mxu0 %v1519
    %2153 = vmatprep.subr.bf16.mxu0 %v1522
    %2154 = vmatpush1.bf16.msra.mxu0 %v1521
    %2155 = vmatprep.subr.bf16.mxu0 %v1524
    %2156 = vmatpush1.bf16.msra.mxu0 %v1523
    %2157 = vmatprep.subr.bf16.mxu0 %v1526
    %2158 = vmatpush1.bf16.msra.mxu0 %v1525
    %2159 = vmatprep.subr.bf16.mxu0 %v1528
    %2160 = vmatpush1.bf16.msra.mxu0 %v1527
    %2161 = vmatprep.subr.bf16.mxu0 %v1530
    %2162 = vmatpush1.bf16.msra.mxu0 %v1529
    %2163 = vmatprep.subr.bf16.mxu0 %v1532
    %2164 = vmatpush1.bf16.msra.mxu0 %v1531
    %2165 = vmatprep.subr.bf16.mxu0 %v1534
    %2166 = vmatpush1.bf16.msra.mxu0 %v1533
    %2167 = vmatprep.subr.bf16.mxu0 %v1536
    %2168 = vmatpush1.bf16.msra.mxu0 %v1535
    %2169 = vmatprep.mubr.bf16.mxu0 %v439
    %2170 = vmatmul.mubr.bf16.gmra.mrb[0].mxu0 %v437
    %v2171 = vpop.f32.mrb[0].mxu0
    %v2172 = vadd.f32 %v2131, %v2171
    %v2173 = vpop.f32.mrb[0].mxu0
    %v2174 = vadd.f32 %v2133, %v2173
    %v2175 = vpop.f32.mrb[0].mxu0
    %v2176 = vpop.f32.mrb[0].mxu0
    %2177 = vdwg.mxu0
    %2178 = vmatprep.subr.bf16.mxu0 %v1538
    %2179 = vmatpush1.bf16.msra.mxu0 %v1537
    %2180 = vmatprep.subr.bf16.mxu0 %v1540
    %2181 = vmatpush1.bf16.msra.mxu0 %v1539
    %2182 = vmatprep.subr.bf16.mxu0 %v1542
    %2183 = vmatpush1.bf16.msra.mxu0 %v1541
    %2184 = vmatprep.subr.bf16.mxu0 %v1544
    %2185 = vmatpush1.bf16.msra.mxu0 %v1543
    %2186 = vmatprep.subr.bf16.mxu0 %v1546
    %2187 = vmatpush1.bf16.msra.mxu0 %v1545
    %2188 = vmatprep.subr.bf16.mxu0 %v1548
    %2189 = vmatpush1.bf16.msra.mxu0 %v1547
    %2190 = vmatprep.subr.bf16.mxu0 %v1550
    %2191 = vmatpush1.bf16.msra.mxu0 %v1549
    %2192 = vmatprep.subr.bf16.mxu0 %v1552
    %2193 = vmatpush1.bf16.msra.mxu0 %v1551
    %2194 = vmatprep.subr.bf16.mxu0 %v1554
    %2195 = vmatpush1.bf16.msra.mxu0 %v1553
    %2196 = vmatprep.subr.bf16.mxu0 %v1556
    %2197 = vmatpush1.bf16.msra.mxu0 %v1555
    %2198 = vmatprep.subr.bf16.mxu0 %v1558
    %2199 = vmatpush1.bf16.msra.mxu0 %v1557
    %2200 = vmatprep.subr.bf16.mxu0 %v1560
    %2201 = vmatpush1.bf16.msra.mxu0 %v1559
    %2202 = vmatprep.subr.bf16.mxu0 %v1562
    %2203 = vmatpush1.bf16.msra.mxu0 %v1561
    %2204 = vmatprep.subr.bf16.mxu0 %v1564
    %2205 = vmatpush1.bf16.msra.mxu0 %v1563
    %2206 = vmatprep.subr.bf16.mxu0 %v1566
    %2207 = vmatpush1.bf16.msra.mxu0 %v1565
    %2208 = vmatprep.subr.bf16.mxu0 %v1568
    %2209 = vmatpush1.bf16.msra.mxu0 %v1567
    %2210 = vmatprep.mubr.bf16.mxu0 %v436
    %2211 = vmatmul.mubr.bf16.gmra.mrb[0].mxu0 %v422
    %v2212 = vpop.f32.mrb[0].mxu0
    %v2213 = vadd.f32 %v2172, %v2212
    %v2214 = vpop.f32.mrb[0].mxu0
    %v2215 = vadd.f32 %v2174, %v2214
    %v2216 = vpop.f32.mrb[0].mxu0
    %v2217 = vpop.f32.mrb[0].mxu0
    %2218 = vdwg.mxu0
    %2219 = vmatprep.subr.bf16.mxu0 %v1570
    %2220 = vmatpush1.bf16.msra.mxu0 %v1569
    %2221 = vmatprep.subr.bf16.mxu0 %v1572
    %2222 = vmatpush1.bf16.msra.mxu0 %v1571
    %2223 = vmatprep.subr.bf16.mxu0 %v1574
    %2224 = vmatpush1.bf16.msra.mxu0 %v1573
    %2225 = vmatprep.subr.bf16.mxu0 %v1576
    %2226 = vmatpush1.bf16.msra.mxu0 %v1575
    %2227 = vmatprep.subr.bf16.mxu0 %v1578
    %2228 = vmatpush1.bf16.msra.mxu0 %v1577
    %2229 = vmatprep.subr.bf16.mxu0 %v1580
    %2230 = vmatpush1.bf16.msra.mxu0 %v1579
    %2231 = vmatprep.subr.bf16.mxu0 %v1582
    %2232 = vmatpush1.bf16.msra.mxu0 %v1581
    %2233 = vmatprep.subr.bf16.mxu0 %v1584
    %2234 = vmatpush1.bf16.msra.mxu0 %v1583
    %2235 = vmatprep.subr.bf16.mxu0 %v1586
    %2236 = vmatpush1.bf16.msra.mxu0 %v1585
    %2237 = vmatprep.subr.bf16.mxu0 %v1588
    %2238 = vmatpush1.bf16.msra.mxu0 %v1587
    %2239 = vmatprep.subr.bf16.mxu0 %v1590
    %2240 = vmatpush1.bf16.msra.mxu0 %v1589
    %2241 = vmatprep.subr.bf16.mxu0 %v1592
    %2242 = vmatpush1.bf16.msra.mxu0 %v1591
    %2243 = vmatprep.subr.bf16.mxu0 %v1594
    %2244 = vmatpush1.bf16.msra.mxu0 %v1593
    %2245 = vmatprep.subr.bf16.mxu0 %v1596
    %2246 = vmatpush1.bf16.msra.mxu0 %v1595
    %2247 = vmatprep.subr.bf16.mxu0 %v1598
    %2248 = vmatpush1.bf16.msra.mxu0 %v1597
    %2249 = vmatprep.subr.bf16.mxu0 %v1600
    %2250 = vmatpush1.bf16.msra.mxu0 %v1599
    %2251 = vmatprep.mubr.bf16.mxu0 %v440
    %2252 = vmatmul.mubr.bf16.gmra.mrb[0].mxu0 %v438
    %v2253 = vpop.f32.mrb[0].mxu0
    %v2254 = vadd.f32 %v2213, %v2253
    %v2255 = vpop.f32.mrb[0].mxu0
    %v2256 = vadd.f32 %v2215, %v2255
    %v2257 = vpop.f32.mrb[0].mxu0
    %v2258 = vpop.f32.mrb[0].mxu0
    %2259 = vdwg.mxu0
    %2260 = vmatprep.subr.bf16.mxu0 %v1602
    %2261 = vmatpush1.bf16.msra.mxu0 %v1601
    %2262 = vmatprep.subr.bf16.mxu0 %v1604
    %2263 = vmatpush1.bf16.msra.mxu0 %v1603
    %2264 = vmatprep.subr.bf16.mxu0 %v1606
    %2265 = vmatpush1.bf16.msra.mxu0 %v1605
    %2266 = vmatprep.subr.bf16.mxu0 %v1608
    %2267 = vmatpush1.bf16.msra.mxu0 %v1607
    %2268 = vmatprep.subr.bf16.mxu0 %v1610
    %2269 = vmatpush1.bf16.msra.mxu0 %v1609
    %2270 = vmatprep.subr.bf16.mxu0 %v1612
    %2271 = vmatpush1.bf16.msra.mxu0 %v1611
    %2272 = vmatprep.subr.bf16.mxu0 %v1614
    %2273 = vmatpush1.bf16.msra.mxu0 %v1613
    %2274 = vmatprep.subr.bf16.mxu0 %v1616
    %2275 = vmatpush1.bf16.msra.mxu0 %v1615
    %2276 = vmatprep.subr.bf16.mxu0 %v1618
    %2277 = vmatpush1.bf16.msra.mxu0 %v1617
    %2278 = vmatprep.subr.bf16.mxu0 %v1620
    %2279 = vmatpush1.bf16.msra.mxu0 %v1619
    %2280 = vmatprep.subr.bf16.mxu0 %v1622
    %2281 = vmatpush1.bf16.msra.mxu0 %v1621
    %2282 = vmatprep.subr.bf16.mxu0 %v1624
    %2283 = vmatpush1.bf16.msra.mxu0 %v1623
    %2284 = vmatprep.subr.bf16.mxu0 %v1626
    %2285 = vmatpush1.bf16.msra.mxu0 %v1625
    %2286 = vmatprep.subr.bf16.mxu0 %v1628
    %2287 = vmatpush1.bf16.msra.mxu0 %v1627
    %2288 = vmatprep.subr.bf16.mxu0 %v1630
    %2289 = vmatpush1.bf16.msra.mxu0 %v1629
    %2290 = vmatprep.subr.bf16.mxu0 %v1632
    %2291 = vmatpush1.bf16.msra.mxu0 %v1631
    %2292 = vmatprep.mubr.bf16.mxu0 %v462
    %2293 = vmatmul.mubr.bf16.gmra.mrb[0].mxu0 %v455
    %v2294 = vpop.f32.mrb[0].mxu0
    %v2295 = vadd.f32 %v2254, %v2294
    %v2296 = vpop.f32.mrb[0].mxu0
    %v2297 = vadd.f32 %v2256, %v2296
    %v2298 = vpop.f32.mrb[0].mxu0
    %v2299 = vpop.f32.mrb[0].mxu0
    %2300 = vdwg.mxu0
    %v2301 = vld [vmem:[%s1] sm:$0xff]
    %v2302 = vld [vmem:[%s1 + $0x8] sm:$0xff]
    %v2303 = vld [vmem:[%s1 + $0x10] sm:$0x3]
    %v2307 = vcombine.high %v2301, %v2301
    %v2309 = vunpack.c.l.s4 1966171168
    %v2310 = vunpack.c.0.s8 %v2309
    %v2311 = vlaneseq
    %v2312 = vshrl.u32 %v2311, 7
    %v2313 = vsub.s32 %v2310, %v2312
    %v2314 = vrot.slane %v2301, %v2313
    %v2316 = vunpack.c.l.s4 1966171168
    %v2317 = vunpack.c.0.s8 %v2316
    %v2318 = vlaneseq
    %v2319 = vshrl.u32 %v2318, 7
    %v2320 = vsub.s32 %v2317, %v2319
    %v2321 = vrot.slane %v2307, %v2320
    %v2322 = vcombine.high %v2314, %v2314
    %v2323 = vcombine.high %v2321, %v2321
    %v2325 = vunpack.c.l.s4 1966171168
    %v2326 = vunpack.c.0.s8 %v2325
    %v2327 = vlaneseq
    %v2328 = vshrl.u32 %v2327, 7
    %v2329 = vsub.s32 %v2326, %v2328
    %v2330 = vrot.slane %v2314, %v2329
    %v2332 = vunpack.c.l.s4 1966171168
    %v2333 = vunpack.c.0.s8 %v2332
    %v2334 = vlaneseq
    %v2335 = vshrl.u32 %v2334, 7
    %v2336 = vsub.s32 %v2333, %v2335
    %v2337 = vrot.slane %v2321, %v2336
    %v2339 = vunpack.c.l.s4 1966171168
    %v2340 = vunpack.c.0.s8 %v2339
    %v2341 = vlaneseq
    %v2342 = vshrl.u32 %v2341, 7
    %v2343 = vsub.s32 %v2340, %v2342
    %v2344 = vrot.slane %v2322, %v2343
    %v2346 = vunpack.c.l.s4 1966171168
    %v2347 = vunpack.c.0.s8 %v2346
    %v2348 = vlaneseq
    %v2349 = vshrl.u32 %v2348, 7
    %v2350 = vsub.s32 %v2347, %v2349
    %v2351 = vrot.slane %v2323, %v2350
    %v2352 = vcombine.high %v2330, %v2330
    %v2353 = vcombine.high %v2337, %v2337
    %v2354 = vcombine.high %v2344, %v2344
    %v2355 = vcombine.high %v2351, %v2351
    %v2356 = vcombine.high %v2302, %v2302
    %v2358 = vunpack.c.l.s4 1966171168
    %v2359 = vunpack.c.0.s8 %v2358
    %v2360 = vlaneseq
    %v2361 = vshrl.u32 %v2360, 7
    %v2362 = vsub.s32 %v2359, %v2361
    %v2363 = vrot.slane %v2302, %v2362
    %v2365 = vunpack.c.l.s4 1966171168
    %v2366 = vunpack.c.0.s8 %v2365
    %v2367 = vlaneseq
    %v2368 = vshrl.u32 %v2367, 7
    %v2369 = vsub.s32 %v2366, %v2368
    %v2370 = vrot.slane %v2356, %v2369
    %v2371 = vcombine.high %v2363, %v2363
    %v2372 = vcombine.high %v2370, %v2370
    %v2374 = vunpack.c.l.s4 1966171168
    %v2375 = vunpack.c.0.s8 %v2374
    %v2376 = vlaneseq
    %v2377 = vshrl.u32 %v2376, 7
    %v2378 = vsub.s32 %v2375, %v2377
    %v2379 = vrot.slane %v2363, %v2378
    %v2381 = vunpack.c.l.s4 1966171168
    %v2382 = vunpack.c.0.s8 %v2381
    %v2383 = vlaneseq
    %v2384 = vshrl.u32 %v2383, 7
    %v2385 = vsub.s32 %v2382, %v2384
    %v2386 = vrot.slane %v2370, %v2385
    %v2388 = vunpack.c.l.s4 1966171168
    %v2389 = vunpack.c.0.s8 %v2388
    %v2390 = vlaneseq
    %v2391 = vshrl.u32 %v2390, 7
    %v2392 = vsub.s32 %v2389, %v2391
    %v2393 = vrot.slane %v2371, %v2392
    %v2395 = vunpack.c.l.s4 1966171168
    %v2396 = vunpack.c.0.s8 %v2395
    %v2397 = vlaneseq
    %v2398 = vshrl.u32 %v2397, 7
    %v2399 = vsub.s32 %v2396, %v2398
    %v2400 = vrot.slane %v2372, %v2399
    %v2401 = vcombine.high %v2379, %v2379
    %v2402 = vcombine.high %v2386, %v2386
    %v2403 = vcombine.high %v2393, %v2393
    %v2404 = vcombine.high %v2400, %v2400
    %v2406 = vunpack.c.l.s4 1966171168
    %v2407 = vunpack.c.0.s8 %v2406
    %v2408 = vlaneseq
    %v2409 = vshrl.u32 %v2408, 7
    %v2410 = vsub.s32 %v2407, %v2409
    %v2411 = vrot.slane %v2303, %v2410
    %v2412 = vcombine.high %v2411, %v2411
    %v2414 = vunpack.c.l.s4 1966171168
    %v2415 = vunpack.c.0.s8 %v2414
    %v2416 = vlaneseq
    %v2417 = vshrl.u32 %v2416, 7
    %v2418 = vsub.s32 %v2415, %v2417
    %v2419 = vrot.slane %v2411, %v2418
    %v2421 = vunpack.c.l.s4 1966171168
    %v2422 = vunpack.c.0.s8 %v2421
    %v2423 = vlaneseq
    %v2424 = vshrl.u32 %v2423, 7
    %v2425 = vsub.s32 %v2422, %v2424
    %v2426 = vrot.slane %v2412, %v2425
    %2445 = vmatprep.subr.bf16.mxu0 %v1346
    %2446 = vmatpush1.bf16.msra.mxu0 %v1345
    %2447 = vmatprep.subr.bf16.mxu0 %v1348
    %2448 = vmatpush1.bf16.msra.mxu0 %v1347
    %2449 = vmatprep.subr.bf16.mxu0 %v1350
    %2450 = vmatpush1.bf16.msra.mxu0 %v1349
    %2451 = vmatprep.subr.bf16.mxu0 %v1352
    %2452 = vmatpush1.bf16.msra.mxu0 %v1351
    %2453 = vmatprep.subr.bf16.mxu0 %v1354
    %2454 = vmatpush1.bf16.msra.mxu0 %v1353
    %2455 = vmatprep.subr.bf16.mxu0 %v1356
    %2456 = vmatpush1.bf16.msra.mxu0 %v1355
    %2457 = vmatprep.subr.bf16.mxu0 %v1358
    %2458 = vmatpush1.bf16.msra.mxu0 %v1357
    %2459 = vmatprep.subr.bf16.mxu0 %v1360
    %2460 = vmatpush1.bf16.msra.mxu0 %v1359
    %2461 = vmatprep.subr.bf16.mxu0 %v1362
    %2462 = vmatpush1.bf16.msra.mxu0 %v1361
    %2463 = vmatprep.subr.bf16.mxu0 %v1364
    %2464 = vmatpush1.bf16.msra.mxu0 %v1363
    %2465 = vmatprep.subr.bf16.mxu0 %v1366
    %2466 = vmatpush1.bf16.msra.mxu0 %v1365
    %2467 = vmatprep.subr.bf16.mxu0 %v1368
    %2468 = vmatpush1.bf16.msra.mxu0 %v1367
    %2469 = vmatprep.subr.bf16.mxu0 %v1370
    %2470 = vmatpush1.bf16.msra.mxu0 %v1369
    %2471 = vmatprep.subr.bf16.mxu0 %v1372
    %2472 = vmatpush1.bf16.msra.mxu0 %v1371
    %2473 = vmatprep.subr.bf16.mxu0 %v1374
    %2474 = vmatpush1.bf16.msra.mxu0 %v1373
    %2475 = vmatprep.subr.bf16.mxu0 %v1376
    %2476 = vmatpush1.bf16.msra.mxu0 %v1375
    %2477 = vmatprep.mubr.bf16.mxu0 %v2344
    %2478 = vmatmul.mubr.bf16.gmra.mrb[0].mxu0 %v2330
    %v2479 = vpop.f32.mrb[0].mxu0
    %v2480 = vadd.f32 %v1925, %v2479
    %v2481 = vpop.f32.mrb[0].mxu0
    %v2482 = vadd.f32 %v1929, %v2481
    %v2483 = vpop.f32.mrb[0].mxu0
    %v2484 = vpop.f32.mrb[0].mxu0
    %2485 = vdwg.mxu0
    %2486 = vmatprep.subr.bf16.mxu0 %v1378
    %2487 = vmatpush1.bf16.msra.mxu0 %v1377
    %2488 = vmatprep.subr.bf16.mxu0 %v1380
    %2489 = vmatpush1.bf16.msra.mxu0 %v1379
    %2490 = vmatprep.subr.bf16.mxu0 %v1382
    %2491 = vmatpush1.bf16.msra.mxu0 %v1381
    %2492 = vmatprep.subr.bf16.mxu0 %v1384
    %2493 = vmatpush1.bf16.msra.mxu0 %v1383
    %2494 = vmatprep.subr.bf16.mxu0 %v1386
    %2495 = vmatpush1.bf16.msra.mxu0 %v1385
    %2496 = vmatprep.subr.bf16.mxu0 %v1388
    %2497 = vmatpush1.bf16.msra.mxu0 %v1387
    %2498 = vmatprep.subr.bf16.mxu0 %v1390
    %2499 = vmatpush1.bf16.msra.mxu0 %v1389
    %2500 = vmatprep.subr.bf16.mxu0 %v1392
    %2501 = vmatpush1.bf16.msra.mxu0 %v1391
    %2502 = vmatprep.subr.bf16.mxu0 %v1394
    %2503 = vmatpush1.bf16.msra.mxu0 %v1393
    %2504 = vmatprep.subr.bf16.mxu0 %v1396
    %2505 = vmatpush1.bf16.msra.mxu0 %v1395
    %2506 = vmatprep.subr.bf16.mxu0 %v1398
    %2507 = vmatpush1.bf16.msra.mxu0 %v1397
    %2508 = vmatprep.subr.bf16.mxu0 %v1400
    %2509 = vmatpush1.bf16.msra.mxu0 %v1399
    %2510 = vmatprep.subr.bf16.mxu0 %v1402
    %2511 = vmatpush1.bf16.msra.mxu0 %v1401
    %2512 = vmatprep.subr.bf16.mxu0 %v1404
    %2513 = vmatpush1.bf16.msra.mxu0 %v1403
    %2514 = vmatprep.subr.bf16.mxu0 %v1406
    %2515 = vmatpush1.bf16.msra.mxu0 %v1405
    %2516 = vmatprep.subr.bf16.mxu0 %v1408
    %2517 = vmatpush1.bf16.msra.mxu0 %v1407
    %2518 = vmatprep.mubr.bf16.mxu0 %v2354
    %2519 = vmatmul.mubr.bf16.gmra.mrb[0].mxu0 %v2352
    %v2520 = vpop.f32.mrb[0].mxu0
    %v2521 = vadd.f32 %v2480, %v2520
    %v2522 = vpop.f32.mrb[0].mxu0
    %v2523 = vadd.f32 %v2482, %v2522
    %v2524 = vpop.f32.mrb[0].mxu0
    %v2525 = vpop.f32.mrb[0].mxu0
    %2526 = vdwg.mxu0
    %2527 = vmatprep.subr.bf16.mxu0 %v1410
    %2528 = vmatpush1.bf16.msra.mxu0 %v1409
    %2529 = vmatprep.subr.bf16.mxu0 %v1412
    %2530 = vmatpush1.bf16.msra.mxu0 %v1411
    %2531 = vmatprep.subr.bf16.mxu0 %v1414
    %2532 = vmatpush1.bf16.msra.mxu0 %v1413
    %2533 = vmatprep.subr.bf16.mxu0 %v1416
    %2534 = vmatpush1.bf16.msra.mxu0 %v1415
    %2535 = vmatprep.subr.bf16.mxu0 %v1418
    %2536 = vmatpush1.bf16.msra.mxu0 %v1417
    %2537 = vmatprep.subr.bf16.mxu0 %v1420
    %2538 = vmatpush1.bf16.msra.mxu0 %v1419
    %2539 = vmatprep.subr.bf16.mxu0 %v1422
    %2540 = vmatpush1.bf16.msra.mxu0 %v1421
    %2541 = vmatprep.subr.bf16.mxu0 %v1424
    %2542 = vmatpush1.bf16.msra.mxu0 %v1423
    %2543 = vmatprep.subr.bf16.mxu0 %v1426
    %2544 = vmatpush1.bf16.msra.mxu0 %v1425
    %2545 = vmatprep.subr.bf16.mxu0 %v1428
    %2546 = vmatpush1.bf16.msra.mxu0 %v1427
    %2547 = vmatprep.subr.bf16.mxu0 %v1430
    %2548 = vmatpush1.bf16.msra.mxu0 %v1429
    %2549 = vmatprep.subr.bf16.mxu0 %v1432
    %2550 = vmatpush1.bf16.msra.mxu0 %v1431
    %2551 = vmatprep.subr.bf16.mxu0 %v1434
    %2552 = vmatpush1.bf16.msra.mxu0 %v1433
    %2553 = vmatprep.subr.bf16.mxu0 %v1436
    %2554 = vmatpush1.bf16.msra.mxu0 %v1435
    %2555 = vmatprep.subr.bf16.mxu0 %v1438
    %2556 = vmatpush1.bf16.msra.mxu0 %v1437
    %2557 = vmatprep.subr.bf16.mxu0 %v1440
    %2558 = vmatpush1.bf16.msra.mxu0 %v1439
    %2559 = vmatprep.mubr.bf16.mxu0 %v2351
    %2560 = vmatmul.mubr.bf16.gmra.mrb[0].mxu0 %v2337
    %v2561 = vpop.f32.mrb[0].mxu0
    %v2562 = vadd.f32 %v2521, %v2561
    %v2563 = vpop.f32.mrb[0].mxu0
    %v2564 = vadd.f32 %v2523, %v2563
    %v2565 = vpop.f32.mrb[0].mxu0
    %v2566 = vpop.f32.mrb[0].mxu0
    %2567 = vdwg.mxu0
    %2568 = vmatprep.subr.bf16.mxu0 %v1442
    %2569 = vmatpush1.bf16.msra.mxu0 %v1441
    %2570 = vmatprep.subr.bf16.mxu0 %v1444
    %2571 = vmatpush1.bf16.msra.mxu0 %v1443
    %2572 = vmatprep.subr.bf16.mxu0 %v1446
    %2573 = vmatpush1.bf16.msra.mxu0 %v1445
    %2574 = vmatprep.subr.bf16.mxu0 %v1448
    %2575 = vmatpush1.bf16.msra.mxu0 %v1447
    %2576 = vmatprep.subr.bf16.mxu0 %v1450
    %2577 = vmatpush1.bf16.msra.mxu0 %v1449
    %2578 = vmatprep.subr.bf16.mxu0 %v1452
    %2579 = vmatpush1.bf16.msra.mxu0 %v1451
    %2580 = vmatprep.subr.bf16.mxu0 %v1454
    %2581 = vmatpush1.bf16.msra.mxu0 %v1453
    %2582 = vmatprep.subr.bf16.mxu0 %v1456
    %2583 = vmatpush1.bf16.msra.mxu0 %v1455
    %2584 = vmatprep.subr.bf16.mxu0 %v1458
    %2585 = vmatpush1.bf16.msra.mxu0 %v1457
    %2586 = vmatprep.subr.bf16.mxu0 %v1460
    %2587 = vmatpush1.bf16.msra.mxu0 %v1459
    %2588 = vmatprep.subr.bf16.mxu0 %v1462
    %2589 = vmatpush1.bf16.msra.mxu0 %v1461
    %2590 = vmatprep.subr.bf16.mxu0 %v1464
    %2591 = vmatpush1.bf16.msra.mxu0 %v1463
    %2592 = vmatprep.subr.bf16.mxu0 %v1466
    %2593 = vmatpush1.bf16.msra.mxu0 %v1465
    %2594 = vmatprep.subr.bf16.mxu0 %v1468
    %2595 = vmatpush1.bf16.msra.mxu0 %v1467
    %2596 = vmatprep.subr.bf16.mxu0 %v1470
    %2597 = vmatpush1.bf16.msra.mxu0 %v1469
    %2598 = vmatprep.subr.bf16.mxu0 %v1472
    %2599 = vmatpush1.bf16.msra.mxu0 %v1471
    %2600 = vmatprep.mubr.bf16.mxu0 %v2355
    %2601 = vmatmul.mubr.bf16.gmra.mrb[0].mxu0 %v2353
    %v2602 = vpop.f32.mrb[0].mxu0
    %v2603 = vadd.f32 %v2562, %v2602
    %v2604 = vpop.f32.mrb[0].mxu0
    %v2605 = vadd.f32 %v2564, %v2604
    %v2606 = vpop.f32.mrb[0].mxu0
    %v2607 = vpop.f32.mrb[0].mxu0
    %2608 = vdwg.mxu0
    %2609 = vmatprep.subr.bf16.mxu0 %v1474
    %2610 = vmatpush1.bf16.msra.mxu0 %v1473
    %2611 = vmatprep.subr.bf16.mxu0 %v1476
    %2612 = vmatpush1.bf16.msra.mxu0 %v1475
    %2613 = vmatprep.subr.bf16.mxu0 %v1478
    %2614 = vmatpush1.bf16.msra.mxu0 %v1477
    %2615 = vmatprep.subr.bf16.mxu0 %v1480
    %2616 = vmatpush1.bf16.msra.mxu0 %v1479
    %2617 = vmatprep.subr.bf16.mxu0 %v1482
    %2618 = vmatpush1.bf16.msra.mxu0 %v1481
    %2619 = vmatprep.subr.bf16.mxu0 %v1484
    %2620 = vmatpush1.bf16.msra.mxu0 %v1483
    %2621 = vmatprep.subr.bf16.mxu0 %v1486
    %2622 = vmatpush1.bf16.msra.mxu0 %v1485
    %2623 = vmatprep.subr.bf16.mxu0 %v1488
    %2624 = vmatpush1.bf16.msra.mxu0 %v1487
    %2625 = vmatprep.subr.bf16.mxu0 %v1490
    %2626 = vmatpush1.bf16.msra.mxu0 %v1489
    %2627 = vmatprep.subr.bf16.mxu0 %v1492
    %2628 = vmatpush1.bf16.msra.mxu0 %v1491
    %2629 = vmatprep.subr.bf16.mxu0 %v1494
    %2630 = vmatpush1.bf16.msra.mxu0 %v1493
    %2631 = vmatprep.subr.bf16.mxu0 %v1496
    %2632 = vmatpush1.bf16.msra.mxu0 %v1495
    %2633 = vmatprep.subr.bf16.mxu0 %v1498
    %2634 = vmatpush1.bf16.msra.mxu0 %v1497
    %2635 = vmatprep.subr.bf16.mxu0 %v1500
    %2636 = vmatpush1.bf16.msra.mxu0 %v1499
    %2637 = vmatprep.subr.bf16.mxu0 %v1502
    %2638 = vmatpush1.bf16.msra.mxu0 %v1501
    %2639 = vmatprep.subr.bf16.mxu0 %v1504
    %2640 = vmatpush1.bf16.msra.mxu0 %v1503
    %2641 = vmatprep.mubr.bf16.mxu0 %v2393
    %2642 = vmatmul.mubr.bf16.gmra.mrb[0].mxu0 %v2379
    %v2643 = vpop.f32.mrb[0].mxu0
    %v2644 = vadd.f32 %v2603, %v2643
    %v2645 = vpop.f32.mrb[0].mxu0
    %v2646 = vadd.f32 %v2605, %v2645
    %v2647 = vpop.f32.mrb[0].mxu0
    %v2648 = vpop.f32.mrb[0].mxu0
    %2649 = vdwg.mxu0
    %2650 = vmatprep.subr.bf16.mxu0 %v1506
    %2651 = vmatpush1.bf16.msra.mxu0 %v1505
    %2652 = vmatprep.subr.bf16.mxu0 %v1508
    %2653 = vmatpush1.bf16.msra.mxu0 %v1507
    %2654 = vmatprep.subr.bf16.mxu0 %v1510
    %2655 = vmatpush1.bf16.msra.mxu0 %v1509
    %2656 = vmatprep.subr.bf16.mxu0 %v1512
    %2657 = vmatpush1.bf16.msra.mxu0 %v1511
    %2658 = vmatprep.subr.bf16.mxu0 %v1514
    %2659 = vmatpush1.bf16.msra.mxu0 %v1513
    %2660 = vmatprep.subr.bf16.mxu0 %v1516
    %2661 = vmatpush1.bf16.msra.mxu0 %v1515
    %2662 = vmatprep.subr.bf16.mxu0 %v1518
    %2663 = vmatpush1.bf16.msra.mxu0 %v1517
    %2664 = vmatprep.subr.bf16.mxu0 %v1520
    %2665 = vmatpush1.bf16.msra.mxu0 %v1519
    %2666 = vmatprep.subr.bf16.mxu0 %v1522
    %2667 = vmatpush1.bf16.msra.mxu0 %v1521
    %2668 = vmatprep.subr.bf16.mxu0 %v1524
    %2669 = vmatpush1.bf16.msra.mxu0 %v1523
    %2670 = vmatprep.subr.bf16.mxu0 %v1526
    %2671 = vmatpush1.bf16.msra.mxu0 %v1525
    %2672 = vmatprep.subr.bf16.mxu0 %v1528
    %2673 = vmatpush1.bf16.msra.mxu0 %v1527
    %2674 = vmatprep.subr.bf16.mxu0 %v1530
    %2675 = vmatpush1.bf16.msra.mxu0 %v1529
    %2676 = vmatprep.subr.bf16.mxu0 %v1532
    %2677 = vmatpush1.bf16.msra.mxu0 %v1531
    %2678 = vmatprep.subr.bf16.mxu0 %v1534
    %2679 = vmatpush1.bf16.msra.mxu0 %v1533
    %2680 = vmatprep.subr.bf16.mxu0 %v1536
    %2681 = vmatpush1.bf16.msra.mxu0 %v1535
    %2682 = vmatprep.mubr.bf16.mxu0 %v2403
    %2683 = vmatmul.mubr.bf16.gmra.mrb[0].mxu0 %v2401
    %v2684 = vpop.f32.mrb[0].mxu0
    %v2685 = vadd.f32 %v2644, %v2684
    %v2686 = vpop.f32.mrb[0].mxu0
    %v2687 = vadd.f32 %v2646, %v2686
    %v2688 = vpop.f32.mrb[0].mxu0
    %v2689 = vpop.f32.mrb[0].mxu0
    %2690 = vdwg.mxu0
    %2691 = vmatprep.subr.bf16.mxu0 %v1538
    %2692 = vmatpush1.bf16.msra.mxu0 %v1537
    %2693 = vmatprep.subr.bf16.mxu0 %v1540
    %2694 = vmatpush1.bf16.msra.mxu0 %v1539
    %2695 = vmatprep.subr.bf16.mxu0 %v1542
    %2696 = vmatpush1.bf16.msra.mxu0 %v1541
    %2697 = vmatprep.subr.bf16.mxu0 %v1544
    %2698 = vmatpush1.bf16.msra.mxu0 %v1543
    %2699 = vmatprep.subr.bf16.mxu0 %v1546
    %2700 = vmatpush1.bf16.msra.mxu0 %v1545
    %2701 = vmatprep.subr.bf16.mxu0 %v1548
    %2702 = vmatpush1.bf16.msra.mxu0 %v1547
    %2703 = vmatprep.subr.bf16.mxu0 %v1550
    %2704 = vmatpush1.bf16.msra.mxu0 %v1549
    %2705 = vmatprep.subr.bf16.mxu0 %v1552
    %2706 = vmatpush1.bf16.msra.mxu0 %v1551
    %2707 = vmatprep.subr.bf16.mxu0 %v1554
    %2708 = vmatpush1.bf16.msra.mxu0 %v1553
    %2709 = vmatprep.subr.bf16.mxu0 %v1556
    %2710 = vmatpush1.bf16.msra.mxu0 %v1555
    %2711 = vmatprep.subr.bf16.mxu0 %v1558
    %2712 = vmatpush1.bf16.msra.mxu0 %v1557
    %2713 = vmatprep.subr.bf16.mxu0 %v1560
    %2714 = vmatpush1.bf16.msra.mxu0 %v1559
    %2715 = vmatprep.subr.bf16.mxu0 %v1562
    %2716 = vmatpush1.bf16.msra.mxu0 %v1561
    %2717 = vmatprep.subr.bf16.mxu0 %v1564
    %2718 = vmatpush1.bf16.msra.mxu0 %v1563
    %2719 = vmatprep.subr.bf16.mxu0 %v1566
    %2720 = vmatpush1.bf16.msra.mxu0 %v1565
    %2721 = vmatprep.subr.bf16.mxu0 %v1568
    %2722 = vmatpush1.bf16.msra.mxu0 %v1567
    %2723 = vmatprep.mubr.bf16.mxu0 %v2400
    %2724 = vmatmul.mubr.bf16.gmra.mrb[0].mxu0 %v2386
    %v2725 = vpop.f32.mrb[0].mxu0
    %v2726 = vadd.f32 %v2685, %v2725
    %v2727 = vpop.f32.mrb[0].mxu0
    %v2728 = vadd.f32 %v2687, %v2727
    %v2729 = vpop.f32.mrb[0].mxu0
    %v2730 = vpop.f32.mrb[0].mxu0
    %2731 = vdwg.mxu0
    %2732 = vmatprep.subr.bf16.mxu0 %v1570
    %2733 = vmatpush1.bf16.msra.mxu0 %v1569
    %2734 = vmatprep.subr.bf16.mxu0 %v1572
    %2735 = vmatpush1.bf16.msra.mxu0 %v1571
    %2736 = vmatprep.subr.bf16.mxu0 %v1574
    %2737 = vmatpush1.bf16.msra.mxu0 %v1573
    %2738 = vmatprep.subr.bf16.mxu0 %v1576
    %2739 = vmatpush1.bf16.msra.mxu0 %v1575
    %2740 = vmatprep.subr.bf16.mxu0 %v1578
    %2741 = vmatpush1.bf16.msra.mxu0 %v1577
    %2742 = vmatprep.subr.bf16.mxu0 %v1580
    %2743 = vmatpush1.bf16.msra.mxu0 %v1579
    %2744 = vmatprep.subr.bf16.mxu0 %v1582
    %2745 = vmatpush1.bf16.msra.mxu0 %v1581
    %2746 = vmatprep.subr.bf16.mxu0 %v1584
    %2747 = vmatpush1.bf16.msra.mxu0 %v1583
    %2748 = vmatprep.subr.bf16.mxu0 %v1586
    %2749 = vmatpush1.bf16.msra.mxu0 %v1585
    %2750 = vmatprep.subr.bf16.mxu0 %v1588
    %2751 = vmatpush1.bf16.msra.mxu0 %v1587
    %2752 = vmatprep.subr.bf16.mxu0 %v1590
    %2753 = vmatpush1.bf16.msra.mxu0 %v1589
    %2754 = vmatprep.subr.bf16.mxu0 %v1592
    %2755 = vmatpush1.bf16.msra.mxu0 %v1591
    %2756 = vmatprep.subr.bf16.mxu0 %v1594
    %2757 = vmatpush1.bf16.msra.mxu0 %v1593
    %2758 = vmatprep.subr.bf16.mxu0 %v1596
    %2759 = vmatpush1.bf16.msra.mxu0 %v1595
    %2760 = vmatprep.subr.bf16.mxu0 %v1598
    %2761 = vmatpush1.bf16.msra.mxu0 %v1597
    %2762 = vmatprep.subr.bf16.mxu0 %v1600
    %2763 = vmatpush1.bf16.msra.mxu0 %v1599
    %2764 = vmatprep.mubr.bf16.mxu0 %v2404
    %2765 = vmatmul.mubr.bf16.gmra.mrb[0].mxu0 %v2402
    %v2766 = vpop.f32.mrb[0].mxu0
    %v2767 = vadd.f32 %v2726, %v2766
    %v2768 = vpop.f32.mrb[0].mxu0
    %v2769 = vadd.f32 %v2728, %v2768
    %v2770 = vpop.f32.mrb[0].mxu0
    %v2771 = vpop.f32.mrb[0].mxu0
    %2772 = vdwg.mxu0
    %2773 = vmatprep.subr.bf16.mxu0 %v1602
    %2774 = vmatpush1.bf16.msra.mxu0 %v1601
    %2775 = vmatprep.subr.bf16.mxu0 %v1604
    %2776 = vmatpush1.bf16.msra.mxu0 %v1603
    %2777 = vmatprep.subr.bf16.mxu0 %v1606
    %2778 = vmatpush1.bf16.msra.mxu0 %v1605
    %2779 = vmatprep.subr.bf16.mxu0 %v1608
    %2780 = vmatpush1.bf16.msra.mxu0 %v1607
    %2781 = vmatprep.subr.bf16.mxu0 %v1610
    %2782 = vmatpush1.bf16.msra.mxu0 %v1609
    %2783 = vmatprep.subr.bf16.mxu0 %v1612
    %2784 = vmatpush1.bf16.msra.mxu0 %v1611
    %2785 = vmatprep.subr.bf16.mxu0 %v1614
    %2786 = vmatpush1.bf16.msra.mxu0 %v1613
    %2787 = vmatprep.subr.bf16.mxu0 %v1616
    %2788 = vmatpush1.bf16.msra.mxu0 %v1615
    %2789 = vmatprep.subr.bf16.mxu0 %v1618
    %2790 = vmatpush1.bf16.msra.mxu0 %v1617
    %2791 = vmatprep.subr.bf16.mxu0 %v1620
    %2792 = vmatpush1.bf16.msra.mxu0 %v1619
    %2793 = vmatprep.subr.bf16.mxu0 %v1622
    %2794 = vmatpush1.bf16.msra.mxu0 %v1621
    %2795 = vmatprep.subr.bf16.mxu0 %v1624
    %2796 = vmatpush1.bf16.msra.mxu0 %v1623
    %2797 = vmatprep.subr.bf16.mxu0 %v1626
    %2798 = vmatpush1.bf16.msra.mxu0 %v1625
    %2799 = vmatprep.subr.bf16.mxu0 %v1628
    %2800 = vmatpush1.bf16.msra.mxu0 %v1627
    %2801 = vmatprep.subr.bf16.mxu0 %v1630
    %2802 = vmatpush1.bf16.msra.mxu0 %v1629
    %2803 = vmatprep.subr.bf16.mxu0 %v1632
    %2804 = vmatpush1.bf16.msra.mxu0 %v1631
    %2805 = vmatprep.mubr.bf16.mxu0 %v2426
    %2806 = vmatmul.mubr.bf16.gmra.mrb[0].mxu0 %v2419
    %v2807 = vpop.f32.mrb[0].mxu0
    %v2808 = vadd.f32 %v2767, %v2807
    %v2809 = vpop.f32.mrb[0].mxu0
    %v2810 = vadd.f32 %v2769, %v2809
    %v2811 = vpop.f32.mrb[0].mxu0
    %v2812 = vpop.f32.mrb[0].mxu0
    %2813 = vdwg.mxu0
    %v2814 = vmax.f32 %v2295, 0.0
    %v2815 = vmax.f32 %v2297, 0.0
    %v2816 = vpack.c.bf16 %v2814, %v2814
    %v2817 = vpack.c.bf16 %v2815, %v2815
    %v2818 = vmax.f32 %v2808, 0.0
    %v2819 = vmax.f32 %v2810, 0.0
    %v2820 = vpack.c.bf16 %v2818, %v2818
    %v2821 = vpack.c.bf16 %v2819, %v2819
    %v2822 = vld [vmem:[%s4] sm:$0xff]
    %v2823 = vld [vmem:[%s4 + $0x8] sm:$0xff]
    %v2824 = vld [vmem:[%s4 + $0x10] sm:$0xff]
    %v2825 = vld [vmem:[%s4 + $0x18] sm:$0xff]
    %v2826 = vld [vmem:[%s4 + $0x20] sm:$0xff]
    %v2827 = vld [vmem:[%s4 + $0x28] sm:$0xff]
    %v2828 = vld [vmem:[%s4 + $0x30] sm:$0xff]
    %v2829 = vld [vmem:[%s4 + $0x38] sm:$0xff]
    %v2830 = vld [vmem:[%s4 + $0x40] sm:$0xff]
    %v2831 = vld [vmem:[%s4 + $0x48] sm:$0xff]
    %v2832 = vld [vmem:[%s4 + $0x50] sm:$0xff]
    %v2833 = vld [vmem:[%s4 + $0x58] sm:$0xff]
    %v2834 = vld [vmem:[%s4 + $0x60] sm:$0xff]
    %v2835 = vld [vmem:[%s4 + $0x68] sm:$0xff]
    %v2836 = vld [vmem:[%s4 + $0x70] sm:$0xff]
    %v2837 = vld [vmem:[%s4 + $0x78] sm:$0xff]
    %v2838 = vld [vmem:[%s4 + $0x80] sm:$0xff]
    %v2839 = vld [vmem:[%s4 + $0x88] sm:$0xff]
    %v2840 = vld [vmem:[%s4 + $0x90] sm:$0xff]
    %v2841 = vld [vmem:[%s4 + $0x98] sm:$0xff]
    %v2842 = vld [vmem:[%s4 + $0xa0] sm:$0xff]
    %v2843 = vld [vmem:[%s4 + $0xa8] sm:$0xff]
    %v2844 = vld [vmem:[%s4 + $0xb0] sm:$0xff]
    %v2845 = vld [vmem:[%s4 + $0xb8] sm:$0xff]
    %v2846 = vld [vmem:[%s4 + $0xc0] sm:$0xff]
    %v2847 = vld [vmem:[%s4 + $0xc8] sm:$0xff]
    %v2848 = vld [vmem:[%s4 + $0xd0] sm:$0xff]
    %v2849 = vld [vmem:[%s4 + $0xd8] sm:$0xff]
    %v2850 = vld [vmem:[%s4 + $0xe0] sm:$0xff]
    %v2851 = vld [vmem:[%s4 + $0xe8] sm:$0xff]
    %v2852 = vld [vmem:[%s4 + $0xf0] sm:$0xff]
    %v2853 = vld [vmem:[%s4 + $0xf8] sm:$0xff]
    %v2854 = vld [vmem:[%s4 + $0x100] sm:$0xff]
    %v2855 = vld [vmem:[%s4 + $0x108] sm:$0xff]
    %v2856 = vld [vmem:[%s4 + $0x110] sm:$0xff]
    %v2857 = vld [vmem:[%s4 + $0x118] sm:$0xff]
    %v2858 = vld [vmem:[%s4 + $0x120] sm:$0xff]
    %v2859 = vld [vmem:[%s4 + $0x128] sm:$0xff]
    %v2860 = vld [vmem:[%s4 + $0x130] sm:$0xff]
    %v2861 = vld [vmem:[%s4 + $0x138] sm:$0xff]
    %v2862 = vld [vmem:[%s4 + $0x140] sm:$0xff]
    %v2863 = vld [vmem:[%s4 + $0x148] sm:$0xff]
    %v2864 = vld [vmem:[%s4 + $0x150] sm:$0xff]
    %v2865 = vld [vmem:[%s4 + $0x158] sm:$0xff]
    %v2866 = vld [vmem:[%s4 + $0x160] sm:$0xff]
    %v2867 = vld [vmem:[%s4 + $0x168] sm:$0xff]
    %v2868 = vld [vmem:[%s4 + $0x170] sm:$0xff]
    %v2869 = vld [vmem:[%s4 + $0x178] sm:$0xff]
    %v2870 = vld [vmem:[%s4 + $0x180] sm:$0xff]
    %v2871 = vld [vmem:[%s4 + $0x188] sm:$0xff]
    %v2872 = vld [vmem:[%s4 + $0x190] sm:$0xff]
    %v2873 = vld [vmem:[%s4 + $0x198] sm:$0xff]
    %v2874 = vld [vmem:[%s4 + $0x1a0] sm:$0xff]
    %v2875 = vld [vmem:[%s4 + $0x1a8] sm:$0xff]
    %v2876 = vld [vmem:[%s4 + $0x1b0] sm:$0xff]
    %v2877 = vld [vmem:[%s4 + $0x1b8] sm:$0xff]
    %v2878 = vld [vmem:[%s4 + $0x1c0] sm:$0xff]
    %v2879 = vld [vmem:[%s4 + $0x1c8] sm:$0xff]
    %v2880 = vld [vmem:[%s4 + $0x1d0] sm:$0xff]
    %v2881 = vld [vmem:[%s4 + $0x1d8] sm:$0xff]
    %v2882 = vld [vmem:[%s4 + $0x1e0] sm:$0xff]
    %v2883 = vld [vmem:[%s4 + $0x1e8] sm:$0xff]
    %v2884 = vld [vmem:[%s4 + $0x1f0] sm:$0xff]
    %v2885 = vld [vmem:[%s4 + $0x1f8] sm:$0xff]
    %v2886 = vld [vmem:[%s5] sm:$0xff]
    %v2887 = vld [vmem:[%s5 + $0x8] sm:$0xff]
    %v2888 = vld [vmem:[%s5 + $0x10] sm:$0xff]
    %v2889 = vld [vmem:[%s5 + $0x18] sm:$0xff]
    %v2890 = vld [vmem:[%s5 + $0x20] sm:$0xff]
    %v2891 = vld [vmem:[%s5 + $0x28] sm:$0xff]
    %v2892 = vld [vmem:[%s5 + $0x30] sm:$0xff]
    %v2893 = vld [vmem:[%s5 + $0x38] sm:$0xff]
    %v2894 = vld [vmem:[%s5 + $0x40] sm:$0xff]
    %v2895 = vld [vmem:[%s5 + $0x48] sm:$0xff]
    %v2896 = vld [vmem:[%s5 + $0x50] sm:$0xff]
    %v2897 = vld [vmem:[%s5 + $0x58] sm:$0xff]
    %v2898 = vld [vmem:[%s5 + $0x60] sm:$0xff]
    %v2899 = vld [vmem:[%s5 + $0x68] sm:$0xff]
    %v2900 = vld [vmem:[%s5 + $0x70] sm:$0xff]
    %v2901 = vld [vmem:[%s5 + $0x78] sm:$0xff]
    %v2902 = vld [vmem:[%s5 + $0x80] sm:$0xff]
    %v2903 = vld [vmem:[%s5 + $0x88] sm:$0xff]
    %v2904 = vld [vmem:[%s5 + $0x90] sm:$0xff]
    %v2905 = vld [vmem:[%s5 + $0x98] sm:$0xff]
    %v2906 = vld [vmem:[%s5 + $0xa0] sm:$0xff]
    %v2907 = vld [vmem:[%s5 + $0xa8] sm:$0xff]
    %v2908 = vld [vmem:[%s5 + $0xb0] sm:$0xff]
    %v2909 = vld [vmem:[%s5 + $0xb8] sm:$0xff]
    %v2910 = vld [vmem:[%s5 + $0xc0] sm:$0xff]
    %v2911 = vld [vmem:[%s5 + $0xc8] sm:$0xff]
    %v2912 = vld [vmem:[%s5 + $0xd0] sm:$0xff]
    %v2913 = vld [vmem:[%s5 + $0xd8] sm:$0xff]
    %v2914 = vld [vmem:[%s5 + $0xe0] sm:$0xff]
    %v2915 = vld [vmem:[%s5 + $0xe8] sm:$0xff]
    %v2916 = vld [vmem:[%s5 + $0xf0] sm:$0xff]
    %v2917 = vld [vmem:[%s5 + $0xf8] sm:$0xff]
    %v2918 = vld [vmem:[%s5 + $0x100] sm:$0xff]
    %v2919 = vld [vmem:[%s5 + $0x108] sm:$0xff]
    %v2920 = vld [vmem:[%s5 + $0x110] sm:$0xff]
    %v2921 = vld [vmem:[%s5 + $0x118] sm:$0xff]
    %v2922 = vld [vmem:[%s5 + $0x120] sm:$0xff]
    %v2923 = vld [vmem:[%s5 + $0x128] sm:$0xff]
    %v2924 = vld [vmem:[%s5 + $0x130] sm:$0xff]
    %v2925 = vld [vmem:[%s5 + $0x138] sm:$0xff]
    %v2926 = vld [vmem:[%s5 + $0x140] sm:$0xff]
    %v2927 = vld [vmem:[%s5 + $0x148] sm:$0xff]
    %v2928 = vld [vmem:[%s5 + $0x150] sm:$0xff]
    %v2929 = vld [vmem:[%s5 + $0x158] sm:$0xff]
    %v2930 = vld [vmem:[%s5 + $0x160] sm:$0xff]
    %v2931 = vld [vmem:[%s5 + $0x168] sm:$0xff]
    %v2932 = vld [vmem:[%s5 + $0x170] sm:$0xff]
    %v2933 = vld [vmem:[%s5 + $0x178] sm:$0xff]
    %v2934 = vld [vmem:[%s5 + $0x180] sm:$0xff]
    %v2935 = vld [vmem:[%s5 + $0x188] sm:$0xff]
    %v2936 = vld [vmem:[%s5 + $0x190] sm:$0xff]
    %v2937 = vld [vmem:[%s5 + $0x198] sm:$0xff]
    %v2938 = vld [vmem:[%s5 + $0x1a0] sm:$0xff]
    %v2939 = vld [vmem:[%s5 + $0x1a8] sm:$0xff]
    %v2940 = vld [vmem:[%s5 + $0x1b0] sm:$0xff]
    %v2941 = vld [vmem:[%s5 + $0x1b8] sm:$0xff]
    %v2942 = vld [vmem:[%s5 + $0x1c0] sm:$0xff]
    %v2943 = vld [vmem:[%s5 + $0x1c8] sm:$0xff]
    %v2944 = vld [vmem:[%s5 + $0x1d0] sm:$0xff]
    %v2945 = vld [vmem:[%s5 + $0x1d8] sm:$0xff]
    %v2946 = vld [vmem:[%s5 + $0x1e0] sm:$0xff]
    %v2947 = vld [vmem:[%s5 + $0x1e8] sm:$0xff]
    %v2948 = vld [vmem:[%s5 + $0x1f0] sm:$0xff]
    %v2949 = vld [vmem:[%s5 + $0x1f8] sm:$0xff]
    %v3014 = vunpack.c.l.b16 %v2886
    %v3015 = vunpack.c.h.b16 %v2886
    %v3016 = vunpack.c.l.b16 %v2887
    %v3017 = vunpack.c.h.b16 %v2887
    %v3018 = vunpack.c.l.b16 %v2888
    %v3019 = vunpack.c.h.b16 %v2888
    %v3020 = vunpack.c.l.b16 %v2889
    %v3021 = vunpack.c.h.b16 %v2889
    %v3022 = vunpack.c.l.b16 %v2890
    %v3023 = vunpack.c.h.b16 %v2890
    %v3024 = vunpack.c.l.b16 %v2891
    %v3025 = vunpack.c.h.b16 %v2891
    %v3026 = vunpack.c.l.b16 %v2892
    %v3027 = vunpack.c.h.b16 %v2892
    %v3028 = vunpack.c.l.b16 %v2893
    %v3029 = vunpack.c.h.b16 %v2893
    %v3030 = vunpack.c.l.b16 %v2894
    %v3031 = vunpack.c.h.b16 %v2894
    %v3032 = vunpack.c.l.b16 %v2895
    %v3033 = vunpack.c.h.b16 %v2895
    %v3034 = vunpack.c.l.b16 %v2896
    %v3035 = vunpack.c.h.b16 %v2896
    %v3036 = vunpack.c.l.b16 %v2897
    %v3037 = vunpack.c.h.b16 %v2897
    %v3038 = vunpack.c.l.b16 %v2898
    %v3039 = vunpack.c.h.b16 %v2898
    %v3040 = vunpack.c.l.b16 %v2899
    %v3041 = vunpack.c.h.b16 %v2899
    %v3042 = vunpack.c.l.b16 %v2900
    %v3043 = vunpack.c.h.b16 %v2900
    %v3044 = vunpack.c.l.b16 %v2901
    %v3045 = vunpack.c.h.b16 %v2901
    %v3046 = vunpack.c.l.b16 %v2902
    %v3047 = vunpack.c.h.b16 %v2902
    %v3048 = vunpack.c.l.b16 %v2903
    %v3049 = vunpack.c.h.b16 %v2903
    %v3050 = vunpack.c.l.b16 %v2904
    %v3051 = vunpack.c.h.b16 %v2904
    %v3052 = vunpack.c.l.b16 %v2905
    %v3053 = vunpack.c.h.b16 %v2905
    %v3054 = vunpack.c.l.b16 %v2906
    %v3055 = vunpack.c.h.b16 %v2906
    %v3056 = vunpack.c.l.b16 %v2907
    %v3057 = vunpack.c.h.b16 %v2907
    %v3058 = vunpack.c.l.b16 %v2908
    %v3059 = vunpack.c.h.b16 %v2908
    %v3060 = vunpack.c.l.b16 %v2909
    %v3061 = vunpack.c.h.b16 %v2909
    %v3062 = vunpack.c.l.b16 %v2910
    %v3063 = vunpack.c.h.b16 %v2910
    %v3064 = vunpack.c.l.b16 %v2911
    %v3065 = vunpack.c.h.b16 %v2911
    %v3066 = vunpack.c.l.b16 %v2912
    %v3067 = vunpack.c.h.b16 %v2912
    %v3068 = vunpack.c.l.b16 %v2913
    %v3069 = vunpack.c.h.b16 %v2913
    %v3070 = vunpack.c.l.b16 %v2914
    %v3071 = vunpack.c.h.b16 %v2914
    %v3072 = vunpack.c.l.b16 %v2915
    %v3073 = vunpack.c.h.b16 %v2915
    %v3074 = vunpack.c.l.b16 %v2916
    %v3075 = vunpack.c.h.b16 %v2916
    %v3076 = vunpack.c.l.b16 %v2917
    %v3077 = vunpack.c.h.b16 %v2917
    %v3078 = vunpack.c.l.b16 %v2918
    %v3079 = vunpack.c.h.b16 %v2918
    %v3080 = vunpack.c.l.b16 %v2919
    %v3081 = vunpack.c.h.b16 %v2919
    %v3082 = vunpack.c.l.b16 %v2920
    %v3083 = vunpack.c.h.b16 %v2920
    %v3084 = vunpack.c.l.b16 %v2921
    %v3085 = vunpack.c.h.b16 %v2921
    %v3086 = vunpack.c.l.b16 %v2922
    %v3087 = vunpack.c.h.b16 %v2922
    %v3088 = vunpack.c.l.b16 %v2923
    %v3089 = vunpack.c.h.b16 %v2923
    %v3090 = vunpack.c.l.b16 %v2924
    %v3091 = vunpack.c.h.b16 %v2924
    %v3092 = vunpack.c.l.b16 %v2925
    %v3093 = vunpack.c.h.b16 %v2925
    %v3094 = vunpack.c.l.b16 %v2926
    %v3095 = vunpack.c.h.b16 %v2926
    %v3096 = vunpack.c.l.b16 %v2927
    %v3097 = vunpack.c.h.b16 %v2927
    %v3098 = vunpack.c.l.b16 %v2928
    %v3099 = vunpack.c.h.b16 %v2928
    %v3100 = vunpack.c.l.b16 %v2929
    %v3101 = vunpack.c.h.b16 %v2929
    %v3102 = vunpack.c.l.b16 %v2930
    %v3103 = vunpack.c.h.b16 %v2930
    %v3104 = vunpack.c.l.b16 %v2931
    %v3105 = vunpack.c.h.b16 %v2931
    %v3106 = vunpack.c.l.b16 %v2932
    %v3107 = vunpack.c.h.b16 %v2932
    %v3108 = vunpack.c.l.b16 %v2933
    %v3109 = vunpack.c.h.b16 %v2933
    %v3110 = vunpack.c.l.b16 %v2934
    %v3111 = vunpack.c.h.b16 %v2934
    %v3112 = vunpack.c.l.b16 %v2935
    %v3113 = vunpack.c.h.b16 %v2935
    %v3114 = vunpack.c.l.b16 %v2936
    %v3115 = vunpack.c.h.b16 %v2936
    %v3116 = vunpack.c.l.b16 %v2937
    %v3117 = vunpack.c.h.b16 %v2937
    %v3118 = vunpack.c.l.b16 %v2938
    %v3119 = vunpack.c.h.b16 %v2938
    %v3120 = vunpack.c.l.b16 %v2939
    %v3121 = vunpack.c.h.b16 %v2939
    %v3122 = vunpack.c.l.b16 %v2940
    %v3123 = vunpack.c.h.b16 %v2940
    %v3124 = vunpack.c.l.b16 %v2941
    %v3125 = vunpack.c.h.b16 %v2941
    %v3126 = vunpack.c.l.b16 %v2942
    %v3127 = vunpack.c.h.b16 %v2942
    %v3128 = vunpack.c.l.b16 %v2943
    %v3129 = vunpack.c.h.b16 %v2943
    %v3130 = vunpack.c.l.b16 %v2944
    %v3131 = vunpack.c.h.b16 %v2944
    %v3132 = vunpack.c.l.b16 %v2945
    %v3133 = vunpack.c.h.b16 %v2945
    %v3134 = vunpack.c.l.b16 %v2946
    %v3135 = vunpack.c.h.b16 %v2946
    %v3136 = vunpack.c.l.b16 %v2947
    %v3137 = vunpack.c.h.b16 %v2947
    %v3138 = vunpack.c.l.b16 %v2948
    %v3139 = vunpack.c.h.b16 %v2948
    %v3140 = vunpack.c.l.b16 %v2949
    %v3141 = vunpack.c.h.b16 %v2949
    %v3142 = vpack.c.b16 %v3018, %v3014
    %v3143 = vpack.c.b16 %v3019, %v3015
    %v3144 = vpack.c.b16 %v3020, %v3016
    %v3145 = vpack.c.b16 %v3021, %v3017
    %v3146 = vpack.c.b16 %v3026, %v3022
    %v3147 = vpack.c.b16 %v3027, %v3023
    %v3148 = vpack.c.b16 %v3028, %v3024
    %v3149 = vpack.c.b16 %v3029, %v3025
    %v3150 = vpack.c.b16 %v3034, %v3030
    %v3151 = vpack.c.b16 %v3035, %v3031
    %v3152 = vpack.c.b16 %v3036, %v3032
    %v3153 = vpack.c.b16 %v3037, %v3033
    %v3154 = vpack.c.b16 %v3042, %v3038
    %v3155 = vpack.c.b16 %v3043, %v3039
    %v3156 = vpack.c.b16 %v3044, %v3040
    %v3157 = vpack.c.b16 %v3045, %v3041
    %v3158 = vpack.c.b16 %v3050, %v3046
    %v3159 = vpack.c.b16 %v3051, %v3047
    %v3160 = vpack.c.b16 %v3052, %v3048
    %v3161 = vpack.c.b16 %v3053, %v3049
    %v3162 = vpack.c.b16 %v3058, %v3054
    %v3163 = vpack.c.b16 %v3059, %v3055
    %v3164 = vpack.c.b16 %v3060, %v3056
    %v3165 = vpack.c.b16 %v3061, %v3057
    %v3166 = vpack.c.b16 %v3066, %v3062
    %v3167 = vpack.c.b16 %v3067, %v3063
    %v3168 = vpack.c.b16 %v3068, %v3064
    %v3169 = vpack.c.b16 %v3069, %v3065
    %v3170 = vpack.c.b16 %v3074, %v3070
    %v3171 = vpack.c.b16 %v3075, %v3071
    %v3172 = vpack.c.b16 %v3076, %v3072
    %v3173 = vpack.c.b16 %v3077, %v3073
    %v3174 = vpack.c.b16 %v3082, %v3078
    %v3175 = vpack.c.b16 %v3083, %v3079
    %v3176 = vpack.c.b16 %v3084, %v3080
    %v3177 = vpack.c.b16 %v3085, %v3081
    %v3178 = vpack.c.b16 %v3090, %v3086
    %v3179 = vpack.c.b16 %v3091, %v3087
    %v3180 = vpack.c.b16 %v3092, %v3088
    %v3181 = vpack.c.b16 %v3093, %v3089
    %v3182 = vpack.c.b16 %v3098, %v3094
    %v3183 = vpack.c.b16 %v3099, %v3095
    %v3184 = vpack.c.b16 %v3100, %v3096
    %v3185 = vpack.c.b16 %v3101, %v3097
    %v3186 = vpack.c.b16 %v3106, %v3102
    %v3187 = vpack.c.b16 %v3107, %v3103
    %v3188 = vpack.c.b16 %v3108, %v3104
    %v3189 = vpack.c.b16 %v3109, %v3105
    %v3190 = vpack.c.b16 %v3114, %v3110
    %v3191 = vpack.c.b16 %v3115, %v3111
    %v3192 = vpack.c.b16 %v3116, %v3112
    %v3193 = vpack.c.b16 %v3117, %v3113
    %v3194 = vpack.c.b16 %v3122, %v3118
    %v3195 = vpack.c.b16 %v3123, %v3119
    %v3196 = vpack.c.b16 %v3124, %v3120
    %v3197 = vpack.c.b16 %v3125, %v3121
    %v3198 = vpack.c.b16 %v3130, %v3126
    %v3199 = vpack.c.b16 %v3131, %v3127
    %v3200 = vpack.c.b16 %v3132, %v3128
    %v3201 = vpack.c.b16 %v3133, %v3129
    %v3202 = vpack.c.b16 %v3138, %v3134
    %v3203 = vpack.c.b16 %v3139, %v3135
    %v3204 = vpack.c.b16 %v3140, %v3136
    %v3205 = vpack.c.b16 %v3141, %v3137
    %3270 = vmatprep.subr.bf16.mxu0 %v3143
    %3271 = vmatpush1.bf16.msra.mxu0 %v3142
    %3272 = vmatprep.subr.bf16.mxu0 %v3147
    %3273 = vmatpush1.bf16.msra.mxu0 %v3146
    %3274 = vmatprep.subr.bf16.mxu0 %v3151
    %3275 = vmatpush1.bf16.msra.mxu0 %v3150
    %3276 = vmatprep.subr.bf16.mxu0 %v3155
    %3277 = vmatpush1.bf16.msra.mxu0 %v3154
    %3278 = vmatprep.subr.bf16.mxu0 %v3159
    %3279 = vmatpush1.bf16.msra.mxu0 %v3158
    %3280 = vmatprep.subr.bf16.mxu0 %v3163
    %3281 = vmatpush1.bf16.msra.mxu0 %v3162
    %3282 = vmatprep.subr.bf16.mxu0 %v3167
    %3283 = vmatpush1.bf16.msra.mxu0 %v3166
    %3284 = vmatprep.subr.bf16.mxu0 %v3171
    %3285 = vmatpush1.bf16.msra.mxu0 %v3170
    %3286 = vmatprep.subr.bf16.mxu0 %v3175
    %3287 = vmatpush1.bf16.msra.mxu0 %v3174
    %3288 = vmatprep.subr.bf16.mxu0 %v3179
    %3289 = vmatpush1.bf16.msra.mxu0 %v3178
    %3290 = vmatprep.subr.bf16.mxu0 %v3183
    %3291 = vmatpush1.bf16.msra.mxu0 %v3182
    %3292 = vmatprep.subr.bf16.mxu0 %v3187
    %3293 = vmatpush1.bf16.msra.mxu0 %v3186
    %3294 = vmatprep.subr.bf16.mxu0 %v3191
    %3295 = vmatpush1.bf16.msra.mxu0 %v3190
    %3296 = vmatprep.subr.bf16.mxu0 %v3195
    %3297 = vmatpush1.bf16.msra.mxu0 %v3194
    %3298 = vmatprep.subr.bf16.mxu0 %v3199
    %3299 = vmatpush1.bf16.msra.mxu0 %v3198
    %3300 = vmatprep.subr.bf16.mxu0 %v3203
    %3301 = vmatpush1.bf16.msra.mxu0 %v3202
    %3302 = vmatprep.mubr.bf16.mxu0 %v2821
    %3303 = vmatmul.mubr.bf16.gmra.mrb[0].mxu0 %v2820
    %v3304 = vpop.f32.mrb[0].mxu0
    %v3305 = vadd.f32 0.0, %v3304
    %v3306 = vpop.f32.mrb[0].mxu0
    %v3307 = vadd.f32 0.0, %v3306
    %v3308 = vpop.f32.mrb[0].mxu0
    %v3309 = vpop.f32.mrb[0].mxu0
    %3310 = vdwg.mxu0
    %3311 = vmatprep.subr.bf16.mxu0 %v3145
    %3312 = vmatpush1.bf16.msra.mxu0 %v3144
    %3313 = vmatprep.subr.bf16.mxu0 %v3149
    %3314 = vmatpush1.bf16.msra.mxu0 %v3148
    %3315 = vmatprep.subr.bf16.mxu0 %v3153
    %3316 = vmatpush1.bf16.msra.mxu0 %v3152
    %3317 = vmatprep.subr.bf16.mxu0 %v3157
    %3318 = vmatpush1.bf16.msra.mxu0 %v3156
    %3319 = vmatprep.subr.bf16.mxu0 %v3161
    %3320 = vmatpush1.bf16.msra.mxu0 %v3160
    %3321 = vmatprep.subr.bf16.mxu0 %v3165
    %3322 = vmatpush1.bf16.msra.mxu0 %v3164
    %3323 = vmatprep.subr.bf16.mxu0 %v3169
    %3324 = vmatpush1.bf16.msra.mxu0 %v3168
    %3325 = vmatprep.subr.bf16.mxu0 %v3173
    %3326 = vmatpush1.bf16.msra.mxu0 %v3172
    %3327 = vmatprep.subr.bf16.mxu0 %v3177
    %3328 = vmatpush1.bf16.msra.mxu0 %v3176
    %3329 = vmatprep.subr.bf16.mxu0 %v3181
    %3330 = vmatpush1.bf16.msra.mxu0 %v3180
    %3331 = vmatprep.subr.bf16.mxu0 %v3185
    %3332 = vmatpush1.bf16.msra.mxu0 %v3184
    %3333 = vmatprep.subr.bf16.mxu0 %v3189
    %3334 = vmatpush1.bf16.msra.mxu0 %v3188
    %3335 = vmatprep.subr.bf16.mxu0 %v3193
    %3336 = vmatpush1.bf16.msra.mxu0 %v3192
    %3337 = vmatprep.subr.bf16.mxu0 %v3197
    %3338 = vmatpush1.bf16.msra.mxu0 %v3196
    %3339 = vmatprep.subr.bf16.mxu0 %v3201
    %3340 = vmatpush1.bf16.msra.mxu0 %v3200
    %3341 = vmatprep.subr.bf16.mxu0 %v3205
    %3342 = vmatpush1.bf16.msra.mxu0 %v3204
    %3343 = vmatprep.mubr.bf16.mxu0 %v2821
    %3344 = vmatmul.mubr.bf16.gmra.mrb[0].mxu0 %v2820
    %v3345 = vpop.f32.mrb[0].mxu0
    %v3346 = vadd.f32 0.0, %v3345
    %v3347 = vpop.f32.mrb[0].mxu0
    %v3348 = vadd.f32 0.0, %v3347
    %v3349 = vpop.f32.mrb[0].mxu0
    %v3350 = vpop.f32.mrb[0].mxu0
    %3351 = vdwg.mxu0
    %v3416 = vunpack.c.l.b16 %v2822
    %v3417 = vunpack.c.h.b16 %v2822
    %v3418 = vunpack.c.l.b16 %v2823
    %v3419 = vunpack.c.h.b16 %v2823
    %v3420 = vunpack.c.l.b16 %v2824
    %v3421 = vunpack.c.h.b16 %v2824
    %v3422 = vunpack.c.l.b16 %v2825
    %v3423 = vunpack.c.h.b16 %v2825
    %v3424 = vunpack.c.l.b16 %v2826
    %v3425 = vunpack.c.h.b16 %v2826
    %v3426 = vunpack.c.l.b16 %v2827
    %v3427 = vunpack.c.h.b16 %v2827
    %v3428 = vunpack.c.l.b16 %v2828
    %v3429 = vunpack.c.h.b16 %v2828
    %v3430 = vunpack.c.l.b16 %v2829
    %v3431 = vunpack.c.h.b16 %v2829
    %v3432 = vunpack.c.l.b16 %v2830
    %v3433 = vunpack.c.h.b16 %v2830
    %v3434 = vunpack.c.l.b16 %v2831
    %v3435 = vunpack.c.h.b16 %v2831
    %v3436 = vunpack.c.l.b16 %v2832
    %v3437 = vunpack.c.h.b16 %v2832
    %v3438 = vunpack.c.l.b16 %v2833
    %v3439 = vunpack.c.h.b16 %v2833
    %v3440 = vunpack.c.l.b16 %v2834
    %v3441 = vunpack.c.h.b16 %v2834
    %v3442 = vunpack.c.l.b16 %v2835
    %v3443 = vunpack.c.h.b16 %v2835
    %v3444 = vunpack.c.l.b16 %v2836
    %v3445 = vunpack.c.h.b16 %v2836
    %v3446 = vunpack.c.l.b16 %v2837
    %v3447 = vunpack.c.h.b16 %v2837
    %v3448 = vunpack.c.l.b16 %v2838
    %v3449 = vunpack.c.h.b16 %v2838
    %v3450 = vunpack.c.l.b16 %v2839
    %v3451 = vunpack.c.h.b16 %v2839
    %v3452 = vunpack.c.l.b16 %v2840
    %v3453 = vunpack.c.h.b16 %v2840
    %v3454 = vunpack.c.l.b16 %v2841
    %v3455 = vunpack.c.h.b16 %v2841
    %v3456 = vunpack.c.l.b16 %v2842
    %v3457 = vunpack.c.h.b16 %v2842
    %v3458 = vunpack.c.l.b16 %v2843
    %v3459 = vunpack.c.h.b16 %v2843
    %v3460 = vunpack.c.l.b16 %v2844
    %v3461 = vunpack.c.h.b16 %v2844
    %v3462 = vunpack.c.l.b16 %v2845
    %v3463 = vunpack.c.h.b16 %v2845
    %v3464 = vunpack.c.l.b16 %v2846
    %v3465 = vunpack.c.h.b16 %v2846
    %v3466 = vunpack.c.l.b16 %v2847
    %v3467 = vunpack.c.h.b16 %v2847
    %v3468 = vunpack.c.l.b16 %v2848
    %v3469 = vunpack.c.h.b16 %v2848
    %v3470 = vunpack.c.l.b16 %v2849
    %v3471 = vunpack.c.h.b16 %v2849
    %v3472 = vunpack.c.l.b16 %v2850
    %v3473 = vunpack.c.h.b16 %v2850
    %v3474 = vunpack.c.l.b16 %v2851
    %v3475 = vunpack.c.h.b16 %v2851
    %v3476 = vunpack.c.l.b16 %v2852
    %v3477 = vunpack.c.h.b16 %v2852
    %v3478 = vunpack.c.l.b16 %v2853
    %v3479 = vunpack.c.h.b16 %v2853
    %v3480 = vunpack.c.l.b16 %v2854
    %v3481 = vunpack.c.h.b16 %v2854
    %v3482 = vunpack.c.l.b16 %v2855
    %v3483 = vunpack.c.h.b16 %v2855
    %v3484 = vunpack.c.l.b16 %v2856
    %v3485 = vunpack.c.h.b16 %v2856
    %v3486 = vunpack.c.l.b16 %v2857
    %v3487 = vunpack.c.h.b16 %v2857
    %v3488 = vunpack.c.l.b16 %v2858
    %v3489 = vunpack.c.h.b16 %v2858
    %v3490 = vunpack.c.l.b16 %v2859
    %v3491 = vunpack.c.h.b16 %v2859
    %v3492 = vunpack.c.l.b16 %v2860
    %v3493 = vunpack.c.h.b16 %v2860
    %v3494 = vunpack.c.l.b16 %v2861
    %v3495 = vunpack.c.h.b16 %v2861
    %v3496 = vunpack.c.l.b16 %v2862
    %v3497 = vunpack.c.h.b16 %v2862
    %v3498 = vunpack.c.l.b16 %v2863
    %v3499 = vunpack.c.h.b16 %v2863
    %v3500 = vunpack.c.l.b16 %v2864
    %v3501 = vunpack.c.h.b16 %v2864
    %v3502 = vunpack.c.l.b16 %v2865
    %v3503 = vunpack.c.h.b16 %v2865
    %v3504 = vunpack.c.l.b16 %v2866
    %v3505 = vunpack.c.h.b16 %v2866
    %v3506 = vunpack.c.l.b16 %v2867
    %v3507 = vunpack.c.h.b16 %v2867
    %v3508 = vunpack.c.l.b16 %v2868
    %v3509 = vunpack.c.h.b16 %v2868
    %v3510 = vunpack.c.l.b16 %v2869
    %v3511 = vunpack.c.h.b16 %v2869
    %v3512 = vunpack.c.l.b16 %v2870
    %v3513 = vunpack.c.h.b16 %v2870
    %v3514 = vunpack.c.l.b16 %v2871
    %v3515 = vunpack.c.h.b16 %v2871
    %v3516 = vunpack.c.l.b16 %v2872
    %v3517 = vunpack.c.h.b16 %v2872
    %v3518 = vunpack.c.l.b16 %v2873
    %v3519 = vunpack.c.h.b16 %v2873
    %v3520 = vunpack.c.l.b16 %v2874
    %v3521 = vunpack.c.h.b16 %v2874
    %v3522 = vunpack.c.l.b16 %v2875
    %v3523 = vunpack.c.h.b16 %v2875
    %v3524 = vunpack.c.l.b16 %v2876
    %v3525 = vunpack.c.h.b16 %v2876
    %v3526 = vunpack.c.l.b16 %v2877
    %v3527 = vunpack.c.h.b16 %v2877
    %v3528 = vunpack.c.l.b16 %v2878
    %v3529 = vunpack.c.h.b16 %v2878
    %v3530 = vunpack.c.l.b16 %v2879
    %v3531 = vunpack.c.h.b16 %v2879
    %v3532 = vunpack.c.l.b16 %v2880
    %v3533 = vunpack.c.h.b16 %v2880
    %v3534 = vunpack.c.l.b16 %v2881
    %v3535 = vunpack.c.h.b16 %v2881
    %v3536 = vunpack.c.l.b16 %v2882
    %v3537 = vunpack.c.h.b16 %v2882
    %v3538 = vunpack.c.l.b16 %v2883
    %v3539 = vunpack.c.h.b16 %v2883
    %v3540 = vunpack.c.l.b16 %v2884
    %v3541 = vunpack.c.h.b16 %v2884
    %v3542 = vunpack.c.l.b16 %v2885
    %v3543 = vunpack.c.h.b16 %v2885
    %v3544 = vpack.c.b16 %v3420, %v3416
    %v3545 = vpack.c.b16 %v3421, %v3417
    %v3546 = vpack.c.b16 %v3422, %v3418
    %v3547 = vpack.c.b16 %v3423, %v3419
    %v3548 = vpack.c.b16 %v3428, %v3424
    %v3549 = vpack.c.b16 %v3429, %v3425
    %v3550 = vpack.c.b16 %v3430, %v3426
    %v3551 = vpack.c.b16 %v3431, %v3427
    %v3552 = vpack.c.b16 %v3436, %v3432
    %v3553 = vpack.c.b16 %v3437, %v3433
    %v3554 = vpack.c.b16 %v3438, %v3434
    %v3555 = vpack.c.b16 %v3439, %v3435
    %v3556 = vpack.c.b16 %v3444, %v3440
    %v3557 = vpack.c.b16 %v3445, %v3441
    %v3558 = vpack.c.b16 %v3446, %v3442
    %v3559 = vpack.c.b16 %v3447, %v3443
    %v3560 = vpack.c.b16 %v3452, %v3448
    %v3561 = vpack.c.b16 %v3453, %v3449
    %v3562 = vpack.c.b16 %v3454, %v3450
    %v3563 = vpack.c.b16 %v3455, %v3451
    %v3564 = vpack.c.b16 %v3460, %v3456
    %v3565 = vpack.c.b16 %v3461, %v3457
    %v3566 = vpack.c.b16 %v3462, %v3458
    %v3567 = vpack.c.b16 %v3463, %v3459
    %v3568 = vpack.c.b16 %v3468, %v3464
    %v3569 = vpack.c.b16 %v3469, %v3465
    %v3570 = vpack.c.b16 %v3470, %v3466
    %v3571 = vpack.c.b16 %v3471, %v3467
    %v3572 = vpack.c.b16 %v3476, %v3472
    %v3573 = vpack.c.b16 %v3477, %v3473
    %v3574 = vpack.c.b16 %v3478, %v3474
    %v3575 = vpack.c.b16 %v3479, %v3475
    %v3576 = vpack.c.b16 %v3484, %v3480
    %v3577 = vpack.c.b16 %v3485, %v3481
    %v3578 = vpack.c.b16 %v3486, %v3482
    %v3579 = vpack.c.b16 %v3487, %v3483
    %v3580 = vpack.c.b16 %v3492, %v3488
    %v3581 = vpack.c.b16 %v3493, %v3489
    %v3582 = vpack.c.b16 %v3494, %v3490
    %v3583 = vpack.c.b16 %v3495, %v3491
    %v3584 = vpack.c.b16 %v3500, %v3496
    %v3585 = vpack.c.b16 %v3501, %v3497
    %v3586 = vpack.c.b16 %v3502, %v3498
    %v3587 = vpack.c.b16 %v3503, %v3499
    %v3588 = vpack.c.b16 %v3508, %v3504
    %v3589 = vpack.c.b16 %v3509, %v3505
    %v3590 = vpack.c.b16 %v3510, %v3506
    %v3591 = vpack.c.b16 %v3511, %v3507
    %v3592 = vpack.c.b16 %v3516, %v3512
    %v3593 = vpack.c.b16 %v3517, %v3513
    %v3594 = vpack.c.b16 %v3518, %v3514
    %v3595 = vpack.c.b16 %v3519, %v3515
    %v3596 = vpack.c.b16 %v3524, %v3520
    %v3597 = vpack.c.b16 %v3525, %v3521
    %v3598 = vpack.c.b16 %v3526, %v3522
    %v3599 = vpack.c.b16 %v3527, %v3523
    %v3600 = vpack.c.b16 %v3532, %v3528
    %v3601 = vpack.c.b16 %v3533, %v3529
    %v3602 = vpack.c.b16 %v3534, %v3530
    %v3603 = vpack.c.b16 %v3535, %v3531
    %v3604 = vpack.c.b16 %v3540, %v3536
    %v3605 = vpack.c.b16 %v3541, %v3537
    %v3606 = vpack.c.b16 %v3542, %v3538
    %v3607 = vpack.c.b16 %v3543, %v3539
    %3672 = vmatprep.subr.bf16.mxu0 %v3545
    %3673 = vmatpush1.bf16.msra.mxu0 %v3544
    %3674 = vmatprep.subr.bf16.mxu0 %v3549
    %3675 = vmatpush1.bf16.msra.mxu0 %v3548
    %3676 = vmatprep.subr.bf16.mxu0 %v3553
    %3677 = vmatpush1.bf16.msra.mxu0 %v3552
    %3678 = vmatprep.subr.bf16.mxu0 %v3557
    %3679 = vmatpush1.bf16.msra.mxu0 %v3556
    %3680 = vmatprep.subr.bf16.mxu0 %v3561
    %3681 = vmatpush1.bf16.msra.mxu0 %v3560
    %3682 = vmatprep.subr.bf16.mxu0 %v3565
    %3683 = vmatpush1.bf16.msra.mxu0 %v3564
    %3684 = vmatprep.subr.bf16.mxu0 %v3569
    %3685 = vmatpush1.bf16.msra.mxu0 %v3568
    %3686 = vmatprep.subr.bf16.mxu0 %v3573
    %3687 = vmatpush1.bf16.msra.mxu0 %v3572
    %3688 = vmatprep.subr.bf16.mxu0 %v3577
    %3689 = vmatpush1.bf16.msra.mxu0 %v3576
    %3690 = vmatprep.subr.bf16.mxu0 %v3581
    %3691 = vmatpush1.bf16.msra.mxu0 %v3580
    %3692 = vmatprep.subr.bf16.mxu0 %v3585
    %3693 = vmatpush1.bf16.msra.mxu0 %v3584
    %3694 = vmatprep.subr.bf16.mxu0 %v3589
    %3695 = vmatpush1.bf16.msra.mxu0 %v3588
    %3696 = vmatprep.subr.bf16.mxu0 %v3593
    %3697 = vmatpush1.bf16.msra.mxu0 %v3592
    %3698 = vmatprep.subr.bf16.mxu0 %v3597
    %3699 = vmatpush1.bf16.msra.mxu0 %v3596
    %3700 = vmatprep.subr.bf16.mxu0 %v3601
    %3701 = vmatpush1.bf16.msra.mxu0 %v3600
    %3702 = vmatprep.subr.bf16.mxu0 %v3605
    %3703 = vmatpush1.bf16.msra.mxu0 %v3604
    %3704 = vmatprep.mubr.bf16.mxu0 %v2817
    %3705 = vmatmul.mubr.bf16.gmra.mrb[0].mxu0 %v2816
    %v3706 = vpop.f32.mrb[0].mxu0
    %v3707 = vadd.f32 %v3305, %v3706
    %v3708 = vpop.f32.mrb[0].mxu0
    %v3709 = vadd.f32 %v3307, %v3708
    %v3710 = vpop.f32.mrb[0].mxu0
    %v3711 = vpop.f32.mrb[0].mxu0
    %3712 = vdwg.mxu0
    %3713 = vmatprep.subr.bf16.mxu0 %v3547
    %3714 = vmatpush1.bf16.msra.mxu0 %v3546
    %3715 = vmatprep.subr.bf16.mxu0 %v3551
    %3716 = vmatpush1.bf16.msra.mxu0 %v3550
    %3717 = vmatprep.subr.bf16.mxu0 %v3555
    %3718 = vmatpush1.bf16.msra.mxu0 %v3554
    %3719 = vmatprep.subr.bf16.mxu0 %v3559
    %3720 = vmatpush1.bf16.msra.mxu0 %v3558
    %3721 = vmatprep.subr.bf16.mxu0 %v3563
    %3722 = vmatpush1.bf16.msra.mxu0 %v3562
    %3723 = vmatprep.subr.bf16.mxu0 %v3567
    %3724 = vmatpush1.bf16.msra.mxu0 %v3566
    %3725 = vmatprep.subr.bf16.mxu0 %v3571
    %3726 = vmatpush1.bf16.msra.mxu0 %v3570
    %3727 = vmatprep.subr.bf16.mxu0 %v3575
    %3728 = vmatpush1.bf16.msra.mxu0 %v3574
    %3729 = vmatprep.subr.bf16.mxu0 %v3579
    %3730 = vmatpush1.bf16.msra.mxu0 %v3578
    %3731 = vmatprep.subr.bf16.mxu0 %v3583
    %3732 = vmatpush1.bf16.msra.mxu0 %v3582
    %3733 = vmatprep.subr.bf16.mxu0 %v3587
    %3734 = vmatpush1.bf16.msra.mxu0 %v3586
    %3735 = vmatprep.subr.bf16.mxu0 %v3591
    %3736 = vmatpush1.bf16.msra.mxu0 %v3590
    %3737 = vmatprep.subr.bf16.mxu0 %v3595
    %3738 = vmatpush1.bf16.msra.mxu0 %v3594
    %3739 = vmatprep.subr.bf16.mxu0 %v3599
    %3740 = vmatpush1.bf16.msra.mxu0 %v3598
    %3741 = vmatprep.subr.bf16.mxu0 %v3603
    %3742 = vmatpush1.bf16.msra.mxu0 %v3602
    %3743 = vmatprep.subr.bf16.mxu0 %v3607
    %3744 = vmatpush1.bf16.msra.mxu0 %v3606
    %3745 = vmatprep.mubr.bf16.mxu0 %v2817
    %3746 = vmatmul.mubr.bf16.gmra.mrb[0].mxu0 %v2816
    %v3747 = vpop.f32.mrb[0].mxu0
    %v3748 = vadd.f32 %v3346, %v3747
    %v3749 = vpop.f32.mrb[0].mxu0
    %v3750 = vadd.f32 %v3348, %v3749
    %v3751 = vpop.f32.mrb[0].mxu0
    %v3752 = vpop.f32.mrb[0].mxu0
    %3753 = vdwg.mxu0
    %v3754 = vld [vmem:[%s6] sm:$0xf]
    %v3756 = vlaneseq
    %v3757 = vshrl.u32 %v3756, 7
    %v3758 = vsub.s32 0, %v3757
    %v3759 = vrot.slane %v3754, %v3758
    %v3760 = vlaneseq
    %v3761 = vshrl.u32 %v3760, 7
    %v3762 = vsub.s32 1, %v3761
    %v3763 = vrot.slane %v3754, %v3762
    %v3764 = vlaneseq
    %v3765 = vshrl.u32 %v3764, 7
    %v3766 = vsub.s32 2, %v3765
    %v3767 = vrot.slane %v3754, %v3766
    %v3768 = vlaneseq
    %v3769 = vshrl.u32 %v3768, 7
    %v3770 = vsub.s32 3, %v3769
    %v3771 = vrot.slane %v3754, %v3770
    %v3776 = vadd.f32 %v3707, %v3759
    %v3777 = vadd.f32 %v3709, %v3763
    %v3778 = vadd.f32 %v3748, %v3767
    %v3779 = vadd.f32 %v3750, %v3771
    %vm3780 = vcmp.gt.f32.partialorder %v3776, 0.0
    %vm3781 = vcmp.gt.f32.partialorder %v3777, 0.0
    %vm3782 = vcmp.gt.f32.partialorder %v3778, 0.0
    %vm3783 = vcmp.gt.f32.partialorder %v3779, 0.0
    %v3784 = vmul.f32 %v3776, 0.01
    %v3785 = vmul.f32 %v3777, 0.01
    %v3786 = vmul.f32 %v3778, 0.01
    %v3787 = vmul.f32 %v3779, 0.01
    %v3788 = vsel %vm3780, %v3776, %v3784
    %v3789 = vsel %vm3781, %v3777, %v3785
    %v3790 = vsel %vm3782, %v3778, %v3786
    %v3791 = vsel %vm3783, %v3779, %v3787
    %v3792 = vpack.c.bf16 %v3788, %v3788
    %v3793 = vpack.c.bf16 %v3789, %v3789
    %v3794 = vpack.c.bf16 %v3790, %v3790
    %v3795 = vpack.c.bf16 %v3791, %v3791
    %v3796 = vld [vmem:[%s7] sm:$0xff]
    %v3797 = vld [vmem:[%s7 + $0x8] sm:$0xff]
    %v3798 = vld [vmem:[%s7 + $0x10] sm:$0xff]
    %v3799 = vld [vmem:[%s7 + $0x18] sm:$0xff]
    %v3800 = vld [vmem:[%s7 + $0x20] sm:$0xff]
    %v3801 = vld [vmem:[%s7 + $0x28] sm:$0xff]
    %v3802 = vld [vmem:[%s7 + $0x30] sm:$0xff]
    %v3803 = vld [vmem:[%s7 + $0x38] sm:$0xff]
    %v3804 = vld [vmem:[%s7 + $0x40] sm:$0xff]
    %v3805 = vld [vmem:[%s7 + $0x48] sm:$0xff]
    %v3806 = vld [vmem:[%s7 + $0x50] sm:$0xff]
    %v3807 = vld [vmem:[%s7 + $0x58] sm:$0xff]
    %v3808 = vld [vmem:[%s7 + $0x60] sm:$0xff]
    %v3809 = vld [vmem:[%s7 + $0x68] sm:$0xff]
    %v3810 = vld [vmem:[%s7 + $0x70] sm:$0xff]
    %v3811 = vld [vmem:[%s7 + $0x78] sm:$0xff]
    %v3812 = vld [vmem:[%s7 + $0x80] sm:$0xff]
    %v3813 = vld [vmem:[%s7 + $0x88] sm:$0xff]
    %v3814 = vld [vmem:[%s7 + $0x90] sm:$0xff]
    %v3815 = vld [vmem:[%s7 + $0x98] sm:$0xff]
    %v3816 = vld [vmem:[%s7 + $0xa0] sm:$0xff]
    %v3817 = vld [vmem:[%s7 + $0xa8] sm:$0xff]
    %v3818 = vld [vmem:[%s7 + $0xb0] sm:$0xff]
    %v3819 = vld [vmem:[%s7 + $0xb8] sm:$0xff]
    %v3820 = vld [vmem:[%s7 + $0xc0] sm:$0xff]
    %v3821 = vld [vmem:[%s7 + $0xc8] sm:$0xff]
    %v3822 = vld [vmem:[%s7 + $0xd0] sm:$0xff]
    %v3823 = vld [vmem:[%s7 + $0xd8] sm:$0xff]
    %v3824 = vld [vmem:[%s7 + $0xe0] sm:$0xff]
    %v3825 = vld [vmem:[%s7 + $0xe8] sm:$0xff]
    %v3826 = vld [vmem:[%s7 + $0xf0] sm:$0xff]
    %v3827 = vld [vmem:[%s7 + $0xf8] sm:$0xff]
    %v3828 = vld [vmem:[%s7 + $0x100] sm:$0xff]
    %v3829 = vld [vmem:[%s7 + $0x108] sm:$0xff]
    %v3830 = vld [vmem:[%s7 + $0x110] sm:$0xff]
    %v3831 = vld [vmem:[%s7 + $0x118] sm:$0xff]
    %v3832 = vld [vmem:[%s7 + $0x120] sm:$0xff]
    %v3833 = vld [vmem:[%s7 + $0x128] sm:$0xff]
    %v3834 = vld [vmem:[%s7 + $0x130] sm:$0xff]
    %v3835 = vld [vmem:[%s7 + $0x138] sm:$0xff]
    %v3836 = vld [vmem:[%s7 + $0x140] sm:$0xff]
    %v3837 = vld [vmem:[%s7 + $0x148] sm:$0xff]
    %v3838 = vld [vmem:[%s7 + $0x150] sm:$0xff]
    %v3839 = vld [vmem:[%s7 + $0x158] sm:$0xff]
    %v3840 = vld [vmem:[%s7 + $0x160] sm:$0xff]
    %v3841 = vld [vmem:[%s7 + $0x168] sm:$0xff]
    %v3842 = vld [vmem:[%s7 + $0x170] sm:$0xff]
    %v3843 = vld [vmem:[%s7 + $0x178] sm:$0xff]
    %v3844 = vld [vmem:[%s7 + $0x180] sm:$0xff]
    %v3845 = vld [vmem:[%s7 + $0x188] sm:$0xff]
    %v3846 = vld [vmem:[%s7 + $0x190] sm:$0xff]
    %v3847 = vld [vmem:[%s7 + $0x198] sm:$0xff]
    %v3848 = vld [vmem:[%s7 + $0x1a0] sm:$0xff]
    %v3849 = vld [vmem:[%s7 + $0x1a8] sm:$0xff]
    %v3850 = vld [vmem:[%s7 + $0x1b0] sm:$0xff]
    %v3851 = vld [vmem:[%s7 + $0x1b8] sm:$0xff]
    %v3852 = vld [vmem:[%s7 + $0x1c0] sm:$0xff]
    %v3853 = vld [vmem:[%s7 + $0x1c8] sm:$0xff]
    %v3854 = vld [vmem:[%s7 + $0x1d0] sm:$0xff]
    %v3855 = vld [vmem:[%s7 + $0x1d8] sm:$0xff]
    %v3856 = vld [vmem:[%s7 + $0x1e0] sm:$0xff]
    %v3857 = vld [vmem:[%s7 + $0x1e8] sm:$0xff]
    %v3858 = vld [vmem:[%s7 + $0x1f0] sm:$0xff]
    %v3859 = vld [vmem:[%s7 + $0x1f8] sm:$0xff]
    %v3860 = vld [vmem:[%s8] sm:$0x3]
    %v3925 = vunpack.c.l.b16 %v3796
    %v3926 = vunpack.c.h.b16 %v3796
    %v3927 = vunpack.c.l.b16 %v3797
    %v3928 = vunpack.c.h.b16 %v3797
    %v3929 = vunpack.c.l.b16 %v3798
    %v3930 = vunpack.c.h.b16 %v3798
    %v3931 = vunpack.c.l.b16 %v3799
    %v3932 = vunpack.c.h.b16 %v3799
    %v3933 = vunpack.c.l.b16 %v3800
    %v3934 = vunpack.c.h.b16 %v3800
    %v3935 = vunpack.c.l.b16 %v3801
    %v3936 = vunpack.c.h.b16 %v3801
    %v3937 = vunpack.c.l.b16 %v3802
    %v3938 = vunpack.c.h.b16 %v3802
    %v3939 = vunpack.c.l.b16 %v3803
    %v3940 = vunpack.c.h.b16 %v3803
    %v3941 = vunpack.c.l.b16 %v3804
    %v3942 = vunpack.c.h.b16 %v3804
    %v3943 = vunpack.c.l.b16 %v3805
    %v3944 = vunpack.c.h.b16 %v3805
    %v3945 = vunpack.c.l.b16 %v3806
    %v3946 = vunpack.c.h.b16 %v3806
    %v3947 = vunpack.c.l.b16 %v3807
    %v3948 = vunpack.c.h.b16 %v3807
    %v3949 = vunpack.c.l.b16 %v3808
    %v3950 = vunpack.c.h.b16 %v3808
    %v3951 = vunpack.c.l.b16 %v3809
    %v3952 = vunpack.c.h.b16 %v3809
    %v3953 = vunpack.c.l.b16 %v3810
    %v3954 = vunpack.c.h.b16 %v3810
    %v3955 = vunpack.c.l.b16 %v3811
    %v3956 = vunpack.c.h.b16 %v3811
    %v3957 = vunpack.c.l.b16 %v3812
    %v3958 = vunpack.c.h.b16 %v3812
    %v3959 = vunpack.c.l.b16 %v3813
    %v3960 = vunpack.c.h.b16 %v3813
    %v3961 = vunpack.c.l.b16 %v3814
    %v3962 = vunpack.c.h.b16 %v3814
    %v3963 = vunpack.c.l.b16 %v3815
    %v3964 = vunpack.c.h.b16 %v3815
    %v3965 = vunpack.c.l.b16 %v3816
    %v3966 = vunpack.c.h.b16 %v3816
    %v3967 = vunpack.c.l.b16 %v3817
    %v3968 = vunpack.c.h.b16 %v3817
    %v3969 = vunpack.c.l.b16 %v3818
    %v3970 = vunpack.c.h.b16 %v3818
    %v3971 = vunpack.c.l.b16 %v3819
    %v3972 = vunpack.c.h.b16 %v3819
    %v3973 = vunpack.c.l.b16 %v3820
    %v3974 = vunpack.c.h.b16 %v3820
    %v3975 = vunpack.c.l.b16 %v3821
    %v3976 = vunpack.c.h.b16 %v3821
    %v3977 = vunpack.c.l.b16 %v3822
    %v3978 = vunpack.c.h.b16 %v3822
    %v3979 = vunpack.c.l.b16 %v3823
    %v3980 = vunpack.c.h.b16 %v3823
    %v3981 = vunpack.c.l.b16 %v3824
    %v3982 = vunpack.c.h.b16 %v3824
    %v3983 = vunpack.c.l.b16 %v3825
    %v3984 = vunpack.c.h.b16 %v3825
    %v3985 = vunpack.c.l.b16 %v3826
    %v3986 = vunpack.c.h.b16 %v3826
    %v3987 = vunpack.c.l.b16 %v3827
    %v3988 = vunpack.c.h.b16 %v3827
    %v3989 = vunpack.c.l.b16 %v3828
    %v3990 = vunpack.c.h.b16 %v3828
    %v3991 = vunpack.c.l.b16 %v3829
    %v3992 = vunpack.c.h.b16 %v3829
    %v3993 = vunpack.c.l.b16 %v3830
    %v3994 = vunpack.c.h.b16 %v3830
    %v3995 = vunpack.c.l.b16 %v3831
    %v3996 = vunpack.c.h.b16 %v3831
    %v3997 = vunpack.c.l.b16 %v3832
    %v3998 = vunpack.c.h.b16 %v3832
    %v3999 = vunpack.c.l.b16 %v3833
    %v4000 = vunpack.c.h.b16 %v3833
    %v4001 = vunpack.c.l.b16 %v3834
    %v4002 = vunpack.c.h.b16 %v3834
    %v4003 = vunpack.c.l.b16 %v3835
    %v4004 = vunpack.c.h.b16 %v3835
    %v4005 = vunpack.c.l.b16 %v3836
    %v4006 = vunpack.c.h.b16 %v3836
    %v4007 = vunpack.c.l.b16 %v3837
    %v4008 = vunpack.c.h.b16 %v3837
    %v4009 = vunpack.c.l.b16 %v3838
    %v4010 = vunpack.c.h.b16 %v3838
    %v4011 = vunpack.c.l.b16 %v3839
    %v4012 = vunpack.c.h.b16 %v3839
    %v4013 = vunpack.c.l.b16 %v3840
    %v4014 = vunpack.c.h.b16 %v3840
    %v4015 = vunpack.c.l.b16 %v3841
    %v4016 = vunpack.c.h.b16 %v3841
    %v4017 = vunpack.c.l.b16 %v3842
    %v4018 = vunpack.c.h.b16 %v3842
    %v4019 = vunpack.c.l.b16 %v3843
    %v4020 = vunpack.c.h.b16 %v3843
    %v4021 = vunpack.c.l.b16 %v3844
    %v4022 = vunpack.c.h.b16 %v3844
    %v4023 = vunpack.c.l.b16 %v3845
    %v4024 = vunpack.c.h.b16 %v3845
    %v4025 = vunpack.c.l.b16 %v3846
    %v4026 = vunpack.c.h.b16 %v3846
    %v4027 = vunpack.c.l.b16 %v3847
    %v4028 = vunpack.c.h.b16 %v3847
    %v4029 = vunpack.c.l.b16 %v3848
    %v4030 = vunpack.c.h.b16 %v3848
    %v4031 = vunpack.c.l.b16 %v3849
    %v4032 = vunpack.c.h.b16 %v3849
    %v4033 = vunpack.c.l.b16 %v3850
    %v4034 = vunpack.c.h.b16 %v3850
    %v4035 = vunpack.c.l.b16 %v3851
    %v4036 = vunpack.c.h.b16 %v3851
    %v4037 = vunpack.c.l.b16 %v3852
    %v4038 = vunpack.c.h.b16 %v3852
    %v4039 = vunpack.c.l.b16 %v3853
    %v4040 = vunpack.c.h.b16 %v3853
    %v4041 = vunpack.c.l.b16 %v3854
    %v4042 = vunpack.c.h.b16 %v3854
    %v4043 = vunpack.c.l.b16 %v3855
    %v4044 = vunpack.c.h.b16 %v3855
    %v4045 = vunpack.c.l.b16 %v3856
    %v4046 = vunpack.c.h.b16 %v3856
    %v4047 = vunpack.c.l.b16 %v3857
    %v4048 = vunpack.c.h.b16 %v3857
    %v4049 = vunpack.c.l.b16 %v3858
    %v4050 = vunpack.c.h.b16 %v3858
    %v4051 = vunpack.c.l.b16 %v3859
    %v4052 = vunpack.c.h.b16 %v3859
    %v4053 = vpack.c.b16 %v3927, %v3925
    %v4054 = vpack.c.b16 %v3928, %v3926
    %v4055 = vpack.c.b16 %v3931, %v3929
    %v4056 = vpack.c.b16 %v3932, %v3930
    %v4057 = vpack.c.b16 %v3935, %v3933
    %v4058 = vpack.c.b16 %v3936, %v3934
    %v4059 = vpack.c.b16 %v3939, %v3937
    %v4060 = vpack.c.b16 %v3940, %v3938
    %v4061 = vpack.c.b16 %v3943, %v3941
    %v4062 = vpack.c.b16 %v3944, %v3942
    %v4063 = vpack.c.b16 %v3947, %v3945
    %v4064 = vpack.c.b16 %v3948, %v3946
    %v4065 = vpack.c.b16 %v3951, %v3949
    %v4066 = vpack.c.b16 %v3952, %v3950
    %v4067 = vpack.c.b16 %v3955, %v3953
    %v4068 = vpack.c.b16 %v3956, %v3954
    %v4069 = vpack.c.b16 %v3959, %v3957
    %v4070 = vpack.c.b16 %v3960, %v3958
    %v4071 = vpack.c.b16 %v3963, %v3961
    %v4072 = vpack.c.b16 %v3964, %v3962
    %v4073 = vpack.c.b16 %v3967, %v3965
    %v4074 = vpack.c.b16 %v3968, %v3966
    %v4075 = vpack.c.b16 %v3971, %v3969
    %v4076 = vpack.c.b16 %v3972, %v3970
    %v4077 = vpack.c.b16 %v3975, %v3973
    %v4078 = vpack.c.b16 %v3976, %v3974
    %v4079 = vpack.c.b16 %v3979, %v3977
    %v4080 = vpack.c.b16 %v3980, %v3978
    %v4081 = vpack.c.b16 %v3983, %v3981
    %v4082 = vpack.c.b16 %v3984, %v3982
    %v4083 = vpack.c.b16 %v3987, %v3985
    %v4084 = vpack.c.b16 %v3988, %v3986
    %v4085 = vpack.c.b16 %v3991, %v3989
    %v4086 = vpack.c.b16 %v3992, %v3990
    %v4087 = vpack.c.b16 %v3995, %v3993
    %v4088 = vpack.c.b16 %v3996, %v3994
    %v4089 = vpack.c.b16 %v3999, %v3997
    %v4090 = vpack.c.b16 %v4000, %v3998
    %v4091 = vpack.c.b16 %v4003, %v4001
    %v4092 = vpack.c.b16 %v4004, %v4002
    %v4093 = vpack.c.b16 %v4007, %v4005
    %v4094 = vpack.c.b16 %v4008, %v4006
    %v4095 = vpack.c.b16 %v4011, %v4009
    %v4096 = vpack.c.b16 %v4012, %v4010
    %v4097 = vpack.c.b16 %v4015, %v4013
    %v4098 = vpack.c.b16 %v4016, %v4014
    %v4099 = vpack.c.b16 %v4019, %v4017
    %v4100 = vpack.c.b16 %v4020, %v4018
    %v4101 = vpack.c.b16 %v4023, %v4021
    %v4102 = vpack.c.b16 %v4024, %v4022
    %v4103 = vpack.c.b16 %v4027, %v4025
    %v4104 = vpack.c.b16 %v4028, %v4026
    %v4105 = vpack.c.b16 %v4031, %v4029
    %v4106 = vpack.c.b16 %v4032, %v4030
    %v4107 = vpack.c.b16 %v4035, %v4033
    %v4108 = vpack.c.b16 %v4036, %v4034
    %v4109 = vpack.c.b16 %v4039, %v4037
    %v4110 = vpack.c.b16 %v4040, %v4038
    %v4111 = vpack.c.b16 %v4043, %v4041
    %v4112 = vpack.c.b16 %v4044, %v4042
    %v4113 = vpack.c.b16 %v4047, %v4045
    %v4114 = vpack.c.b16 %v4048, %v4046
    %v4115 = vpack.c.b16 %v4051, %v4049
    %v4116 = vpack.c.b16 %v4052, %v4050
    %v4182 = vlaneseq
    %v4183 = vshrl.u32 %v4182, 7
    %v4184 = vsub.s32 0, %v4183
    %v4185 = vrot.slane %v3860, %v4184
    %v4186 = vlaneseq
    %v4187 = vshrl.u32 %v4186, 7
    %v4188 = vsub.s32 1, %v4187
    %v4189 = vrot.slane %v3860, %v4188
    %4192 = vmatprep.subr.bf16.mxu0 %v4054
    %4193 = vmatpush1.bf16.msra.mxu0 %v4053
    %4194 = vmatprep.subr.bf16.mxu0 %v4056
    %4195 = vmatpush1.bf16.msra.mxu0 %v4055
    %4196 = vmatprep.subr.bf16.mxu0 %v4058
    %4197 = vmatpush1.bf16.msra.mxu0 %v4057
    %4198 = vmatprep.subr.bf16.mxu0 %v4060
    %4199 = vmatpush1.bf16.msra.mxu0 %v4059
    %4200 = vmatprep.subr.bf16.mxu0 %v4062
    %4201 = vmatpush1.bf16.msra.mxu0 %v4061
    %4202 = vmatprep.subr.bf16.mxu0 %v4064
    %4203 = vmatpush1.bf16.msra.mxu0 %v4063
    %4204 = vmatprep.subr.bf16.mxu0 %v4066
    %4205 = vmatpush1.bf16.msra.mxu0 %v4065
    %4206 = vmatprep.subr.bf16.mxu0 %v4068
    %4207 = vmatpush1.bf16.msra.mxu0 %v4067
    %4208 = vmatprep.subr.bf16.mxu0 %v4070
    %4209 = vmatpush1.bf16.msra.mxu0 %v4069
    %4210 = vmatprep.subr.bf16.mxu0 %v4072
    %4211 = vmatpush1.bf16.msra.mxu0 %v4071
    %4212 = vmatprep.subr.bf16.mxu0 %v4074
    %4213 = vmatpush1.bf16.msra.mxu0 %v4073
    %4214 = vmatprep.subr.bf16.mxu0 %v4076
    %4215 = vmatpush1.bf16.msra.mxu0 %v4075
    %4216 = vmatprep.subr.bf16.mxu0 %v4078
    %4217 = vmatpush1.bf16.msra.mxu0 %v4077
    %4218 = vmatprep.subr.bf16.mxu0 %v4080
    %4219 = vmatpush1.bf16.msra.mxu0 %v4079
    %4220 = vmatprep.subr.bf16.mxu0 %v4082
    %4221 = vmatpush1.bf16.msra.mxu0 %v4081
    %4222 = vmatprep.subr.bf16.mxu0 %v4084
    %4223 = vmatpush1.bf16.msra.mxu0 %v4083
    %4224 = vmatprep.mubr.bf16.mxu0 %v3793
    %4225 = vmatmul.mubr.bf16.gmra.mrb[0].mxu0 %v3792
    %v4226 = vpop.f32.mrb[0].mxu0
    %v4227 = vadd.f32 %v4185, %v4226
    %v4228 = vpop.f32.mrb[0].mxu0
    %v4229 = vadd.f32 %v4189, %v4228
    %v4230 = vpop.f32.mrb[0].mxu0
    %v4231 = vpop.f32.mrb[0].mxu0
    %4232 = vdwg.mxu0
    %4233 = vmatprep.subr.bf16.mxu0 %v4086
    %4234 = vmatpush1.bf16.msra.mxu0 %v4085
    %4235 = vmatprep.subr.bf16.mxu0 %v4088
    %4236 = vmatpush1.bf16.msra.mxu0 %v4087
    %4237 = vmatprep.subr.bf16.mxu0 %v4090
    %4238 = vmatpush1.bf16.msra.mxu0 %v4089
    %4239 = vmatprep.subr.bf16.mxu0 %v4092
    %4240 = vmatpush1.bf16.msra.mxu0 %v4091
    %4241 = vmatprep.subr.bf16.mxu0 %v4094
    %4242 = vmatpush1.bf16.msra.mxu0 %v4093
    %4243 = vmatprep.subr.bf16.mxu0 %v4096
    %4244 = vmatpush1.bf16.msra.mxu0 %v4095
    %4245 = vmatprep.subr.bf16.mxu0 %v4098
    %4246 = vmatpush1.bf16.msra.mxu0 %v4097
    %4247 = vmatprep.subr.bf16.mxu0 %v4100
    %4248 = vmatpush1.bf16.msra.mxu0 %v4099
    %4249 = vmatprep.subr.bf16.mxu0 %v4102
    %4250 = vmatpush1.bf16.msra.mxu0 %v4101
    %4251 = vmatprep.subr.bf16.mxu0 %v4104
    %4252 = vmatpush1.bf16.msra.mxu0 %v4103
    %4253 = vmatprep.subr.bf16.mxu0 %v4106
    %4254 = vmatpush1.bf16.msra.mxu0 %v4105
    %4255 = vmatprep.subr.bf16.mxu0 %v4108
    %4256 = vmatpush1.bf16.msra.mxu0 %v4107
    %4257 = vmatprep.subr.bf16.mxu0 %v4110
    %4258 = vmatpush1.bf16.msra.mxu0 %v4109
    %4259 = vmatprep.subr.bf16.mxu0 %v4112
    %4260 = vmatpush1.bf16.msra.mxu0 %v4111
    %4261 = vmatprep.subr.bf16.mxu0 %v4114
    %4262 = vmatpush1.bf16.msra.mxu0 %v4113
    %4263 = vmatprep.subr.bf16.mxu0 %v4116
    %4264 = vmatpush1.bf16.msra.mxu0 %v4115
    %4265 = vmatprep.mubr.bf16.mxu0 %v3795
    %4266 = vmatmul.mubr.bf16.gmra.mrb[0].mxu0 %v3794
    %v4267 = vpop.f32.mrb[0].mxu0
    %v4268 = vadd.f32 %v4227, %v4267
    %v4269 = vpop.f32.mrb[0].mxu0
    %v4270 = vadd.f32 %v4229, %v4269
    %v4271 = vpop.f32.mrb[0].mxu0
    %v4272 = vpop.f32.mrb[0].mxu0
    %4273 = vdwg.mxu0
    %vm4274 = vcmp.gt.f32.partialorder %v4268, 0.0
    %vm4275 = vcmp.gt.f32.partialorder %v4270, 0.0
    %v4276 = vmul.f32 %v4268, 0.01
    %v4277 = vmul.f32 %v4270, 0.01
    %v4278 = vsel %vm4274, %v4268, %v4276
    %v4279 = vsel %vm4275, %v4270, %v4277
    %v4280 = vpack.c.bf16 %v4278, %v4278
    %v4281 = vpack.c.bf16 %v4279, %v4279
    %v4282 = vld [vmem:[%s9] sm:$0xf]
    %v4283 = vld [vmem:[%s9 + $0x4] sm:$0xf]
    %v4284 = vld [vmem:[%s9 + $0x8] sm:$0xf]
    %v4285 = vld [vmem:[%s9 + $0xc] sm:$0xf]
    %v4286 = vld [vmem:[%s9 + $0x10] sm:$0xf]
    %v4287 = vld [vmem:[%s9 + $0x14] sm:$0xf]
    %v4288 = vld [vmem:[%s9 + $0x18] sm:$0xf]
    %v4289 = vld [vmem:[%s9 + $0x1c] sm:$0xf]
    %v4290 = vld [vmem:[%s9 + $0x20] sm:$0xf]
    %v4291 = vld [vmem:[%s9 + $0x24] sm:$0xf]
    %v4292 = vld [vmem:[%s9 + $0x28] sm:$0xf]
    %v4293 = vld [vmem:[%s9 + $0x2c] sm:$0xf]
    %v4294 = vld [vmem:[%s9 + $0x30] sm:$0xf]
    %v4295 = vld [vmem:[%s9 + $0x34] sm:$0xf]
    %v4296 = vld [vmem:[%s9 + $0x38] sm:$0xf]
    %v4297 = vld [vmem:[%s9 + $0x3c] sm:$0xf]
    %v4298 = vld [vmem:[%s9 + $0x40] sm:$0xf]
    %v4299 = vld [vmem:[%s9 + $0x44] sm:$0xf]
    %v4300 = vld [vmem:[%s9 + $0x48] sm:$0xf]
    %v4301 = vld [vmem:[%s9 + $0x4c] sm:$0xf]
    %v4302 = vld [vmem:[%s9 + $0x50] sm:$0xf]
    %v4303 = vld [vmem:[%s9 + $0x54] sm:$0xf]
    %v4304 = vld [vmem:[%s9 + $0x58] sm:$0xf]
    %v4305 = vld [vmem:[%s9 + $0x5c] sm:$0xf]
    %v4306 = vld [vmem:[%s9 + $0x60] sm:$0xf]
    %v4307 = vld [vmem:[%s9 + $0x64] sm:$0xf]
    %v4308 = vld [vmem:[%s9 + $0x68] sm:$0xf]
    %v4309 = vld [vmem:[%s9 + $0x6c] sm:$0xf]
    %v4310 = vld [vmem:[%s9 + $0x70] sm:$0xf]
    %v4311 = vld [vmem:[%s9 + $0x74] sm:$0xf]
    %v4312 = vld [vmem:[%s9 + $0x78] sm:$0xf]
    %v4313 = vld [vmem:[%s9 + $0x7c] sm:$0xf]
    %v4314 = vld [vmem:[%s10] sm:$0x1]
    %v4347 = vunpack.c.l.b16 %v4282
    %v4348 = vunpack.c.l.b16 %v4283
    %v4349 = vunpack.c.l.b16 %v4284
    %v4350 = vunpack.c.l.b16 %v4285
    %v4351 = vunpack.c.l.b16 %v4286
    %v4352 = vunpack.c.l.b16 %v4287
    %v4353 = vunpack.c.l.b16 %v4288
    %v4354 = vunpack.c.l.b16 %v4289
    %v4355 = vunpack.c.l.b16 %v4290
    %v4356 = vunpack.c.l.b16 %v4291
    %v4357 = vunpack.c.l.b16 %v4292
    %v4358 = vunpack.c.l.b16 %v4293
    %v4359 = vunpack.c.l.b16 %v4294
    %v4360 = vunpack.c.l.b16 %v4295
    %v4361 = vunpack.c.l.b16 %v4296
    %v4362 = vunpack.c.l.b16 %v4297
    %v4363 = vunpack.c.l.b16 %v4298
    %v4364 = vunpack.c.l.b16 %v4299
    %v4365 = vunpack.c.l.b16 %v4300
    %v4366 = vunpack.c.l.b16 %v4301
    %v4367 = vunpack.c.l.b16 %v4302
    %v4368 = vunpack.c.l.b16 %v4303
    %v4369 = vunpack.c.l.b16 %v4304
    %v4370 = vunpack.c.l.b16 %v4305
    %v4371 = vunpack.c.l.b16 %v4306
    %v4372 = vunpack.c.l.b16 %v4307
    %v4373 = vunpack.c.l.b16 %v4308
    %v4374 = vunpack.c.l.b16 %v4309
    %v4375 = vunpack.c.l.b16 %v4310
    %v4376 = vunpack.c.l.b16 %v4311
    %v4377 = vunpack.c.l.b16 %v4312
    %v4378 = vunpack.c.l.b16 %v4313
    %v4379 = vpack.c.b16 %v4348, %v4347
    %v4380 = vpack.c.b16 %v4350, %v4349
    %v4381 = vpack.c.b16 %v4352, %v4351
    %v4382 = vpack.c.b16 %v4354, %v4353
    %v4383 = vpack.c.b16 %v4356, %v4355
    %v4384 = vpack.c.b16 %v4358, %v4357
    %v4385 = vpack.c.b16 %v4360, %v4359
    %v4386 = vpack.c.b16 %v4362, %v4361
    %v4387 = vpack.c.b16 %v4364, %v4363
    %v4388 = vpack.c.b16 %v4366, %v4365
    %v4389 = vpack.c.b16 %v4368, %v4367
    %v4390 = vpack.c.b16 %v4370, %v4369
    %v4391 = vpack.c.b16 %v4372, %v4371
    %v4392 = vpack.c.b16 %v4374, %v4373
    %v4393 = vpack.c.b16 %v4376, %v4375
    %v4394 = vpack.c.b16 %v4378, %v4377
    %4411 = vmatprep.subr.bf16.mxu0 0
    %4412 = vmatpush1.bf16.msra.mxu0 %v4379
    %4413 = vmatprep.subr.bf16.mxu0 0
    %4414 = vmatpush1.bf16.msra.mxu0 %v4380
    %4415 = vmatprep.subr.bf16.mxu0 0
    %4416 = vmatpush1.bf16.msra.mxu0 %v4381
    %4417 = vmatprep.subr.bf16.mxu0 0
    %4418 = vmatpush1.bf16.msra.mxu0 %v4382
    %4419 = vmatprep.subr.bf16.mxu0 0
    %4420 = vmatpush1.bf16.msra.mxu0 %v4383
    %4421 = vmatprep.subr.bf16.mxu0 0
    %4422 = vmatpush1.bf16.msra.mxu0 %v4384
    %4423 = vmatprep.subr.bf16.mxu0 0
    %4424 = vmatpush1.bf16.msra.mxu0 %v4385
    %4425 = vmatprep.subr.bf16.mxu0 0
    %4426 = vmatpush1.bf16.msra.mxu0 %v4386
    %4427 = vmatprep.subr.bf16.mxu0 0
    %4428 = vmatpush1.bf16.msra.mxu0 %v4387
    %4429 = vmatprep.subr.bf16.mxu0 0
    %4430 = vmatpush1.bf16.msra.mxu0 %v4388
    %4431 = vmatprep.subr.bf16.mxu0 0
    %4432 = vmatpush1.bf16.msra.mxu0 %v4389
    %4433 = vmatprep.subr.bf16.mxu0 0
    %4434 = vmatpush1.bf16.msra.mxu0 %v4390
    %4435 = vmatprep.subr.bf16.mxu0 0
    %4436 = vmatpush1.bf16.msra.mxu0 %v4391
    %4437 = vmatprep.subr.bf16.mxu0 0
    %4438 = vmatpush1.bf16.msra.mxu0 %v4392
    %4439 = vmatprep.subr.bf16.mxu0 0
    %4440 = vmatpush1.bf16.msra.mxu0 %v4393
    %4441 = vmatprep.subr.bf16.mxu0 0
    %4442 = vmatpush1.bf16.msra.mxu0 %v4394
    %4443 = vmatprep.mubr.bf16.mxu0 %v4281
    %4444 = vmatmul.mubr.bf16.gmra.mrb[0].mxu0 %v4280
    %v4445 = vpop.f32.mrb[0].mxu0
    %v4446 = vadd.f32 %v4314, %v4445
    %v4447 = vpop.f32.mrb[0].mxu0
    %v4448 = vpop.f32.mrb[0].mxu0
    %v4449 = vpop.f32.mrb[0].mxu0
    %4450 = vdwg.mxu0
    %vm4451 = vcmp.gt.f32.partialorder %v4446, 0.0
    %v4452 = vmul.f32 %v4446, 0.01
    %v4453 = vsel %vm4451, %v4446, %v4452
    %v4454 = vpack.c.bf16 %v4453, %v4453
    %v4455 = vld [vmem:[%s11] sm:$0xf]
    %v4456 = vld [vmem:[%s11 + $0x4] sm:$0xf]
    %v4457 = vld [vmem:[%s11 + $0x8] sm:$0xf]
    %v4458 = vld [vmem:[%s11 + $0xc] sm:$0xf]
    %v4459 = vld [vmem:[%s11 + $0x10] sm:$0xf]
    %v4460 = vld [vmem:[%s11 + $0x14] sm:$0xf]
    %v4461 = vld [vmem:[%s11 + $0x18] sm:$0xf]
    %v4462 = vld [vmem:[%s11 + $0x1c] sm:$0xf]
    %v4463 = vld [vmem:[#allocation2] sm:$0x1]
    %v4472 = vunpack.c.l.b16 %v4455
    %v4473 = vunpack.c.l.b16 %v4456
    %v4474 = vunpack.c.l.b16 %v4457
    %v4475 = vunpack.c.l.b16 %v4458
    %v4476 = vunpack.c.l.b16 %v4459
    %v4477 = vunpack.c.l.b16 %v4460
    %v4478 = vunpack.c.l.b16 %v4461
    %v4479 = vunpack.c.l.b16 %v4462
    %v4480 = vpack.c.b16 %v4473, %v4472
    %v4481 = vpack.c.b16 %v4475, %v4474
    %v4482 = vpack.c.b16 %v4477, %v4476
    %v4483 = vpack.c.b16 %v4479, %v4478
    %vm4488 = vcmask 523264
    %v4490 = vsel %vm4488, %v4454, 0
    %4492 = vmatprep.subr.bf16.mxu0 0
    %4493 = vmatpush1.bf16.msra.mxu0 %v4480
    %4494 = vmatprep.subr.bf16.mxu0 0
    %4495 = vmatpush1.bf16.msra.mxu0 %v4481
    %4496 = vmatprep.subr.bf16.mxu0 0
    %4497 = vmatpush1.bf16.msra.mxu0 %v4482
    %4498 = vmatprep.subr.bf16.mxu0 0
    %4499 = vmatpush1.bf16.msra.mxu0 %v4483
    %4500 = vmatprep.subr.bf16.mxu0 0
    %4501 = vmatpush1.bf16.msra.mxu0 0
    %4502 = vmatprep.subr.bf16.mxu0 0
    %4503 = vmatpush1.bf16.msra.mxu0 0
    %4504 = vmatprep.subr.bf16.mxu0 0
    %4505 = vmatpush1.bf16.msra.mxu0 0
    %4506 = vmatprep.subr.bf16.mxu0 0
    %4507 = vmatpush1.bf16.msra.mxu0 0
    %4508 = vmatprep.subr.bf16.mxu0 0
    %4509 = vmatpush1.bf16.msra.mxu0 0
    %4510 = vmatprep.subr.bf16.mxu0 0
    %4511 = vmatpush1.bf16.msra.mxu0 0
    %4512 = vmatprep.subr.bf16.mxu0 0
    %4513 = vmatpush1.bf16.msra.mxu0 0
    %4514 = vmatprep.subr.bf16.mxu0 0
    %4515 = vmatpush1.bf16.msra.mxu0 0
    %4516 = vmatprep.subr.bf16.mxu0 0
    %4517 = vmatpush1.bf16.msra.mxu0 0
    %4518 = vmatprep.subr.bf16.mxu0 0
    %4519 = vmatpush1.bf16.msra.mxu0 0
    %4520 = vmatprep.subr.bf16.mxu0 0
    %4521 = vmatpush1.bf16.msra.mxu0 0
    %4522 = vmatprep.subr.bf16.mxu0 0
    %4523 = vmatpush1.bf16.msra.mxu0 0
    %4524 = vmatprep.mubr.bf16.mxu0 0
    %4525 = vmatmul.mubr.bf16.gmra.mrb[0].mxu0 %v4490
    %v4526 = vpop.f32.mrb[0].mxu0
    %v4527 = vadd.f32 %v4463, %v4526
    %v4528 = vpop.f32.mrb[0].mxu0
    %v4529 = vpop.f32.mrb[0].mxu0
    %v4530 = vpop.f32.mrb[0].mxu0
    %4531 = vdwg.mxu0
    %vm4532 = vcmp.gt.f32.partialorder %v4527, 0.0
    %v4533 = vmul.f32 %v4527, 0.01
    %v4534 = vsel %vm4532, %v4527, %v4533
    %v4535 = vtanh.pop %v4534
    %vm4536 = vcmask 0
    %4537 = vst.msk [vmem:[#allocation3] sm:$0x1] %vm4536, %v4535
    // Predicated region
    $region54: #{model_forward.13} parent=1 // pred_check
      _
    $region55: #{model_forward.13} parent=1 // pred_check_branch
      %4539 = sbr.rel (0) target = $region57
    $region56: #{model_forward.13} parent=1 // pred_region
      %s4541 = ssub.s32 16, 16
      %4542 = vsyncadd [#allocation4], %s4541
      %s4544 = sshll.u32 [#allocation3], 4
      %s4545 = int_to_ptr.vmem [resolvable:$true] %s4544
      %4547 = dma.vmem_to_hbm [thread:$0]  %s4545, 16, %s13, [#allocation4]
    $region57: #{model_forward.13} parent=1 // pred_fallthru
      _
    // Predicated region
    $region58: #{model_forward.13} parent=1 // pred_check
      _
    $region59: #{model_forward.13} parent=1 // pred_check_branch
      %4549 = sbr.rel (0) target = $region61
    $region60: #{model_forward.13} parent=1 // pred_region
      %4550 = dma.done [#allocation4], 16
    $region61: #{model_forward.13} parent=1 // pred_fallthru
      _
    %4551 = vsyncpa [#allocation4], 1

</llo_original>
